<compile_context>
chip_gen: v7x
topology: tpu7x:2x2x1
jax: 0.10.0
libtpu: 0.0.40
codegen_flags: <defaults>
</compile_context>

<pallas_src>
import jax
import jax.numpy as jnp
import numpy as np
from jax.experimental import pallas as pl
from jax.experimental.pallas import tpu as pltpu


# ----------------------------- fused kernel ----------------------------------

def decoder2_kernel(x_ref, w5_ref, b5_ref, w6_ref, b6_ref, w7_ref, b7_ref,
                    o_ref, pad1, uprow, pad2, pad3):
    # Per grid step: one batch sample.
    #   x_ref : (1, h, w, cin)      input sample (NHWC)
    #   w*_ref: (3, 3, cin, cout)   conv weights (HWIO)
    #   b*_ref: (1, cout)           conv biases
    #   o_ref : (1, 2h, 2w, c3)     output sample (NHWC)
    #   pad1  : (h+2,  w+2,  cin)   reflection-padded input          (VMEM)
    #   uprow : (2h+2, w,    c1)    row-upsampled + row-reflected a1 (VMEM)
    #   pad2  : (2h+2, 2w+2, c1)    padded upsampled a1              (VMEM)
    #   pad3  : (2h+2, 2w+2, c2)    reflection-padded a2             (VMEM)
    _, h, w, _ = x_ref.shape
    c1 = w5_ref.shape[3]
    c2 = w6_ref.shape[3]
    c3 = w7_ref.shape[3]
    h2, w2 = 2 * h, 2 * w

    def conv3x3(pad_ref, w_ref, b_ref, oh, ow, relu):
        # valid 3x3 conv over a pre-padded (oh+2, ow+2, cin) VMEM ref.
        kcin = w_ref.shape[2]
        kcout = w_ref.shape[3]
        acc = jnp.zeros((oh * ow, kcout), jnp.float32)
        for dy in range(3):
            for dx in range(3):
                patch = pad_ref[dy:dy + oh, dx:dx + ow, :]          # (oh, ow, cin)
                acc = acc + jnp.dot(patch.reshape(oh * ow, kcin),
                                    w_ref[dy, dx],
                                    preferred_element_type=jnp.float32)
        acc = acc + b_ref[...]                                      # (1, cout) bcast
        if relu:
            acc = jnp.maximum(acc, 0.0)
        return acc                                                  # (oh*ow, cout)

    # ---- stage 1: reflection-pad x (in VMEM) -> conv5 -> relu ---------------
    x = x_ref[0]                                                    # (h, w, cin)
    pad1[1:h + 1, 1:w + 1, :] = x
    pad1[0, 1:w + 1, :] = x[1]                                      # reflect top
    pad1[h + 1, 1:w + 1, :] = x[h - 2]                              # reflect bottom
    pad1[:, 0, :] = pad1[:, 2, :]                                   # reflect left (+corners)
    pad1[:, w + 1, :] = pad1[:, w - 1, :]                           # reflect right (+corners)
    a1 = conv3x3(pad1, w5_ref, b5_ref, h, w, relu=True)             # (h*w, c1)

    # ---- stage 2: nearest-upsample 2x + reflection-pad, fully in VMEM -------
    # rows (leading dim of uprow): [r0, r0, r0, r1, r1, ..., r_{h-1}, r_{h-1}, r_{h-1}]
    uprow[0] = a1[0:w, :]
    for i in range(h):
        ri = a1[i * w:(i + 1) * w, :]                               # image row i, (w, c1)
        uprow[2 * i + 1] = ri
        uprow[2 * i + 2] = ri
    uprow[h2 + 1] = a1[(h - 1) * w:h * w, :]
    # columns: duplicate each source column into two padded columns, reflect edges
    for j in range(w):
        col = uprow[:, j, :]                                        # (h2+2, c1)
        pad2[:, 2 * j + 1, :] = col
        pad2[:, 2 * j + 2, :] = col
    pad2[:, 0, :] = uprow[:, 0, :]
    pad2[:, w2 + 1, :] = uprow[:, w - 1, :]
    a2 = conv3x3(pad2, w6_ref, b6_ref, h2, w2, relu=True)           # (h2*w2, c2)

    # ---- stage 3: reflection-pad a2 -> conv7 (no relu) -----------------------
    a2i = a2.reshape(h2, w2, c2)
    pad3[1:h2 + 1, 1:w2 + 1, :] = a2i
    pad3[0, 1:w2 + 1, :] = a2i[1]
    pad3[h2 + 1, 1:w2 + 1, :] = a2i[h2 - 2]
    pad3[:, 0, :] = pad3[:, 2, :]
    pad3[:, w2 + 1, :] = pad3[:, w2 - 1, :]
    a3 = conv3x3(pad3, w7_ref, b7_ref, h2, w2, relu=False)          # (h2*w2, c3)

    o_ref[0] = a3.reshape(h2, w2, c3)


# ----------------------------- wrapper ---------------------------------------

def decoder2_forward(x_nchw, p):
    """decoder2.forward. x_nchw: (N, 128, H, W) f32 -> (N, 3, 2H, 2W) f32."""
    n, cin, h, w = x_nchw.shape
    c1 = p["w5"].shape[-1]
    c2 = p["w6"].shape[-1]
    c3 = p["w7"].shape[-1]
    h2, w2 = 2 * h, 2 * w

    x = jnp.transpose(x_nchw, (0, 2, 3, 1))                         # NCHW -> NHWC
    b5 = p["b5"].reshape(1, c1)
    b6 = p["b6"].reshape(1, c2)
    b7 = p["b7"].reshape(1, c3)

    out = pl.pallas_call(
        decoder2_kernel,
        out_shape=jax.ShapeDtypeStruct((n, h2, w2, c3), jnp.float32),
        grid_spec=pltpu.PrefetchScalarGridSpec(
            num_scalar_prefetch=0,
            grid=(n,),
            in_specs=[
                pl.BlockSpec((1, h, w, cin), lambda i: (i, 0, 0, 0)),
                pl.BlockSpec((3, 3, cin, c1), lambda i: (0, 0, 0, 0)),
                pl.BlockSpec((1, c1), lambda i: (0, 0)),
                pl.BlockSpec((3, 3, c1, c2), lambda i: (0, 0, 0, 0)),
                pl.BlockSpec((1, c2), lambda i: (0, 0)),
                pl.BlockSpec((3, 3, c2, c3), lambda i: (0, 0, 0, 0)),
                pl.BlockSpec((1, c3), lambda i: (0, 0)),
            ],
            out_specs=pl.BlockSpec((1, h2, w2, c3), lambda i: (i, 0, 0, 0)),
            scratch_shapes=[
                pltpu.VMEM((h + 2, w + 2, cin), jnp.float32),        # pad1
                pltpu.VMEM((h2 + 2, w, c1), jnp.float32),            # uprow
                pltpu.VMEM((h2 + 2, w2 + 2, c1), jnp.float32),       # pad2
                pltpu.VMEM((h2 + 2, w2 + 2, c2), jnp.float32),       # pad3
            ],
        ),
        compiler_params=pltpu.CompilerParams(
            dimension_semantics=("parallel",)),                      # v7x: 2 TCs over batch
    )(x, p["w5"], b5, p["w6"], b6, p["w7"], b7)

    return jnp.transpose(out, (0, 3, 1, 2))                          # NHWC -> NCHW


# ----------------------------- pure-JAX reference -----------------------------

def decoder2_reference(x_nchw, p):
    x = jnp.transpose(x_nchw, (0, 2, 3, 1))

    def rpad(t):
        return jnp.pad(t, ((0, 0), (1, 1), (1, 1), (0, 0)), mode="reflect")

    def conv(t, wgt, b):
        y = jax.lax.conv_general_dilated(
            t, wgt, window_strides=(1, 1), padding="VALID",
            dimension_numbers=("NHWC", "HWIO", "NHWC"))
        return y + b[None, None, None, :]

    y = jnp.maximum(conv(rpad(x), p["w5"], p["b5"]), 0.0)            # conv5 + relu
    y = jnp.repeat(jnp.repeat(y, 2, axis=1), 2, axis=2)              # nearest upsample x2
    y = jnp.maximum(conv(rpad(y), p["w6"], p["b6"]), 0.0)            # conv6 + relu
    y = conv(rpad(y), p["w7"], p["b7"])                              # conv7
    return jnp.transpose(y, (0, 3, 1, 2))


# ----------------------------- main -------------------------------------------

if __name__ == "__main__":
    key = jax.random.PRNGKey(0)
    ks = jax.random.split(key, 8)

    N, C_IN, H, W = 2, 128, 8, 8          # conv5 in the module requires 128 input channels
    C1, C2, C3 = 64, 64, 3

    x = jax.random.normal(ks[0], (N, C_IN, H, W), jnp.float32)

    def make_conv_w(k, cout, cin, scale):
        # PyTorch layout OIHW, then -> HWIO for the kernel (glue).
        w_oihw = scale * jax.random.normal(k, (cout, cin, 3, 3), jnp.float32)
        return jnp.transpose(w_oihw, (2, 3, 1, 0))

    params = {
        "w5": make_conv_w(ks[1], C1, C_IN, 0.03),
        "b5": 0.05 * jax.random.normal(ks[2], (C1,), jnp.float32),
        "w6": make_conv_w(ks[3], C2, C1, 0.05),
        "b6": 0.05 * jax.random.normal(ks[4], (C2,), jnp.float32),
        "w7": make_conv_w(ks[5], C3, C2, 0.05),
        "b7": 0.05 * jax.random.normal(ks[6], (C3,), jnp.float32),
    }

    out = decoder2_forward(x, params)
    out = jax.block_until_ready(out)

    ref = decoder2_reference(x, params)
    assert out.shape == (N, C3, 2 * H, 2 * W), out.shape
    np.testing.assert_allclose(np.asarray(out), np.asarray(ref),
                               atol=5e-2, rtol=5e-2)

    print("KERNEL_OK")
</pallas_src>

<mosaic_0001>
module attributes {stable_mosaic.version = 11 : i64} {
  func.func @decoder2_kernel(%arg0: i32, %arg1: memref<1x8x8x128xf32, #tpu.memory_space<vmem>>, %arg2: memref<3x3x128x64xf32, #tpu.memory_space<vmem>>, %arg3: memref<1x64xf32, #tpu.memory_space<vmem>>, %arg4: memref<3x3x64x64xf32, #tpu.memory_space<vmem>>, %arg5: memref<1x64xf32, #tpu.memory_space<vmem>>, %arg6: memref<3x3x64x3xf32, #tpu.memory_space<vmem>>, %arg7: memref<1x3xf32, #tpu.memory_space<vmem>>, %arg8: memref<1x16x16x3xf32, #tpu.memory_space<vmem>>, %arg9: memref<10x10x128xf32, #tpu.memory_space<vmem>>, %arg10: memref<18x8x64xf32, #tpu.memory_space<vmem>>, %arg11: memref<18x18x64xf32, #tpu.memory_space<vmem>>, %arg12: memref<18x18x64xf32, #tpu.memory_space<vmem>>) attributes {dimension_semantics = [#tpu.dimension_semantics<parallel>], iteration_bounds = array<i64: 2>, scalar_prefetch = 0 : i64, scratch_operands = 4 : i64, tpu.core_type = #tpu.core_type<tc>, window_params = [{transform_indices = @transform_0, window_bounds = array<i64: 1, 8, 8, 128>}, {pipeline_mode = #tpu.pipeline_mode<synchronous>, transform_indices = @transform_1, window_bounds = array<i64: 3, 3, 128, 64>}, {pipeline_mode = #tpu.pipeline_mode<synchronous>, transform_indices = @transform_2, window_bounds = array<i64: 1, 64>}, {pipeline_mode = #tpu.pipeline_mode<synchronous>, transform_indices = @transform_3, window_bounds = array<i64: 3, 3, 64, 64>}, {pipeline_mode = #tpu.pipeline_mode<synchronous>, transform_indices = @transform_4, window_bounds = array<i64: 1, 64>}, {pipeline_mode = #tpu.pipeline_mode<synchronous>, transform_indices = @transform_5, window_bounds = array<i64: 3, 3, 64, 3>}, {pipeline_mode = #tpu.pipeline_mode<synchronous>, transform_indices = @transform_6, window_bounds = array<i64: 1, 3>}, {transform_indices = @transform_7, window_bounds = array<i64: 1, 16, 16, 3>}]} {
    %c0 = arith.constant 0 : index
    %c0_0 = arith.constant 0 : index
    %c0_1 = arith.constant 0 : index
    %c0_2 = arith.constant 0 : index
    %0 = vector.load %arg1[%c0, %c0_0, %c0_1, %c0_2] : memref<1x8x8x128xf32, #tpu.memory_space<vmem>>, vector<1x8x8x128xf32>
    %1 = vector.shape_cast %0 : vector<1x8x8x128xf32> to vector<8x8x128xf32>
    %c1 = arith.constant 1 : index
    %c1_3 = arith.constant 1 : index
    %c0_4 = arith.constant 0 : index
    %2 = vector.load %arg9[%c1, %c1_3, %c0_4] : memref<10x10x128xf32, #tpu.memory_space<vmem>>, vector<8x8x128xf32>
    tpu.vector_store %arg9[%c1, %c1_3, %c0_4], %1 {strides = array<i32>} : memref<10x10x128xf32, #tpu.memory_space<vmem>>, vector<8x8x128xf32>,
    %3 = vector.extract_strided_slice %1 {offsets = [1, 0, 0], sizes = [1, 8, 128], strides = [1, 1, 1]} : vector<8x8x128xf32> to vector<1x8x128xf32>
    %4 = vector.shape_cast %3 : vector<1x8x128xf32> to vector<8x128xf32>
    %c0_5 = arith.constant 0 : index
    %c1_6 = arith.constant 1 : index
    %c0_7 = arith.constant 0 : index
    %5 = vector.load %arg9[%c0_5, %c1_6, %c0_7] : memref<10x10x128xf32, #tpu.memory_space<vmem>>, vector<1x8x128xf32>
    %6 = vector.shape_cast %5 : vector<1x8x128xf32> to vector<8x128xf32>
    %7 = vector.shape_cast %4 : vector<8x128xf32> to vector<1x8x128xf32>
    tpu.vector_store %arg9[%c0_5, %c1_6, %c0_7], %7 {strides = array<i32>} : memref<10x10x128xf32, #tpu.memory_space<vmem>>, vector<1x8x128xf32>,
    %8 = vector.extract_strided_slice %1 {offsets = [6, 0, 0], sizes = [1, 8, 128], strides = [1, 1, 1]} : vector<8x8x128xf32> to vector<1x8x128xf32>
    %9 = vector.shape_cast %8 : vector<1x8x128xf32> to vector<8x128xf32>
    %c9 = arith.constant 9 : index
    %c1_8 = arith.constant 1 : index
    %c0_9 = arith.constant 0 : index
    %10 = vector.load %arg9[%c9, %c1_8, %c0_9] : memref<10x10x128xf32, #tpu.memory_space<vmem>>, vector<1x8x128xf32>
    %11 = vector.shape_cast %10 : vector<1x8x128xf32> to vector<8x128xf32>
    %12 = vector.shape_cast %9 : vector<8x128xf32> to vector<1x8x128xf32>
    tpu.vector_store %arg9[%c9, %c1_8, %c0_9], %12 {strides = array<i32>} : memref<10x10x128xf32, #tpu.memory_space<vmem>>, vector<1x8x128xf32>,
    %c0_10 = arith.constant 0 : index
    %c2 = arith.constant 2 : index
    %c0_11 = arith.constant 0 : index
    %13 = vector.load %arg9[%c0_10, %c2, %c0_11] : memref<10x10x128xf32, #tpu.memory_space<vmem>>, vector<10x1x128xf32>
    %14 = vector.shape_cast %13 : vector<10x1x128xf32> to vector<10x128xf32>
    %c0_12 = arith.constant 0 : index
    %c0_13 = arith.constant 0 : index
    %c0_14 = arith.constant 0 : index
    %15 = vector.load %arg9[%c0_12, %c0_13, %c0_14] : memref<10x10x128xf32, #tpu.memory_space<vmem>>, vector<10x1x128xf32>
    %16 = vector.shape_cast %15 : vector<10x1x128xf32> to vector<10x128xf32>
    %17 = vector.shape_cast %14 : vector<10x128xf32> to vector<10x1x128xf32>
    tpu.vector_store %arg9[%c0_12, %c0_13, %c0_14], %17 {strides = array<i32>} : memref<10x10x128xf32, #tpu.memory_space<vmem>>, vector<10x1x128xf32>,
    %c0_15 = arith.constant 0 : index
    %c7 = arith.constant 7 : index
    %c0_16 = arith.constant 0 : index
    %18 = vector.load %arg9[%c0_15, %c7, %c0_16] : memref<10x10x128xf32, #tpu.memory_space<vmem>>, vector<10x1x128xf32>
    %19 = vector.shape_cast %18 : vector<10x1x128xf32> to vector<10x128xf32>
    %c0_17 = arith.constant 0 : index
    %c9_18 = arith.constant 9 : index
    %c0_19 = arith.constant 0 : index
    %20 = vector.load %arg9[%c0_17, %c9_18, %c0_19] : memref<10x10x128xf32, #tpu.memory_space<vmem>>, vector<10x1x128xf32>
    %21 = vector.shape_cast %20 : vector<10x1x128xf32> to vector<10x128xf32>
    %22 = vector.shape_cast %19 : vector<10x128xf32> to vector<10x1x128xf32>
    tpu.vector_store %arg9[%c0_17, %c9_18, %c0_19], %22 {strides = array<i32>} : memref<10x10x128xf32, #tpu.memory_space<vmem>>, vector<10x1x128xf32>,
    %cst = arith.constant 0.000000e+00 : f32
    %23 = vector.broadcast %cst : f32 to vector<64x64xf32>
    %c0_20 = arith.constant 0 : index
    %c0_21 = arith.constant 0 : index
    %c0_22 = arith.constant 0 : index
    %24 = vector.load %arg9[%c0_20, %c0_21, %c0_22] : memref<10x10x128xf32, #tpu.memory_space<vmem>>, vector<8x8x128xf32>
    %25 = vector.shape_cast %24 : vector<8x8x128xf32> to vector<64x128xf32>
    %c0_23 = arith.constant 0 : index
    %c0_24 = arith.constant 0 : index
    %c0_25 = arith.constant 0 : index
    %c0_26 = arith.constant 0 : index
    %26 = vector.load %arg2[%c0_23, %c0_24, %c0_25, %c0_26] : memref<3x3x128x64xf32, #tpu.memory_space<vmem>>, vector<1x1x128x64xf32>
    %27 = vector.shape_cast %26 : vector<1x1x128x64xf32> to vector<128x64xf32>
    %cst_27 = arith.constant dense<0.000000e+00> : vector<64x64xf32>
    %28 = tpu.matmul %25, %27, %cst_27 {dimension_numbers = #tpu.dot_dimension_numbers<[1], [0], [0], [1], [0, 0, 1, 1], [], []>} : vector<64x128xf32>, vector<128x64xf32>, vector<64x64xf32> -> vector<64x64xf32>
    %29 = arith.addf %23, %28 : vector<64x64xf32>
    %c0_28 = arith.constant 0 : index
    %c1_29 = arith.constant 1 : index
    %c0_30 = arith.constant 0 : index
    %30 = vector.load %arg9[%c0_28, %c1_29, %c0_30] : memref<10x10x128xf32, #tpu.memory_space<vmem>>, vector<8x8x128xf32>
    %31 = vector.shape_cast %30 : vector<8x8x128xf32> to vector<64x128xf32>
    %c0_31 = arith.constant 0 : index
    %c1_32 = arith.constant 1 : index
    %c0_33 = arith.constant 0 : index
    %c0_34 = arith.constant 0 : index
    %32 = vector.load %arg2[%c0_31, %c1_32, %c0_33, %c0_34] : memref<3x3x128x64xf32, #tpu.memory_space<vmem>>, vector<1x1x128x64xf32>
    %33 = vector.shape_cast %32 : vector<1x1x128x64xf32> to vector<128x64xf32>
    %cst_35 = arith.constant dense<0.000000e+00> : vector<64x64xf32>
    %34 = tpu.matmul %31, %33, %cst_35 {dimension_numbers = #tpu.dot_dimension_numbers<[1], [0], [0], [1], [0, 0, 1, 1], [], []>} : vector<64x128xf32>, vector<128x64xf32>, vector<64x64xf32> -> vector<64x64xf32>
    %35 = arith.addf %29, %34 : vector<64x64xf32>
    %c0_36 = arith.constant 0 : index
    %c2_37 = arith.constant 2 : index
    %c0_38 = arith.constant 0 : index
    %36 = vector.load %arg9[%c0_36, %c2_37, %c0_38] : memref<10x10x128xf32, #tpu.memory_space<vmem>>, vector<8x8x128xf32>
    %37 = vector.shape_cast %36 : vector<8x8x128xf32> to vector<64x128xf32>
    %c0_39 = arith.constant 0 : index
    %c2_40 = arith.constant 2 : index
    %c0_41 = arith.constant 0 : index
    %c0_42 = arith.constant 0 : index
    %38 = vector.load %arg2[%c0_39, %c2_40, %c0_41, %c0_42] : memref<3x3x128x64xf32, #tpu.memory_space<vmem>>, vector<1x1x128x64xf32>
    %39 = vector.shape_cast %38 : vector<1x1x128x64xf32> to vector<128x64xf32>
    %cst_43 = arith.constant dense<0.000000e+00> : vector<64x64xf32>
    %40 = tpu.matmul %37, %39, %cst_43 {dimension_numbers = #tpu.dot_dimension_numbers<[1], [0], [0], [1], [0, 0, 1, 1], [], []>} : vector<64x128xf32>, vector<128x64xf32>, vector<64x64xf32> -> vector<64x64xf32>
    %41 = arith.addf %35, %40 : vector<64x64xf32>
    %c1_44 = arith.constant 1 : index
    %c0_45 = arith.constant 0 : index
    %c0_46 = arith.constant 0 : index
    %42 = vector.load %arg9[%c1_44, %c0_45, %c0_46] : memref<10x10x128xf32, #tpu.memory_space<vmem>>, vector<8x8x128xf32>
    %43 = vector.shape_cast %42 : vector<8x8x128xf32> to vector<64x128xf32>
    %c1_47 = arith.constant 1 : index
    %c0_48 = arith.constant 0 : index
    %c0_49 = arith.constant 0 : index
    %c0_50 = arith.constant 0 : index
    %44 = vector.load %arg2[%c1_47, %c0_48, %c0_49, %c0_50] : memref<3x3x128x64xf32, #tpu.memory_space<vmem>>, vector<1x1x128x64xf32>
    %45 = vector.shape_cast %44 : vector<1x1x128x64xf32> to vector<128x64xf32>
    %cst_51 = arith.constant dense<0.000000e+00> : vector<64x64xf32>
    %46 = tpu.matmul %43, %45, %cst_51 {dimension_numbers = #tpu.dot_dimension_numbers<[1], [0], [0], [1], [0, 0, 1, 1], [], []>} : vector<64x128xf32>, vector<128x64xf32>, vector<64x64xf32> -> vector<64x64xf32>
    %47 = arith.addf %41, %46 : vector<64x64xf32>
    %c1_52 = arith.constant 1 : index
    %c1_53 = arith.constant 1 : index
    %c0_54 = arith.constant 0 : index
    %48 = vector.load %arg9[%c1_52, %c1_53, %c0_54] : memref<10x10x128xf32, #tpu.memory_space<vmem>>, vector<8x8x128xf32>
    %49 = vector.shape_cast %48 : vector<8x8x128xf32> to vector<64x128xf32>
    %c1_55 = arith.constant 1 : index
    %c1_56 = arith.constant 1 : index
    %c0_57 = arith.constant 0 : index
    %c0_58 = arith.constant 0 : index
    %50 = vector.load %arg2[%c1_55, %c1_56, %c0_57, %c0_58] : memref<3x3x128x64xf32, #tpu.memory_space<vmem>>, vector<1x1x128x64xf32>
    %51 = vector.shape_cast %50 : vector<1x1x128x64xf32> to vector<128x64xf32>
    %cst_59 = arith.constant dense<0.000000e+00> : vector<64x64xf32>
    %52 = tpu.matmul %49, %51, %cst_59 {dimension_numbers = #tpu.dot_dimension_numbers<[1], [0], [0], [1], [0, 0, 1, 1], [], []>} : vector<64x128xf32>, vector<128x64xf32>, vector<64x64xf32> -> vector<64x64xf32>
    %53 = arith.addf %47, %52 : vector<64x64xf32>
    %c1_60 = arith.constant 1 : index
    %c2_61 = arith.constant 2 : index
    %c0_62 = arith.constant 0 : index
    %54 = vector.load %arg9[%c1_60, %c2_61, %c0_62] : memref<10x10x128xf32, #tpu.memory_space<vmem>>, vector<8x8x128xf32>
    %55 = vector.shape_cast %54 : vector<8x8x128xf32> to vector<64x128xf32>
    %c1_63 = arith.constant 1 : index
    %c2_64 = arith.constant 2 : index
    %c0_65 = arith.constant 0 : index
    %c0_66 = arith.constant 0 : index
    %56 = vector.load %arg2[%c1_63, %c2_64, %c0_65, %c0_66] : memref<3x3x128x64xf32, #tpu.memory_space<vmem>>, vector<1x1x128x64xf32>
    %57 = vector.shape_cast %56 : vector<1x1x128x64xf32> to vector<128x64xf32>
    %cst_67 = arith.constant dense<0.000000e+00> : vector<64x64xf32>
    %58 = tpu.matmul %55, %57, %cst_67 {dimension_numbers = #tpu.dot_dimension_numbers<[1], [0], [0], [1], [0, 0, 1, 1], [], []>} : vector<64x128xf32>, vector<128x64xf32>, vector<64x64xf32> -> vector<64x64xf32>
    %59 = arith.addf %53, %58 : vector<64x64xf32>
    %c2_68 = arith.constant 2 : index
    %c0_69 = arith.constant 0 : index
    %c0_70 = arith.constant 0 : index
    %60 = vector.load %arg9[%c2_68, %c0_69, %c0_70] : memref<10x10x128xf32, #tpu.memory_space<vmem>>, vector<8x8x128xf32>
    %61 = vector.shape_cast %60 : vector<8x8x128xf32> to vector<64x128xf32>
    %c2_71 = arith.constant 2 : index
    %c0_72 = arith.constant 0 : index
    %c0_73 = arith.constant 0 : index
    %c0_74 = arith.constant 0 : index
    %62 = vector.load %arg2[%c2_71, %c0_72, %c0_73, %c0_74] : memref<3x3x128x64xf32, #tpu.memory_space<vmem>>, vector<1x1x128x64xf32>
    %63 = vector.shape_cast %62 : vector<1x1x128x64xf32> to vector<128x64xf32>
    %cst_75 = arith.constant dense<0.000000e+00> : vector<64x64xf32>
    %64 = tpu.matmul %61, %63, %cst_75 {dimension_numbers = #tpu.dot_dimension_numbers<[1], [0], [0], [1], [0, 0, 1, 1], [], []>} : vector<64x128xf32>, vector<128x64xf32>, vector<64x64xf32> -> vector<64x64xf32>
    %65 = arith.addf %59, %64 : vector<64x64xf32>
    %c2_76 = arith.constant 2 : index
    %c1_77 = arith.constant 1 : index
    %c0_78 = arith.constant 0 : index
    %66 = vector.load %arg9[%c2_76, %c1_77, %c0_78] : memref<10x10x128xf32, #tpu.memory_space<vmem>>, vector<8x8x128xf32>
    %67 = vector.shape_cast %66 : vector<8x8x128xf32> to vector<64x128xf32>
    %c2_79 = arith.constant 2 : index
    %c1_80 = arith.constant 1 : index
    %c0_81 = arith.constant 0 : index
    %c0_82 = arith.constant 0 : index
    %68 = vector.load %arg2[%c2_79, %c1_80, %c0_81, %c0_82] : memref<3x3x128x64xf32, #tpu.memory_space<vmem>>, vector<1x1x128x64xf32>
    %69 = vector.shape_cast %68 : vector<1x1x128x64xf32> to vector<128x64xf32>
    %cst_83 = arith.constant dense<0.000000e+00> : vector<64x64xf32>
    %70 = tpu.matmul %67, %69, %cst_83 {dimension_numbers = #tpu.dot_dimension_numbers<[1], [0], [0], [1], [0, 0, 1, 1], [], []>} : vector<64x128xf32>, vector<128x64xf32>, vector<64x64xf32> -> vector<64x64xf32>
    %71 = arith.addf %65, %70 : vector<64x64xf32>
    %c2_84 = arith.constant 2 : index
    %c2_85 = arith.constant 2 : index
    %c0_86 = arith.constant 0 : index
    %72 = vector.load %arg9[%c2_84, %c2_85, %c0_86] : memref<10x10x128xf32, #tpu.memory_space<vmem>>, vector<8x8x128xf32>
    %73 = vector.shape_cast %72 : vector<8x8x128xf32> to vector<64x128xf32>
    %c2_87 = arith.constant 2 : index
    %c2_88 = arith.constant 2 : index
    %c0_89 = arith.constant 0 : index
    %c0_90 = arith.constant 0 : index
    %74 = vector.load %arg2[%c2_87, %c2_88, %c0_89, %c0_90] : memref<3x3x128x64xf32, #tpu.memory_space<vmem>>, vector<1x1x128x64xf32>
    %75 = vector.shape_cast %74 : vector<1x1x128x64xf32> to vector<128x64xf32>
    %cst_91 = arith.constant dense<0.000000e+00> : vector<64x64xf32>
    %76 = tpu.matmul %73, %75, %cst_91 {dimension_numbers = #tpu.dot_dimension_numbers<[1], [0], [0], [1], [0, 0, 1, 1], [], []>} : vector<64x128xf32>, vector<128x64xf32>, vector<64x64xf32> -> vector<64x64xf32>
    %77 = arith.addf %71, %76 : vector<64x64xf32>
    %c0_92 = arith.constant 0 : index
    %c0_93 = arith.constant 0 : index
    %78 = vector.load %arg3[%c0_92, %c0_93] : memref<1x64xf32, #tpu.memory_space<vmem>>, vector<1x64xf32>
    %79 = vector.broadcast %78 : vector<1x64xf32> to vector<64x64xf32>
    %80 = arith.addf %77, %79 : vector<64x64xf32>
    %cst_94 = arith.constant 0.000000e+00 : f32
    %81 = vector.broadcast %cst_94 : f32 to vector<64x64xf32>
    %82 = arith.maximumf %80, %81 : vector<64x64xf32>
    %83 = vector.extract_strided_slice %82 {offsets = [0, 0], sizes = [8, 64], strides = [1, 1]} : vector<64x64xf32> to vector<8x64xf32>
    %c0_95 = arith.constant 0 : index
    %c0_96 = arith.constant 0 : index
    %c0_97 = arith.constant 0 : index
    %84 = vector.load %arg10[%c0_95, %c0_96, %c0_97] : memref<18x8x64xf32, #tpu.memory_space<vmem>>, vector<1x8x64xf32>
    %85 = vector.shape_cast %84 : vector<1x8x64xf32> to vector<8x64xf32>
    %86 = vector.shape_cast %83 : vector<8x64xf32> to vector<1x8x64xf32>
    tpu.vector_store %arg10[%c0_95, %c0_96, %c0_97], %86 {strides = array<i32>} : memref<18x8x64xf32, #tpu.memory_space<vmem>>, vector<1x8x64xf32>,
    %87 = vector.extract_strided_slice %82 {offsets = [0, 0], sizes = [8, 64], strides = [1, 1]} : vector<64x64xf32> to vector<8x64xf32>
    %c1_98 = arith.constant 1 : index
    %c0_99 = arith.constant 0 : index
    %c0_100 = arith.constant 0 : index
    %88 = vector.load %arg10[%c1_98, %c0_99, %c0_100] : memref<18x8x64xf32, #tpu.memory_space<vmem>>, vector<1x8x64xf32>
    %89 = vector.shape_cast %88 : vector<1x8x64xf32> to vector<8x64xf32>
    %90 = vector.shape_cast %87 : vector<8x64xf32> to vector<1x8x64xf32>
    tpu.vector_store %arg10[%c1_98, %c0_99, %c0_100], %90 {strides = array<i32>} : memref<18x8x64xf32, #tpu.memory_space<vmem>>, vector<1x8x64xf32>,
    %c2_101 = arith.constant 2 : index
    %c0_102 = arith.constant 0 : index
    %c0_103 = arith.constant 0 : index
    %91 = vector.load %arg10[%c2_101, %c0_102, %c0_103] : memref<18x8x64xf32, #tpu.memory_space<vmem>>, vector<1x8x64xf32>
    %92 = vector.shape_cast %91 : vector<1x8x64xf32> to vector<8x64xf32>
    %93 = vector.shape_cast %87 : vector<8x64xf32> to vector<1x8x64xf32>
    tpu.vector_store %arg10[%c2_101, %c0_102, %c0_103], %93 {strides = array<i32>} : memref<18x8x64xf32, #tpu.memory_space<vmem>>, vector<1x8x64xf32>,
    %94 = vector.extract_strided_slice %82 {offsets = [8, 0], sizes = [8, 64], strides = [1, 1]} : vector<64x64xf32> to vector<8x64xf32>
    %c3 = arith.constant 3 : index
    %c0_104 = arith.constant 0 : index
    %c0_105 = arith.constant 0 : index
    %95 = vector.load %arg10[%c3, %c0_104, %c0_105] : memref<18x8x64xf32, #tpu.memory_space<vmem>>, vector<1x8x64xf32>
    %96 = vector.shape_cast %95 : vector<1x8x64xf32> to vector<8x64xf32>
    %97 = vector.shape_cast %94 : vector<8x64xf32> to vector<1x8x64xf32>
    tpu.vector_store %arg10[%c3, %c0_104, %c0_105], %97 {strides = array<i32>} : memref<18x8x64xf32, #tpu.memory_space<vmem>>, vector<1x8x64xf32>,
    %c4 = arith.constant 4 : index
    %c0_106 = arith.constant 0 : index
    %c0_107 = arith.constant 0 : index
    %98 = vector.load %arg10[%c4, %c0_106, %c0_107] : memref<18x8x64xf32, #tpu.memory_space<vmem>>, vector<1x8x64xf32>
    %99 = vector.shape_cast %98 : vector<1x8x64xf32> to vector<8x64xf32>
    %100 = vector.shape_cast %94 : vector<8x64xf32> to vector<1x8x64xf32>
    tpu.vector_store %arg10[%c4, %c0_106, %c0_107], %100 {strides = array<i32>} : memref<18x8x64xf32, #tpu.memory_space<vmem>>, vector<1x8x64xf32>,
    %101 = vector.extract_strided_slice %82 {offsets = [16, 0], sizes = [8, 64], strides = [1, 1]} : vector<64x64xf32> to vector<8x64xf32>
    %c5 = arith.constant 5 : index
    %c0_108 = arith.constant 0 : index
    %c0_109 = arith.constant 0 : index
    %102 = vector.load %arg10[%c5, %c0_108, %c0_109] : memref<18x8x64xf32, #tpu.memory_space<vmem>>, vector<1x8x64xf32>
    %103 = vector.shape_cast %102 : vector<1x8x64xf32> to vector<8x64xf32>
    %104 = vector.shape_cast %101 : vector<8x64xf32> to vector<1x8x64xf32>
    tpu.vector_store %arg10[%c5, %c0_108, %c0_109], %104 {strides = array<i32>} : memref<18x8x64xf32, #tpu.memory_space<vmem>>, vector<1x8x64xf32>,
    %c6 = arith.constant 6 : index
    %c0_110 = arith.constant 0 : index
    %c0_111 = arith.constant 0 : index
    %105 = vector.load %arg10[%c6, %c0_110, %c0_111] : memref<18x8x64xf32, #tpu.memory_space<vmem>>, vector<1x8x64xf32>
    %106 = vector.shape_cast %105 : vector<1x8x64xf32> to vector<8x64xf32>
    %107 = vector.shape_cast %101 : vector<8x64xf32> to vector<1x8x64xf32>
    tpu.vector_store %arg10[%c6, %c0_110, %c0_111], %107 {strides = array<i32>} : memref<18x8x64xf32, #tpu.memory_space<vmem>>, vector<1x8x64xf32>,
    %108 = vector.extract_strided_slice %82 {offsets = [24, 0], sizes = [8, 64], strides = [1, 1]} : vector<64x64xf32> to vector<8x64xf32>
    %c7_112 = arith.constant 7 : index
    %c0_113 = arith.constant 0 : index
    %c0_114 = arith.constant 0 : index
    %109 = vector.load %arg10[%c7_112, %c0_113, %c0_114] : memref<18x8x64xf32, #tpu.memory_space<vmem>>, vector<1x8x64xf32>
    %110 = vector.shape_cast %109 : vector<1x8x64xf32> to vector<8x64xf32>
    %111 = vector.shape_cast %108 : vector<8x64xf32> to vector<1x8x64xf32>
    tpu.vector_store %arg10[%c7_112, %c0_113, %c0_114], %111 {strides = array<i32>} : memref<18x8x64xf32, #tpu.memory_space<vmem>>, vector<1x8x64xf32>,
    %c8 = arith.constant 8 : index
    %c0_115 = arith.constant 0 : index
    %c0_116 = arith.constant 0 : index
    %112 = vector.load %arg10[%c8, %c0_115, %c0_116] : memref<18x8x64xf32, #tpu.memory_space<vmem>>, vector<1x8x64xf32>
    %113 = vector.shape_cast %112 : vector<1x8x64xf32> to vector<8x64xf32>
    %114 = vector.shape_cast %108 : vector<8x64xf32> to vector<1x8x64xf32>
    tpu.vector_store %arg10[%c8, %c0_115, %c0_116], %114 {strides = array<i32>} : memref<18x8x64xf32, #tpu.memory_space<vmem>>, vector<1x8x64xf32>,
    %115 = vector.extract_strided_slice %82 {offsets = [32, 0], sizes = [8, 64], strides = [1, 1]} : vector<64x64xf32> to vector<8x64xf32>
    %c9_117 = arith.constant 9 : index
    %c0_118 = arith.constant 0 : index
    %c0_119 = arith.constant 0 : index
    %116 = vector.load %arg10[%c9_117, %c0_118, %c0_119] : memref<18x8x64xf32, #tpu.memory_space<vmem>>, vector<1x8x64xf32>
    %117 = vector.shape_cast %116 : vector<1x8x64xf32> to vector<8x64xf32>
    %118 = vector.shape_cast %115 : vector<8x64xf32> to vector<1x8x64xf32>
    tpu.vector_store %arg10[%c9_117, %c0_118, %c0_119], %118 {strides = array<i32>} : memref<18x8x64xf32, #tpu.memory_space<vmem>>, vector<1x8x64xf32>,
    %c10 = arith.constant 10 : index
    %c0_120 = arith.constant 0 : index
    %c0_121 = arith.constant 0 : index
    %119 = vector.load %arg10[%c10, %c0_120, %c0_121] : memref<18x8x64xf32, #tpu.memory_space<vmem>>, vector<1x8x64xf32>
    %120 = vector.shape_cast %119 : vector<1x8x64xf32> to vector<8x64xf32>
    %121 = vector.shape_cast %115 : vector<8x64xf32> to vector<1x8x64xf32>
    tpu.vector_store %arg10[%c10, %c0_120, %c0_121], %121 {strides = array<i32>} : memref<18x8x64xf32, #tpu.memory_space<vmem>>, vector<1x8x64xf32>,
    %122 = vector.extract_strided_slice %82 {offsets = [40, 0], sizes = [8, 64], strides = [1, 1]} : vector<64x64xf32> to vector<8x64xf32>
    %c11 = arith.constant 11 : index
    %c0_122 = arith.constant 0 : index
    %c0_123 = arith.constant 0 : index
    %123 = vector.load %arg10[%c11, %c0_122, %c0_123] : memref<18x8x64xf32, #tpu.memory_space<vmem>>, vector<1x8x64xf32>
    %124 = vector.shape_cast %123 : vector<1x8x64xf32> to vector<8x64xf32>
    %125 = vector.shape_cast %122 : vector<8x64xf32> to vector<1x8x64xf32>
    tpu.vector_store %arg10[%c11, %c0_122, %c0_123], %125 {strides = array<i32>} : memref<18x8x64xf32, #tpu.memory_space<vmem>>, vector<1x8x64xf32>,
    %c12 = arith.constant 12 : index
    %c0_124 = arith.constant 0 : index
    %c0_125 = arith.constant 0 : index
    %126 = vector.load %arg10[%c12, %c0_124, %c0_125] : memref<18x8x64xf32, #tpu.memory_space<vmem>>, vector<1x8x64xf32>
    %127 = vector.shape_cast %126 : vector<1x8x64xf32> to vector<8x64xf32>
    %128 = vector.shape_cast %122 : vector<8x64xf32> to vector<1x8x64xf32>
    tpu.vector_store %arg10[%c12, %c0_124, %c0_125], %128 {strides = array<i32>} : memref<18x8x64xf32, #tpu.memory_space<vmem>>, vector<1x8x64xf32>,
    %129 = vector.extract_strided_slice %82 {offsets = [48, 0], sizes = [8, 64], strides = [1, 1]} : vector<64x64xf32> to vector<8x64xf32>
    %c13 = arith.constant 13 : index
    %c0_126 = arith.constant 0 : index
    %c0_127 = arith.constant 0 : index
    %130 = vector.load %arg10[%c13, %c0_126, %c0_127] : memref<18x8x64xf32, #tpu.memory_space<vmem>>, vector<1x8x64xf32>
    %131 = vector.shape_cast %130 : vector<1x8x64xf32> to vector<8x64xf32>
    %132 = vector.shape_cast %129 : vector<8x64xf32> to vector<1x8x64xf32>
    tpu.vector_store %arg10[%c13, %c0_126, %c0_127], %132 {strides = array<i32>} : memref<18x8x64xf32, #tpu.memory_space<vmem>>, vector<1x8x64xf32>,
    %c14 = arith.constant 14 : index
    %c0_128 = arith.constant 0 : index
    %c0_129 = arith.constant 0 : index
    %133 = vector.load %arg10[%c14, %c0_128, %c0_129] : memref<18x8x64xf32, #tpu.memory_space<vmem>>, vector<1x8x64xf32>
    %134 = vector.shape_cast %133 : vector<1x8x64xf32> to vector<8x64xf32>
    %135 = vector.shape_cast %129 : vector<8x64xf32> to vector<1x8x64xf32>
    tpu.vector_store %arg10[%c14, %c0_128, %c0_129], %135 {strides = array<i32>} : memref<18x8x64xf32, #tpu.memory_space<vmem>>, vector<1x8x64xf32>,
    %136 = vector.extract_strided_slice %82 {offsets = [56, 0], sizes = [8, 64], strides = [1, 1]} : vector<64x64xf32> to vector<8x64xf32>
    %c15 = arith.constant 15 : index
    %c0_130 = arith.constant 0 : index
    %c0_131 = arith.constant 0 : index
    %137 = vector.load %arg10[%c15, %c0_130, %c0_131] : memref<18x8x64xf32, #tpu.memory_space<vmem>>, vector<1x8x64xf32>
    %138 = vector.shape_cast %137 : vector<1x8x64xf32> to vector<8x64xf32>
    %139 = vector.shape_cast %136 : vector<8x64xf32> to vector<1x8x64xf32>
    tpu.vector_store %arg10[%c15, %c0_130, %c0_131], %139 {strides = array<i32>} : memref<18x8x64xf32, #tpu.memory_space<vmem>>, vector<1x8x64xf32>,
    %c16 = arith.constant 16 : index
    %c0_132 = arith.constant 0 : index
    %c0_133 = arith.constant 0 : index
    %140 = vector.load %arg10[%c16, %c0_132, %c0_133] : memref<18x8x64xf32, #tpu.memory_space<vmem>>, vector<1x8x64xf32>
    %141 = vector.shape_cast %140 : vector<1x8x64xf32> to vector<8x64xf32>
    %142 = vector.shape_cast %136 : vector<8x64xf32> to vector<1x8x64xf32>
    tpu.vector_store %arg10[%c16, %c0_132, %c0_133], %142 {strides = array<i32>} : memref<18x8x64xf32, #tpu.memory_space<vmem>>, vector<1x8x64xf32>,
    %143 = vector.extract_strided_slice %82 {offsets = [56, 0], sizes = [8, 64], strides = [1, 1]} : vector<64x64xf32> to vector<8x64xf32>
    %c17 = arith.constant 17 : index
    %c0_134 = arith.constant 0 : index
    %c0_135 = arith.constant 0 : index
    %144 = vector.load %arg10[%c17, %c0_134, %c0_135] : memref<18x8x64xf32, #tpu.memory_space<vmem>>, vector<1x8x64xf32>
    %145 = vector.shape_cast %144 : vector<1x8x64xf32> to vector<8x64xf32>
    %146 = vector.shape_cast %143 : vector<8x64xf32> to vector<1x8x64xf32>
    tpu.vector_store %arg10[%c17, %c0_134, %c0_135], %146 {strides = array<i32>} : memref<18x8x64xf32, #tpu.memory_space<vmem>>, vector<1x8x64xf32>,
    %c0_136 = arith.constant 0 : index
    %c0_137 = arith.constant 0 : index
    %c0_138 = arith.constant 0 : index
    %147 = vector.load %arg10[%c0_136, %c0_137, %c0_138] : memref<18x8x64xf32, #tpu.memory_space<vmem>>, vector<18x1x64xf32>
    %148 = vector.shape_cast %147 : vector<18x1x64xf32> to vector<18x64xf32>
    %c0_139 = arith.constant 0 : index
    %c1_140 = arith.constant 1 : index
    %c0_141 = arith.constant 0 : index
    %149 = vector.load %arg11[%c0_139, %c1_140, %c0_141] : memref<18x18x64xf32, #tpu.memory_space<vmem>>, vector<18x1x64xf32>
    %150 = vector.shape_cast %149 : vector<18x1x64xf32> to vector<18x64xf32>
    %151 = vector.shape_cast %148 : vector<18x64xf32> to vector<18x1x64xf32>
    tpu.vector_store %arg11[%c0_139, %c1_140, %c0_141], %151 {strides = array<i32>} : memref<18x18x64xf32, #tpu.memory_space<vmem>>, vector<18x1x64xf32>,
    %c0_142 = arith.constant 0 : index
    %c2_143 = arith.constant 2 : index
    %c0_144 = arith.constant 0 : index
    %152 = vector.load %arg11[%c0_142, %c2_143, %c0_144] : memref<18x18x64xf32, #tpu.memory_space<vmem>>, vector<18x1x64xf32>
    %153 = vector.shape_cast %152 : vector<18x1x64xf32> to vector<18x64xf32>
    %154 = vector.shape_cast %148 : vector<18x64xf32> to vector<18x1x64xf32>
    tpu.vector_store %arg11[%c0_142, %c2_143, %c0_144], %154 {strides = array<i32>} : memref<18x18x64xf32, #tpu.memory_space<vmem>>, vector<18x1x64xf32>,
    %c0_145 = arith.constant 0 : index
    %c1_146 = arith.constant 1 : index
    %c0_147 = arith.constant 0 : index
    %155 = vector.load %arg10[%c0_145, %c1_146, %c0_147] : memref<18x8x64xf32, #tpu.memory_space<vmem>>, vector<18x1x64xf32>
    %156 = vector.shape_cast %155 : vector<18x1x64xf32> to vector<18x64xf32>
    %c0_148 = arith.constant 0 : index
    %c3_149 = arith.constant 3 : index
    %c0_150 = arith.constant 0 : index
    %157 = vector.load %arg11[%c0_148, %c3_149, %c0_150] : memref<18x18x64xf32, #tpu.memory_space<vmem>>, vector<18x1x64xf32>
    %158 = vector.shape_cast %157 : vector<18x1x64xf32> to vector<18x64xf32>
    %159 = vector.shape_cast %156 : vector<18x64xf32> to vector<18x1x64xf32>
    tpu.vector_store %arg11[%c0_148, %c3_149, %c0_150], %159 {strides = array<i32>} : memref<18x18x64xf32, #tpu.memory_space<vmem>>, vector<18x1x64xf32>,
    %c0_151 = arith.constant 0 : index
    %c4_152 = arith.constant 4 : index
    %c0_153 = arith.constant 0 : index
    %160 = vector.load %arg11[%c0_151, %c4_152, %c0_153] : memref<18x18x64xf32, #tpu.memory_space<vmem>>, vector<18x1x64xf32>
    %161 = vector.shape_cast %160 : vector<18x1x64xf32> to vector<18x64xf32>
    %162 = vector.shape_cast %156 : vector<18x64xf32> to vector<18x1x64xf32>
    tpu.vector_store %arg11[%c0_151, %c4_152, %c0_153], %162 {strides = array<i32>} : memref<18x18x64xf32, #tpu.memory_space<vmem>>, vector<18x1x64xf32>,
    %c0_154 = arith.constant 0 : index
    %c2_155 = arith.constant 2 : index
    %c0_156 = arith.constant 0 : index
    %163 = vector.load %arg10[%c0_154, %c2_155, %c0_156] : memref<18x8x64xf32, #tpu.memory_space<vmem>>, vector<18x1x64xf32>
    %164 = vector.shape_cast %163 : vector<18x1x64xf32> to vector<18x64xf32>
    %c0_157 = arith.constant 0 : index
    %c5_158 = arith.constant 5 : index
    %c0_159 = arith.constant 0 : index
    %165 = vector.load %arg11[%c0_157, %c5_158, %c0_159] : memref<18x18x64xf32, #tpu.memory_space<vmem>>, vector<18x1x64xf32>
    %166 = vector.shape_cast %165 : vector<18x1x64xf32> to vector<18x64xf32>
    %167 = vector.shape_cast %164 : vector<18x64xf32> to vector<18x1x64xf32>
    tpu.vector_store %arg11[%c0_157, %c5_158, %c0_159], %167 {strides = array<i32>} : memref<18x18x64xf32, #tpu.memory_space<vmem>>, vector<18x1x64xf32>,
    %c0_160 = arith.constant 0 : index
    %c6_161 = arith.constant 6 : index
    %c0_162 = arith.constant 0 : index
    %168 = vector.load %arg11[%c0_160, %c6_161, %c0_162] : memref<18x18x64xf32, #tpu.memory_space<vmem>>, vector<18x1x64xf32>
    %169 = vector.shape_cast %168 : vector<18x1x64xf32> to vector<18x64xf32>
    %170 = vector.shape_cast %164 : vector<18x64xf32> to vector<18x1x64xf32>
    tpu.vector_store %arg11[%c0_160, %c6_161, %c0_162], %170 {strides = array<i32>} : memref<18x18x64xf32, #tpu.memory_space<vmem>>, vector<18x1x64xf32>,
    %c0_163 = arith.constant 0 : index
    %c3_164 = arith.constant 3 : index
    %c0_165 = arith.constant 0 : index
    %171 = vector.load %arg10[%c0_163, %c3_164, %c0_165] : memref<18x8x64xf32, #tpu.memory_space<vmem>>, vector<18x1x64xf32>
    %172 = vector.shape_cast %171 : vector<18x1x64xf32> to vector<18x64xf32>
    %c0_166 = arith.constant 0 : index
    %c7_167 = arith.constant 7 : index
    %c0_168 = arith.constant 0 : index
    %173 = vector.load %arg11[%c0_166, %c7_167, %c0_168] : memref<18x18x64xf32, #tpu.memory_space<vmem>>, vector<18x1x64xf32>
    %174 = vector.shape_cast %173 : vector<18x1x64xf32> to vector<18x64xf32>
    %175 = vector.shape_cast %172 : vector<18x64xf32> to vector<18x1x64xf32>
    tpu.vector_store %arg11[%c0_166, %c7_167, %c0_168], %175 {strides = array<i32>} : memref<18x18x64xf32, #tpu.memory_space<vmem>>, vector<18x1x64xf32>,
    %c0_169 = arith.constant 0 : index
    %c8_170 = arith.constant 8 : index
    %c0_171 = arith.constant 0 : index
    %176 = vector.load %arg11[%c0_169, %c8_170, %c0_171] : memref<18x18x64xf32, #tpu.memory_space<vmem>>, vector<18x1x64xf32>
    %177 = vector.shape_cast %176 : vector<18x1x64xf32> to vector<18x64xf32>
    %178 = vector.shape_cast %172 : vector<18x64xf32> to vector<18x1x64xf32>
    tpu.vector_store %arg11[%c0_169, %c8_170, %c0_171], %178 {strides = array<i32>} : memref<18x18x64xf32, #tpu.memory_space<vmem>>, vector<18x1x64xf32>,
    %c0_172 = arith.constant 0 : index
    %c4_173 = arith.constant 4 : index
    %c0_174 = arith.constant 0 : index
    %179 = vector.load %arg10[%c0_172, %c4_173, %c0_174] : memref<18x8x64xf32, #tpu.memory_space<vmem>>, vector<18x1x64xf32>
    %180 = vector.shape_cast %179 : vector<18x1x64xf32> to vector<18x64xf32>
    %c0_175 = arith.constant 0 : index
    %c9_176 = arith.constant 9 : index
    %c0_177 = arith.constant 0 : index
    %181 = vector.load %arg11[%c0_175, %c9_176, %c0_177] : memref<18x18x64xf32, #tpu.memory_space<vmem>>, vector<18x1x64xf32>
    %182 = vector.shape_cast %181 : vector<18x1x64xf32> to vector<18x64xf32>
    %183 = vector.shape_cast %180 : vector<18x64xf32> to vector<18x1x64xf32>
    tpu.vector_store %arg11[%c0_175, %c9_176, %c0_177], %183 {strides = array<i32>} : memref<18x18x64xf32, #tpu.memory_space<vmem>>, vector<18x1x64xf32>,
    %c0_178 = arith.constant 0 : index
    %c10_179 = arith.constant 10 : index
    %c0_180 = arith.constant 0 : index
    %184 = vector.load %arg11[%c0_178, %c10_179, %c0_180] : memref<18x18x64xf32, #tpu.memory_space<vmem>>, vector<18x1x64xf32>
    %185 = vector.shape_cast %184 : vector<18x1x64xf32> to vector<18x64xf32>
    %186 = vector.shape_cast %180 : vector<18x64xf32> to vector<18x1x64xf32>
    tpu.vector_store %arg11[%c0_178, %c10_179, %c0_180], %186 {strides = array<i32>} : memref<18x18x64xf32, #tpu.memory_space<vmem>>, vector<18x1x64xf32>,
    %c0_181 = arith.constant 0 : index
    %c5_182 = arith.constant 5 : index
    %c0_183 = arith.constant 0 : index
    %187 = vector.load %arg10[%c0_181, %c5_182, %c0_183] : memref<18x8x64xf32, #tpu.memory_space<vmem>>, vector<18x1x64xf32>
    %188 = vector.shape_cast %187 : vector<18x1x64xf32> to vector<18x64xf32>
    %c0_184 = arith.constant 0 : index
    %c11_185 = arith.constant 11 : index
    %c0_186 = arith.constant 0 : index
    %189 = vector.load %arg11[%c0_184, %c11_185, %c0_186] : memref<18x18x64xf32, #tpu.memory_space<vmem>>, vector<18x1x64xf32>
    %190 = vector.shape_cast %189 : vector<18x1x64xf32> to vector<18x64xf32>
    %191 = vector.shape_cast %188 : vector<18x64xf32> to vector<18x1x64xf32>
    tpu.vector_store %arg11[%c0_184, %c11_185, %c0_186], %191 {strides = array<i32>} : memref<18x18x64xf32, #tpu.memory_space<vmem>>, vector<18x1x64xf32>,
    %c0_187 = arith.constant 0 : index
    %c12_188 = arith.constant 12 : index
    %c0_189 = arith.constant 0 : index
    %192 = vector.load %arg11[%c0_187, %c12_188, %c0_189] : memref<18x18x64xf32, #tpu.memory_space<vmem>>, vector<18x1x64xf32>
    %193 = vector.shape_cast %192 : vector<18x1x64xf32> to vector<18x64xf32>
    %194 = vector.shape_cast %188 : vector<18x64xf32> to vector<18x1x64xf32>
    tpu.vector_store %arg11[%c0_187, %c12_188, %c0_189], %194 {strides = array<i32>} : memref<18x18x64xf32, #tpu.memory_space<vmem>>, vector<18x1x64xf32>,
    %c0_190 = arith.constant 0 : index
    %c6_191 = arith.constant 6 : index
    %c0_192 = arith.constant 0 : index
    %195 = vector.load %arg10[%c0_190, %c6_191, %c0_192] : memref<18x8x64xf32, #tpu.memory_space<vmem>>, vector<18x1x64xf32>
    %196 = vector.shape_cast %195 : vector<18x1x64xf32> to vector<18x64xf32>
    %c0_193 = arith.constant 0 : index
    %c13_194 = arith.constant 13 : index
    %c0_195 = arith.constant 0 : index
    %197 = vector.load %arg11[%c0_193, %c13_194, %c0_195] : memref<18x18x64xf32, #tpu.memory_space<vmem>>, vector<18x1x64xf32>
    %198 = vector.shape_cast %197 : vector<18x1x64xf32> to vector<18x64xf32>
    %199 = vector.shape_cast %196 : vector<18x64xf32> to vector<18x1x64xf32>
    tpu.vector_store %arg11[%c0_193, %c13_194, %c0_195], %199 {strides = array<i32>} : memref<18x18x64xf32, #tpu.memory_space<vmem>>, vector<18x1x64xf32>,
    %c0_196 = arith.constant 0 : index
    %c14_197 = arith.constant 14 : index
    %c0_198 = arith.constant 0 : index
    %200 = vector.load %arg11[%c0_196, %c14_197, %c0_198] : memref<18x18x64xf32, #tpu.memory_space<vmem>>, vector<18x1x64xf32>
    %201 = vector.shape_cast %200 : vector<18x1x64xf32> to vector<18x64xf32>
    %202 = vector.shape_cast %196 : vector<18x64xf32> to vector<18x1x64xf32>
    tpu.vector_store %arg11[%c0_196, %c14_197, %c0_198], %202 {strides = array<i32>} : memref<18x18x64xf32, #tpu.memory_space<vmem>>, vector<18x1x64xf32>,
    %c0_199 = arith.constant 0 : index
    %c7_200 = arith.constant 7 : index
    %c0_201 = arith.constant 0 : index
    %203 = vector.load %arg10[%c0_199, %c7_200, %c0_201] : memref<18x8x64xf32, #tpu.memory_space<vmem>>, vector<18x1x64xf32>
    %204 = vector.shape_cast %203 : vector<18x1x64xf32> to vector<18x64xf32>
    %c0_202 = arith.constant 0 : index
    %c15_203 = arith.constant 15 : index
    %c0_204 = arith.constant 0 : index
    %205 = vector.load %arg11[%c0_202, %c15_203, %c0_204] : memref<18x18x64xf32, #tpu.memory_space<vmem>>, vector<18x1x64xf32>
    %206 = vector.shape_cast %205 : vector<18x1x64xf32> to vector<18x64xf32>
    %207 = vector.shape_cast %204 : vector<18x64xf32> to vector<18x1x64xf32>
    tpu.vector_store %arg11[%c0_202, %c15_203, %c0_204], %207 {strides = array<i32>} : memref<18x18x64xf32, #tpu.memory_space<vmem>>, vector<18x1x64xf32>,
    %c0_205 = arith.constant 0 : index
    %c16_206 = arith.constant 16 : index
    %c0_207 = arith.constant 0 : index
    %208 = vector.load %arg11[%c0_205, %c16_206, %c0_207] : memref<18x18x64xf32, #tpu.memory_space<vmem>>, vector<18x1x64xf32>
    %209 = vector.shape_cast %208 : vector<18x1x64xf32> to vector<18x64xf32>
    %210 = vector.shape_cast %204 : vector<18x64xf32> to vector<18x1x64xf32>
    tpu.vector_store %arg11[%c0_205, %c16_206, %c0_207], %210 {strides = array<i32>} : memref<18x18x64xf32, #tpu.memory_space<vmem>>, vector<18x1x64xf32>,
    %c0_208 = arith.constant 0 : index
    %c0_209 = arith.constant 0 : index
    %c0_210 = arith.constant 0 : index
    %211 = vector.load %arg10[%c0_208, %c0_209, %c0_210] : memref<18x8x64xf32, #tpu.memory_space<vmem>>, vector<18x1x64xf32>
    %212 = vector.shape_cast %211 : vector<18x1x64xf32> to vector<18x64xf32>
    %c0_211 = arith.constant 0 : index
    %c0_212 = arith.constant 0 : index
    %c0_213 = arith.constant 0 : index
    %213 = vector.load %arg11[%c0_211, %c0_212, %c0_213] : memref<18x18x64xf32, #tpu.memory_space<vmem>>, vector<18x1x64xf32>
    %214 = vector.shape_cast %213 : vector<18x1x64xf32> to vector<18x64xf32>
    %215 = vector.shape_cast %212 : vector<18x64xf32> to vector<18x1x64xf32>
    tpu.vector_store %arg11[%c0_211, %c0_212, %c0_213], %215 {strides = array<i32>} : memref<18x18x64xf32, #tpu.memory_space<vmem>>, vector<18x1x64xf32>,
    %c0_214 = arith.constant 0 : index
    %c7_215 = arith.constant 7 : index
    %c0_216 = arith.constant 0 : index
    %216 = vector.load %arg10[%c0_214, %c7_215, %c0_216] : memref<18x8x64xf32, #tpu.memory_space<vmem>>, vector<18x1x64xf32>
    %217 = vector.shape_cast %216 : vector<18x1x64xf32> to vector<18x64xf32>
    %c0_217 = arith.constant 0 : index
    %c17_218 = arith.constant 17 : index
    %c0_219 = arith.constant 0 : index
    %218 = vector.load %arg11[%c0_217, %c17_218, %c0_219] : memref<18x18x64xf32, #tpu.memory_space<vmem>>, vector<18x1x64xf32>
    %219 = vector.shape_cast %218 : vector<18x1x64xf32> to vector<18x64xf32>
    %220 = vector.shape_cast %217 : vector<18x64xf32> to vector<18x1x64xf32>
    tpu.vector_store %arg11[%c0_217, %c17_218, %c0_219], %220 {strides = array<i32>} : memref<18x18x64xf32, #tpu.memory_space<vmem>>, vector<18x1x64xf32>,
    %cst_220 = arith.constant 0.000000e+00 : f32
    %221 = vector.broadcast %cst_220 : f32 to vector<256x64xf32>
    %c0_221 = arith.constant 0 : index
    %c0_222 = arith.constant 0 : index
    %c0_223 = arith.constant 0 : index
    %222 = vector.load %arg11[%c0_221, %c0_222, %c0_223] : memref<18x18x64xf32, #tpu.memory_space<vmem>>, vector<16x16x64xf32>
    %223 = vector.shape_cast %222 : vector<16x16x64xf32> to vector<256x64xf32>
    %c0_224 = arith.constant 0 : index
    %c0_225 = arith.constant 0 : index
    %c0_226 = arith.constant 0 : index
    %c0_227 = arith.constant 0 : index
    %224 = vector.load %arg4[%c0_224, %c0_225, %c0_226, %c0_227] : memref<3x3x64x64xf32, #tpu.memory_space<vmem>>, vector<1x1x64x64xf32>
    %225 = vector.shape_cast %224 : vector<1x1x64x64xf32> to vector<64x64xf32>
    %cst_228 = arith.constant dense<0.000000e+00> : vector<256x64xf32>
    %226 = tpu.matmul %223, %225, %cst_228 {dimension_numbers = #tpu.dot_dimension_numbers<[1], [0], [0], [1], [0, 0, 1, 1], [], []>} : vector<256x64xf32>, vector<64x64xf32>, vector<256x64xf32> -> vector<256x64xf32>
    %227 = arith.addf %221, %226 : vector<256x64xf32>
    %c0_229 = arith.constant 0 : index
    %c1_230 = arith.constant 1 : index
    %c0_231 = arith.constant 0 : index
    %228 = vector.load %arg11[%c0_229, %c1_230, %c0_231] : memref<18x18x64xf32, #tpu.memory_space<vmem>>, vector<16x16x64xf32>
    %229 = vector.shape_cast %228 : vector<16x16x64xf32> to vector<256x64xf32>
    %c0_232 = arith.constant 0 : index
    %c1_233 = arith.constant 1 : index
    %c0_234 = arith.constant 0 : index
    %c0_235 = arith.constant 0 : index
    %230 = vector.load %arg4[%c0_232, %c1_233, %c0_234, %c0_235] : memref<3x3x64x64xf32, #tpu.memory_space<vmem>>, vector<1x1x64x64xf32>
    %231 = vector.shape_cast %230 : vector<1x1x64x64xf32> to vector<64x64xf32>
    %cst_236 = arith.constant dense<0.000000e+00> : vector<256x64xf32>
    %232 = tpu.matmul %229, %231, %cst_236 {dimension_numbers = #tpu.dot_dimension_numbers<[1], [0], [0], [1], [0, 0, 1, 1], [], []>} : vector<256x64xf32>, vector<64x64xf32>, vector<256x64xf32> -> vector<256x64xf32>
    %233 = arith.addf %227, %232 : vector<256x64xf32>
    %c0_237 = arith.constant 0 : index
    %c2_238 = arith.constant 2 : index
    %c0_239 = arith.constant 0 : index
    %234 = vector.load %arg11[%c0_237, %c2_238, %c0_239] : memref<18x18x64xf32, #tpu.memory_space<vmem>>, vector<16x16x64xf32>
    %235 = vector.shape_cast %234 : vector<16x16x64xf32> to vector<256x64xf32>
    %c0_240 = arith.constant 0 : index
    %c2_241 = arith.constant 2 : index
    %c0_242 = arith.constant 0 : index
    %c0_243 = arith.constant 0 : index
    %236 = vector.load %arg4[%c0_240, %c2_241, %c0_242, %c0_243] : memref<3x3x64x64xf32, #tpu.memory_space<vmem>>, vector<1x1x64x64xf32>
    %237 = vector.shape_cast %236 : vector<1x1x64x64xf32> to vector<64x64xf32>
    %cst_244 = arith.constant dense<0.000000e+00> : vector<256x64xf32>
    %238 = tpu.matmul %235, %237, %cst_244 {dimension_numbers = #tpu.dot_dimension_numbers<[1], [0], [0], [1], [0, 0, 1, 1], [], []>} : vector<256x64xf32>, vector<64x64xf32>, vector<256x64xf32> -> vector<256x64xf32>
    %239 = arith.addf %233, %238 : vector<256x64xf32>
    %c1_245 = arith.constant 1 : index
    %c0_246 = arith.constant 0 : index
    %c0_247 = arith.constant 0 : index
    %240 = vector.load %arg11[%c1_245, %c0_246, %c0_247] : memref<18x18x64xf32, #tpu.memory_space<vmem>>, vector<16x16x64xf32>
    %241 = vector.shape_cast %240 : vector<16x16x64xf32> to vector<256x64xf32>
    %c1_248 = arith.constant 1 : index
    %c0_249 = arith.constant 0 : index
    %c0_250 = arith.constant 0 : index
    %c0_251 = arith.constant 0 : index
    %242 = vector.load %arg4[%c1_248, %c0_249, %c0_250, %c0_251] : memref<3x3x64x64xf32, #tpu.memory_space<vmem>>, vector<1x1x64x64xf32>
    %243 = vector.shape_cast %242 : vector<1x1x64x64xf32> to vector<64x64xf32>
    %cst_252 = arith.constant dense<0.000000e+00> : vector<256x64xf32>
    %244 = tpu.matmul %241, %243, %cst_252 {dimension_numbers = #tpu.dot_dimension_numbers<[1], [0], [0], [1], [0, 0, 1, 1], [], []>} : vector<256x64xf32>, vector<64x64xf32>, vector<256x64xf32> -> vector<256x64xf32>
    %245 = arith.addf %239, %244 : vector<256x64xf32>
    %c1_253 = arith.constant 1 : index
    %c1_254 = arith.constant 1 : index
    %c0_255 = arith.constant 0 : index
    %246 = vector.load %arg11[%c1_253, %c1_254, %c0_255] : memref<18x18x64xf32, #tpu.memory_space<vmem>>, vector<16x16x64xf32>
    %247 = vector.shape_cast %246 : vector<16x16x64xf32> to vector<256x64xf32>
    %c1_256 = arith.constant 1 : index
    %c1_257 = arith.constant 1 : index
    %c0_258 = arith.constant 0 : index
    %c0_259 = arith.constant 0 : index
    %248 = vector.load %arg4[%c1_256, %c1_257, %c0_258, %c0_259] : memref<3x3x64x64xf32, #tpu.memory_space<vmem>>, vector<1x1x64x64xf32>
    %249 = vector.shape_cast %248 : vector<1x1x64x64xf32> to vector<64x64xf32>
    %cst_260 = arith.constant dense<0.000000e+00> : vector<256x64xf32>
    %250 = tpu.matmul %247, %249, %cst_260 {dimension_numbers = #tpu.dot_dimension_numbers<[1], [0], [0], [1], [0, 0, 1, 1], [], []>} : vector<256x64xf32>, vector<64x64xf32>, vector<256x64xf32> -> vector<256x64xf32>
    %251 = arith.addf %245, %250 : vector<256x64xf32>
    %c1_261 = arith.constant 1 : index
    %c2_262 = arith.constant 2 : index
    %c0_263 = arith.constant 0 : index
    %252 = vector.load %arg11[%c1_261, %c2_262, %c0_263] : memref<18x18x64xf32, #tpu.memory_space<vmem>>, vector<16x16x64xf32>
    %253 = vector.shape_cast %252 : vector<16x16x64xf32> to vector<256x64xf32>
    %c1_264 = arith.constant 1 : index
    %c2_265 = arith.constant 2 : index
    %c0_266 = arith.constant 0 : index
    %c0_267 = arith.constant 0 : index
    %254 = vector.load %arg4[%c1_264, %c2_265, %c0_266, %c0_267] : memref<3x3x64x64xf32, #tpu.memory_space<vmem>>, vector<1x1x64x64xf32>
    %255 = vector.shape_cast %254 : vector<1x1x64x64xf32> to vector<64x64xf32>
    %cst_268 = arith.constant dense<0.000000e+00> : vector<256x64xf32>
    %256 = tpu.matmul %253, %255, %cst_268 {dimension_numbers = #tpu.dot_dimension_numbers<[1], [0], [0], [1], [0, 0, 1, 1], [], []>} : vector<256x64xf32>, vector<64x64xf32>, vector<256x64xf32> -> vector<256x64xf32>
    %257 = arith.addf %251, %256 : vector<256x64xf32>
    %c2_269 = arith.constant 2 : index
    %c0_270 = arith.constant 0 : index
    %c0_271 = arith.constant 0 : index
    %258 = vector.load %arg11[%c2_269, %c0_270, %c0_271] : memref<18x18x64xf32, #tpu.memory_space<vmem>>, vector<16x16x64xf32>
    %259 = vector.shape_cast %258 : vector<16x16x64xf32> to vector<256x64xf32>
    %c2_272 = arith.constant 2 : index
    %c0_273 = arith.constant 0 : index
    %c0_274 = arith.constant 0 : index
    %c0_275 = arith.constant 0 : index
    %260 = vector.load %arg4[%c2_272, %c0_273, %c0_274, %c0_275] : memref<3x3x64x64xf32, #tpu.memory_space<vmem>>, vector<1x1x64x64xf32>
    %261 = vector.shape_cast %260 : vector<1x1x64x64xf32> to vector<64x64xf32>
    %cst_276 = arith.constant dense<0.000000e+00> : vector<256x64xf32>
    %262 = tpu.matmul %259, %261, %cst_276 {dimension_numbers = #tpu.dot_dimension_numbers<[1], [0], [0], [1], [0, 0, 1, 1], [], []>} : vector<256x64xf32>, vector<64x64xf32>, vector<256x64xf32> -> vector<256x64xf32>
    %263 = arith.addf %257, %262 : vector<256x64xf32>
    %c2_277 = arith.constant 2 : index
    %c1_278 = arith.constant 1 : index
    %c0_279 = arith.constant 0 : index
    %264 = vector.load %arg11[%c2_277, %c1_278, %c0_279] : memref<18x18x64xf32, #tpu.memory_space<vmem>>, vector<16x16x64xf32>
    %265 = vector.shape_cast %264 : vector<16x16x64xf32> to vector<256x64xf32>
    %c2_280 = arith.constant 2 : index
    %c1_281 = arith.constant 1 : index
    %c0_282 = arith.constant 0 : index
    %c0_283 = arith.constant 0 : index
    %266 = vector.load %arg4[%c2_280, %c1_281, %c0_282, %c0_283] : memref<3x3x64x64xf32, #tpu.memory_space<vmem>>, vector<1x1x64x64xf32>
    %267 = vector.shape_cast %266 : vector<1x1x64x64xf32> to vector<64x64xf32>
    %cst_284 = arith.constant dense<0.000000e+00> : vector<256x64xf32>
    %268 = tpu.matmul %265, %267, %cst_284 {dimension_numbers = #tpu.dot_dimension_numbers<[1], [0], [0], [1], [0, 0, 1, 1], [], []>} : vector<256x64xf32>, vector<64x64xf32>, vector<256x64xf32> -> vector<256x64xf32>
    %269 = arith.addf %263, %268 : vector<256x64xf32>
    %c2_285 = arith.constant 2 : index
    %c2_286 = arith.constant 2 : index
    %c0_287 = arith.constant 0 : index
    %270 = vector.load %arg11[%c2_285, %c2_286, %c0_287] : memref<18x18x64xf32, #tpu.memory_space<vmem>>, vector<16x16x64xf32>
    %271 = vector.shape_cast %270 : vector<16x16x64xf32> to vector<256x64xf32>
    %c2_288 = arith.constant 2 : index
    %c2_289 = arith.constant 2 : index
    %c0_290 = arith.constant 0 : index
    %c0_291 = arith.constant 0 : index
    %272 = vector.load %arg4[%c2_288, %c2_289, %c0_290, %c0_291] : memref<3x3x64x64xf32, #tpu.memory_space<vmem>>, vector<1x1x64x64xf32>
    %273 = vector.shape_cast %272 : vector<1x1x64x64xf32> to vector<64x64xf32>
    %cst_292 = arith.constant dense<0.000000e+00> : vector<256x64xf32>
    %274 = tpu.matmul %271, %273, %cst_292 {dimension_numbers = #tpu.dot_dimension_numbers<[1], [0], [0], [1], [0, 0, 1, 1], [], []>} : vector<256x64xf32>, vector<64x64xf32>, vector<256x64xf32> -> vector<256x64xf32>
    %275 = arith.addf %269, %274 : vector<256x64xf32>
    %c0_293 = arith.constant 0 : index
    %c0_294 = arith.constant 0 : index
    %276 = vector.load %arg5[%c0_293, %c0_294] : memref<1x64xf32, #tpu.memory_space<vmem>>, vector<1x64xf32>
    %277 = vector.broadcast %276 : vector<1x64xf32> to vector<256x64xf32>
    %278 = arith.addf %275, %277 : vector<256x64xf32>
    %cst_295 = arith.constant 0.000000e+00 : f32
    %279 = vector.broadcast %cst_295 : f32 to vector<256x64xf32>
    %280 = arith.maximumf %278, %279 : vector<256x64xf32>
    %281 = vector.shape_cast %280 : vector<256x64xf32> to vector<16x16x64xf32>
    %c1_296 = arith.constant 1 : index
    %c1_297 = arith.constant 1 : index
    %c0_298 = arith.constant 0 : index
    %282 = vector.load %arg12[%c1_296, %c1_297, %c0_298] : memref<18x18x64xf32, #tpu.memory_space<vmem>>, vector<16x16x64xf32>
    tpu.vector_store %arg12[%c1_296, %c1_297, %c0_298], %281 {strides = array<i32>} : memref<18x18x64xf32, #tpu.memory_space<vmem>>, vector<16x16x64xf32>,
    %283 = vector.extract_strided_slice %281 {offsets = [1, 0, 0], sizes = [1, 16, 64], strides = [1, 1, 1]} : vector<16x16x64xf32> to vector<1x16x64xf32>
    %284 = vector.shape_cast %283 : vector<1x16x64xf32> to vector<16x64xf32>
    %c0_299 = arith.constant 0 : index
    %c1_300 = arith.constant 1 : index
    %c0_301 = arith.constant 0 : index
    %285 = vector.load %arg12[%c0_299, %c1_300, %c0_301] : memref<18x18x64xf32, #tpu.memory_space<vmem>>, vector<1x16x64xf32>
    %286 = vector.shape_cast %285 : vector<1x16x64xf32> to vector<16x64xf32>
    %287 = vector.shape_cast %284 : vector<16x64xf32> to vector<1x16x64xf32>
    tpu.vector_store %arg12[%c0_299, %c1_300, %c0_301], %287 {strides = array<i32>} : memref<18x18x64xf32, #tpu.memory_space<vmem>>, vector<1x16x64xf32>,
    %288 = vector.extract_strided_slice %281 {offsets = [14, 0, 0], sizes = [1, 16, 64], strides = [1, 1, 1]} : vector<16x16x64xf32> to vector<1x16x64xf32>
    %289 = vector.shape_cast %288 : vector<1x16x64xf32> to vector<16x64xf32>
    %c17_302 = arith.constant 17 : index
    %c1_303 = arith.constant 1 : index
    %c0_304 = arith.constant 0 : index
    %290 = vector.load %arg12[%c17_302, %c1_303, %c0_304] : memref<18x18x64xf32, #tpu.memory_space<vmem>>, vector<1x16x64xf32>
    %291 = vector.shape_cast %290 : vector<1x16x64xf32> to vector<16x64xf32>
    %292 = vector.shape_cast %289 : vector<16x64xf32> to vector<1x16x64xf32>
    tpu.vector_store %arg12[%c17_302, %c1_303, %c0_304], %292 {strides = array<i32>} : memref<18x18x64xf32, #tpu.memory_space<vmem>>, vector<1x16x64xf32>,
    %c0_305 = arith.constant 0 : index
    %c2_306 = arith.constant 2 : index
    %c0_307 = arith.constant 0 : index
    %293 = vector.load %arg12[%c0_305, %c2_306, %c0_307] : memref<18x18x64xf32, #tpu.memory_space<vmem>>, vector<18x1x64xf32>
    %294 = vector.shape_cast %293 : vector<18x1x64xf32> to vector<18x64xf32>
    %c0_308 = arith.constant 0 : index
    %c0_309 = arith.constant 0 : index
    %c0_310 = arith.constant 0 : index
    %295 = vector.load %arg12[%c0_308, %c0_309, %c0_310] : memref<18x18x64xf32, #tpu.memory_space<vmem>>, vector<18x1x64xf32>
    %296 = vector.shape_cast %295 : vector<18x1x64xf32> to vector<18x64xf32>
    %297 = vector.shape_cast %294 : vector<18x64xf32> to vector<18x1x64xf32>
    tpu.vector_store %arg12[%c0_308, %c0_309, %c0_310], %297 {strides = array<i32>} : memref<18x18x64xf32, #tpu.memory_space<vmem>>, vector<18x1x64xf32>,
    %c0_311 = arith.constant 0 : index
    %c15_312 = arith.constant 15 : index
    %c0_313 = arith.constant 0 : index
    %298 = vector.load %arg12[%c0_311, %c15_312, %c0_313] : memref<18x18x64xf32, #tpu.memory_space<vmem>>, vector<18x1x64xf32>
    %299 = vector.shape_cast %298 : vector<18x1x64xf32> to vector<18x64xf32>
    %c0_314 = arith.constant 0 : index
    %c17_315 = arith.constant 17 : index
    %c0_316 = arith.constant 0 : index
    %300 = vector.load %arg12[%c0_314, %c17_315, %c0_316] : memref<18x18x64xf32, #tpu.memory_space<vmem>>, vector<18x1x64xf32>
    %301 = vector.shape_cast %300 : vector<18x1x64xf32> to vector<18x64xf32>
    %302 = vector.shape_cast %299 : vector<18x64xf32> to vector<18x1x64xf32>
    tpu.vector_store %arg12[%c0_314, %c17_315, %c0_316], %302 {strides = array<i32>} : memref<18x18x64xf32, #tpu.memory_space<vmem>>, vector<18x1x64xf32>,
    %cst_317 = arith.constant 0.000000e+00 : f32
    %303 = vector.broadcast %cst_317 : f32 to vector<256x3xf32>
    %c0_318 = arith.constant 0 : index
    %c0_319 = arith.constant 0 : index
    %c0_320 = arith.constant 0 : index
    %304 = vector.load %arg12[%c0_318, %c0_319, %c0_320] : memref<18x18x64xf32, #tpu.memory_space<vmem>>, vector<16x16x64xf32>
    %305 = vector.shape_cast %304 : vector<16x16x64xf32> to vector<256x64xf32>
    %c0_321 = arith.constant 0 : index
    %c0_322 = arith.constant 0 : index
    %c0_323 = arith.constant 0 : index
    %c0_324 = arith.constant 0 : index
    %306 = vector.load %arg6[%c0_321, %c0_322, %c0_323, %c0_324] : memref<3x3x64x3xf32, #tpu.memory_space<vmem>>, vector<1x1x64x3xf32>
    %307 = vector.shape_cast %306 : vector<1x1x64x3xf32> to vector<64x3xf32>
    %cst_325 = arith.constant dense<0.000000e+00> : vector<256x3xf32>
    %308 = tpu.matmul %305, %307, %cst_325 {dimension_numbers = #tpu.dot_dimension_numbers<[1], [0], [0], [1], [0, 0, 1, 1], [], []>} : vector<256x64xf32>, vector<64x3xf32>, vector<256x3xf32> -> vector<256x3xf32>
    %309 = arith.addf %303, %308 : vector<256x3xf32>
    %c0_326 = arith.constant 0 : index
    %c1_327 = arith.constant 1 : index
    %c0_328 = arith.constant 0 : index
    %310 = vector.load %arg12[%c0_326, %c1_327, %c0_328] : memref<18x18x64xf32, #tpu.memory_space<vmem>>, vector<16x16x64xf32>
    %311 = vector.shape_cast %310 : vector<16x16x64xf32> to vector<256x64xf32>
    %c0_329 = arith.constant 0 : index
    %c1_330 = arith.constant 1 : index
    %c0_331 = arith.constant 0 : index
    %c0_332 = arith.constant 0 : index
    %312 = vector.load %arg6[%c0_329, %c1_330, %c0_331, %c0_332] : memref<3x3x64x3xf32, #tpu.memory_space<vmem>>, vector<1x1x64x3xf32>
    %313 = vector.shape_cast %312 : vector<1x1x64x3xf32> to vector<64x3xf32>
    %cst_333 = arith.constant dense<0.000000e+00> : vector<256x3xf32>
    %314 = tpu.matmul %311, %313, %cst_333 {dimension_numbers = #tpu.dot_dimension_numbers<[1], [0], [0], [1], [0, 0, 1, 1], [], []>} : vector<256x64xf32>, vector<64x3xf32>, vector<256x3xf32> -> vector<256x3xf32>
    %315 = arith.addf %309, %314 : vector<256x3xf32>
    %c0_334 = arith.constant 0 : index
    %c2_335 = arith.constant 2 : index
    %c0_336 = arith.constant 0 : index
    %316 = vector.load %arg12[%c0_334, %c2_335, %c0_336] : memref<18x18x64xf32, #tpu.memory_space<vmem>>, vector<16x16x64xf32>
    %317 = vector.shape_cast %316 : vector<16x16x64xf32> to vector<256x64xf32>
    %c0_337 = arith.constant 0 : index
    %c2_338 = arith.constant 2 : index
    %c0_339 = arith.constant 0 : index
    %c0_340 = arith.constant 0 : index
    %318 = vector.load %arg6[%c0_337, %c2_338, %c0_339, %c0_340] : memref<3x3x64x3xf32, #tpu.memory_space<vmem>>, vector<1x1x64x3xf32>
    %319 = vector.shape_cast %318 : vector<1x1x64x3xf32> to vector<64x3xf32>
    %cst_341 = arith.constant dense<0.000000e+00> : vector<256x3xf32>
    %320 = tpu.matmul %317, %319, %cst_341 {dimension_numbers = #tpu.dot_dimension_numbers<[1], [0], [0], [1], [0, 0, 1, 1], [], []>} : vector<256x64xf32>, vector<64x3xf32>, vector<256x3xf32> -> vector<256x3xf32>
    %321 = arith.addf %315, %320 : vector<256x3xf32>
    %c1_342 = arith.constant 1 : index
    %c0_343 = arith.constant 0 : index
    %c0_344 = arith.constant 0 : index
    %322 = vector.load %arg12[%c1_342, %c0_343, %c0_344] : memref<18x18x64xf32, #tpu.memory_space<vmem>>, vector<16x16x64xf32>
    %323 = vector.shape_cast %322 : vector<16x16x64xf32> to vector<256x64xf32>
    %c1_345 = arith.constant 1 : index
    %c0_346 = arith.constant 0 : index
    %c0_347 = arith.constant 0 : index
    %c0_348 = arith.constant 0 : index
    %324 = vector.load %arg6[%c1_345, %c0_346, %c0_347, %c0_348] : memref<3x3x64x3xf32, #tpu.memory_space<vmem>>, vector<1x1x64x3xf32>
    %325 = vector.shape_cast %324 : vector<1x1x64x3xf32> to vector<64x3xf32>
    %cst_349 = arith.constant dense<0.000000e+00> : vector<256x3xf32>
    %326 = tpu.matmul %323, %325, %cst_349 {dimension_numbers = #tpu.dot_dimension_numbers<[1], [0], [0], [1], [0, 0, 1, 1], [], []>} : vector<256x64xf32>, vector<64x3xf32>, vector<256x3xf32> -> vector<256x3xf32>
    %327 = arith.addf %321, %326 : vector<256x3xf32>
    %c1_350 = arith.constant 1 : index
    %c1_351 = arith.constant 1 : index
    %c0_352 = arith.constant 0 : index
    %328 = vector.load %arg12[%c1_350, %c1_351, %c0_352] : memref<18x18x64xf32, #tpu.memory_space<vmem>>, vector<16x16x64xf32>
    %329 = vector.shape_cast %328 : vector<16x16x64xf32> to vector<256x64xf32>
    %c1_353 = arith.constant 1 : index
    %c1_354 = arith.constant 1 : index
    %c0_355 = arith.constant 0 : index
    %c0_356 = arith.constant 0 : index
    %330 = vector.load %arg6[%c1_353, %c1_354, %c0_355, %c0_356] : memref<3x3x64x3xf32, #tpu.memory_space<vmem>>, vector<1x1x64x3xf32>
    %331 = vector.shape_cast %330 : vector<1x1x64x3xf32> to vector<64x3xf32>
    %cst_357 = arith.constant dense<0.000000e+00> : vector<256x3xf32>
    %332 = tpu.matmul %329, %331, %cst_357 {dimension_numbers = #tpu.dot_dimension_numbers<[1], [0], [0], [1], [0, 0, 1, 1], [], []>} : vector<256x64xf32>, vector<64x3xf32>, vector<256x3xf32> -> vector<256x3xf32>
    %333 = arith.addf %327, %332 : vector<256x3xf32>
    %c1_358 = arith.constant 1 : index
    %c2_359 = arith.constant 2 : index
    %c0_360 = arith.constant 0 : index
    %334 = vector.load %arg12[%c1_358, %c2_359, %c0_360] : memref<18x18x64xf32, #tpu.memory_space<vmem>>, vector<16x16x64xf32>
    %335 = vector.shape_cast %334 : vector<16x16x64xf32> to vector<256x64xf32>
    %c1_361 = arith.constant 1 : index
    %c2_362 = arith.constant 2 : index
    %c0_363 = arith.constant 0 : index
    %c0_364 = arith.constant 0 : index
    %336 = vector.load %arg6[%c1_361, %c2_362, %c0_363, %c0_364] : memref<3x3x64x3xf32, #tpu.memory_space<vmem>>, vector<1x1x64x3xf32>
    %337 = vector.shape_cast %336 : vector<1x1x64x3xf32> to vector<64x3xf32>
    %cst_365 = arith.constant dense<0.000000e+00> : vector<256x3xf32>
    %338 = tpu.matmul %335, %337, %cst_365 {dimension_numbers = #tpu.dot_dimension_numbers<[1], [0], [0], [1], [0, 0, 1, 1], [], []>} : vector<256x64xf32>, vector<64x3xf32>, vector<256x3xf32> -> vector<256x3xf32>
    %339 = arith.addf %333, %338 : vector<256x3xf32>
    %c2_366 = arith.constant 2 : index
    %c0_367 = arith.constant 0 : index
    %c0_368 = arith.constant 0 : index
    %340 = vector.load %arg12[%c2_366, %c0_367, %c0_368] : memref<18x18x64xf32, #tpu.memory_space<vmem>>, vector<16x16x64xf32>
    %341 = vector.shape_cast %340 : vector<16x16x64xf32> to vector<256x64xf32>
    %c2_369 = arith.constant 2 : index
    %c0_370 = arith.constant 0 : index
    %c0_371 = arith.constant 0 : index
    %c0_372 = arith.constant 0 : index
    %342 = vector.load %arg6[%c2_369, %c0_370, %c0_371, %c0_372] : memref<3x3x64x3xf32, #tpu.memory_space<vmem>>, vector<1x1x64x3xf32>
    %343 = vector.shape_cast %342 : vector<1x1x64x3xf32> to vector<64x3xf32>
    %cst_373 = arith.constant dense<0.000000e+00> : vector<256x3xf32>
    %344 = tpu.matmul %341, %343, %cst_373 {dimension_numbers = #tpu.dot_dimension_numbers<[1], [0], [0], [1], [0, 0, 1, 1], [], []>} : vector<256x64xf32>, vector<64x3xf32>, vector<256x3xf32> -> vector<256x3xf32>
    %345 = arith.addf %339, %344 : vector<256x3xf32>
    %c2_374 = arith.constant 2 : index
    %c1_375 = arith.constant 1 : index
    %c0_376 = arith.constant 0 : index
    %346 = vector.load %arg12[%c2_374, %c1_375, %c0_376] : memref<18x18x64xf32, #tpu.memory_space<vmem>>, vector<16x16x64xf32>
    %347 = vector.shape_cast %346 : vector<16x16x64xf32> to vector<256x64xf32>
    %c2_377 = arith.constant 2 : index
    %c1_378 = arith.constant 1 : index
    %c0_379 = arith.constant 0 : index
    %c0_380 = arith.constant 0 : index
    %348 = vector.load %arg6[%c2_377, %c1_378, %c0_379, %c0_380] : memref<3x3x64x3xf32, #tpu.memory_space<vmem>>, vector<1x1x64x3xf32>
    %349 = vector.shape_cast %348 : vector<1x1x64x3xf32> to vector<64x3xf32>
    %cst_381 = arith.constant dense<0.000000e+00> : vector<256x3xf32>
    %350 = tpu.matmul %347, %349, %cst_381 {dimension_numbers = #tpu.dot_dimension_numbers<[1], [0], [0], [1], [0, 0, 1, 1], [], []>} : vector<256x64xf32>, vector<64x3xf32>, vector<256x3xf32> -> vector<256x3xf32>
    %351 = arith.addf %345, %350 : vector<256x3xf32>
    %c2_382 = arith.constant 2 : index
    %c2_383 = arith.constant 2 : index
    %c0_384 = arith.constant 0 : index
    %352 = vector.load %arg12[%c2_382, %c2_383, %c0_384] : memref<18x18x64xf32, #tpu.memory_space<vmem>>, vector<16x16x64xf32>
    %353 = vector.shape_cast %352 : vector<16x16x64xf32> to vector<256x64xf32>
    %c2_385 = arith.constant 2 : index
    %c2_386 = arith.constant 2 : index
    %c0_387 = arith.constant 0 : index
    %c0_388 = arith.constant 0 : index
    %354 = vector.load %arg6[%c2_385, %c2_386, %c0_387, %c0_388] : memref<3x3x64x3xf32, #tpu.memory_space<vmem>>, vector<1x1x64x3xf32>
    %355 = vector.shape_cast %354 : vector<1x1x64x3xf32> to vector<64x3xf32>
    %cst_389 = arith.constant dense<0.000000e+00> : vector<256x3xf32>
    %356 = tpu.matmul %353, %355, %cst_389 {dimension_numbers = #tpu.dot_dimension_numbers<[1], [0], [0], [1], [0, 0, 1, 1], [], []>} : vector<256x64xf32>, vector<64x3xf32>, vector<256x3xf32> -> vector<256x3xf32>
    %357 = arith.addf %351, %356 : vector<256x3xf32>
    %c0_390 = arith.constant 0 : index
    %c0_391 = arith.constant 0 : index
    %358 = vector.load %arg7[%c0_390, %c0_391] : memref<1x3xf32, #tpu.memory_space<vmem>>, vector<1x3xf32>
    %359 = vector.broadcast %358 : vector<1x3xf32> to vector<256x3xf32>
    %360 = arith.addf %357, %359 : vector<256x3xf32>
    %361 = vector.shape_cast %360 : vector<256x3xf32> to vector<16x16x3xf32>
    %c0_392 = arith.constant 0 : index
    %c0_393 = arith.constant 0 : index
    %c0_394 = arith.constant 0 : index
    %c0_395 = arith.constant 0 : index
    %362 = vector.load %arg8[%c0_392, %c0_393, %c0_394, %c0_395] : memref<1x16x16x3xf32, #tpu.memory_space<vmem>>, vector<1x16x16x3xf32>
    %363 = vector.shape_cast %362 : vector<1x16x16x3xf32> to vector<16x16x3xf32>
    %364 = vector.shape_cast %361 : vector<16x16x3xf32> to vector<1x16x16x3xf32>
    tpu.vector_store %arg8[%c0_392, %c0_393, %c0_394, %c0_395], %364 {strides = array<i32>} : memref<1x16x16x3xf32, #tpu.memory_space<vmem>>, vector<1x16x16x3xf32>,
    return
  }
  func.func @transform_0(%arg0: i32) -> (i32, i32, i32, i32) {
    %c0_i32 = arith.constant 0 : i32
    %c0_i32_0 = arith.constant 0 : i32
    %c0_i32_1 = arith.constant 0 : i32
    %c0_i32_2 = arith.constant 0 : i32
    return %arg0, %c0_i32, %c0_i32_0, %c0_i32_1 : i32, i32, i32, i32
  }
  func.func @transform_1(%arg0: i32) -> (i32, i32, i32, i32) {
    %c0_i32 = arith.constant 0 : i32
    %c0_i32_0 = arith.constant 0 : i32
    %c0_i32_1 = arith.constant 0 : i32
    %c0_i32_2 = arith.constant 0 : i32
    %c0_i32_3 = arith.constant 0 : i32
    return %c0_i32, %c0_i32_0, %c0_i32_1, %c0_i32_2 : i32, i32, i32, i32
  }
  func.func @transform_2(%arg0: i32) -> (i32, i32) {
    %c0_i32 = arith.constant 0 : i32
    %c0_i32_0 = arith.constant 0 : i32
    %c0_i32_1 = arith.constant 0 : i32
    return %c0_i32, %c0_i32_0 : i32, i32
  }
  func.func @transform_3(%arg0: i32) -> (i32, i32, i32, i32) {
    %c0_i32 = arith.constant 0 : i32
    %c0_i32_0 = arith.constant 0 : i32
    %c0_i32_1 = arith.constant 0 : i32
    %c0_i32_2 = arith.constant 0 : i32
    %c0_i32_3 = arith.constant 0 : i32
    return %c0_i32, %c0_i32_0, %c0_i32_1, %c0_i32_2 : i32, i32, i32, i32
  }
  func.func @transform_4(%arg0: i32) -> (i32, i32) {
    %c0_i32 = arith.constant 0 : i32
    %c0_i32_0 = arith.constant 0 : i32
    %c0_i32_1 = arith.constant 0 : i32
    return %c0_i32, %c0_i32_0 : i32, i32
  }
  func.func @transform_5(%arg0: i32) -> (i32, i32, i32, i32) {
    %c0_i32 = arith.constant 0 : i32
    %c0_i32_0 = arith.constant 0 : i32
    %c0_i32_1 = arith.constant 0 : i32
    %c0_i32_2 = arith.constant 0 : i32
    %c0_i32_3 = arith.constant 0 : i32
    return %c0_i32, %c0_i32_0, %c0_i32_1, %c0_i32_2 : i32, i32, i32, i32
  }
  func.func @transform_6(%arg0: i32) -> (i32, i32) {
    %c0_i32 = arith.constant 0 : i32
    %c0_i32_0 = arith.constant 0 : i32
    %c0_i32_1 = arith.constant 0 : i32
    return %c0_i32, %c0_i32_0 : i32, i32
  }
  func.func @transform_7(%arg0: i32) -> (i32, i32, i32, i32) {
    %c0_i32 = arith.constant 0 : i32
    %c0_i32_0 = arith.constant 0 : i32
    %c0_i32_1 = arith.constant 0 : i32
    %c0_i32_2 = arith.constant 0 : i32
    return %arg0, %c0_i32, %c0_i32_0, %c0_i32_1 : i32, i32, i32, i32
  }
}

</mosaic_0001>

<llo_original>
// kernel: tpu_custom_call.1
$region0: #{tpu_custom_call.1}
  #allocation0 [shape = 'u32[]', space=smem, size = 0x4, offset = 0x4, fixed_abs, tag = 'smem constant byte address 0x4 - core index']
  #allocation1 [shape = 'u32[144,128]{1,0:T(1,128)}', space=vmem, size = 0x12000, scoped, tag = 'internal scratch']
  #allocation2 [shape = 'f32[10,10,128]{2,1,0:T(8,128)}', space=vmem, size = 0x14000, scoped, tag = 'scratch operand']
  #allocation3 [shape = 'f32[18,8,64]{2,1,0:T(8,128)}', space=vmem, size = 0x12000, scoped, tag = 'scratch operand']
  #allocation4 [shape = 'f32[18,18,64]{2,1,0:T(8,128)}', space=vmem, size = 0x36000, scoped, tag = 'scratch operand']
  #allocation5 [shape = 'f32[18,18,64]{2,1,0:T(8,128)}', space=vmem, size = 0x36000, scoped, tag = 'scratch operand']
  %s0 = inlined_call_operand.vmem [shape: f32[2,8,8,128], index: 0, kind: input, shape index: {}]
  %s1 = inlined_call_operand.vmem [shape: f32[3,3,128,64], index: 1, kind: input, shape index: {}]
  %s2 = inlined_call_operand.vmem [shape: f32[1,64], index: 2, kind: input, shape index: {}]
  %s3 = inlined_call_operand.vmem [shape: f32[3,3,64,64], index: 3, kind: input, shape index: {}]
  %s4 = inlined_call_operand.vmem [shape: f32[1,64], index: 4, kind: input, shape index: {}]
  %s5 = inlined_call_operand.vmem [shape: f32[3,3,64,3], index: 5, kind: input, shape index: {}]
  %s6 = inlined_call_operand.vmem [shape: f32[1,3], index: 6, kind: input, shape index: {}]
  %s7 = inlined_call_operand.vmem [shape: f32[2,16,16,3], index: 7, kind: output, shape index: {}]
  %s8 = sld [smem:[#allocation0]]
  $region61: #{tpu_custom_call.1} parent=0
    _
  %s10 = ssub.s32 1, %s8
  %s11 = scalar_select 0, %s10, %s8
  loop: start=0, step=1, limit=4
  $region2: #{tpu_custom_call.1} parent=0 // loop_pre_header
    _
  $region3: #{tpu_custom_call.1} parent=0 // loop_header
    %s13 = sphi 0, %s17
    %p14 = scmp.ge.s32.totalorder %s13, 4
    %s23 = sphi 0, %s25
    %s26 = sphi 0, %s23
    %s27 = sphi 0, %s26
    %s43 = sphi 0, %s27
    %s47 = sphi 0, %s47
    %s49 = sphi 0, %s47
    %s50 = sphi 0, %s49
    %s64 = sphi 0, %s50
    %s68 = sphi 0, %s68
    %s70 = sphi 0, %s68
    %s71 = sphi 0, %s70
    %s85 = sphi 0, %s71
    %s89 = sphi 0, %s89
    %s91 = sphi 0, %s89
    %s92 = sphi 0, %s91
    %s106 = sphi 0, %s92
    %s110 = sphi 0, %s110
    %s112 = sphi 0, %s110
    %s113 = sphi 0, %s112
    %s127 = sphi 0, %s113
    %s131 = sphi 0, %s131
    %s133 = sphi 0, %s131
    %s134 = sphi 0, %s133
    %s148 = sphi 0, %s134
    %s152 = sphi 0, %s152
    %s154 = sphi 0, %s152
    %s155 = sphi 0, %s154
    %s169 = sphi 0, %s155
    %s175 = sphi 0, %s177
    %s178 = sphi 0, %s175
    %s179 = sphi 0, %s178
    %s195 = sphi 0, %s179
  $region4: #{tpu_custom_call.1} parent=0 // loop_header_branch
    %16 = sbr.rel (%p14) target = $region8
  $region5: #{tpu_custom_call.1} parent=0 // loop_body
    %s18 = ssub.s32 %s13, 1
    %s19 = ssub.s32 %s13, 2
    %s20 = sadd.s32 %s13, 1
    %s21 = ssub.s32 %s13, %s20
    %p22 = scmp.eq.s32.totalorder %s21, 0
    %s24 = sadd.s32 %s23, 1
    %s25 = scalar_select %p22, %s23, %s24
    %p28 = pneg %p22
    %p29 = scmp.eq.s32.totalorder %s13, 1
    %p30 = por %p28, %p29
    %p31 = scmp.ne.s32.totalorder %s23, %s26
    %p32 = scmp.eq.s32.totalorder %s13, 0
    %p33 = por %p31, %p32
    %p34 = scmp.ne.s32.totalorder %s23, %s26
    %p35 = scmp.eq.s32.totalorder %s18, 1
    %p36 = por %p34, %p35
    %p37 = scmp.ne.s32.totalorder %s26, %s27
    %p38 = scmp.eq.s32.totalorder %s18, 0
    %p39 = por %p37, %p38
    %p40 = scmp.ne.s32.totalorder %s26, %s27
    %p41 = scmp.eq.s32.totalorder %s19, 1
    %p42 = por %p40, %p41
    %p44 = scmp.ne.s32.totalorder %s27, %s43
    %p45 = scmp.eq.s32.totalorder %s19, 0
    %p46 = por %p44, %p45
    %s48 = sadd.s32 %s47, 1
    %p51 = scmp.eq.s32.totalorder %s13, 1
    %p52 = scmp.ne.s32.totalorder %s47, %s49
    %p53 = scmp.eq.s32.totalorder %s13, 0
    %p54 = por %p52, %p53
    %p55 = scmp.ne.s32.totalorder %s47, %s49
    %p56 = scmp.eq.s32.totalorder %s18, 1
    %p57 = por %p55, %p56
    %p58 = scmp.ne.s32.totalorder %s49, %s50
    %p59 = scmp.eq.s32.totalorder %s18, 0
    %p60 = por %p58, %p59
    %p61 = scmp.ne.s32.totalorder %s49, %s50
    %p62 = scmp.eq.s32.totalorder %s19, 1
    %p63 = por %p61, %p62
    %p65 = scmp.ne.s32.totalorder %s50, %s64
    %p66 = scmp.eq.s32.totalorder %s19, 0
    %p67 = por %p65, %p66
    %s69 = sadd.s32 %s68, 1
    %p72 = scmp.eq.s32.totalorder %s13, 1
    %p73 = scmp.ne.s32.totalorder %s68, %s70
    %p74 = scmp.eq.s32.totalorder %s13, 0
    %p75 = por %p73, %p74
    %p76 = scmp.ne.s32.totalorder %s68, %s70
    %p77 = scmp.eq.s32.totalorder %s18, 1
    %p78 = por %p76, %p77
    %p79 = scmp.ne.s32.totalorder %s70, %s71
    %p80 = scmp.eq.s32.totalorder %s18, 0
    %p81 = por %p79, %p80
    %p82 = scmp.ne.s32.totalorder %s70, %s71
    %p83 = scmp.eq.s32.totalorder %s19, 1
    %p84 = por %p82, %p83
    %p86 = scmp.ne.s32.totalorder %s71, %s85
    %p87 = scmp.eq.s32.totalorder %s19, 0
    %p88 = por %p86, %p87
    %s90 = sadd.s32 %s89, 1
    %p93 = scmp.eq.s32.totalorder %s13, 1
    %p94 = scmp.ne.s32.totalorder %s89, %s91
    %p95 = scmp.eq.s32.totalorder %s13, 0
    %p96 = por %p94, %p95
    %p97 = scmp.ne.s32.totalorder %s89, %s91
    %p98 = scmp.eq.s32.totalorder %s18, 1
    %p99 = por %p97, %p98
    %p100 = scmp.ne.s32.totalorder %s91, %s92
    %p101 = scmp.eq.s32.totalorder %s18, 0
    %p102 = por %p100, %p101
    %p103 = scmp.ne.s32.totalorder %s91, %s92
    %p104 = scmp.eq.s32.totalorder %s19, 1
    %p105 = por %p103, %p104
    %p107 = scmp.ne.s32.totalorder %s92, %s106
    %p108 = scmp.eq.s32.totalorder %s19, 0
    %p109 = por %p107, %p108
    %s111 = sadd.s32 %s110, 1
    %p114 = scmp.eq.s32.totalorder %s13, 1
    %p115 = scmp.ne.s32.totalorder %s110, %s112
    %p116 = scmp.eq.s32.totalorder %s13, 0
    %p117 = por %p115, %p116
    %p118 = scmp.ne.s32.totalorder %s110, %s112
    %p119 = scmp.eq.s32.totalorder %s18, 1
    %p120 = por %p118, %p119
    %p121 = scmp.ne.s32.totalorder %s112, %s113
    %p122 = scmp.eq.s32.totalorder %s18, 0
    %p123 = por %p121, %p122
    %p124 = scmp.ne.s32.totalorder %s112, %s113
    %p125 = scmp.eq.s32.totalorder %s19, 1
    %p126 = por %p124, %p125
    %p128 = scmp.ne.s32.totalorder %s113, %s127
    %p129 = scmp.eq.s32.totalorder %s19, 0
    %p130 = por %p128, %p129
    %s132 = sadd.s32 %s131, 1
    %p135 = scmp.eq.s32.totalorder %s13, 1
    %p136 = scmp.ne.s32.totalorder %s131, %s133
    %p137 = scmp.eq.s32.totalorder %s13, 0
    %p138 = por %p136, %p137
    %p139 = scmp.ne.s32.totalorder %s131, %s133
    %p140 = scmp.eq.s32.totalorder %s18, 1
    %p141 = por %p139, %p140
    %p142 = scmp.ne.s32.totalorder %s133, %s134
    %p143 = scmp.eq.s32.totalorder %s18, 0
    %p144 = por %p142, %p143
    %p145 = scmp.ne.s32.totalorder %s133, %s134
    %p146 = scmp.eq.s32.totalorder %s19, 1
    %p147 = por %p145, %p146
    %p149 = scmp.ne.s32.totalorder %s134, %s148
    %p150 = scmp.eq.s32.totalorder %s19, 0
    %p151 = por %p149, %p150
    %s153 = sadd.s32 %s152, 1
    %p156 = scmp.eq.s32.totalorder %s13, 1
    %p157 = scmp.ne.s32.totalorder %s152, %s154
    %p158 = scmp.eq.s32.totalorder %s13, 0
    %p159 = por %p157, %p158
    %p160 = scmp.ne.s32.totalorder %s152, %s154
    %p161 = scmp.eq.s32.totalorder %s18, 1
    %p162 = por %p160, %p161
    %p163 = scmp.ne.s32.totalorder %s154, %s155
    %p164 = scmp.eq.s32.totalorder %s18, 0
    %p165 = por %p163, %p164
    %p166 = scmp.ne.s32.totalorder %s154, %s155
    %p167 = scmp.eq.s32.totalorder %s19, 1
    %p168 = por %p166, %p167
    %p170 = scmp.ne.s32.totalorder %s155, %s169
    %p171 = scmp.eq.s32.totalorder %s19, 0
    %p172 = por %p170, %p171
    %s173 = ssub.s32 %s13, %s20
    %p174 = scmp.eq.s32.totalorder %s173, 0
    %s176 = sadd.s32 %s175, 1
    %s177 = scalar_select %p174, %s175, %s176
    %p180 = pneg %p174
    %p181 = scmp.eq.s32.totalorder %s13, 1
    %p182 = por %p180, %p181
    %p183 = scmp.ne.s32.totalorder %s175, %s178
    %p184 = scmp.eq.s32.totalorder %s13, 0
    %p185 = por %p183, %p184
    %p186 = scmp.ne.s32.totalorder %s175, %s178
    %p187 = scmp.eq.s32.totalorder %s18, 1
    %p188 = por %p186, %p187
    %p189 = scmp.ne.s32.totalorder %s178, %s179
    %p190 = scmp.eq.s32.totalorder %s18, 0
    %p191 = por %p189, %p190
    %p192 = scmp.ne.s32.totalorder %s178, %s179
    %p193 = scmp.eq.s32.totalorder %s19, 1
    %p194 = por %p192, %p193
    %p196 = scmp.ne.s32.totalorder %s179, %s195
    %p197 = scmp.eq.s32.totalorder %s19, 0
    %p198 = por %p196, %p197
    %p199 = scmp.le.s32.totalorder 1, %s13
    %p200 = scmp.lt.s32.totalorder %s13, 3
    %p201 = pnand %p199, %p200
    %p202 = pneg %p201
    // Predicated region
    $region9: #{tpu_custom_call.1} parent=5 // pred_check
      _
    $region10: #{tpu_custom_call.1} parent=5 // pred_check_branch
      %204 = sbr.rel (%p201) target = $region12
    $region11: #{tpu_custom_call.1} parent=5 // pred_region
      %s205 = ssub.s32 %s13, 1
      // Predicated region
      $region13: #{tpu_custom_call.1} parent=11 // pred_check
        %p206 = pneg %p60
      $region14: #{tpu_custom_call.1} parent=11 // pred_check_branch
        %208 = sbr.rel (%p206) target = $region16
      $region15: #{tpu_custom_call.1} parent=11 // pred_region
        _
      $region16: #{tpu_custom_call.1} parent=11 // pred_fallthru
        _
      // Predicated region
      $region17: #{tpu_custom_call.1} parent=11 // pred_check
        %p209 = pneg %p81
      $region18: #{tpu_custom_call.1} parent=11 // pred_check_branch
        %211 = sbr.rel (%p209) target = $region20
      $region19: #{tpu_custom_call.1} parent=11 // pred_region
        _
      $region20: #{tpu_custom_call.1} parent=11 // pred_fallthru
        _
      // Predicated region
      $region21: #{tpu_custom_call.1} parent=11 // pred_check
        %p212 = pneg %p102
      $region22: #{tpu_custom_call.1} parent=11 // pred_check_branch
        %214 = sbr.rel (%p212) target = $region24
      $region23: #{tpu_custom_call.1} parent=11 // pred_region
        _
      $region24: #{tpu_custom_call.1} parent=11 // pred_fallthru
        _
      // Predicated region
      $region25: #{tpu_custom_call.1} parent=11 // pred_check
        %p215 = pneg %p123
      $region26: #{tpu_custom_call.1} parent=11 // pred_check_branch
        %217 = sbr.rel (%p215) target = $region28
      $region27: #{tpu_custom_call.1} parent=11 // pred_region
        _
      $region28: #{tpu_custom_call.1} parent=11 // pred_fallthru
        _
      // Predicated region
      $region29: #{tpu_custom_call.1} parent=11 // pred_check
        %p218 = pneg %p144
      $region30: #{tpu_custom_call.1} parent=11 // pred_check_branch
        %220 = sbr.rel (%p218) target = $region32
      $region31: #{tpu_custom_call.1} parent=11 // pred_region
        _
      $region32: #{tpu_custom_call.1} parent=11 // pred_fallthru
        _
      // Predicated region
      $region33: #{tpu_custom_call.1} parent=11 // pred_check
        %p221 = pneg %p165
      $region34: #{tpu_custom_call.1} parent=11 // pred_check_branch
        %223 = sbr.rel (%p221) target = $region36
      $region35: #{tpu_custom_call.1} parent=11 // pred_region
        _
      $region36: #{tpu_custom_call.1} parent=11 // pred_fallthru
        _
    $region12: #{tpu_custom_call.1} parent=5 // pred_fallthru
      _
    %p224 = scmp.lt.s32.totalorder %s13, 2
    // Predicated region
    $region37: #{tpu_custom_call.1} parent=5 // pred_check
      %p225 = pneg %p224
    $region38: #{tpu_custom_call.1} parent=5 // pred_check_branch
      %227 = sbr.rel (%p225) target = $region40
    $region39: #{tpu_custom_call.1} parent=5 // pred_region
      // Predicated region
      $region41: #{tpu_custom_call.1} parent=39 // pred_check
        %p228 = pneg %p33
      $region42: #{tpu_custom_call.1} parent=39 // pred_check_branch
        %230 = sbr.rel (%p228) target = $region44
      $region43: #{tpu_custom_call.1} parent=39 // pred_region
        %p231 = scmp.lt.s32.totalorder %s13, 1
        %s232 = scalar_select %p231, %s13, 1
        %s233 = smul.addr %s232, 8
        %s234 = smul.addr %s233, 8
        %s235 = scalar_lea.vmem %s0, %s234
      $region44: #{tpu_custom_call.1} parent=39 // pred_fallthru
        _
    $region40: #{tpu_custom_call.1} parent=5 // pred_fallthru
      _
    %p236 = scmp.le.s32.totalorder 1, %s13
    %p237 = scmp.lt.s32.totalorder %s13, 3
    %p238 = pnand %p236, %p237
    %p239 = pneg %p238
    // Predicated region
    $region45: #{tpu_custom_call.1} parent=5 // pred_check
      _
    $region46: #{tpu_custom_call.1} parent=5 // pred_check_branch
      %241 = sbr.rel (%p238) target = $region48
    $region47: #{tpu_custom_call.1} parent=5 // pred_region
      %s242 = ssub.s32 %s13, 1
      %p243 = scmp.lt.s32.totalorder %s18, 1
      %s244 = scalar_select %p243, %s18, 1
      %s245 = smul.addr %s244, 8
      %s246 = smul.addr %s245, 8
      %s247 = scalar_lea.vmem %s0, %s246
      %p248 = pneg %p39
      %p249 = pneg %p36
      %p250 = pneg %p60
      %p251 = pneg %p57
      %p252 = pneg %p81
      %p253 = pneg %p78
      %p254 = pneg %p102
      %p255 = pneg %p99
      %p256 = pneg %p123
      %p257 = pneg %p120
      %p258 = pneg %p144
      %p259 = pneg %p141
      %p260 = pneg %p165
      %p261 = pneg %p162
      %p262 = pneg %p191
      %p263 = pneg %p188
      %p264 = scmp.lt.s32.totalorder %s18, 1
      %s265 = scalar_select %p264, %s18, 1
      %s266 = smul.addr %s265, 32
      %s267 = smul.addr %s266, 8
      %s268 = scalar_lea.vmem %s7, %s267
      %p269 = scmp.lt.s32.totalorder %s18, 1
      %s270 = scalar_select %p269, %s18, 1
      %s271 = smul.addr %s270, 8
      %s272 = smul.addr %s271, 8
      %s273 = scalar_lea.vmem %s0, %s272
      %p274 = scmp.lt.s32.totalorder %s18, 1
      %s275 = scalar_select %p274, %s18, 1
      %s276 = smul.addr %s275, 32
      %s277 = smul.addr %s276, 8
      %s278 = scalar_lea.vmem %s7, %s277
      %v279 = vld [vmem:[%s273] sm:$0xff]
      %v280 = vld [vmem:[%s273 + $0x8] sm:$0xff]
      %v281 = vld [vmem:[%s273 + $0x10] sm:$0xff]
      %v282 = vld [vmem:[%s273 + $0x18] sm:$0xff]
      %v283 = vld [vmem:[%s273 + $0x20] sm:$0xff]
      %v284 = vld [vmem:[%s273 + $0x28] sm:$0xff]
      %v285 = vld [vmem:[%s273 + $0x30] sm:$0xff]
      %v286 = vld [vmem:[%s273 + $0x38] sm:$0xff]
      %s287 = scalar_lea.vmem [#allocation2], 16
      %288 = vst [vmem:[%s287 + $0x1] sm:$0xff] %v279
      %289 = vst [vmem:[%s287 + $0x11] sm:$0xff] %v280
      %290 = vst [vmem:[%s287 + $0x21] sm:$0xff] %v281
      %291 = vst [vmem:[%s287 + $0x31] sm:$0xff] %v282
      %292 = vst [vmem:[%s287 + $0x41] sm:$0xff] %v283
      %293 = vst [vmem:[%s287 + $0x51] sm:$0xff] %v284
      %294 = vst [vmem:[%s287 + $0x61] sm:$0xff] %v285
      %295 = vst [vmem:[%s287 + $0x71] sm:$0xff] %v286
      %296 = vst [vmem:[#allocation2 + $0x1] sm:$0xff] %v280
      %s297 = scalar_lea.vmem [#allocation2], 144
      %298 = vst [vmem:[%s297 + $0x1] sm:$0xff] %v285
      %v299 = vld [vmem:[#allocation2 + $0x2] sm:$0x1]
      %v300 = vld [vmem:[#allocation2 + $0x12] sm:$0x1]
      %v301 = vld [vmem:[#allocation2 + $0x22] sm:$0x1]
      %v302 = vld [vmem:[#allocation2 + $0x32] sm:$0x1]
      %v303 = vld [vmem:[#allocation2 + $0x42] sm:$0x1]
      %v304 = vld [vmem:[#allocation2 + $0x52] sm:$0x1]
      %v305 = vld [vmem:[#allocation2 + $0x62] sm:$0x1]
      %v306 = vld [vmem:[#allocation2 + $0x72] sm:$0x1]
      %v307 = vld [vmem:[#allocation2 + $0x82] sm:$0x1]
      %v308 = vld [vmem:[#allocation2 + $0x92] sm:$0x1]
      %309 = vst [vmem:[#allocation2] sm:$0x1] %v299
      %310 = vst [vmem:[#allocation2 + $0x10] sm:$0x1] %v300
      %311 = vst [vmem:[#allocation2 + $0x20] sm:$0x1] %v301
      %312 = vst [vmem:[#allocation2 + $0x30] sm:$0x1] %v302
      %313 = vst [vmem:[#allocation2 + $0x40] sm:$0x1] %v303
      %314 = vst [vmem:[#allocation2 + $0x50] sm:$0x1] %v304
      %315 = vst [vmem:[#allocation2 + $0x60] sm:$0x1] %v305
      %316 = vst [vmem:[#allocation2 + $0x70] sm:$0x1] %v306
      %317 = vst [vmem:[#allocation2 + $0x80] sm:$0x1] %v307
      %318 = vst [vmem:[#allocation2 + $0x90] sm:$0x1] %v308
      %v319 = vld [vmem:[#allocation2 + $0x7] sm:$0x1]
      %v320 = vld [vmem:[#allocation2 + $0x17] sm:$0x1]
      %v321 = vld [vmem:[#allocation2 + $0x27] sm:$0x1]
      %v322 = vld [vmem:[#allocation2 + $0x37] sm:$0x1]
      %v323 = vld [vmem:[#allocation2 + $0x47] sm:$0x1]
      %v324 = vld [vmem:[#allocation2 + $0x57] sm:$0x1]
      %v325 = vld [vmem:[#allocation2 + $0x67] sm:$0x1]
      %v326 = vld [vmem:[#allocation2 + $0x77] sm:$0x1]
      %v327 = vld [vmem:[#allocation2 + $0x87] sm:$0x1]
      %v328 = vld [vmem:[#allocation2 + $0x97] sm:$0x1]
      %329 = vst [vmem:[#allocation2 + $0x9] sm:$0x1] %v319
      %330 = vst [vmem:[#allocation2 + $0x19] sm:$0x1] %v320
      %331 = vst [vmem:[#allocation2 + $0x29] sm:$0x1] %v321
      %332 = vst [vmem:[#allocation2 + $0x39] sm:$0x1] %v322
      %333 = vst [vmem:[#allocation2 + $0x49] sm:$0x1] %v323
      %334 = vst [vmem:[#allocation2 + $0x59] sm:$0x1] %v324
      %335 = vst [vmem:[#allocation2 + $0x69] sm:$0x1] %v325
      %336 = vst [vmem:[#allocation2 + $0x79] sm:$0x1] %v326
      %337 = vst [vmem:[#allocation2 + $0x89] sm:$0x1] %v327
      %338 = vst [vmem:[#allocation2 + $0x99] sm:$0x1] %v328
      %v339 = vld [vmem:[#allocation2] sm:$0xff]
      %v340 = vld [vmem:[#allocation2 + $0x10] sm:$0xff]
      %v341 = vld [vmem:[#allocation2 + $0x20] sm:$0xff]
      %v342 = vld [vmem:[#allocation2 + $0x30] sm:$0xff]
      %v343 = vld [vmem:[#allocation2 + $0x40] sm:$0xff]
      %v344 = vld [vmem:[#allocation2 + $0x50] sm:$0xff]
      %v345 = vld [vmem:[#allocation2 + $0x60] sm:$0xff]
      %v346 = vld [vmem:[#allocation2 + $0x70] sm:$0xff]
      %v347 = vld [vmem:[%s1] sm:$0xff]
      %v348 = vld [vmem:[%s1 + $0x8] sm:$0xff]
      %v349 = vld [vmem:[%s1 + $0x10] sm:$0xff]
      %v350 = vld [vmem:[%s1 + $0x18] sm:$0xff]
      %v351 = vld [vmem:[%s1 + $0x20] sm:$0xff]
      %v352 = vld [vmem:[%s1 + $0x28] sm:$0xff]
      %v353 = vld [vmem:[%s1 + $0x30] sm:$0xff]
      %v354 = vld [vmem:[%s1 + $0x38] sm:$0xff]
      %v355 = vld [vmem:[%s1 + $0x40] sm:$0xff]
      %v356 = vld [vmem:[%s1 + $0x48] sm:$0xff]
      %v357 = vld [vmem:[%s1 + $0x50] sm:$0xff]
      %v358 = vld [vmem:[%s1 + $0x58] sm:$0xff]
      %v359 = vld [vmem:[%s1 + $0x60] sm:$0xff]
      %v360 = vld [vmem:[%s1 + $0x68] sm:$0xff]
      %v361 = vld [vmem:[%s1 + $0x70] sm:$0xff]
      %v362 = vld [vmem:[%s1 + $0x78] sm:$0xff]
      %v363 = vld [vmem:[#allocation2 + $0x1] sm:$0xff]
      %v364 = vld [vmem:[#allocation2 + $0x11] sm:$0xff]
      %v365 = vld [vmem:[#allocation2 + $0x21] sm:$0xff]
      %v366 = vld [vmem:[#allocation2 + $0x31] sm:$0xff]
      %v367 = vld [vmem:[#allocation2 + $0x41] sm:$0xff]
      %v368 = vld [vmem:[#allocation2 + $0x51] sm:$0xff]
      %v369 = vld [vmem:[#allocation2 + $0x61] sm:$0xff]
      %v370 = vld [vmem:[#allocation2 + $0x71] sm:$0xff]
      %s371 = scalar_lea.vmem %s1, 128
      %v372 = vld [vmem:[%s371] sm:$0xff]
      %v373 = vld [vmem:[%s371 + $0x8] sm:$0xff]
      %v374 = vld [vmem:[%s371 + $0x10] sm:$0xff]
      %v375 = vld [vmem:[%s371 + $0x18] sm:$0xff]
      %v376 = vld [vmem:[%s371 + $0x20] sm:$0xff]
      %v377 = vld [vmem:[%s371 + $0x28] sm:$0xff]
      %v378 = vld [vmem:[%s371 + $0x30] sm:$0xff]
      %v379 = vld [vmem:[%s371 + $0x38] sm:$0xff]
      %v380 = vld [vmem:[%s371 + $0x40] sm:$0xff]
      %v381 = vld [vmem:[%s371 + $0x48] sm:$0xff]
      %v382 = vld [vmem:[%s371 + $0x50] sm:$0xff]
      %v383 = vld [vmem:[%s371 + $0x58] sm:$0xff]
      %v384 = vld [vmem:[%s371 + $0x60] sm:$0xff]
      %v385 = vld [vmem:[%s371 + $0x68] sm:$0xff]
      %v386 = vld [vmem:[%s371 + $0x70] sm:$0xff]
      %v387 = vld [vmem:[%s371 + $0x78] sm:$0xff]
      %388 = vmatprep.subr.mxu0 0.0
      %389 = vmatpush1.msra.mxu0 %v372
      %390 = vmatprep.subr.mxu0 0.0
      %391 = vmatpush1.msra.mxu0 %v373
      %392 = vmatprep.subr.mxu0 0.0
      %393 = vmatpush1.msra.mxu0 %v374
      %394 = vmatprep.subr.mxu0 0.0
      %395 = vmatpush1.msra.mxu0 %v375
      %396 = vmatprep.subr.mxu0 0.0
      %397 = vmatpush1.msra.mxu0 %v376
      %398 = vmatprep.subr.mxu0 0.0
      %399 = vmatpush1.msra.mxu0 %v377
      %400 = vmatprep.subr.mxu0 0.0
      %401 = vmatpush1.msra.mxu0 %v378
      %402 = vmatprep.subr.mxu0 0.0
      %403 = vmatpush1.msra.mxu0 %v379
      %404 = vmatprep.subr.mxu0 0.0
      %405 = vmatpush1.msra.mxu0 %v380
      %406 = vmatprep.subr.mxu0 0.0
      %407 = vmatpush1.msra.mxu0 %v381
      %408 = vmatprep.subr.mxu0 0.0
      %409 = vmatpush1.msra.mxu0 %v382
      %410 = vmatprep.subr.mxu0 0.0
      %411 = vmatpush1.msra.mxu0 %v383
      %412 = vmatprep.subr.mxu0 0.0
      %413 = vmatpush1.msra.mxu0 %v384
      %414 = vmatprep.subr.mxu0 0.0
      %415 = vmatpush1.msra.mxu0 %v385
      %416 = vmatprep.subr.mxu0 0.0
      %417 = vmatpush1.msra.mxu0 %v386
      %418 = vmatprep.subr.mxu0 0.0
      %419 = vmatpush1.msra.mxu0 %v387
      %420 = vmatprep.subr.mxu0 0.0
      %421 = vmatpush1.msra.mxu0 0.0
      %422 = vmatprep.subr.mxu0 0.0
      %423 = vmatpush1.msra.mxu0 0.0
      %424 = vmatprep.subr.mxu0 0.0
      %425 = vmatpush1.msra.mxu0 0.0
      %426 = vmatprep.subr.mxu0 0.0
      %427 = vmatpush1.msra.mxu0 0.0
      %428 = vmatprep.subr.mxu0 0.0
      %429 = vmatpush1.msra.mxu0 0.0
      %430 = vmatprep.subr.mxu0 0.0
      %431 = vmatpush1.msra.mxu0 0.0
      %432 = vmatprep.subr.mxu0 0.0
      %433 = vmatpush1.msra.mxu0 0.0
      %434 = vmatprep.subr.mxu0 0.0
      %435 = vmatpush1.msra.mxu0 0.0
      %436 = vmatprep.subr.mxu0 0.0
      %437 = vmatpush1.msra.mxu0 0.0
      %438 = vmatprep.subr.mxu0 0.0
      %439 = vmatpush1.msra.mxu0 0.0
      %440 = vmatprep.subr.mxu0 0.0
      %441 = vmatpush1.msra.mxu0 0.0
      %442 = vmatprep.subr.mxu0 0.0
      %443 = vmatpush1.msra.mxu0 0.0
      %444 = vmatprep.subr.mxu0 0.0
      %445 = vmatpush1.msra.mxu0 0.0
      %446 = vmatprep.subr.mxu0 0.0
      %447 = vmatpush1.msra.mxu0 0.0
      %448 = vmatprep.subr.mxu0 0.0
      %449 = vmatpush1.msra.mxu0 0.0
      %450 = vmatprep.subr.mxu0 0.0
      %451 = vmatpush1.msra.mxu0 0.0
      %452 = vmatprep.mubr.f32.mxu0 0.0
      %453 = vmatmul.mubr.f32.gmra.mrb[0].mxu0 %v363
      %v454 = vpop.f32.mrb[0].mxu0
      %v455 = vadd.f32 0.0, %v454
      %v456 = vpop.f32.mrb[0].mxu0
      %457 = vmatprep.mubr.f32.mxu0 0.0
      %458 = vmatmul.mubr.f32.gmra.mrb[0].mxu0 %v364
      %v459 = vpop.f32.mrb[0].mxu0
      %v460 = vadd.f32 0.0, %v459
      %v461 = vpop.f32.mrb[0].mxu0
      %462 = vmatprep.mubr.f32.mxu0 0.0
      %463 = vmatmul.mubr.f32.gmra.mrb[0].mxu0 %v365
      %v464 = vpop.f32.mrb[0].mxu0
      %v465 = vadd.f32 0.0, %v464
      %v466 = vpop.f32.mrb[0].mxu0
      %467 = vmatprep.mubr.f32.mxu0 0.0
      %468 = vmatmul.mubr.f32.gmra.mrb[0].mxu0 %v366
      %v469 = vpop.f32.mrb[0].mxu0
      %v470 = vadd.f32 0.0, %v469
      %v471 = vpop.f32.mrb[0].mxu0
      %472 = vmatprep.mubr.f32.mxu0 0.0
      %473 = vmatmul.mubr.f32.gmra.mrb[0].mxu0 %v367
      %v474 = vpop.f32.mrb[0].mxu0
      %v475 = vadd.f32 0.0, %v474
      %v476 = vpop.f32.mrb[0].mxu0
      %477 = vmatprep.mubr.f32.mxu0 0.0
      %478 = vmatmul.mubr.f32.gmra.mrb[0].mxu0 %v368
      %v479 = vpop.f32.mrb[0].mxu0
      %v480 = vadd.f32 0.0, %v479
      %v481 = vpop.f32.mrb[0].mxu0
      %482 = vmatprep.mubr.f32.mxu0 0.0
      %483 = vmatmul.mubr.f32.gmra.mrb[0].mxu0 %v369
      %v484 = vpop.f32.mrb[0].mxu0
      %v485 = vadd.f32 0.0, %v484
      %v486 = vpop.f32.mrb[0].mxu0
      %487 = vmatprep.mubr.f32.mxu0 0.0
      %488 = vmatmul.mubr.f32.gmra.mrb[0].mxu0 %v370
      %v489 = vpop.f32.mrb[0].mxu0
      %v490 = vadd.f32 0.0, %v489
      %v491 = vpop.f32.mrb[0].mxu0
      %492 = vdwg.mxu0
      %493 = vmatprep.subr.mxu0 0.0
      %494 = vmatpush1.msra.mxu0 %v347
      %495 = vmatprep.subr.mxu0 0.0
      %496 = vmatpush1.msra.mxu0 %v348
      %497 = vmatprep.subr.mxu0 0.0
      %498 = vmatpush1.msra.mxu0 %v349
      %499 = vmatprep.subr.mxu0 0.0
      %500 = vmatpush1.msra.mxu0 %v350
      %501 = vmatprep.subr.mxu0 0.0
      %502 = vmatpush1.msra.mxu0 %v351
      %503 = vmatprep.subr.mxu0 0.0
      %504 = vmatpush1.msra.mxu0 %v352
      %505 = vmatprep.subr.mxu0 0.0
      %506 = vmatpush1.msra.mxu0 %v353
      %507 = vmatprep.subr.mxu0 0.0
      %508 = vmatpush1.msra.mxu0 %v354
      %509 = vmatprep.subr.mxu0 0.0
      %510 = vmatpush1.msra.mxu0 %v355
      %511 = vmatprep.subr.mxu0 0.0
      %512 = vmatpush1.msra.mxu0 %v356
      %513 = vmatprep.subr.mxu0 0.0
      %514 = vmatpush1.msra.mxu0 %v357
      %515 = vmatprep.subr.mxu0 0.0
      %516 = vmatpush1.msra.mxu0 %v358
      %517 = vmatprep.subr.mxu0 0.0
      %518 = vmatpush1.msra.mxu0 %v359
      %519 = vmatprep.subr.mxu0 0.0
      %520 = vmatpush1.msra.mxu0 %v360
      %521 = vmatprep.subr.mxu0 0.0
      %522 = vmatpush1.msra.mxu0 %v361
      %523 = vmatprep.subr.mxu0 0.0
      %524 = vmatpush1.msra.mxu0 %v362
      %525 = vmatprep.subr.mxu0 0.0
      %526 = vmatpush1.msra.mxu0 0.0
      %527 = vmatprep.subr.mxu0 0.0
      %528 = vmatpush1.msra.mxu0 0.0
      %529 = vmatprep.subr.mxu0 0.0
      %530 = vmatpush1.msra.mxu0 0.0
      %531 = vmatprep.subr.mxu0 0.0
      %532 = vmatpush1.msra.mxu0 0.0
      %533 = vmatprep.subr.mxu0 0.0
      %534 = vmatpush1.msra.mxu0 0.0
      %535 = vmatprep.subr.mxu0 0.0
      %536 = vmatpush1.msra.mxu0 0.0
      %537 = vmatprep.subr.mxu0 0.0
      %538 = vmatpush1.msra.mxu0 0.0
      %539 = vmatprep.subr.mxu0 0.0
      %540 = vmatpush1.msra.mxu0 0.0
      %541 = vmatprep.subr.mxu0 0.0
      %542 = vmatpush1.msra.mxu0 0.0
      %543 = vmatprep.subr.mxu0 0.0
      %544 = vmatpush1.msra.mxu0 0.0
      %545 = vmatprep.subr.mxu0 0.0
      %546 = vmatpush1.msra.mxu0 0.0
      %547 = vmatprep.subr.mxu0 0.0
      %548 = vmatpush1.msra.mxu0 0.0
      %549 = vmatprep.subr.mxu0 0.0
      %550 = vmatpush1.msra.mxu0 0.0
      %551 = vmatprep.subr.mxu0 0.0
      %552 = vmatpush1.msra.mxu0 0.0
      %553 = vmatprep.subr.mxu0 0.0
      %554 = vmatpush1.msra.mxu0 0.0
      %555 = vmatprep.subr.mxu0 0.0
      %556 = vmatpush1.msra.mxu0 0.0
      %557 = vmatprep.mubr.f32.mxu0 0.0
      %558 = vmatmul.mubr.f32.gmra.mrb[0].mxu0 %v339
      %v559 = vpop.f32.mrb[0].mxu0
      %v560 = vadd.f32 %v455, %v559
      %v561 = vpop.f32.mrb[0].mxu0
      %562 = vmatprep.mubr.f32.mxu0 0.0
      %563 = vmatmul.mubr.f32.gmra.mrb[0].mxu0 %v340
      %v564 = vpop.f32.mrb[0].mxu0
      %v565 = vadd.f32 %v460, %v564
      %v566 = vpop.f32.mrb[0].mxu0
      %567 = vmatprep.mubr.f32.mxu0 0.0
      %568 = vmatmul.mubr.f32.gmra.mrb[0].mxu0 %v341
      %v569 = vpop.f32.mrb[0].mxu0
      %v570 = vadd.f32 %v465, %v569
      %v571 = vpop.f32.mrb[0].mxu0
      %572 = vmatprep.mubr.f32.mxu0 0.0
      %573 = vmatmul.mubr.f32.gmra.mrb[0].mxu0 %v342
      %v574 = vpop.f32.mrb[0].mxu0
      %v575 = vadd.f32 %v470, %v574
      %v576 = vpop.f32.mrb[0].mxu0
      %577 = vmatprep.mubr.f32.mxu0 0.0
      %578 = vmatmul.mubr.f32.gmra.mrb[0].mxu0 %v343
      %v579 = vpop.f32.mrb[0].mxu0
      %v580 = vadd.f32 %v475, %v579
      %v581 = vpop.f32.mrb[0].mxu0
      %582 = vmatprep.mubr.f32.mxu0 0.0
      %583 = vmatmul.mubr.f32.gmra.mrb[0].mxu0 %v344
      %v584 = vpop.f32.mrb[0].mxu0
      %v585 = vadd.f32 %v480, %v584
      %v586 = vpop.f32.mrb[0].mxu0
      %587 = vmatprep.mubr.f32.mxu0 0.0
      %588 = vmatmul.mubr.f32.gmra.mrb[0].mxu0 %v345
      %v589 = vpop.f32.mrb[0].mxu0
      %v590 = vadd.f32 %v485, %v589
      %v591 = vpop.f32.mrb[0].mxu0
      %592 = vmatprep.mubr.f32.mxu0 0.0
      %593 = vmatmul.mubr.f32.gmra.mrb[0].mxu0 %v346
      %v594 = vpop.f32.mrb[0].mxu0
      %v595 = vadd.f32 %v490, %v594
      %v596 = vpop.f32.mrb[0].mxu0
      %597 = vdwg.mxu0
      %v598 = vld [vmem:[#allocation2 + $0x2] sm:$0xff]
      %v599 = vld [vmem:[#allocation2 + $0x12] sm:$0xff]
      %v600 = vld [vmem:[#allocation2 + $0x22] sm:$0xff]
      %v601 = vld [vmem:[#allocation2 + $0x32] sm:$0xff]
      %v602 = vld [vmem:[#allocation2 + $0x42] sm:$0xff]
      %v603 = vld [vmem:[#allocation2 + $0x52] sm:$0xff]
      %v604 = vld [vmem:[#allocation2 + $0x62] sm:$0xff]
      %v605 = vld [vmem:[#allocation2 + $0x72] sm:$0xff]
      %s606 = scalar_lea.vmem %s1, 256
      %v607 = vld [vmem:[%s606] sm:$0xff]
      %v608 = vld [vmem:[%s606 + $0x8] sm:$0xff]
      %v609 = vld [vmem:[%s606 + $0x10] sm:$0xff]
      %v610 = vld [vmem:[%s606 + $0x18] sm:$0xff]
      %v611 = vld [vmem:[%s606 + $0x20] sm:$0xff]
      %v612 = vld [vmem:[%s606 + $0x28] sm:$0xff]
      %v613 = vld [vmem:[%s606 + $0x30] sm:$0xff]
      %v614 = vld [vmem:[%s606 + $0x38] sm:$0xff]
      %v615 = vld [vmem:[%s606 + $0x40] sm:$0xff]
      %v616 = vld [vmem:[%s606 + $0x48] sm:$0xff]
      %v617 = vld [vmem:[%s606 + $0x50] sm:$0xff]
      %v618 = vld [vmem:[%s606 + $0x58] sm:$0xff]
      %v619 = vld [vmem:[%s606 + $0x60] sm:$0xff]
      %v620 = vld [vmem:[%s606 + $0x68] sm:$0xff]
      %v621 = vld [vmem:[%s606 + $0x70] sm:$0xff]
      %v622 = vld [vmem:[%s606 + $0x78] sm:$0xff]
      %623 = vmatprep.subr.mxu0 0.0
      %624 = vmatpush1.msra.mxu0 %v607
      %625 = vmatprep.subr.mxu0 0.0
      %626 = vmatpush1.msra.mxu0 %v608
      %627 = vmatprep.subr.mxu0 0.0
      %628 = vmatpush1.msra.mxu0 %v609
      %629 = vmatprep.subr.mxu0 0.0
      %630 = vmatpush1.msra.mxu0 %v610
      %631 = vmatprep.subr.mxu0 0.0
      %632 = vmatpush1.msra.mxu0 %v611
      %633 = vmatprep.subr.mxu0 0.0
      %634 = vmatpush1.msra.mxu0 %v612
      %635 = vmatprep.subr.mxu0 0.0
      %636 = vmatpush1.msra.mxu0 %v613
      %637 = vmatprep.subr.mxu0 0.0
      %638 = vmatpush1.msra.mxu0 %v614
      %639 = vmatprep.subr.mxu0 0.0
      %640 = vmatpush1.msra.mxu0 %v615
      %641 = vmatprep.subr.mxu0 0.0
      %642 = vmatpush1.msra.mxu0 %v616
      %643 = vmatprep.subr.mxu0 0.0
      %644 = vmatpush1.msra.mxu0 %v617
      %645 = vmatprep.subr.mxu0 0.0
      %646 = vmatpush1.msra.mxu0 %v618
      %647 = vmatprep.subr.mxu0 0.0
      %648 = vmatpush1.msra.mxu0 %v619
      %649 = vmatprep.subr.mxu0 0.0
      %650 = vmatpush1.msra.mxu0 %v620
      %651 = vmatprep.subr.mxu0 0.0
      %652 = vmatpush1.msra.mxu0 %v621
      %653 = vmatprep.subr.mxu0 0.0
      %654 = vmatpush1.msra.mxu0 %v622
      %655 = vmatprep.subr.mxu0 0.0
      %656 = vmatpush1.msra.mxu0 0.0
      %657 = vmatprep.subr.mxu0 0.0
      %658 = vmatpush1.msra.mxu0 0.0
      %659 = vmatprep.subr.mxu0 0.0
      %660 = vmatpush1.msra.mxu0 0.0
      %661 = vmatprep.subr.mxu0 0.0
      %662 = vmatpush1.msra.mxu0 0.0
      %663 = vmatprep.subr.mxu0 0.0
      %664 = vmatpush1.msra.mxu0 0.0
      %665 = vmatprep.subr.mxu0 0.0
      %666 = vmatpush1.msra.mxu0 0.0
      %667 = vmatprep.subr.mxu0 0.0
      %668 = vmatpush1.msra.mxu0 0.0
      %669 = vmatprep.subr.mxu0 0.0
      %670 = vmatpush1.msra.mxu0 0.0
      %671 = vmatprep.subr.mxu0 0.0
      %672 = vmatpush1.msra.mxu0 0.0
      %673 = vmatprep.subr.mxu0 0.0
      %674 = vmatpush1.msra.mxu0 0.0
      %675 = vmatprep.subr.mxu0 0.0
      %676 = vmatpush1.msra.mxu0 0.0
      %677 = vmatprep.subr.mxu0 0.0
      %678 = vmatpush1.msra.mxu0 0.0
      %679 = vmatprep.subr.mxu0 0.0
      %680 = vmatpush1.msra.mxu0 0.0
      %681 = vmatprep.subr.mxu0 0.0
      %682 = vmatpush1.msra.mxu0 0.0
      %683 = vmatprep.subr.mxu0 0.0
      %684 = vmatpush1.msra.mxu0 0.0
      %685 = vmatprep.subr.mxu0 0.0
      %686 = vmatpush1.msra.mxu0 0.0
      %687 = vmatprep.mubr.f32.mxu0 0.0
      %688 = vmatmul.mubr.f32.gmra.mrb[0].mxu0 %v598
      %v689 = vpop.f32.mrb[0].mxu0
      %v690 = vadd.f32 0.0, %v689
      %v691 = vpop.f32.mrb[0].mxu0
      %692 = vmatprep.mubr.f32.mxu0 0.0
      %693 = vmatmul.mubr.f32.gmra.mrb[0].mxu0 %v599
      %v694 = vpop.f32.mrb[0].mxu0
      %v695 = vadd.f32 0.0, %v694
      %v696 = vpop.f32.mrb[0].mxu0
      %697 = vmatprep.mubr.f32.mxu0 0.0
      %698 = vmatmul.mubr.f32.gmra.mrb[0].mxu0 %v600
      %v699 = vpop.f32.mrb[0].mxu0
      %v700 = vadd.f32 0.0, %v699
      %v701 = vpop.f32.mrb[0].mxu0
      %702 = vmatprep.mubr.f32.mxu0 0.0
      %703 = vmatmul.mubr.f32.gmra.mrb[0].mxu0 %v601
      %v704 = vpop.f32.mrb[0].mxu0
      %v705 = vadd.f32 0.0, %v704
      %v706 = vpop.f32.mrb[0].mxu0
      %707 = vmatprep.mubr.f32.mxu0 0.0
      %708 = vmatmul.mubr.f32.gmra.mrb[0].mxu0 %v602
      %v709 = vpop.f32.mrb[0].mxu0
      %v710 = vadd.f32 0.0, %v709
      %v711 = vpop.f32.mrb[0].mxu0
      %712 = vmatprep.mubr.f32.mxu0 0.0
      %713 = vmatmul.mubr.f32.gmra.mrb[0].mxu0 %v603
      %v714 = vpop.f32.mrb[0].mxu0
      %v715 = vadd.f32 0.0, %v714
      %v716 = vpop.f32.mrb[0].mxu0
      %717 = vmatprep.mubr.f32.mxu0 0.0
      %718 = vmatmul.mubr.f32.gmra.mrb[0].mxu0 %v604
      %v719 = vpop.f32.mrb[0].mxu0
      %v720 = vadd.f32 0.0, %v719
      %v721 = vpop.f32.mrb[0].mxu0
      %722 = vmatprep.mubr.f32.mxu0 0.0
      %723 = vmatmul.mubr.f32.gmra.mrb[0].mxu0 %v605
      %v724 = vpop.f32.mrb[0].mxu0
      %v725 = vadd.f32 0.0, %v724
      %v726 = vpop.f32.mrb[0].mxu0
      %727 = vdwg.mxu0
      %v728 = vadd.f32 %v560, %v690
      %v729 = vadd.f32 %v565, %v695
      %v730 = vadd.f32 %v570, %v700
      %v731 = vadd.f32 %v575, %v705
      %v732 = vadd.f32 %v580, %v710
      %v733 = vadd.f32 %v585, %v715
      %v734 = vadd.f32 %v590, %v720
      %v735 = vadd.f32 %v595, %v725
      %v736 = vld [vmem:[%s287] sm:$0xff]
      %v737 = vld [vmem:[%s287 + $0x10] sm:$0xff]
      %v738 = vld [vmem:[%s287 + $0x20] sm:$0xff]
      %v739 = vld [vmem:[%s287 + $0x30] sm:$0xff]
      %v740 = vld [vmem:[%s287 + $0x40] sm:$0xff]
      %v741 = vld [vmem:[%s287 + $0x50] sm:$0xff]
      %v742 = vld [vmem:[%s287 + $0x60] sm:$0xff]
      %v743 = vld [vmem:[%s287 + $0x70] sm:$0xff]
      %s744 = scalar_lea.vmem %s1, 384
      %v745 = vld [vmem:[%s744] sm:$0xff]
      %v746 = vld [vmem:[%s744 + $0x8] sm:$0xff]
      %v747 = vld [vmem:[%s744 + $0x10] sm:$0xff]
      %v748 = vld [vmem:[%s744 + $0x18] sm:$0xff]
      %v749 = vld [vmem:[%s744 + $0x20] sm:$0xff]
      %v750 = vld [vmem:[%s744 + $0x28] sm:$0xff]
      %v751 = vld [vmem:[%s744 + $0x30] sm:$0xff]
      %v752 = vld [vmem:[%s744 + $0x38] sm:$0xff]
      %v753 = vld [vmem:[%s744 + $0x40] sm:$0xff]
      %v754 = vld [vmem:[%s744 + $0x48] sm:$0xff]
      %v755 = vld [vmem:[%s744 + $0x50] sm:$0xff]
      %v756 = vld [vmem:[%s744 + $0x58] sm:$0xff]
      %v757 = vld [vmem:[%s744 + $0x60] sm:$0xff]
      %v758 = vld [vmem:[%s744 + $0x68] sm:$0xff]
      %v759 = vld [vmem:[%s744 + $0x70] sm:$0xff]
      %v760 = vld [vmem:[%s744 + $0x78] sm:$0xff]
      %761 = vmatprep.subr.mxu0 0.0
      %762 = vmatpush1.msra.mxu0 %v745
      %763 = vmatprep.subr.mxu0 0.0
      %764 = vmatpush1.msra.mxu0 %v746
      %765 = vmatprep.subr.mxu0 0.0
      %766 = vmatpush1.msra.mxu0 %v747
      %767 = vmatprep.subr.mxu0 0.0
      %768 = vmatpush1.msra.mxu0 %v748
      %769 = vmatprep.subr.mxu0 0.0
      %770 = vmatpush1.msra.mxu0 %v749
      %771 = vmatprep.subr.mxu0 0.0
      %772 = vmatpush1.msra.mxu0 %v750
      %773 = vmatprep.subr.mxu0 0.0
      %774 = vmatpush1.msra.mxu0 %v751
      %775 = vmatprep.subr.mxu0 0.0
      %776 = vmatpush1.msra.mxu0 %v752
      %777 = vmatprep.subr.mxu0 0.0
      %778 = vmatpush1.msra.mxu0 %v753
      %779 = vmatprep.subr.mxu0 0.0
      %780 = vmatpush1.msra.mxu0 %v754
      %781 = vmatprep.subr.mxu0 0.0
      %782 = vmatpush1.msra.mxu0 %v755
      %783 = vmatprep.subr.mxu0 0.0
      %784 = vmatpush1.msra.mxu0 %v756
      %785 = vmatprep.subr.mxu0 0.0
      %786 = vmatpush1.msra.mxu0 %v757
      %787 = vmatprep.subr.mxu0 0.0
      %788 = vmatpush1.msra.mxu0 %v758
      %789 = vmatprep.subr.mxu0 0.0
      %790 = vmatpush1.msra.mxu0 %v759
      %791 = vmatprep.subr.mxu0 0.0
      %792 = vmatpush1.msra.mxu0 %v760
      %793 = vmatprep.subr.mxu0 0.0
      %794 = vmatpush1.msra.mxu0 0.0
      %795 = vmatprep.subr.mxu0 0.0
      %796 = vmatpush1.msra.mxu0 0.0
      %797 = vmatprep.subr.mxu0 0.0
      %798 = vmatpush1.msra.mxu0 0.0
      %799 = vmatprep.subr.mxu0 0.0
      %800 = vmatpush1.msra.mxu0 0.0
      %801 = vmatprep.subr.mxu0 0.0
      %802 = vmatpush1.msra.mxu0 0.0
      %803 = vmatprep.subr.mxu0 0.0
      %804 = vmatpush1.msra.mxu0 0.0
      %805 = vmatprep.subr.mxu0 0.0
      %806 = vmatpush1.msra.mxu0 0.0
      %807 = vmatprep.subr.mxu0 0.0
      %808 = vmatpush1.msra.mxu0 0.0
      %809 = vmatprep.subr.mxu0 0.0
      %810 = vmatpush1.msra.mxu0 0.0
      %811 = vmatprep.subr.mxu0 0.0
      %812 = vmatpush1.msra.mxu0 0.0
      %813 = vmatprep.subr.mxu0 0.0
      %814 = vmatpush1.msra.mxu0 0.0
      %815 = vmatprep.subr.mxu0 0.0
      %816 = vmatpush1.msra.mxu0 0.0
      %817 = vmatprep.subr.mxu0 0.0
      %818 = vmatpush1.msra.mxu0 0.0
      %819 = vmatprep.subr.mxu0 0.0
      %820 = vmatpush1.msra.mxu0 0.0
      %821 = vmatprep.subr.mxu0 0.0
      %822 = vmatpush1.msra.mxu0 0.0
      %823 = vmatprep.subr.mxu0 0.0
      %824 = vmatpush1.msra.mxu0 0.0
      %825 = vmatprep.mubr.f32.mxu0 0.0
      %826 = vmatmul.mubr.f32.gmra.mrb[0].mxu0 %v736
      %v827 = vpop.f32.mrb[0].mxu0
      %v828 = vadd.f32 0.0, %v827
      %v829 = vpop.f32.mrb[0].mxu0
      %830 = vmatprep.mubr.f32.mxu0 0.0
      %831 = vmatmul.mubr.f32.gmra.mrb[0].mxu0 %v737
      %v832 = vpop.f32.mrb[0].mxu0
      %v833 = vadd.f32 0.0, %v832
      %v834 = vpop.f32.mrb[0].mxu0
      %835 = vmatprep.mubr.f32.mxu0 0.0
      %836 = vmatmul.mubr.f32.gmra.mrb[0].mxu0 %v738
      %v837 = vpop.f32.mrb[0].mxu0
      %v838 = vadd.f32 0.0, %v837
      %v839 = vpop.f32.mrb[0].mxu0
      %840 = vmatprep.mubr.f32.mxu0 0.0
      %841 = vmatmul.mubr.f32.gmra.mrb[0].mxu0 %v739
      %v842 = vpop.f32.mrb[0].mxu0
      %v843 = vadd.f32 0.0, %v842
      %v844 = vpop.f32.mrb[0].mxu0
      %845 = vmatprep.mubr.f32.mxu0 0.0
      %846 = vmatmul.mubr.f32.gmra.mrb[0].mxu0 %v740
      %v847 = vpop.f32.mrb[0].mxu0
      %v848 = vadd.f32 0.0, %v847
      %v849 = vpop.f32.mrb[0].mxu0
      %850 = vmatprep.mubr.f32.mxu0 0.0
      %851 = vmatmul.mubr.f32.gmra.mrb[0].mxu0 %v741
      %v852 = vpop.f32.mrb[0].mxu0
      %v853 = vadd.f32 0.0, %v852
      %v854 = vpop.f32.mrb[0].mxu0
      %855 = vmatprep.mubr.f32.mxu0 0.0
      %856 = vmatmul.mubr.f32.gmra.mrb[0].mxu0 %v742
      %v857 = vpop.f32.mrb[0].mxu0
      %v858 = vadd.f32 0.0, %v857
      %v859 = vpop.f32.mrb[0].mxu0
      %860 = vmatprep.mubr.f32.mxu0 0.0
      %861 = vmatmul.mubr.f32.gmra.mrb[0].mxu0 %v743
      %v862 = vpop.f32.mrb[0].mxu0
      %v863 = vadd.f32 0.0, %v862
      %v864 = vpop.f32.mrb[0].mxu0
      %865 = vdwg.mxu0
      %v866 = vadd.f32 %v728, %v828
      %v867 = vadd.f32 %v729, %v833
      %v868 = vadd.f32 %v730, %v838
      %v869 = vadd.f32 %v731, %v843
      %v870 = vadd.f32 %v732, %v848
      %v871 = vadd.f32 %v733, %v853
      %v872 = vadd.f32 %v734, %v858
      %v873 = vadd.f32 %v735, %v863
      %v874 = vld [vmem:[%s287 + $0x1] sm:$0xff]
      %v875 = vld [vmem:[%s287 + $0x11] sm:$0xff]
      %v876 = vld [vmem:[%s287 + $0x21] sm:$0xff]
      %v877 = vld [vmem:[%s287 + $0x31] sm:$0xff]
      %v878 = vld [vmem:[%s287 + $0x41] sm:$0xff]
      %v879 = vld [vmem:[%s287 + $0x51] sm:$0xff]
      %v880 = vld [vmem:[%s287 + $0x61] sm:$0xff]
      %v881 = vld [vmem:[%s287 + $0x71] sm:$0xff]
      %s882 = scalar_lea.vmem %s1, 512
      %v883 = vld [vmem:[%s882] sm:$0xff]
      %v884 = vld [vmem:[%s882 + $0x8] sm:$0xff]
      %v885 = vld [vmem:[%s882 + $0x10] sm:$0xff]
      %v886 = vld [vmem:[%s882 + $0x18] sm:$0xff]
      %v887 = vld [vmem:[%s882 + $0x20] sm:$0xff]
      %v888 = vld [vmem:[%s882 + $0x28] sm:$0xff]
      %v889 = vld [vmem:[%s882 + $0x30] sm:$0xff]
      %v890 = vld [vmem:[%s882 + $0x38] sm:$0xff]
      %v891 = vld [vmem:[%s882 + $0x40] sm:$0xff]
      %v892 = vld [vmem:[%s882 + $0x48] sm:$0xff]
      %v893 = vld [vmem:[%s882 + $0x50] sm:$0xff]
      %v894 = vld [vmem:[%s882 + $0x58] sm:$0xff]
      %v895 = vld [vmem:[%s882 + $0x60] sm:$0xff]
      %v896 = vld [vmem:[%s882 + $0x68] sm:$0xff]
      %v897 = vld [vmem:[%s882 + $0x70] sm:$0xff]
      %v898 = vld [vmem:[%s882 + $0x78] sm:$0xff]
      %899 = vmatprep.subr.mxu0 0.0
      %900 = vmatpush1.msra.mxu0 %v883
      %901 = vmatprep.subr.mxu0 0.0
      %902 = vmatpush1.msra.mxu0 %v884
      %903 = vmatprep.subr.mxu0 0.0
      %904 = vmatpush1.msra.mxu0 %v885
      %905 = vmatprep.subr.mxu0 0.0
      %906 = vmatpush1.msra.mxu0 %v886
      %907 = vmatprep.subr.mxu0 0.0
      %908 = vmatpush1.msra.mxu0 %v887
      %909 = vmatprep.subr.mxu0 0.0
      %910 = vmatpush1.msra.mxu0 %v888
      %911 = vmatprep.subr.mxu0 0.0
      %912 = vmatpush1.msra.mxu0 %v889
      %913 = vmatprep.subr.mxu0 0.0
      %914 = vmatpush1.msra.mxu0 %v890
      %915 = vmatprep.subr.mxu0 0.0
      %916 = vmatpush1.msra.mxu0 %v891
      %917 = vmatprep.subr.mxu0 0.0
      %918 = vmatpush1.msra.mxu0 %v892
      %919 = vmatprep.subr.mxu0 0.0
      %920 = vmatpush1.msra.mxu0 %v893
      %921 = vmatprep.subr.mxu0 0.0
      %922 = vmatpush1.msra.mxu0 %v894
      %923 = vmatprep.subr.mxu0 0.0
      %924 = vmatpush1.msra.mxu0 %v895
      %925 = vmatprep.subr.mxu0 0.0
      %926 = vmatpush1.msra.mxu0 %v896
      %927 = vmatprep.subr.mxu0 0.0
      %928 = vmatpush1.msra.mxu0 %v897
      %929 = vmatprep.subr.mxu0 0.0
      %930 = vmatpush1.msra.mxu0 %v898
      %931 = vmatprep.subr.mxu0 0.0
      %932 = vmatpush1.msra.mxu0 0.0
      %933 = vmatprep.subr.mxu0 0.0
      %934 = vmatpush1.msra.mxu0 0.0
      %935 = vmatprep.subr.mxu0 0.0
      %936 = vmatpush1.msra.mxu0 0.0
      %937 = vmatprep.subr.mxu0 0.0
      %938 = vmatpush1.msra.mxu0 0.0
      %939 = vmatprep.subr.mxu0 0.0
      %940 = vmatpush1.msra.mxu0 0.0
      %941 = vmatprep.subr.mxu0 0.0
      %942 = vmatpush1.msra.mxu0 0.0
      %943 = vmatprep.subr.mxu0 0.0
      %944 = vmatpush1.msra.mxu0 0.0
      %945 = vmatprep.subr.mxu0 0.0
      %946 = vmatpush1.msra.mxu0 0.0
      %947 = vmatprep.subr.mxu0 0.0
      %948 = vmatpush1.msra.mxu0 0.0
      %949 = vmatprep.subr.mxu0 0.0
      %950 = vmatpush1.msra.mxu0 0.0
      %951 = vmatprep.subr.mxu0 0.0
      %952 = vmatpush1.msra.mxu0 0.0
      %953 = vmatprep.subr.mxu0 0.0
      %954 = vmatpush1.msra.mxu0 0.0
      %955 = vmatprep.subr.mxu0 0.0
      %956 = vmatpush1.msra.mxu0 0.0
      %957 = vmatprep.subr.mxu0 0.0
      %958 = vmatpush1.msra.mxu0 0.0
      %959 = vmatprep.subr.mxu0 0.0
      %960 = vmatpush1.msra.mxu0 0.0
      %961 = vmatprep.subr.mxu0 0.0
      %962 = vmatpush1.msra.mxu0 0.0
      %963 = vmatprep.mubr.f32.mxu0 0.0
      %964 = vmatmul.mubr.f32.gmra.mrb[0].mxu0 %v874
      %v965 = vpop.f32.mrb[0].mxu0
      %v966 = vadd.f32 0.0, %v965
      %v967 = vpop.f32.mrb[0].mxu0
      %968 = vmatprep.mubr.f32.mxu0 0.0
      %969 = vmatmul.mubr.f32.gmra.mrb[0].mxu0 %v875
      %v970 = vpop.f32.mrb[0].mxu0
      %v971 = vadd.f32 0.0, %v970
      %v972 = vpop.f32.mrb[0].mxu0
      %973 = vmatprep.mubr.f32.mxu0 0.0
      %974 = vmatmul.mubr.f32.gmra.mrb[0].mxu0 %v876
      %v975 = vpop.f32.mrb[0].mxu0
      %v976 = vadd.f32 0.0, %v975
      %v977 = vpop.f32.mrb[0].mxu0
      %978 = vmatprep.mubr.f32.mxu0 0.0
      %979 = vmatmul.mubr.f32.gmra.mrb[0].mxu0 %v877
      %v980 = vpop.f32.mrb[0].mxu0
      %v981 = vadd.f32 0.0, %v980
      %v982 = vpop.f32.mrb[0].mxu0
      %983 = vmatprep.mubr.f32.mxu0 0.0
      %984 = vmatmul.mubr.f32.gmra.mrb[0].mxu0 %v878
      %v985 = vpop.f32.mrb[0].mxu0
      %v986 = vadd.f32 0.0, %v985
      %v987 = vpop.f32.mrb[0].mxu0
      %988 = vmatprep.mubr.f32.mxu0 0.0
      %989 = vmatmul.mubr.f32.gmra.mrb[0].mxu0 %v879
      %v990 = vpop.f32.mrb[0].mxu0
      %v991 = vadd.f32 0.0, %v990
      %v992 = vpop.f32.mrb[0].mxu0
      %993 = vmatprep.mubr.f32.mxu0 0.0
      %994 = vmatmul.mubr.f32.gmra.mrb[0].mxu0 %v880
      %v995 = vpop.f32.mrb[0].mxu0
      %v996 = vadd.f32 0.0, %v995
      %v997 = vpop.f32.mrb[0].mxu0
      %998 = vmatprep.mubr.f32.mxu0 0.0
      %999 = vmatmul.mubr.f32.gmra.mrb[0].mxu0 %v881
      %v1000 = vpop.f32.mrb[0].mxu0
      %v1001 = vadd.f32 0.0, %v1000
      %v1002 = vpop.f32.mrb[0].mxu0
      %1003 = vdwg.mxu0
      %v1004 = vadd.f32 %v866, %v966
      %v1005 = vadd.f32 %v867, %v971
      %v1006 = vadd.f32 %v868, %v976
      %v1007 = vadd.f32 %v869, %v981
      %v1008 = vadd.f32 %v870, %v986
      %v1009 = vadd.f32 %v871, %v991
      %v1010 = vadd.f32 %v872, %v996
      %v1011 = vadd.f32 %v873, %v1001
      %v1012 = vld [vmem:[%s287 + $0x2] sm:$0xff]
      %v1013 = vld [vmem:[%s287 + $0x12] sm:$0xff]
      %v1014 = vld [vmem:[%s287 + $0x22] sm:$0xff]
      %v1015 = vld [vmem:[%s287 + $0x32] sm:$0xff]
      %v1016 = vld [vmem:[%s287 + $0x42] sm:$0xff]
      %v1017 = vld [vmem:[%s287 + $0x52] sm:$0xff]
      %v1018 = vld [vmem:[%s287 + $0x62] sm:$0xff]
      %v1019 = vld [vmem:[%s287 + $0x72] sm:$0xff]
      %s1020 = scalar_lea.vmem %s1, 640
      %v1021 = vld [vmem:[%s1020] sm:$0xff]
      %v1022 = vld [vmem:[%s1020 + $0x8] sm:$0xff]
      %v1023 = vld [vmem:[%s1020 + $0x10] sm:$0xff]
      %v1024 = vld [vmem:[%s1020 + $0x18] sm:$0xff]
      %v1025 = vld [vmem:[%s1020 + $0x20] sm:$0xff]
      %v1026 = vld [vmem:[%s1020 + $0x28] sm:$0xff]
      %v1027 = vld [vmem:[%s1020 + $0x30] sm:$0xff]
      %v1028 = vld [vmem:[%s1020 + $0x38] sm:$0xff]
      %v1029 = vld [vmem:[%s1020 + $0x40] sm:$0xff]
      %v1030 = vld [vmem:[%s1020 + $0x48] sm:$0xff]
      %v1031 = vld [vmem:[%s1020 + $0x50] sm:$0xff]
      %v1032 = vld [vmem:[%s1020 + $0x58] sm:$0xff]
      %v1033 = vld [vmem:[%s1020 + $0x60] sm:$0xff]
      %v1034 = vld [vmem:[%s1020 + $0x68] sm:$0xff]
      %v1035 = vld [vmem:[%s1020 + $0x70] sm:$0xff]
      %v1036 = vld [vmem:[%s1020 + $0x78] sm:$0xff]
      %1037 = vmatprep.subr.mxu0 0.0
      %1038 = vmatpush1.msra.mxu0 %v1021
      %1039 = vmatprep.subr.mxu0 0.0
      %1040 = vmatpush1.msra.mxu0 %v1022
      %1041 = vmatprep.subr.mxu0 0.0
      %1042 = vmatpush1.msra.mxu0 %v1023
      %1043 = vmatprep.subr.mxu0 0.0
      %1044 = vmatpush1.msra.mxu0 %v1024
      %1045 = vmatprep.subr.mxu0 0.0
      %1046 = vmatpush1.msra.mxu0 %v1025
      %1047 = vmatprep.subr.mxu0 0.0
      %1048 = vmatpush1.msra.mxu0 %v1026
      %1049 = vmatprep.subr.mxu0 0.0
      %1050 = vmatpush1.msra.mxu0 %v1027
      %1051 = vmatprep.subr.mxu0 0.0
      %1052 = vmatpush1.msra.mxu0 %v1028
      %1053 = vmatprep.subr.mxu0 0.0
      %1054 = vmatpush1.msra.mxu0 %v1029
      %1055 = vmatprep.subr.mxu0 0.0
      %1056 = vmatpush1.msra.mxu0 %v1030
      %1057 = vmatprep.subr.mxu0 0.0
      %1058 = vmatpush1.msra.mxu0 %v1031
      %1059 = vmatprep.subr.mxu0 0.0
      %1060 = vmatpush1.msra.mxu0 %v1032
      %1061 = vmatprep.subr.mxu0 0.0
      %1062 = vmatpush1.msra.mxu0 %v1033
      %1063 = vmatprep.subr.mxu0 0.0
      %1064 = vmatpush1.msra.mxu0 %v1034
      %1065 = vmatprep.subr.mxu0 0.0
      %1066 = vmatpush1.msra.mxu0 %v1035
      %1067 = vmatprep.subr.mxu0 0.0
      %1068 = vmatpush1.msra.mxu0 %v1036
      %1069 = vmatprep.subr.mxu0 0.0
      %1070 = vmatpush1.msra.mxu0 0.0
      %1071 = vmatprep.subr.mxu0 0.0
      %1072 = vmatpush1.msra.mxu0 0.0
      %1073 = vmatprep.subr.mxu0 0.0
      %1074 = vmatpush1.msra.mxu0 0.0
      %1075 = vmatprep.subr.mxu0 0.0
      %1076 = vmatpush1.msra.mxu0 0.0
      %1077 = vmatprep.subr.mxu0 0.0
      %1078 = vmatpush1.msra.mxu0 0.0
      %1079 = vmatprep.subr.mxu0 0.0
      %1080 = vmatpush1.msra.mxu0 0.0
      %1081 = vmatprep.subr.mxu0 0.0
      %1082 = vmatpush1.msra.mxu0 0.0
      %1083 = vmatprep.subr.mxu0 0.0
      %1084 = vmatpush1.msra.mxu0 0.0
      %1085 = vmatprep.subr.mxu0 0.0
      %1086 = vmatpush1.msra.mxu0 0.0
      %1087 = vmatprep.subr.mxu0 0.0
      %1088 = vmatpush1.msra.mxu0 0.0
      %1089 = vmatprep.subr.mxu0 0.0
      %1090 = vmatpush1.msra.mxu0 0.0
      %1091 = vmatprep.subr.mxu0 0.0
      %1092 = vmatpush1.msra.mxu0 0.0
      %1093 = vmatprep.subr.mxu0 0.0
      %1094 = vmatpush1.msra.mxu0 0.0
      %1095 = vmatprep.subr.mxu0 0.0
      %1096 = vmatpush1.msra.mxu0 0.0
      %1097 = vmatprep.subr.mxu0 0.0
      %1098 = vmatpush1.msra.mxu0 0.0
      %1099 = vmatprep.subr.mxu0 0.0
      %1100 = vmatpush1.msra.mxu0 0.0
      %1101 = vmatprep.mubr.f32.mxu0 0.0
      %1102 = vmatmul.mubr.f32.gmra.mrb[0].mxu0 %v1012
      %v1103 = vpop.f32.mrb[0].mxu0
      %v1104 = vadd.f32 0.0, %v1103
      %v1105 = vpop.f32.mrb[0].mxu0
      %1106 = vmatprep.mubr.f32.mxu0 0.0
      %1107 = vmatmul.mubr.f32.gmra.mrb[0].mxu0 %v1013
      %v1108 = vpop.f32.mrb[0].mxu0
      %v1109 = vadd.f32 0.0, %v1108
      %v1110 = vpop.f32.mrb[0].mxu0
      %1111 = vmatprep.mubr.f32.mxu0 0.0
      %1112 = vmatmul.mubr.f32.gmra.mrb[0].mxu0 %v1014
      %v1113 = vpop.f32.mrb[0].mxu0
      %v1114 = vadd.f32 0.0, %v1113
      %v1115 = vpop.f32.mrb[0].mxu0
      %1116 = vmatprep.mubr.f32.mxu0 0.0
      %1117 = vmatmul.mubr.f32.gmra.mrb[0].mxu0 %v1015
      %v1118 = vpop.f32.mrb[0].mxu0
      %v1119 = vadd.f32 0.0, %v1118
      %v1120 = vpop.f32.mrb[0].mxu0
      %1121 = vmatprep.mubr.f32.mxu0 0.0
      %1122 = vmatmul.mubr.f32.gmra.mrb[0].mxu0 %v1016
      %v1123 = vpop.f32.mrb[0].mxu0
      %v1124 = vadd.f32 0.0, %v1123
      %v1125 = vpop.f32.mrb[0].mxu0
      %1126 = vmatprep.mubr.f32.mxu0 0.0
      %1127 = vmatmul.mubr.f32.gmra.mrb[0].mxu0 %v1017
      %v1128 = vpop.f32.mrb[0].mxu0
      %v1129 = vadd.f32 0.0, %v1128
      %v1130 = vpop.f32.mrb[0].mxu0
      %1131 = vmatprep.mubr.f32.mxu0 0.0
      %1132 = vmatmul.mubr.f32.gmra.mrb[0].mxu0 %v1018
      %v1133 = vpop.f32.mrb[0].mxu0
      %v1134 = vadd.f32 0.0, %v1133
      %v1135 = vpop.f32.mrb[0].mxu0
      %1136 = vmatprep.mubr.f32.mxu0 0.0
      %1137 = vmatmul.mubr.f32.gmra.mrb[0].mxu0 %v1019
      %v1138 = vpop.f32.mrb[0].mxu0
      %v1139 = vadd.f32 0.0, %v1138
      %v1140 = vpop.f32.mrb[0].mxu0
      %1141 = vdwg.mxu0
      %v1142 = vadd.f32 %v1004, %v1104
      %v1143 = vadd.f32 %v1005, %v1109
      %v1144 = vadd.f32 %v1006, %v1114
      %v1145 = vadd.f32 %v1007, %v1119
      %v1146 = vadd.f32 %v1008, %v1124
      %v1147 = vadd.f32 %v1009, %v1129
      %v1148 = vadd.f32 %v1010, %v1134
      %v1149 = vadd.f32 %v1011, %v1139
      %s1150 = scalar_lea.vmem [#allocation2], 32
      %v1151 = vld [vmem:[%s1150] sm:$0xff]
      %v1152 = vld [vmem:[%s1150 + $0x10] sm:$0xff]
      %v1153 = vld [vmem:[%s1150 + $0x20] sm:$0xff]
      %v1154 = vld [vmem:[%s1150 + $0x30] sm:$0xff]
      %v1155 = vld [vmem:[%s1150 + $0x40] sm:$0xff]
      %v1156 = vld [vmem:[%s1150 + $0x50] sm:$0xff]
      %v1157 = vld [vmem:[%s1150 + $0x60] sm:$0xff]
      %v1158 = vld [vmem:[%s1150 + $0x70] sm:$0xff]
      %s1159 = scalar_lea.vmem %s1, 768
      %v1160 = vld [vmem:[%s1159] sm:$0xff]
      %v1161 = vld [vmem:[%s1159 + $0x8] sm:$0xff]
      %v1162 = vld [vmem:[%s1159 + $0x10] sm:$0xff]
      %v1163 = vld [vmem:[%s1159 + $0x18] sm:$0xff]
      %v1164 = vld [vmem:[%s1159 + $0x20] sm:$0xff]
      %v1165 = vld [vmem:[%s1159 + $0x28] sm:$0xff]
      %v1166 = vld [vmem:[%s1159 + $0x30] sm:$0xff]
      %v1167 = vld [vmem:[%s1159 + $0x38] sm:$0xff]
      %v1168 = vld [vmem:[%s1159 + $0x40] sm:$0xff]
      %v1169 = vld [vmem:[%s1159 + $0x48] sm:$0xff]
      %v1170 = vld [vmem:[%s1159 + $0x50] sm:$0xff]
      %v1171 = vld [vmem:[%s1159 + $0x58] sm:$0xff]
      %v1172 = vld [vmem:[%s1159 + $0x60] sm:$0xff]
      %v1173 = vld [vmem:[%s1159 + $0x68] sm:$0xff]
      %v1174 = vld [vmem:[%s1159 + $0x70] sm:$0xff]
      %v1175 = vld [vmem:[%s1159 + $0x78] sm:$0xff]
      %1176 = vmatprep.subr.mxu0 0.0
      %1177 = vmatpush1.msra.mxu0 %v1160
      %1178 = vmatprep.subr.mxu0 0.0
      %1179 = vmatpush1.msra.mxu0 %v1161
      %1180 = vmatprep.subr.mxu0 0.0
      %1181 = vmatpush1.msra.mxu0 %v1162
      %1182 = vmatprep.subr.mxu0 0.0
      %1183 = vmatpush1.msra.mxu0 %v1163
      %1184 = vmatprep.subr.mxu0 0.0
      %1185 = vmatpush1.msra.mxu0 %v1164
      %1186 = vmatprep.subr.mxu0 0.0
      %1187 = vmatpush1.msra.mxu0 %v1165
      %1188 = vmatprep.subr.mxu0 0.0
      %1189 = vmatpush1.msra.mxu0 %v1166
      %1190 = vmatprep.subr.mxu0 0.0
      %1191 = vmatpush1.msra.mxu0 %v1167
      %1192 = vmatprep.subr.mxu0 0.0
      %1193 = vmatpush1.msra.mxu0 %v1168
      %1194 = vmatprep.subr.mxu0 0.0
      %1195 = vmatpush1.msra.mxu0 %v1169
      %1196 = vmatprep.subr.mxu0 0.0
      %1197 = vmatpush1.msra.mxu0 %v1170
      %1198 = vmatprep.subr.mxu0 0.0
      %1199 = vmatpush1.msra.mxu0 %v1171
      %1200 = vmatprep.subr.mxu0 0.0
      %1201 = vmatpush1.msra.mxu0 %v1172
      %1202 = vmatprep.subr.mxu0 0.0
      %1203 = vmatpush1.msra.mxu0 %v1173
      %1204 = vmatprep.subr.mxu0 0.0
      %1205 = vmatpush1.msra.mxu0 %v1174
      %1206 = vmatprep.subr.mxu0 0.0
      %1207 = vmatpush1.msra.mxu0 %v1175
      %1208 = vmatprep.subr.mxu0 0.0
      %1209 = vmatpush1.msra.mxu0 0.0
      %1210 = vmatprep.subr.mxu0 0.0
      %1211 = vmatpush1.msra.mxu0 0.0
      %1212 = vmatprep.subr.mxu0 0.0
      %1213 = vmatpush1.msra.mxu0 0.0
      %1214 = vmatprep.subr.mxu0 0.0
      %1215 = vmatpush1.msra.mxu0 0.0
      %1216 = vmatprep.subr.mxu0 0.0
      %1217 = vmatpush1.msra.mxu0 0.0
      %1218 = vmatprep.subr.mxu0 0.0
      %1219 = vmatpush1.msra.mxu0 0.0
      %1220 = vmatprep.subr.mxu0 0.0
      %1221 = vmatpush1.msra.mxu0 0.0
      %1222 = vmatprep.subr.mxu0 0.0
      %1223 = vmatpush1.msra.mxu0 0.0
      %1224 = vmatprep.subr.mxu0 0.0
      %1225 = vmatpush1.msra.mxu0 0.0
      %1226 = vmatprep.subr.mxu0 0.0
      %1227 = vmatpush1.msra.mxu0 0.0
      %1228 = vmatprep.subr.mxu0 0.0
      %1229 = vmatpush1.msra.mxu0 0.0
      %1230 = vmatprep.subr.mxu0 0.0
      %1231 = vmatpush1.msra.mxu0 0.0
      %1232 = vmatprep.subr.mxu0 0.0
      %1233 = vmatpush1.msra.mxu0 0.0
      %1234 = vmatprep.subr.mxu0 0.0
      %1235 = vmatpush1.msra.mxu0 0.0
      %1236 = vmatprep.subr.mxu0 0.0
      %1237 = vmatpush1.msra.mxu0 0.0
      %1238 = vmatprep.subr.mxu0 0.0
      %1239 = vmatpush1.msra.mxu0 0.0
      %1240 = vmatprep.mubr.f32.mxu0 0.0
      %1241 = vmatmul.mubr.f32.gmra.mrb[0].mxu0 %v1151
      %v1242 = vpop.f32.mrb[0].mxu0
      %v1243 = vadd.f32 0.0, %v1242
      %v1244 = vpop.f32.mrb[0].mxu0
      %1245 = vmatprep.mubr.f32.mxu0 0.0
      %1246 = vmatmul.mubr.f32.gmra.mrb[0].mxu0 %v1152
      %v1247 = vpop.f32.mrb[0].mxu0
      %v1248 = vadd.f32 0.0, %v1247
      %v1249 = vpop.f32.mrb[0].mxu0
      %1250 = vmatprep.mubr.f32.mxu0 0.0
      %1251 = vmatmul.mubr.f32.gmra.mrb[0].mxu0 %v1153
      %v1252 = vpop.f32.mrb[0].mxu0
      %v1253 = vadd.f32 0.0, %v1252
      %v1254 = vpop.f32.mrb[0].mxu0
      %1255 = vmatprep.mubr.f32.mxu0 0.0
      %1256 = vmatmul.mubr.f32.gmra.mrb[0].mxu0 %v1154
      %v1257 = vpop.f32.mrb[0].mxu0
      %v1258 = vadd.f32 0.0, %v1257
      %v1259 = vpop.f32.mrb[0].mxu0
      %1260 = vmatprep.mubr.f32.mxu0 0.0
      %1261 = vmatmul.mubr.f32.gmra.mrb[0].mxu0 %v1155
      %v1262 = vpop.f32.mrb[0].mxu0
      %v1263 = vadd.f32 0.0, %v1262
      %v1264 = vpop.f32.mrb[0].mxu0
      %1265 = vmatprep.mubr.f32.mxu0 0.0
      %1266 = vmatmul.mubr.f32.gmra.mrb[0].mxu0 %v1156
      %v1267 = vpop.f32.mrb[0].mxu0
      %v1268 = vadd.f32 0.0, %v1267
      %v1269 = vpop.f32.mrb[0].mxu0
      %1270 = vmatprep.mubr.f32.mxu0 0.0
      %1271 = vmatmul.mubr.f32.gmra.mrb[0].mxu0 %v1157
      %v1272 = vpop.f32.mrb[0].mxu0
      %v1273 = vadd.f32 0.0, %v1272
      %v1274 = vpop.f32.mrb[0].mxu0
      %1275 = vmatprep.mubr.f32.mxu0 0.0
      %1276 = vmatmul.mubr.f32.gmra.mrb[0].mxu0 %v1158
      %v1277 = vpop.f32.mrb[0].mxu0
      %v1278 = vadd.f32 0.0, %v1277
      %v1279 = vpop.f32.mrb[0].mxu0
      %1280 = vdwg.mxu0
      %v1281 = vadd.f32 %v1142, %v1243
      %v1282 = vadd.f32 %v1143, %v1248
      %v1283 = vadd.f32 %v1144, %v1253
      %v1284 = vadd.f32 %v1145, %v1258
      %v1285 = vadd.f32 %v1146, %v1263
      %v1286 = vadd.f32 %v1147, %v1268
      %v1287 = vadd.f32 %v1148, %v1273
      %v1288 = vadd.f32 %v1149, %v1278
      %v1289 = vld [vmem:[%s1150 + $0x1] sm:$0xff]
      %v1290 = vld [vmem:[%s1150 + $0x11] sm:$0xff]
      %v1291 = vld [vmem:[%s1150 + $0x21] sm:$0xff]
      %v1292 = vld [vmem:[%s1150 + $0x31] sm:$0xff]
      %v1293 = vld [vmem:[%s1150 + $0x41] sm:$0xff]
      %v1294 = vld [vmem:[%s1150 + $0x51] sm:$0xff]
      %v1295 = vld [vmem:[%s1150 + $0x61] sm:$0xff]
      %v1296 = vld [vmem:[%s1150 + $0x71] sm:$0xff]
      %s1297 = scalar_lea.vmem %s1, 896
      %v1298 = vld [vmem:[%s1297] sm:$0xff]
      %v1299 = vld [vmem:[%s1297 + $0x8] sm:$0xff]
      %v1300 = vld [vmem:[%s1297 + $0x10] sm:$0xff]
      %v1301 = vld [vmem:[%s1297 + $0x18] sm:$0xff]
      %v1302 = vld [vmem:[%s1297 + $0x20] sm:$0xff]
      %v1303 = vld [vmem:[%s1297 + $0x28] sm:$0xff]
      %v1304 = vld [vmem:[%s1297 + $0x30] sm:$0xff]
      %v1305 = vld [vmem:[%s1297 + $0x38] sm:$0xff]
      %v1306 = vld [vmem:[%s1297 + $0x40] sm:$0xff]
      %v1307 = vld [vmem:[%s1297 + $0x48] sm:$0xff]
      %v1308 = vld [vmem:[%s1297 + $0x50] sm:$0xff]
      %v1309 = vld [vmem:[%s1297 + $0x58] sm:$0xff]
      %v1310 = vld [vmem:[%s1297 + $0x60] sm:$0xff]
      %v1311 = vld [vmem:[%s1297 + $0x68] sm:$0xff]
      %v1312 = vld [vmem:[%s1297 + $0x70] sm:$0xff]
      %v1313 = vld [vmem:[%s1297 + $0x78] sm:$0xff]
      %1314 = vmatprep.subr.mxu0 0.0
      %1315 = vmatpush1.msra.mxu0 %v1298
      %1316 = vmatprep.subr.mxu0 0.0
      %1317 = vmatpush1.msra.mxu0 %v1299
      %1318 = vmatprep.subr.mxu0 0.0
      %1319 = vmatpush1.msra.mxu0 %v1300
      %1320 = vmatprep.subr.mxu0 0.0
      %1321 = vmatpush1.msra.mxu0 %v1301
      %1322 = vmatprep.subr.mxu0 0.0
      %1323 = vmatpush1.msra.mxu0 %v1302
      %1324 = vmatprep.subr.mxu0 0.0
      %1325 = vmatpush1.msra.mxu0 %v1303
      %1326 = vmatprep.subr.mxu0 0.0
      %1327 = vmatpush1.msra.mxu0 %v1304
      %1328 = vmatprep.subr.mxu0 0.0
      %1329 = vmatpush1.msra.mxu0 %v1305
      %1330 = vmatprep.subr.mxu0 0.0
      %1331 = vmatpush1.msra.mxu0 %v1306
      %1332 = vmatprep.subr.mxu0 0.0
      %1333 = vmatpush1.msra.mxu0 %v1307
      %1334 = vmatprep.subr.mxu0 0.0
      %1335 = vmatpush1.msra.mxu0 %v1308
      %1336 = vmatprep.subr.mxu0 0.0
      %1337 = vmatpush1.msra.mxu0 %v1309
      %1338 = vmatprep.subr.mxu0 0.0
      %1339 = vmatpush1.msra.mxu0 %v1310
      %1340 = vmatprep.subr.mxu0 0.0
      %1341 = vmatpush1.msra.mxu0 %v1311
      %1342 = vmatprep.subr.mxu0 0.0
      %1343 = vmatpush1.msra.mxu0 %v1312
      %1344 = vmatprep.subr.mxu0 0.0
      %1345 = vmatpush1.msra.mxu0 %v1313
      %1346 = vmatprep.subr.mxu0 0.0
      %1347 = vmatpush1.msra.mxu0 0.0
      %1348 = vmatprep.subr.mxu0 0.0
      %1349 = vmatpush1.msra.mxu0 0.0
      %1350 = vmatprep.subr.mxu0 0.0
      %1351 = vmatpush1.msra.mxu0 0.0
      %1352 = vmatprep.subr.mxu0 0.0
      %1353 = vmatpush1.msra.mxu0 0.0
      %1354 = vmatprep.subr.mxu0 0.0
      %1355 = vmatpush1.msra.mxu0 0.0
      %1356 = vmatprep.subr.mxu0 0.0
      %1357 = vmatpush1.msra.mxu0 0.0
      %1358 = vmatprep.subr.mxu0 0.0
      %1359 = vmatpush1.msra.mxu0 0.0
      %1360 = vmatprep.subr.mxu0 0.0
      %1361 = vmatpush1.msra.mxu0 0.0
      %1362 = vmatprep.subr.mxu0 0.0
      %1363 = vmatpush1.msra.mxu0 0.0
      %1364 = vmatprep.subr.mxu0 0.0
      %1365 = vmatpush1.msra.mxu0 0.0
      %1366 = vmatprep.subr.mxu0 0.0
      %1367 = vmatpush1.msra.mxu0 0.0
      %1368 = vmatprep.subr.mxu0 0.0
      %1369 = vmatpush1.msra.mxu0 0.0
      %1370 = vmatprep.subr.mxu0 0.0
      %1371 = vmatpush1.msra.mxu0 0.0
      %1372 = vmatprep.subr.mxu0 0.0
      %1373 = vmatpush1.msra.mxu0 0.0
      %1374 = vmatprep.subr.mxu0 0.0
      %1375 = vmatpush1.msra.mxu0 0.0
      %1376 = vmatprep.subr.mxu0 0.0
      %1377 = vmatpush1.msra.mxu0 0.0
      %1378 = vmatprep.mubr.f32.mxu0 0.0
      %1379 = vmatmul.mubr.f32.gmra.mrb[0].mxu0 %v1289
      %v1380 = vpop.f32.mrb[0].mxu0
      %v1381 = vadd.f32 0.0, %v1380
      %v1382 = vpop.f32.mrb[0].mxu0
      %1383 = vmatprep.mubr.f32.mxu0 0.0
      %1384 = vmatmul.mubr.f32.gmra.mrb[0].mxu0 %v1290
      %v1385 = vpop.f32.mrb[0].mxu0
      %v1386 = vadd.f32 0.0, %v1385
      %v1387 = vpop.f32.mrb[0].mxu0
      %1388 = vmatprep.mubr.f32.mxu0 0.0
      %1389 = vmatmul.mubr.f32.gmra.mrb[0].mxu0 %v1291
      %v1390 = vpop.f32.mrb[0].mxu0
      %v1391 = vadd.f32 0.0, %v1390
      %v1392 = vpop.f32.mrb[0].mxu0
      %1393 = vmatprep.mubr.f32.mxu0 0.0
      %1394 = vmatmul.mubr.f32.gmra.mrb[0].mxu0 %v1292
      %v1395 = vpop.f32.mrb[0].mxu0
      %v1396 = vadd.f32 0.0, %v1395
      %v1397 = vpop.f32.mrb[0].mxu0
      %1398 = vmatprep.mubr.f32.mxu0 0.0
      %1399 = vmatmul.mubr.f32.gmra.mrb[0].mxu0 %v1293
      %v1400 = vpop.f32.mrb[0].mxu0
      %v1401 = vadd.f32 0.0, %v1400
      %v1402 = vpop.f32.mrb[0].mxu0
      %1403 = vmatprep.mubr.f32.mxu0 0.0
      %1404 = vmatmul.mubr.f32.gmra.mrb[0].mxu0 %v1294
      %v1405 = vpop.f32.mrb[0].mxu0
      %v1406 = vadd.f32 0.0, %v1405
      %v1407 = vpop.f32.mrb[0].mxu0
      %1408 = vmatprep.mubr.f32.mxu0 0.0
      %1409 = vmatmul.mubr.f32.gmra.mrb[0].mxu0 %v1295
      %v1410 = vpop.f32.mrb[0].mxu0
      %v1411 = vadd.f32 0.0, %v1410
      %v1412 = vpop.f32.mrb[0].mxu0
      %1413 = vmatprep.mubr.f32.mxu0 0.0
      %1414 = vmatmul.mubr.f32.gmra.mrb[0].mxu0 %v1296
      %v1415 = vpop.f32.mrb[0].mxu0
      %v1416 = vadd.f32 0.0, %v1415
      %v1417 = vpop.f32.mrb[0].mxu0
      %1418 = vdwg.mxu0
      %v1419 = vadd.f32 %v1281, %v1381
      %v1420 = vadd.f32 %v1282, %v1386
      %v1421 = vadd.f32 %v1283, %v1391
      %v1422 = vadd.f32 %v1284, %v1396
      %v1423 = vadd.f32 %v1285, %v1401
      %v1424 = vadd.f32 %v1286, %v1406
      %v1425 = vadd.f32 %v1287, %v1411
      %v1426 = vadd.f32 %v1288, %v1416
      %v1427 = vld [vmem:[%s1150 + $0x2] sm:$0xff]
      %v1428 = vld [vmem:[%s1150 + $0x12] sm:$0xff]
      %v1429 = vld [vmem:[%s1150 + $0x22] sm:$0xff]
      %v1430 = vld [vmem:[%s1150 + $0x32] sm:$0xff]
      %v1431 = vld [vmem:[%s1150 + $0x42] sm:$0xff]
      %v1432 = vld [vmem:[%s1150 + $0x52] sm:$0xff]
      %v1433 = vld [vmem:[%s1150 + $0x62] sm:$0xff]
      %v1434 = vld [vmem:[%s1150 + $0x72] sm:$0xff]
      %s1435 = scalar_lea.vmem %s1, 1024
      %v1436 = vld [vmem:[%s1435] sm:$0xff]
      %v1437 = vld [vmem:[%s1435 + $0x8] sm:$0xff]
      %v1438 = vld [vmem:[%s1435 + $0x10] sm:$0xff]
      %v1439 = vld [vmem:[%s1435 + $0x18] sm:$0xff]
      %v1440 = vld [vmem:[%s1435 + $0x20] sm:$0xff]
      %v1441 = vld [vmem:[%s1435 + $0x28] sm:$0xff]
      %v1442 = vld [vmem:[%s1435 + $0x30] sm:$0xff]
      %v1443 = vld [vmem:[%s1435 + $0x38] sm:$0xff]
      %v1444 = vld [vmem:[%s1435 + $0x40] sm:$0xff]
      %v1445 = vld [vmem:[%s1435 + $0x48] sm:$0xff]
      %v1446 = vld [vmem:[%s1435 + $0x50] sm:$0xff]
      %v1447 = vld [vmem:[%s1435 + $0x58] sm:$0xff]
      %v1448 = vld [vmem:[%s1435 + $0x60] sm:$0xff]
      %v1449 = vld [vmem:[%s1435 + $0x68] sm:$0xff]
      %v1450 = vld [vmem:[%s1435 + $0x70] sm:$0xff]
      %v1451 = vld [vmem:[%s1435 + $0x78] sm:$0xff]
      %1452 = vmatprep.subr.mxu0 0.0
      %1453 = vmatpush1.msra.mxu0 %v1436
      %1454 = vmatprep.subr.mxu0 0.0
      %1455 = vmatpush1.msra.mxu0 %v1437
      %1456 = vmatprep.subr.mxu0 0.0
      %1457 = vmatpush1.msra.mxu0 %v1438
      %1458 = vmatprep.subr.mxu0 0.0
      %1459 = vmatpush1.msra.mxu0 %v1439
      %1460 = vmatprep.subr.mxu0 0.0
      %1461 = vmatpush1.msra.mxu0 %v1440
      %1462 = vmatprep.subr.mxu0 0.0
      %1463 = vmatpush1.msra.mxu0 %v1441
      %1464 = vmatprep.subr.mxu0 0.0
      %1465 = vmatpush1.msra.mxu0 %v1442
      %1466 = vmatprep.subr.mxu0 0.0
      %1467 = vmatpush1.msra.mxu0 %v1443
      %1468 = vmatprep.subr.mxu0 0.0
      %1469 = vmatpush1.msra.mxu0 %v1444
      %1470 = vmatprep.subr.mxu0 0.0
      %1471 = vmatpush1.msra.mxu0 %v1445
      %1472 = vmatprep.subr.mxu0 0.0
      %1473 = vmatpush1.msra.mxu0 %v1446
      %1474 = vmatprep.subr.mxu0 0.0
      %1475 = vmatpush1.msra.mxu0 %v1447
      %1476 = vmatprep.subr.mxu0 0.0
      %1477 = vmatpush1.msra.mxu0 %v1448
      %1478 = vmatprep.subr.mxu0 0.0
      %1479 = vmatpush1.msra.mxu0 %v1449
      %1480 = vmatprep.subr.mxu0 0.0
      %1481 = vmatpush1.msra.mxu0 %v1450
      %1482 = vmatprep.subr.mxu0 0.0
      %1483 = vmatpush1.msra.mxu0 %v1451
      %1484 = vmatprep.subr.mxu0 0.0
      %1485 = vmatpush1.msra.mxu0 0.0
      %1486 = vmatprep.subr.mxu0 0.0
      %1487 = vmatpush1.msra.mxu0 0.0
      %1488 = vmatprep.subr.mxu0 0.0
      %1489 = vmatpush1.msra.mxu0 0.0
      %1490 = vmatprep.subr.mxu0 0.0
      %1491 = vmatpush1.msra.mxu0 0.0
      %1492 = vmatprep.subr.mxu0 0.0
      %1493 = vmatpush1.msra.mxu0 0.0
      %1494 = vmatprep.subr.mxu0 0.0
      %1495 = vmatpush1.msra.mxu0 0.0
      %1496 = vmatprep.subr.mxu0 0.0
      %1497 = vmatpush1.msra.mxu0 0.0
      %1498 = vmatprep.subr.mxu0 0.0
      %1499 = vmatpush1.msra.mxu0 0.0
      %1500 = vmatprep.subr.mxu0 0.0
      %1501 = vmatpush1.msra.mxu0 0.0
      %1502 = vmatprep.subr.mxu0 0.0
      %1503 = vmatpush1.msra.mxu0 0.0
      %1504 = vmatprep.subr.mxu0 0.0
      %1505 = vmatpush1.msra.mxu0 0.0
      %1506 = vmatprep.subr.mxu0 0.0
      %1507 = vmatpush1.msra.mxu0 0.0
      %1508 = vmatprep.subr.mxu0 0.0
      %1509 = vmatpush1.msra.mxu0 0.0
      %1510 = vmatprep.subr.mxu0 0.0
      %1511 = vmatpush1.msra.mxu0 0.0
      %1512 = vmatprep.subr.mxu0 0.0
      %1513 = vmatpush1.msra.mxu0 0.0
      %1514 = vmatprep.subr.mxu0 0.0
      %1515 = vmatpush1.msra.mxu0 0.0
      %1516 = vmatprep.mubr.f32.mxu0 0.0
      %1517 = vmatmul.mubr.f32.gmra.mrb[0].mxu0 %v1427
      %v1518 = vpop.f32.mrb[0].mxu0
      %v1519 = vadd.f32 0.0, %v1518
      %v1520 = vpop.f32.mrb[0].mxu0
      %1521 = vmatprep.mubr.f32.mxu0 0.0
      %1522 = vmatmul.mubr.f32.gmra.mrb[0].mxu0 %v1428
      %v1523 = vpop.f32.mrb[0].mxu0
      %v1524 = vadd.f32 0.0, %v1523
      %v1525 = vpop.f32.mrb[0].mxu0
      %1526 = vmatprep.mubr.f32.mxu0 0.0
      %1527 = vmatmul.mubr.f32.gmra.mrb[0].mxu0 %v1429
      %v1528 = vpop.f32.mrb[0].mxu0
      %v1529 = vadd.f32 0.0, %v1528
      %v1530 = vpop.f32.mrb[0].mxu0
      %1531 = vmatprep.mubr.f32.mxu0 0.0
      %1532 = vmatmul.mubr.f32.gmra.mrb[0].mxu0 %v1430
      %v1533 = vpop.f32.mrb[0].mxu0
      %v1534 = vadd.f32 0.0, %v1533
      %v1535 = vpop.f32.mrb[0].mxu0
      %1536 = vmatprep.mubr.f32.mxu0 0.0
      %1537 = vmatmul.mubr.f32.gmra.mrb[0].mxu0 %v1431
      %v1538 = vpop.f32.mrb[0].mxu0
      %v1539 = vadd.f32 0.0, %v1538
      %v1540 = vpop.f32.mrb[0].mxu0
      %1541 = vmatprep.mubr.f32.mxu0 0.0
      %1542 = vmatmul.mubr.f32.gmra.mrb[0].mxu0 %v1432
      %v1543 = vpop.f32.mrb[0].mxu0
      %v1544 = vadd.f32 0.0, %v1543
      %v1545 = vpop.f32.mrb[0].mxu0
      %1546 = vmatprep.mubr.f32.mxu0 0.0
      %1547 = vmatmul.mubr.f32.gmra.mrb[0].mxu0 %v1433
      %v1548 = vpop.f32.mrb[0].mxu0
      %v1549 = vadd.f32 0.0, %v1548
      %v1550 = vpop.f32.mrb[0].mxu0
      %1551 = vmatprep.mubr.f32.mxu0 0.0
      %1552 = vmatmul.mubr.f32.gmra.mrb[0].mxu0 %v1434
      %v1553 = vpop.f32.mrb[0].mxu0
      %v1554 = vadd.f32 0.0, %v1553
      %v1555 = vpop.f32.mrb[0].mxu0
      %1556 = vdwg.mxu0
      %v1557 = vadd.f32 %v1419, %v1519
      %v1558 = vadd.f32 %v1420, %v1524
      %v1559 = vadd.f32 %v1421, %v1529
      %v1560 = vadd.f32 %v1422, %v1534
      %v1561 = vadd.f32 %v1423, %v1539
      %v1562 = vadd.f32 %v1424, %v1544
      %v1563 = vadd.f32 %v1425, %v1549
      %v1564 = vadd.f32 %v1426, %v1554
      %v1565 = vld [vmem:[%s2] sm:$0x1]
      %v1567 = vlaneseq
      %v1568 = vshrl.u32 %v1567, 7
      %v1569 = vsub.s32 0, %v1568
      %v1570 = vrot.slane %v1565, %v1569
      %v1572 = vadd.f32 %v1557, %v1570
      %v1573 = vadd.f32 %v1558, %v1570
      %v1574 = vadd.f32 %v1559, %v1570
      %v1575 = vadd.f32 %v1560, %v1570
      %v1576 = vadd.f32 %v1561, %v1570
      %v1577 = vadd.f32 %v1562, %v1570
      %v1578 = vadd.f32 %v1563, %v1570
      %v1579 = vadd.f32 %v1564, %v1570
      %v1580 = vmax.f32 %v1572, 0.0
      %v1581 = vmax.f32 %v1573, 0.0
      %v1582 = vmax.f32 %v1574, 0.0
      %v1583 = vmax.f32 %v1575, 0.0
      %v1584 = vmax.f32 %v1576, 0.0
      %v1585 = vmax.f32 %v1577, 0.0
      %v1586 = vmax.f32 %v1578, 0.0
      %v1587 = vmax.f32 %v1579, 0.0
      %vm1588 = vcmask 523264
      %1589 = vst.msk [vmem:[#allocation3] sm:$0xff] %vm1588, %v1580
      %s1590 = scalar_lea.vmem [#allocation3], 8
      %1591 = vst.msk [vmem:[%s1590] sm:$0xff] %vm1588, %v1580
      %s1592 = scalar_lea.vmem [#allocation3], 16
      %1593 = vst.msk [vmem:[%s1592] sm:$0xff] %vm1588, %v1580
      %s1594 = scalar_lea.vmem [#allocation3], 24
      %1595 = vst.msk [vmem:[%s1594] sm:$0xff] %vm1588, %v1581
      %s1596 = scalar_lea.vmem [#allocation3], 32
      %1597 = vst.msk [vmem:[%s1596] sm:$0xff] %vm1588, %v1581
      %s1598 = scalar_lea.vmem [#allocation3], 40
      %1599 = vst.msk [vmem:[%s1598] sm:$0xff] %vm1588, %v1582
      %s1600 = scalar_lea.vmem [#allocation3], 48
      %1601 = vst.msk [vmem:[%s1600] sm:$0xff] %vm1588, %v1582
      %s1602 = scalar_lea.vmem [#allocation3], 56
      %1603 = vst.msk [vmem:[%s1602] sm:$0xff] %vm1588, %v1583
      %s1604 = scalar_lea.vmem [#allocation3], 64
      %1605 = vst.msk [vmem:[%s1604] sm:$0xff] %vm1588, %v1583
      %s1606 = scalar_lea.vmem [#allocation3], 72
      %1607 = vst.msk [vmem:[%s1606] sm:$0xff] %vm1588, %v1584
      %s1608 = scalar_lea.vmem [#allocation3], 80
      %1609 = vst.msk [vmem:[%s1608] sm:$0xff] %vm1588, %v1584
      %s1610 = scalar_lea.vmem [#allocation3], 88
      %1611 = vst.msk [vmem:[%s1610] sm:$0xff] %vm1588, %v1585
      %s1612 = scalar_lea.vmem [#allocation3], 96
      %1613 = vst.msk [vmem:[%s1612] sm:$0xff] %vm1588, %v1585
      %s1614 = scalar_lea.vmem [#allocation3], 104
      %1615 = vst.msk [vmem:[%s1614] sm:$0xff] %vm1588, %v1586
      %s1616 = scalar_lea.vmem [#allocation3], 112
      %1617 = vst.msk [vmem:[%s1616] sm:$0xff] %vm1588, %v1586
      %s1618 = scalar_lea.vmem [#allocation3], 120
      %1619 = vst.msk [vmem:[%s1618] sm:$0xff] %vm1588, %v1587
      %s1620 = scalar_lea.vmem [#allocation3], 128
      %1621 = vst.msk [vmem:[%s1620] sm:$0xff] %vm1588, %v1587
      %s1622 = scalar_lea.vmem [#allocation3], 136
      %1623 = vst.msk [vmem:[%s1622] sm:$0xff] %vm1588, %v1587
      %v1624 = vld [vmem:[#allocation3] sm:$0x1]
      %v1625 = vld [vmem:[#allocation3 + $0x8] sm:$0x1]
      %v1626 = vld [vmem:[#allocation3 + $0x10] sm:$0x1]
      %v1627 = vld [vmem:[#allocation3 + $0x18] sm:$0x1]
      %v1628 = vld [vmem:[#allocation3 + $0x20] sm:$0x1]
      %v1629 = vld [vmem:[#allocation3 + $0x28] sm:$0x1]
      %v1630 = vld [vmem:[#allocation3 + $0x30] sm:$0x1]
      %v1631 = vld [vmem:[#allocation3 + $0x38] sm:$0x1]
      %v1632 = vld [vmem:[#allocation3 + $0x40] sm:$0x1]
      %v1633 = vld [vmem:[#allocation3 + $0x48] sm:$0x1]
      %v1634 = vld [vmem:[#allocation3 + $0x50] sm:$0x1]
      %v1635 = vld [vmem:[#allocation3 + $0x58] sm:$0x1]
      %v1636 = vld [vmem:[#allocation3 + $0x60] sm:$0x1]
      %v1637 = vld [vmem:[#allocation3 + $0x68] sm:$0x1]
      %v1638 = vld [vmem:[#allocation3 + $0x70] sm:$0x1]
      %v1639 = vld [vmem:[#allocation3 + $0x78] sm:$0x1]
      %v1640 = vld [vmem:[#allocation3 + $0x80] sm:$0x1]
      %v1641 = vld [vmem:[#allocation3 + $0x88] sm:$0x1]
      %vm1642 = vcmask 516096
      %1643 = vst.msk [vmem:[#allocation4 + $0x1] sm:$0x1] %vm1642, %v1624
      %1644 = vst.msk [vmem:[#allocation4 + $0x19] sm:$0x1] %vm1642, %v1625
      %1645 = vst.msk [vmem:[#allocation4 + $0x31] sm:$0x1] %vm1642, %v1626
      %1646 = vst.msk [vmem:[#allocation4 + $0x49] sm:$0x1] %vm1642, %v1627
      %1647 = vst.msk [vmem:[#allocation4 + $0x61] sm:$0x1] %vm1642, %v1628
      %1648 = vst.msk [vmem:[#allocation4 + $0x79] sm:$0x1] %vm1642, %v1629
      %1649 = vst.msk [vmem:[#allocation4 + $0x91] sm:$0x1] %vm1642, %v1630
      %1650 = vst.msk [vmem:[#allocation4 + $0xa9] sm:$0x1] %vm1642, %v1631
      %1651 = vst.msk [vmem:[#allocation4 + $0xc1] sm:$0x1] %vm1642, %v1632
      %1652 = vst.msk [vmem:[#allocation4 + $0xd9] sm:$0x1] %vm1642, %v1633
      %1653 = vst.msk [vmem:[#allocation4 + $0xf1] sm:$0x1] %vm1642, %v1634
      %1654 = vst.msk [vmem:[#allocation4 + $0x109] sm:$0x1] %vm1642, %v1635
      %1655 = vst.msk [vmem:[#allocation4 + $0x121] sm:$0x1] %vm1642, %v1636
      %1656 = vst.msk [vmem:[#allocation4 + $0x139] sm:$0x1] %vm1642, %v1637
      %1657 = vst.msk [vmem:[#allocation4 + $0x151] sm:$0x1] %vm1642, %v1638
      %1658 = vst.msk [vmem:[#allocation4 + $0x169] sm:$0x1] %vm1642, %v1639
      %1659 = vst.msk [vmem:[#allocation4 + $0x181] sm:$0x1] %vm1642, %v1640
      %1660 = vst.msk [vmem:[#allocation4 + $0x199] sm:$0x1] %vm1642, %v1641
      %1661 = vst.msk [vmem:[#allocation4 + $0x2] sm:$0x1] %vm1642, %v1624
      %1662 = vst.msk [vmem:[#allocation4 + $0x1a] sm:$0x1] %vm1642, %v1625
      %1663 = vst.msk [vmem:[#allocation4 + $0x32] sm:$0x1] %vm1642, %v1626
      %1664 = vst.msk [vmem:[#allocation4 + $0x4a] sm:$0x1] %vm1642, %v1627
      %1665 = vst.msk [vmem:[#allocation4 + $0x62] sm:$0x1] %vm1642, %v1628
      %1666 = vst.msk [vmem:[#allocation4 + $0x7a] sm:$0x1] %vm1642, %v1629
      %1667 = vst.msk [vmem:[#allocation4 + $0x92] sm:$0x1] %vm1642, %v1630
      %1668 = vst.msk [vmem:[#allocation4 + $0xaa] sm:$0x1] %vm1642, %v1631
      %1669 = vst.msk [vmem:[#allocation4 + $0xc2] sm:$0x1] %vm1642, %v1632
      %1670 = vst.msk [vmem:[#allocation4 + $0xda] sm:$0x1] %vm1642, %v1633
      %1671 = vst.msk [vmem:[#allocation4 + $0xf2] sm:$0x1] %vm1642, %v1634
      %1672 = vst.msk [vmem:[#allocation4 + $0x10a] sm:$0x1] %vm1642, %v1635
      %1673 = vst.msk [vmem:[#allocation4 + $0x122] sm:$0x1] %vm1642, %v1636
      %1674 = vst.msk [vmem:[#allocation4 + $0x13a] sm:$0x1] %vm1642, %v1637
      %1675 = vst.msk [vmem:[#allocation4 + $0x152] sm:$0x1] %vm1642, %v1638
      %1676 = vst.msk [vmem:[#allocation4 + $0x16a] sm:$0x1] %vm1642, %v1639
      %1677 = vst.msk [vmem:[#allocation4 + $0x182] sm:$0x1] %vm1642, %v1640
      %1678 = vst.msk [vmem:[#allocation4 + $0x19a] sm:$0x1] %vm1642, %v1641
      %v1679 = vld [vmem:[#allocation3 + $0x1] sm:$0x1]
      %v1680 = vld [vmem:[#allocation3 + $0x9] sm:$0x1]
      %v1681 = vld [vmem:[#allocation3 + $0x11] sm:$0x1]
      %v1682 = vld [vmem:[#allocation3 + $0x19] sm:$0x1]
      %v1683 = vld [vmem:[#allocation3 + $0x21] sm:$0x1]
      %v1684 = vld [vmem:[#allocation3 + $0x29] sm:$0x1]
      %v1685 = vld [vmem:[#allocation3 + $0x31] sm:$0x1]
      %v1686 = vld [vmem:[#allocation3 + $0x39] sm:$0x1]
      %v1687 = vld [vmem:[#allocation3 + $0x41] sm:$0x1]
      %v1688 = vld [vmem:[#allocation3 + $0x49] sm:$0x1]
      %v1689 = vld [vmem:[#allocation3 + $0x51] sm:$0x1]
      %v1690 = vld [vmem:[#allocation3 + $0x59] sm:$0x1]
      %v1691 = vld [vmem:[#allocation3 + $0x61] sm:$0x1]
      %v1692 = vld [vmem:[#allocation3 + $0x69] sm:$0x1]
      %v1693 = vld [vmem:[#allocation3 + $0x71] sm:$0x1]
      %v1694 = vld [vmem:[#allocation3 + $0x79] sm:$0x1]
      %v1695 = vld [vmem:[#allocation3 + $0x81] sm:$0x1]
      %v1696 = vld [vmem:[#allocation3 + $0x89] sm:$0x1]
      %1697 = vst.msk [vmem:[#allocation4 + $0x3] sm:$0x1] %vm1642, %v1679
      %1698 = vst.msk [vmem:[#allocation4 + $0x1b] sm:$0x1] %vm1642, %v1680
      %1699 = vst.msk [vmem:[#allocation4 + $0x33] sm:$0x1] %vm1642, %v1681
      %1700 = vst.msk [vmem:[#allocation4 + $0x4b] sm:$0x1] %vm1642, %v1682
      %1701 = vst.msk [vmem:[#allocation4 + $0x63] sm:$0x1] %vm1642, %v1683
      %1702 = vst.msk [vmem:[#allocation4 + $0x7b] sm:$0x1] %vm1642, %v1684
      %1703 = vst.msk [vmem:[#allocation4 + $0x93] sm:$0x1] %vm1642, %v1685
      %1704 = vst.msk [vmem:[#allocation4 + $0xab] sm:$0x1] %vm1642, %v1686
      %1705 = vst.msk [vmem:[#allocation4 + $0xc3] sm:$0x1] %vm1642, %v1687
      %1706 = vst.msk [vmem:[#allocation4 + $0xdb] sm:$0x1] %vm1642, %v1688
      %1707 = vst.msk [vmem:[#allocation4 + $0xf3] sm:$0x1] %vm1642, %v1689
      %1708 = vst.msk [vmem:[#allocation4 + $0x10b] sm:$0x1] %vm1642, %v1690
      %1709 = vst.msk [vmem:[#allocation4 + $0x123] sm:$0x1] %vm1642, %v1691
      %1710 = vst.msk [vmem:[#allocation4 + $0x13b] sm:$0x1] %vm1642, %v1692
      %1711 = vst.msk [vmem:[#allocation4 + $0x153] sm:$0x1] %vm1642, %v1693
      %1712 = vst.msk [vmem:[#allocation4 + $0x16b] sm:$0x1] %vm1642, %v1694
      %1713 = vst.msk [vmem:[#allocation4 + $0x183] sm:$0x1] %vm1642, %v1695
      %1714 = vst.msk [vmem:[#allocation4 + $0x19b] sm:$0x1] %vm1642, %v1696
      %1715 = vst.msk [vmem:[#allocation4 + $0x4] sm:$0x1] %vm1642, %v1679
      %1716 = vst.msk [vmem:[#allocation4 + $0x1c] sm:$0x1] %vm1642, %v1680
      %1717 = vst.msk [vmem:[#allocation4 + $0x34] sm:$0x1] %vm1642, %v1681
      %1718 = vst.msk [vmem:[#allocation4 + $0x4c] sm:$0x1] %vm1642, %v1682
      %1719 = vst.msk [vmem:[#allocation4 + $0x64] sm:$0x1] %vm1642, %v1683
      %1720 = vst.msk [vmem:[#allocation4 + $0x7c] sm:$0x1] %vm1642, %v1684
      %1721 = vst.msk [vmem:[#allocation4 + $0x94] sm:$0x1] %vm1642, %v1685
      %1722 = vst.msk [vmem:[#allocation4 + $0xac] sm:$0x1] %vm1642, %v1686
      %1723 = vst.msk [vmem:[#allocation4 + $0xc4] sm:$0x1] %vm1642, %v1687
      %1724 = vst.msk [vmem:[#allocation4 + $0xdc] sm:$0x1] %vm1642, %v1688
      %1725 = vst.msk [vmem:[#allocation4 + $0xf4] sm:$0x1] %vm1642, %v1689
      %1726 = vst.msk [vmem:[#allocation4 + $0x10c] sm:$0x1] %vm1642, %v1690
      %1727 = vst.msk [vmem:[#allocation4 + $0x124] sm:$0x1] %vm1642, %v1691
      %1728 = vst.msk [vmem:[#allocation4 + $0x13c] sm:$0x1] %vm1642, %v1692
      %1729 = vst.msk [vmem:[#allocation4 + $0x154] sm:$0x1] %vm1642, %v1693
      %1730 = vst.msk [vmem:[#allocation4 + $0x16c] sm:$0x1] %vm1642, %v1694
      %1731 = vst.msk [vmem:[#allocation4 + $0x184] sm:$0x1] %vm1642, %v1695
      %1732 = vst.msk [vmem:[#allocation4 + $0x19c] sm:$0x1] %vm1642, %v1696
      %v1733 = vld [vmem:[#allocation3 + $0x2] sm:$0x1]
      %v1734 = vld [vmem:[#allocation3 + $0xa] sm:$0x1]
      %v1735 = vld [vmem:[#allocation3 + $0x12] sm:$0x1]
      %v1736 = vld [vmem:[#allocation3 + $0x1a] sm:$0x1]
      %v1737 = vld [vmem:[#allocation3 + $0x22] sm:$0x1]
      %v1738 = vld [vmem:[#allocation3 + $0x2a] sm:$0x1]
      %v1739 = vld [vmem:[#allocation3 + $0x32] sm:$0x1]
      %v1740 = vld [vmem:[#allocation3 + $0x3a] sm:$0x1]
      %v1741 = vld [vmem:[#allocation3 + $0x42] sm:$0x1]
      %v1742 = vld [vmem:[#allocation3 + $0x4a] sm:$0x1]
      %v1743 = vld [vmem:[#allocation3 + $0x52] sm:$0x1]
      %v1744 = vld [vmem:[#allocation3 + $0x5a] sm:$0x1]
      %v1745 = vld [vmem:[#allocation3 + $0x62] sm:$0x1]
      %v1746 = vld [vmem:[#allocation3 + $0x6a] sm:$0x1]
      %v1747 = vld [vmem:[#allocation3 + $0x72] sm:$0x1]
      %v1748 = vld [vmem:[#allocation3 + $0x7a] sm:$0x1]
      %v1749 = vld [vmem:[#allocation3 + $0x82] sm:$0x1]
      %v1750 = vld [vmem:[#allocation3 + $0x8a] sm:$0x1]
      %1751 = vst.msk [vmem:[#allocation4 + $0x5] sm:$0x1] %vm1642, %v1733
      %1752 = vst.msk [vmem:[#allocation4 + $0x1d] sm:$0x1] %vm1642, %v1734
      %1753 = vst.msk [vmem:[#allocation4 + $0x35] sm:$0x1] %vm1642, %v1735
      %1754 = vst.msk [vmem:[#allocation4 + $0x4d] sm:$0x1] %vm1642, %v1736
      %1755 = vst.msk [vmem:[#allocation4 + $0x65] sm:$0x1] %vm1642, %v1737
      %1756 = vst.msk [vmem:[#allocation4 + $0x7d] sm:$0x1] %vm1642, %v1738
      %1757 = vst.msk [vmem:[#allocation4 + $0x95] sm:$0x1] %vm1642, %v1739
      %1758 = vst.msk [vmem:[#allocation4 + $0xad] sm:$0x1] %vm1642, %v1740
      %1759 = vst.msk [vmem:[#allocation4 + $0xc5] sm:$0x1] %vm1642, %v1741
      %1760 = vst.msk [vmem:[#allocation4 + $0xdd] sm:$0x1] %vm1642, %v1742
      %1761 = vst.msk [vmem:[#allocation4 + $0xf5] sm:$0x1] %vm1642, %v1743
      %1762 = vst.msk [vmem:[#allocation4 + $0x10d] sm:$0x1] %vm1642, %v1744
      %1763 = vst.msk [vmem:[#allocation4 + $0x125] sm:$0x1] %vm1642, %v1745
      %1764 = vst.msk [vmem:[#allocation4 + $0x13d] sm:$0x1] %vm1642, %v1746
      %1765 = vst.msk [vmem:[#allocation4 + $0x155] sm:$0x1] %vm1642, %v1747
      %1766 = vst.msk [vmem:[#allocation4 + $0x16d] sm:$0x1] %vm1642, %v1748
      %1767 = vst.msk [vmem:[#allocation4 + $0x185] sm:$0x1] %vm1642, %v1749
      %1768 = vst.msk [vmem:[#allocation4 + $0x19d] sm:$0x1] %vm1642, %v1750
      %1769 = vst.msk [vmem:[#allocation4 + $0x6] sm:$0x1] %vm1642, %v1733
      %1770 = vst.msk [vmem:[#allocation4 + $0x1e] sm:$0x1] %vm1642, %v1734
      %1771 = vst.msk [vmem:[#allocation4 + $0x36] sm:$0x1] %vm1642, %v1735
      %1772 = vst.msk [vmem:[#allocation4 + $0x4e] sm:$0x1] %vm1642, %v1736
      %1773 = vst.msk [vmem:[#allocation4 + $0x66] sm:$0x1] %vm1642, %v1737
      %1774 = vst.msk [vmem:[#allocation4 + $0x7e] sm:$0x1] %vm1642, %v1738
      %1775 = vst.msk [vmem:[#allocation4 + $0x96] sm:$0x1] %vm1642, %v1739
      %1776 = vst.msk [vmem:[#allocation4 + $0xae] sm:$0x1] %vm1642, %v1740
      %1777 = vst.msk [vmem:[#allocation4 + $0xc6] sm:$0x1] %vm1642, %v1741
      %1778 = vst.msk [vmem:[#allocation4 + $0xde] sm:$0x1] %vm1642, %v1742
      %1779 = vst.msk [vmem:[#allocation4 + $0xf6] sm:$0x1] %vm1642, %v1743
      %1780 = vst.msk [vmem:[#allocation4 + $0x10e] sm:$0x1] %vm1642, %v1744
      %1781 = vst.msk [vmem:[#allocation4 + $0x126] sm:$0x1] %vm1642, %v1745
      %1782 = vst.msk [vmem:[#allocation4 + $0x13e] sm:$0x1] %vm1642, %v1746
      %1783 = vst.msk [vmem:[#allocation4 + $0x156] sm:$0x1] %vm1642, %v1747
      %1784 = vst.msk [vmem:[#allocation4 + $0x16e] sm:$0x1] %vm1642, %v1748
      %1785 = vst.msk [vmem:[#allocation4 + $0x186] sm:$0x1] %vm1642, %v1749
      %1786 = vst.msk [vmem:[#allocation4 + $0x19e] sm:$0x1] %vm1642, %v1750
      %v1787 = vld [vmem:[#allocation3 + $0x3] sm:$0x1]
      %v1788 = vld [vmem:[#allocation3 + $0xb] sm:$0x1]
      %v1789 = vld [vmem:[#allocation3 + $0x13] sm:$0x1]
      %v1790 = vld [vmem:[#allocation3 + $0x1b] sm:$0x1]
      %v1791 = vld [vmem:[#allocation3 + $0x23] sm:$0x1]
      %v1792 = vld [vmem:[#allocation3 + $0x2b] sm:$0x1]
      %v1793 = vld [vmem:[#allocation3 + $0x33] sm:$0x1]
      %v1794 = vld [vmem:[#allocation3 + $0x3b] sm:$0x1]
      %v1795 = vld [vmem:[#allocation3 + $0x43] sm:$0x1]
      %v1796 = vld [vmem:[#allocation3 + $0x4b] sm:$0x1]
      %v1797 = vld [vmem:[#allocation3 + $0x53] sm:$0x1]
      %v1798 = vld [vmem:[#allocation3 + $0x5b] sm:$0x1]
      %v1799 = vld [vmem:[#allocation3 + $0x63] sm:$0x1]
      %v1800 = vld [vmem:[#allocation3 + $0x6b] sm:$0x1]
      %v1801 = vld [vmem:[#allocation3 + $0x73] sm:$0x1]
      %v1802 = vld [vmem:[#allocation3 + $0x7b] sm:$0x1]
      %v1803 = vld [vmem:[#allocation3 + $0x83] sm:$0x1]
      %v1804 = vld [vmem:[#allocation3 + $0x8b] sm:$0x1]
      %1805 = vst.msk [vmem:[#allocation4 + $0x7] sm:$0x1] %vm1642, %v1787
      %1806 = vst.msk [vmem:[#allocation4 + $0x1f] sm:$0x1] %vm1642, %v1788
      %1807 = vst.msk [vmem:[#allocation4 + $0x37] sm:$0x1] %vm1642, %v1789
      %1808 = vst.msk [vmem:[#allocation4 + $0x4f] sm:$0x1] %vm1642, %v1790
      %1809 = vst.msk [vmem:[#allocation4 + $0x67] sm:$0x1] %vm1642, %v1791
      %1810 = vst.msk [vmem:[#allocation4 + $0x7f] sm:$0x1] %vm1642, %v1792
      %1811 = vst.msk [vmem:[#allocation4 + $0x97] sm:$0x1] %vm1642, %v1793
      %1812 = vst.msk [vmem:[#allocation4 + $0xaf] sm:$0x1] %vm1642, %v1794
      %1813 = vst.msk [vmem:[#allocation4 + $0xc7] sm:$0x1] %vm1642, %v1795
      %1814 = vst.msk [vmem:[#allocation4 + $0xdf] sm:$0x1] %vm1642, %v1796
      %1815 = vst.msk [vmem:[#allocation4 + $0xf7] sm:$0x1] %vm1642, %v1797
      %1816 = vst.msk [vmem:[#allocation4 + $0x10f] sm:$0x1] %vm1642, %v1798
      %1817 = vst.msk [vmem:[#allocation4 + $0x127] sm:$0x1] %vm1642, %v1799
      %1818 = vst.msk [vmem:[#allocation4 + $0x13f] sm:$0x1] %vm1642, %v1800
      %1819 = vst.msk [vmem:[#allocation4 + $0x157] sm:$0x1] %vm1642, %v1801
      %1820 = vst.msk [vmem:[#allocation4 + $0x16f] sm:$0x1] %vm1642, %v1802
      %1821 = vst.msk [vmem:[#allocation4 + $0x187] sm:$0x1] %vm1642, %v1803
      %1822 = vst.msk [vmem:[#allocation4 + $0x19f] sm:$0x1] %vm1642, %v1804
      %1823 = vst.msk [vmem:[#allocation4 + $0x8] sm:$0x1] %vm1642, %v1787
      %1824 = vst.msk [vmem:[#allocation4 + $0x20] sm:$0x1] %vm1642, %v1788
      %1825 = vst.msk [vmem:[#allocation4 + $0x38] sm:$0x1] %vm1642, %v1789
      %1826 = vst.msk [vmem:[#allocation4 + $0x50] sm:$0x1] %vm1642, %v1790
      %1827 = vst.msk [vmem:[#allocation4 + $0x68] sm:$0x1] %vm1642, %v1791
      %1828 = vst.msk [vmem:[#allocation4 + $0x80] sm:$0x1] %vm1642, %v1792
      %1829 = vst.msk [vmem:[#allocation4 + $0x98] sm:$0x1] %vm1642, %v1793
      %1830 = vst.msk [vmem:[#allocation4 + $0xb0] sm:$0x1] %vm1642, %v1794
      %1831 = vst.msk [vmem:[#allocation4 + $0xc8] sm:$0x1] %vm1642, %v1795
      %1832 = vst.msk [vmem:[#allocation4 + $0xe0] sm:$0x1] %vm1642, %v1796
      %1833 = vst.msk [vmem:[#allocation4 + $0xf8] sm:$0x1] %vm1642, %v1797
      %1834 = vst.msk [vmem:[#allocation4 + $0x110] sm:$0x1] %vm1642, %v1798
      %1835 = vst.msk [vmem:[#allocation4 + $0x128] sm:$0x1] %vm1642, %v1799
      %1836 = vst.msk [vmem:[#allocation4 + $0x140] sm:$0x1] %vm1642, %v1800
      %1837 = vst.msk [vmem:[#allocation4 + $0x158] sm:$0x1] %vm1642, %v1801
      %1838 = vst.msk [vmem:[#allocation4 + $0x170] sm:$0x1] %vm1642, %v1802
      %1839 = vst.msk [vmem:[#allocation4 + $0x188] sm:$0x1] %vm1642, %v1803
      %1840 = vst.msk [vmem:[#allocation4 + $0x1a0] sm:$0x1] %vm1642, %v1804
      %v1841 = vld [vmem:[#allocation3 + $0x4] sm:$0x1]
      %v1842 = vld [vmem:[#allocation3 + $0xc] sm:$0x1]
      %v1843 = vld [vmem:[#allocation3 + $0x14] sm:$0x1]
      %v1844 = vld [vmem:[#allocation3 + $0x1c] sm:$0x1]
      %v1845 = vld [vmem:[#allocation3 + $0x24] sm:$0x1]
      %v1846 = vld [vmem:[#allocation3 + $0x2c] sm:$0x1]
      %v1847 = vld [vmem:[#allocation3 + $0x34] sm:$0x1]
      %v1848 = vld [vmem:[#allocation3 + $0x3c] sm:$0x1]
      %v1849 = vld [vmem:[#allocation3 + $0x44] sm:$0x1]
      %v1850 = vld [vmem:[#allocation3 + $0x4c] sm:$0x1]
      %v1851 = vld [vmem:[#allocation3 + $0x54] sm:$0x1]
      %v1852 = vld [vmem:[#allocation3 + $0x5c] sm:$0x1]
      %v1853 = vld [vmem:[#allocation3 + $0x64] sm:$0x1]
      %v1854 = vld [vmem:[#allocation3 + $0x6c] sm:$0x1]
      %v1855 = vld [vmem:[#allocation3 + $0x74] sm:$0x1]
      %v1856 = vld [vmem:[#allocation3 + $0x7c] sm:$0x1]
      %v1857 = vld [vmem:[#allocation3 + $0x84] sm:$0x1]
      %v1858 = vld [vmem:[#allocation3 + $0x8c] sm:$0x1]
      %1859 = vst.msk [vmem:[#allocation4 + $0x9] sm:$0x1] %vm1642, %v1841
      %1860 = vst.msk [vmem:[#allocation4 + $0x21] sm:$0x1] %vm1642, %v1842
      %1861 = vst.msk [vmem:[#allocation4 + $0x39] sm:$0x1] %vm1642, %v1843
      %1862 = vst.msk [vmem:[#allocation4 + $0x51] sm:$0x1] %vm1642, %v1844
      %1863 = vst.msk [vmem:[#allocation4 + $0x69] sm:$0x1] %vm1642, %v1845
      %1864 = vst.msk [vmem:[#allocation4 + $0x81] sm:$0x1] %vm1642, %v1846
      %1865 = vst.msk [vmem:[#allocation4 + $0x99] sm:$0x1] %vm1642, %v1847
      %1866 = vst.msk [vmem:[#allocation4 + $0xb1] sm:$0x1] %vm1642, %v1848
      %1867 = vst.msk [vmem:[#allocation4 + $0xc9] sm:$0x1] %vm1642, %v1849
      %1868 = vst.msk [vmem:[#allocation4 + $0xe1] sm:$0x1] %vm1642, %v1850
      %1869 = vst.msk [vmem:[#allocation4 + $0xf9] sm:$0x1] %vm1642, %v1851
      %1870 = vst.msk [vmem:[#allocation4 + $0x111] sm:$0x1] %vm1642, %v1852
      %1871 = vst.msk [vmem:[#allocation4 + $0x129] sm:$0x1] %vm1642, %v1853
      %1872 = vst.msk [vmem:[#allocation4 + $0x141] sm:$0x1] %vm1642, %v1854
      %1873 = vst.msk [vmem:[#allocation4 + $0x159] sm:$0x1] %vm1642, %v1855
      %1874 = vst.msk [vmem:[#allocation4 + $0x171] sm:$0x1] %vm1642, %v1856
      %1875 = vst.msk [vmem:[#allocation4 + $0x189] sm:$0x1] %vm1642, %v1857
      %1876 = vst.msk [vmem:[#allocation4 + $0x1a1] sm:$0x1] %vm1642, %v1858
      %1877 = vst.msk [vmem:[#allocation4 + $0xa] sm:$0x1] %vm1642, %v1841
      %1878 = vst.msk [vmem:[#allocation4 + $0x22] sm:$0x1] %vm1642, %v1842
      %1879 = vst.msk [vmem:[#allocation4 + $0x3a] sm:$0x1] %vm1642, %v1843
      %1880 = vst.msk [vmem:[#allocation4 + $0x52] sm:$0x1] %vm1642, %v1844
      %1881 = vst.msk [vmem:[#allocation4 + $0x6a] sm:$0x1] %vm1642, %v1845
      %1882 = vst.msk [vmem:[#allocation4 + $0x82] sm:$0x1] %vm1642, %v1846
      %1883 = vst.msk [vmem:[#allocation4 + $0x9a] sm:$0x1] %vm1642, %v1847
      %1884 = vst.msk [vmem:[#allocation4 + $0xb2] sm:$0x1] %vm1642, %v1848
      %1885 = vst.msk [vmem:[#allocation4 + $0xca] sm:$0x1] %vm1642, %v1849
      %1886 = vst.msk [vmem:[#allocation4 + $0xe2] sm:$0x1] %vm1642, %v1850
      %1887 = vst.msk [vmem:[#allocation4 + $0xfa] sm:$0x1] %vm1642, %v1851
      %1888 = vst.msk [vmem:[#allocation4 + $0x112] sm:$0x1] %vm1642, %v1852
      %1889 = vst.msk [vmem:[#allocation4 + $0x12a] sm:$0x1] %vm1642, %v1853
      %1890 = vst.msk [vmem:[#allocation4 + $0x142] sm:$0x1] %vm1642, %v1854
      %1891 = vst.msk [vmem:[#allocation4 + $0x15a] sm:$0x1] %vm1642, %v1855
      %1892 = vst.msk [vmem:[#allocation4 + $0x172] sm:$0x1] %vm1642, %v1856
      %1893 = vst.msk [vmem:[#allocation4 + $0x18a] sm:$0x1] %vm1642, %v1857
      %1894 = vst.msk [vmem:[#allocation4 + $0x1a2] sm:$0x1] %vm1642, %v1858
      %v1895 = vld [vmem:[#allocation3 + $0x5] sm:$0x1]
      %v1896 = vld [vmem:[#allocation3 + $0xd] sm:$0x1]
      %v1897 = vld [vmem:[#allocation3 + $0x15] sm:$0x1]
      %v1898 = vld [vmem:[#allocation3 + $0x1d] sm:$0x1]
      %v1899 = vld [vmem:[#allocation3 + $0x25] sm:$0x1]
      %v1900 = vld [vmem:[#allocation3 + $0x2d] sm:$0x1]
      %v1901 = vld [vmem:[#allocation3 + $0x35] sm:$0x1]
      %v1902 = vld [vmem:[#allocation3 + $0x3d] sm:$0x1]
      %v1903 = vld [vmem:[#allocation3 + $0x45] sm:$0x1]
      %v1904 = vld [vmem:[#allocation3 + $0x4d] sm:$0x1]
      %v1905 = vld [vmem:[#allocation3 + $0x55] sm:$0x1]
      %v1906 = vld [vmem:[#allocation3 + $0x5d] sm:$0x1]
      %v1907 = vld [vmem:[#allocation3 + $0x65] sm:$0x1]
      %v1908 = vld [vmem:[#allocation3 + $0x6d] sm:$0x1]
      %v1909 = vld [vmem:[#allocation3 + $0x75] sm:$0x1]
      %v1910 = vld [vmem:[#allocation3 + $0x7d] sm:$0x1]
      %v1911 = vld [vmem:[#allocation3 + $0x85] sm:$0x1]
      %v1912 = vld [vmem:[#allocation3 + $0x8d] sm:$0x1]
      %1913 = vst.msk [vmem:[#allocation4 + $0xb] sm:$0x1] %vm1642, %v1895
      %1914 = vst.msk [vmem:[#allocation4 + $0x23] sm:$0x1] %vm1642, %v1896
      %1915 = vst.msk [vmem:[#allocation4 + $0x3b] sm:$0x1] %vm1642, %v1897
      %1916 = vst.msk [vmem:[#allocation4 + $0x53] sm:$0x1] %vm1642, %v1898
      %1917 = vst.msk [vmem:[#allocation4 + $0x6b] sm:$0x1] %vm1642, %v1899
      %1918 = vst.msk [vmem:[#allocation4 + $0x83] sm:$0x1] %vm1642, %v1900
      %1919 = vst.msk [vmem:[#allocation4 + $0x9b] sm:$0x1] %vm1642, %v1901
      %1920 = vst.msk [vmem:[#allocation4 + $0xb3] sm:$0x1] %vm1642, %v1902
      %1921 = vst.msk [vmem:[#allocation4 + $0xcb] sm:$0x1] %vm1642, %v1903
      %1922 = vst.msk [vmem:[#allocation4 + $0xe3] sm:$0x1] %vm1642, %v1904
      %1923 = vst.msk [vmem:[#allocation4 + $0xfb] sm:$0x1] %vm1642, %v1905
      %1924 = vst.msk [vmem:[#allocation4 + $0x113] sm:$0x1] %vm1642, %v1906
      %1925 = vst.msk [vmem:[#allocation4 + $0x12b] sm:$0x1] %vm1642, %v1907
      %1926 = vst.msk [vmem:[#allocation4 + $0x143] sm:$0x1] %vm1642, %v1908
      %1927 = vst.msk [vmem:[#allocation4 + $0x15b] sm:$0x1] %vm1642, %v1909
      %1928 = vst.msk [vmem:[#allocation4 + $0x173] sm:$0x1] %vm1642, %v1910
      %1929 = vst.msk [vmem:[#allocation4 + $0x18b] sm:$0x1] %vm1642, %v1911
      %1930 = vst.msk [vmem:[#allocation4 + $0x1a3] sm:$0x1] %vm1642, %v1912
      %1931 = vst.msk [vmem:[#allocation4 + $0xc] sm:$0x1] %vm1642, %v1895
      %1932 = vst.msk [vmem:[#allocation4 + $0x24] sm:$0x1] %vm1642, %v1896
      %1933 = vst.msk [vmem:[#allocation4 + $0x3c] sm:$0x1] %vm1642, %v1897
      %1934 = vst.msk [vmem:[#allocation4 + $0x54] sm:$0x1] %vm1642, %v1898
      %1935 = vst.msk [vmem:[#allocation4 + $0x6c] sm:$0x1] %vm1642, %v1899
      %1936 = vst.msk [vmem:[#allocation4 + $0x84] sm:$0x1] %vm1642, %v1900
      %1937 = vst.msk [vmem:[#allocation4 + $0x9c] sm:$0x1] %vm1642, %v1901
      %1938 = vst.msk [vmem:[#allocation4 + $0xb4] sm:$0x1] %vm1642, %v1902
      %1939 = vst.msk [vmem:[#allocation4 + $0xcc] sm:$0x1] %vm1642, %v1903
      %1940 = vst.msk [vmem:[#allocation4 + $0xe4] sm:$0x1] %vm1642, %v1904
      %1941 = vst.msk [vmem:[#allocation4 + $0xfc] sm:$0x1] %vm1642, %v1905
      %1942 = vst.msk [vmem:[#allocation4 + $0x114] sm:$0x1] %vm1642, %v1906
      %1943 = vst.msk [vmem:[#allocation4 + $0x12c] sm:$0x1] %vm1642, %v1907
      %1944 = vst.msk [vmem:[#allocation4 + $0x144] sm:$0x1] %vm1642, %v1908
      %1945 = vst.msk [vmem:[#allocation4 + $0x15c] sm:$0x1] %vm1642, %v1909
      %1946 = vst.msk [vmem:[#allocation4 + $0x174] sm:$0x1] %vm1642, %v1910
      %1947 = vst.msk [vmem:[#allocation4 + $0x18c] sm:$0x1] %vm1642, %v1911
      %1948 = vst.msk [vmem:[#allocation4 + $0x1a4] sm:$0x1] %vm1642, %v1912
      %v1949 = vld [vmem:[#allocation3 + $0x6] sm:$0x1]
      %v1950 = vld [vmem:[#allocation3 + $0xe] sm:$0x1]
      %v1951 = vld [vmem:[#allocation3 + $0x16] sm:$0x1]
      %v1952 = vld [vmem:[#allocation3 + $0x1e] sm:$0x1]
      %v1953 = vld [vmem:[#allocation3 + $0x26] sm:$0x1]
      %v1954 = vld [vmem:[#allocation3 + $0x2e] sm:$0x1]
      %v1955 = vld [vmem:[#allocation3 + $0x36] sm:$0x1]
      %v1956 = vld [vmem:[#allocation3 + $0x3e] sm:$0x1]
      %v1957 = vld [vmem:[#allocation3 + $0x46] sm:$0x1]
      %v1958 = vld [vmem:[#allocation3 + $0x4e] sm:$0x1]
      %v1959 = vld [vmem:[#allocation3 + $0x56] sm:$0x1]
      %v1960 = vld [vmem:[#allocation3 + $0x5e] sm:$0x1]
      %v1961 = vld [vmem:[#allocation3 + $0x66] sm:$0x1]
      %v1962 = vld [vmem:[#allocation3 + $0x6e] sm:$0x1]
      %v1963 = vld [vmem:[#allocation3 + $0x76] sm:$0x1]
      %v1964 = vld [vmem:[#allocation3 + $0x7e] sm:$0x1]
      %v1965 = vld [vmem:[#allocation3 + $0x86] sm:$0x1]
      %v1966 = vld [vmem:[#allocation3 + $0x8e] sm:$0x1]
      %1967 = vst.msk [vmem:[#allocation4 + $0xd] sm:$0x1] %vm1642, %v1949
      %1968 = vst.msk [vmem:[#allocation4 + $0x25] sm:$0x1] %vm1642, %v1950
      %1969 = vst.msk [vmem:[#allocation4 + $0x3d] sm:$0x1] %vm1642, %v1951
      %1970 = vst.msk [vmem:[#allocation4 + $0x55] sm:$0x1] %vm1642, %v1952
      %1971 = vst.msk [vmem:[#allocation4 + $0x6d] sm:$0x1] %vm1642, %v1953
      %1972 = vst.msk [vmem:[#allocation4 + $0x85] sm:$0x1] %vm1642, %v1954
      %1973 = vst.msk [vmem:[#allocation4 + $0x9d] sm:$0x1] %vm1642, %v1955
      %1974 = vst.msk [vmem:[#allocation4 + $0xb5] sm:$0x1] %vm1642, %v1956
      %1975 = vst.msk [vmem:[#allocation4 + $0xcd] sm:$0x1] %vm1642, %v1957
      %1976 = vst.msk [vmem:[#allocation4 + $0xe5] sm:$0x1] %vm1642, %v1958
      %1977 = vst.msk [vmem:[#allocation4 + $0xfd] sm:$0x1] %vm1642, %v1959
      %1978 = vst.msk [vmem:[#allocation4 + $0x115] sm:$0x1] %vm1642, %v1960
      %1979 = vst.msk [vmem:[#allocation4 + $0x12d] sm:$0x1] %vm1642, %v1961
      %1980 = vst.msk [vmem:[#allocation4 + $0x145] sm:$0x1] %vm1642, %v1962
      %1981 = vst.msk [vmem:[#allocation4 + $0x15d] sm:$0x1] %vm1642, %v1963
      %1982 = vst.msk [vmem:[#allocation4 + $0x175] sm:$0x1] %vm1642, %v1964
      %1983 = vst.msk [vmem:[#allocation4 + $0x18d] sm:$0x1] %vm1642, %v1965
      %1984 = vst.msk [vmem:[#allocation4 + $0x1a5] sm:$0x1] %vm1642, %v1966
      %1985 = vst.msk [vmem:[#allocation4 + $0xe] sm:$0x1] %vm1642, %v1949
      %1986 = vst.msk [vmem:[#allocation4 + $0x26] sm:$0x1] %vm1642, %v1950
      %1987 = vst.msk [vmem:[#allocation4 + $0x3e] sm:$0x1] %vm1642, %v1951
      %1988 = vst.msk [vmem:[#allocation4 + $0x56] sm:$0x1] %vm1642, %v1952
      %1989 = vst.msk [vmem:[#allocation4 + $0x6e] sm:$0x1] %vm1642, %v1953
      %1990 = vst.msk [vmem:[#allocation4 + $0x86] sm:$0x1] %vm1642, %v1954
      %1991 = vst.msk [vmem:[#allocation4 + $0x9e] sm:$0x1] %vm1642, %v1955
      %1992 = vst.msk [vmem:[#allocation4 + $0xb6] sm:$0x1] %vm1642, %v1956
      %1993 = vst.msk [vmem:[#allocation4 + $0xce] sm:$0x1] %vm1642, %v1957
      %1994 = vst.msk [vmem:[#allocation4 + $0xe6] sm:$0x1] %vm1642, %v1958
      %1995 = vst.msk [vmem:[#allocation4 + $0xfe] sm:$0x1] %vm1642, %v1959
      %1996 = vst.msk [vmem:[#allocation4 + $0x116] sm:$0x1] %vm1642, %v1960
      %1997 = vst.msk [vmem:[#allocation4 + $0x12e] sm:$0x1] %vm1642, %v1961
      %1998 = vst.msk [vmem:[#allocation4 + $0x146] sm:$0x1] %vm1642, %v1962
      %1999 = vst.msk [vmem:[#allocation4 + $0x15e] sm:$0x1] %vm1642, %v1963
      %2000 = vst.msk [vmem:[#allocation4 + $0x176] sm:$0x1] %vm1642, %v1964
      %2001 = vst.msk [vmem:[#allocation4 + $0x18e] sm:$0x1] %vm1642, %v1965
      %2002 = vst.msk [vmem:[#allocation4 + $0x1a6] sm:$0x1] %vm1642, %v1966
      %v2003 = vld [vmem:[#allocation3 + $0x7] sm:$0x1]
      %v2004 = vld [vmem:[#allocation3 + $0xf] sm:$0x1]
      %v2005 = vld [vmem:[#allocation3 + $0x17] sm:$0x1]
      %v2006 = vld [vmem:[#allocation3 + $0x1f] sm:$0x1]
      %v2007 = vld [vmem:[#allocation3 + $0x27] sm:$0x1]
      %v2008 = vld [vmem:[#allocation3 + $0x2f] sm:$0x1]
      %v2009 = vld [vmem:[#allocation3 + $0x37] sm:$0x1]
      %v2010 = vld [vmem:[#allocation3 + $0x3f] sm:$0x1]
      %v2011 = vld [vmem:[#allocation3 + $0x47] sm:$0x1]
      %v2012 = vld [vmem:[#allocation3 + $0x4f] sm:$0x1]
      %v2013 = vld [vmem:[#allocation3 + $0x57] sm:$0x1]
      %v2014 = vld [vmem:[#allocation3 + $0x5f] sm:$0x1]
      %v2015 = vld [vmem:[#allocation3 + $0x67] sm:$0x1]
      %v2016 = vld [vmem:[#allocation3 + $0x6f] sm:$0x1]
      %v2017 = vld [vmem:[#allocation3 + $0x77] sm:$0x1]
      %v2018 = vld [vmem:[#allocation3 + $0x7f] sm:$0x1]
      %v2019 = vld [vmem:[#allocation3 + $0x87] sm:$0x1]
      %v2020 = vld [vmem:[#allocation3 + $0x8f] sm:$0x1]
      %2021 = vst.msk [vmem:[#allocation4 + $0xf] sm:$0x1] %vm1642, %v2003
      %2022 = vst.msk [vmem:[#allocation4 + $0x27] sm:$0x1] %vm1642, %v2004
      %2023 = vst.msk [vmem:[#allocation4 + $0x3f] sm:$0x1] %vm1642, %v2005
      %2024 = vst.msk [vmem:[#allocation4 + $0x57] sm:$0x1] %vm1642, %v2006
      %2025 = vst.msk [vmem:[#allocation4 + $0x6f] sm:$0x1] %vm1642, %v2007
      %2026 = vst.msk [vmem:[#allocation4 + $0x87] sm:$0x1] %vm1642, %v2008
      %2027 = vst.msk [vmem:[#allocation4 + $0x9f] sm:$0x1] %vm1642, %v2009
      %2028 = vst.msk [vmem:[#allocation4 + $0xb7] sm:$0x1] %vm1642, %v2010
      %2029 = vst.msk [vmem:[#allocation4 + $0xcf] sm:$0x1] %vm1642, %v2011
      %2030 = vst.msk [vmem:[#allocation4 + $0xe7] sm:$0x1] %vm1642, %v2012
      %2031 = vst.msk [vmem:[#allocation4 + $0xff] sm:$0x1] %vm1642, %v2013
      %2032 = vst.msk [vmem:[#allocation4 + $0x117] sm:$0x1] %vm1642, %v2014
      %2033 = vst.msk [vmem:[#allocation4 + $0x12f] sm:$0x1] %vm1642, %v2015
      %2034 = vst.msk [vmem:[#allocation4 + $0x147] sm:$0x1] %vm1642, %v2016
      %2035 = vst.msk [vmem:[#allocation4 + $0x15f] sm:$0x1] %vm1642, %v2017
      %2036 = vst.msk [vmem:[#allocation4 + $0x177] sm:$0x1] %vm1642, %v2018
      %2037 = vst.msk [vmem:[#allocation4 + $0x18f] sm:$0x1] %vm1642, %v2019
      %2038 = vst.msk [vmem:[#allocation4 + $0x1a7] sm:$0x1] %vm1642, %v2020
      %2039 = vst.msk [vmem:[#allocation4 + $0x10] sm:$0x1] %vm1642, %v2003
      %2040 = vst.msk [vmem:[#allocation4 + $0x28] sm:$0x1] %vm1642, %v2004
      %2041 = vst.msk [vmem:[#allocation4 + $0x40] sm:$0x1] %vm1642, %v2005
      %2042 = vst.msk [vmem:[#allocation4 + $0x58] sm:$0x1] %vm1642, %v2006
      %2043 = vst.msk [vmem:[#allocation4 + $0x70] sm:$0x1] %vm1642, %v2007
      %2044 = vst.msk [vmem:[#allocation4 + $0x88] sm:$0x1] %vm1642, %v2008
      %2045 = vst.msk [vmem:[#allocation4 + $0xa0] sm:$0x1] %vm1642, %v2009
      %2046 = vst.msk [vmem:[#allocation4 + $0xb8] sm:$0x1] %vm1642, %v2010
      %2047 = vst.msk [vmem:[#allocation4 + $0xd0] sm:$0x1] %vm1642, %v2011
      %2048 = vst.msk [vmem:[#allocation4 + $0xe8] sm:$0x1] %vm1642, %v2012
      %2049 = vst.msk [vmem:[#allocation4 + $0x100] sm:$0x1] %vm1642, %v2013
      %2050 = vst.msk [vmem:[#allocation4 + $0x118] sm:$0x1] %vm1642, %v2014
      %2051 = vst.msk [vmem:[#allocation4 + $0x130] sm:$0x1] %vm1642, %v2015
      %2052 = vst.msk [vmem:[#allocation4 + $0x148] sm:$0x1] %vm1642, %v2016
      %2053 = vst.msk [vmem:[#allocation4 + $0x160] sm:$0x1] %vm1642, %v2017
      %2054 = vst.msk [vmem:[#allocation4 + $0x178] sm:$0x1] %vm1642, %v2018
      %2055 = vst.msk [vmem:[#allocation4 + $0x190] sm:$0x1] %vm1642, %v2019
      %2056 = vst.msk [vmem:[#allocation4 + $0x1a8] sm:$0x1] %vm1642, %v2020
      %v2057 = vld [vmem:[#allocation3] sm:$0x1]
      %v2058 = vld [vmem:[#allocation3 + $0x8] sm:$0x1]
      %v2059 = vld [vmem:[#allocation3 + $0x10] sm:$0x1]
      %v2060 = vld [vmem:[#allocation3 + $0x18] sm:$0x1]
      %v2061 = vld [vmem:[#allocation3 + $0x20] sm:$0x1]
      %v2062 = vld [vmem:[#allocation3 + $0x28] sm:$0x1]
      %v2063 = vld [vmem:[#allocation3 + $0x30] sm:$0x1]
      %v2064 = vld [vmem:[#allocation3 + $0x38] sm:$0x1]
      %v2065 = vld [vmem:[#allocation3 + $0x40] sm:$0x1]
      %v2066 = vld [vmem:[#allocation3 + $0x48] sm:$0x1]
      %v2067 = vld [vmem:[#allocation3 + $0x50] sm:$0x1]
      %v2068 = vld [vmem:[#allocation3 + $0x58] sm:$0x1]
      %v2069 = vld [vmem:[#allocation3 + $0x60] sm:$0x1]
      %v2070 = vld [vmem:[#allocation3 + $0x68] sm:$0x1]
      %v2071 = vld [vmem:[#allocation3 + $0x70] sm:$0x1]
      %v2072 = vld [vmem:[#allocation3 + $0x78] sm:$0x1]
      %v2073 = vld [vmem:[#allocation3 + $0x80] sm:$0x1]
      %v2074 = vld [vmem:[#allocation3 + $0x88] sm:$0x1]
      %2075 = vst.msk [vmem:[#allocation4] sm:$0x1] %vm1642, %v2057
      %2076 = vst.msk [vmem:[#allocation4 + $0x18] sm:$0x1] %vm1642, %v2058
      %2077 = vst.msk [vmem:[#allocation4 + $0x30] sm:$0x1] %vm1642, %v2059
      %2078 = vst.msk [vmem:[#allocation4 + $0x48] sm:$0x1] %vm1642, %v2060
      %2079 = vst.msk [vmem:[#allocation4 + $0x60] sm:$0x1] %vm1642, %v2061
      %2080 = vst.msk [vmem:[#allocation4 + $0x78] sm:$0x1] %vm1642, %v2062
      %2081 = vst.msk [vmem:[#allocation4 + $0x90] sm:$0x1] %vm1642, %v2063
      %2082 = vst.msk [vmem:[#allocation4 + $0xa8] sm:$0x1] %vm1642, %v2064
      %2083 = vst.msk [vmem:[#allocation4 + $0xc0] sm:$0x1] %vm1642, %v2065
      %2084 = vst.msk [vmem:[#allocation4 + $0xd8] sm:$0x1] %vm1642, %v2066
      %2085 = vst.msk [vmem:[#allocation4 + $0xf0] sm:$0x1] %vm1642, %v2067
      %2086 = vst.msk [vmem:[#allocation4 + $0x108] sm:$0x1] %vm1642, %v2068
      %2087 = vst.msk [vmem:[#allocation4 + $0x120] sm:$0x1] %vm1642, %v2069
      %2088 = vst.msk [vmem:[#allocation4 + $0x138] sm:$0x1] %vm1642, %v2070
      %2089 = vst.msk [vmem:[#allocation4 + $0x150] sm:$0x1] %vm1642, %v2071
      %2090 = vst.msk [vmem:[#allocation4 + $0x168] sm:$0x1] %vm1642, %v2072
      %2091 = vst.msk [vmem:[#allocation4 + $0x180] sm:$0x1] %vm1642, %v2073
      %2092 = vst.msk [vmem:[#allocation4 + $0x198] sm:$0x1] %vm1642, %v2074
      %v2093 = vld [vmem:[#allocation3 + $0x7] sm:$0x1]
      %v2094 = vld [vmem:[#allocation3 + $0xf] sm:$0x1]
      %v2095 = vld [vmem:[#allocation3 + $0x17] sm:$0x1]
      %v2096 = vld [vmem:[#allocation3 + $0x1f] sm:$0x1]
      %v2097 = vld [vmem:[#allocation3 + $0x27] sm:$0x1]
      %v2098 = vld [vmem:[#allocation3 + $0x2f] sm:$0x1]
      %v2099 = vld [vmem:[#allocation3 + $0x37] sm:$0x1]
      %v2100 = vld [vmem:[#allocation3 + $0x3f] sm:$0x1]
      %v2101 = vld [vmem:[#allocation3 + $0x47] sm:$0x1]
      %v2102 = vld [vmem:[#allocation3 + $0x4f] sm:$0x1]
      %v2103 = vld [vmem:[#allocation3 + $0x57] sm:$0x1]
      %v2104 = vld [vmem:[#allocation3 + $0x5f] sm:$0x1]
      %v2105 = vld [vmem:[#allocation3 + $0x67] sm:$0x1]
      %v2106 = vld [vmem:[#allocation3 + $0x6f] sm:$0x1]
      %v2107 = vld [vmem:[#allocation3 + $0x77] sm:$0x1]
      %v2108 = vld [vmem:[#allocation3 + $0x7f] sm:$0x1]
      %v2109 = vld [vmem:[#allocation3 + $0x87] sm:$0x1]
      %v2110 = vld [vmem:[#allocation3 + $0x8f] sm:$0x1]
      %2111 = vst.msk [vmem:[#allocation4 + $0x11] sm:$0x1] %vm1642, %v2093
      %2112 = vst.msk [vmem:[#allocation4 + $0x29] sm:$0x1] %vm1642, %v2094
      %2113 = vst.msk [vmem:[#allocation4 + $0x41] sm:$0x1] %vm1642, %v2095
      %2114 = vst.msk [vmem:[#allocation4 + $0x59] sm:$0x1] %vm1642, %v2096
      %2115 = vst.msk [vmem:[#allocation4 + $0x71] sm:$0x1] %vm1642, %v2097
      %2116 = vst.msk [vmem:[#allocation4 + $0x89] sm:$0x1] %vm1642, %v2098
      %2117 = vst.msk [vmem:[#allocation4 + $0xa1] sm:$0x1] %vm1642, %v2099
      %2118 = vst.msk [vmem:[#allocation4 + $0xb9] sm:$0x1] %vm1642, %v2100
      %2119 = vst.msk [vmem:[#allocation4 + $0xd1] sm:$0x1] %vm1642, %v2101
      %2120 = vst.msk [vmem:[#allocation4 + $0xe9] sm:$0x1] %vm1642, %v2102
      %2121 = vst.msk [vmem:[#allocation4 + $0x101] sm:$0x1] %vm1642, %v2103
      %2122 = vst.msk [vmem:[#allocation4 + $0x119] sm:$0x1] %vm1642, %v2104
      %2123 = vst.msk [vmem:[#allocation4 + $0x131] sm:$0x1] %vm1642, %v2105
      %2124 = vst.msk [vmem:[#allocation4 + $0x149] sm:$0x1] %vm1642, %v2106
      %2125 = vst.msk [vmem:[#allocation4 + $0x161] sm:$0x1] %vm1642, %v2107
      %2126 = vst.msk [vmem:[#allocation4 + $0x179] sm:$0x1] %vm1642, %v2108
      %2127 = vst.msk [vmem:[#allocation4 + $0x191] sm:$0x1] %vm1642, %v2109
      %2128 = vst.msk [vmem:[#allocation4 + $0x1a9] sm:$0x1] %vm1642, %v2110
      %v2129 = vld [vmem:[#allocation4] sm:$0xff]
      %v2130 = vld [vmem:[#allocation4 + $0x8] sm:$0xff]
      %v2131 = vld [vmem:[#allocation4 + $0x18] sm:$0xff]
      %v2132 = vld [vmem:[#allocation4 + $0x20] sm:$0xff]
      %v2133 = vld [vmem:[#allocation4 + $0x30] sm:$0xff]
      %v2134 = vld [vmem:[#allocation4 + $0x38] sm:$0xff]
      %v2135 = vld [vmem:[#allocation4 + $0x48] sm:$0xff]
      %v2136 = vld [vmem:[#allocation4 + $0x50] sm:$0xff]
      %v2137 = vld [vmem:[#allocation4 + $0x60] sm:$0xff]
      %v2138 = vld [vmem:[#allocation4 + $0x68] sm:$0xff]
      %v2139 = vld [vmem:[#allocation4 + $0x78] sm:$0xff]
      %v2140 = vld [vmem:[#allocation4 + $0x80] sm:$0xff]
      %v2141 = vld [vmem:[#allocation4 + $0x90] sm:$0xff]
      %v2142 = vld [vmem:[#allocation4 + $0x98] sm:$0xff]
      %v2143 = vld [vmem:[#allocation4 + $0xa8] sm:$0xff]
      %v2144 = vld [vmem:[#allocation4 + $0xb0] sm:$0xff]
      %v2145 = vld [vmem:[#allocation4 + $0xc0] sm:$0xff]
      %v2146 = vld [vmem:[#allocation4 + $0xc8] sm:$0xff]
      %v2147 = vld [vmem:[#allocation4 + $0xd8] sm:$0xff]
      %v2148 = vld [vmem:[#allocation4 + $0xe0] sm:$0xff]
      %v2149 = vld [vmem:[#allocation4 + $0xf0] sm:$0xff]
      %v2150 = vld [vmem:[#allocation4 + $0xf8] sm:$0xff]
      %v2151 = vld [vmem:[#allocation4 + $0x108] sm:$0xff]
      %v2152 = vld [vmem:[#allocation4 + $0x110] sm:$0xff]
      %v2153 = vld [vmem:[#allocation4 + $0x120] sm:$0xff]
      %v2154 = vld [vmem:[#allocation4 + $0x128] sm:$0xff]
      %v2155 = vld [vmem:[#allocation4 + $0x138] sm:$0xff]
      %v2156 = vld [vmem:[#allocation4 + $0x140] sm:$0xff]
      %v2157 = vld [vmem:[#allocation4 + $0x150] sm:$0xff]
      %v2158 = vld [vmem:[#allocation4 + $0x158] sm:$0xff]
      %v2159 = vld [vmem:[#allocation4 + $0x168] sm:$0xff]
      %v2160 = vld [vmem:[#allocation4 + $0x170] sm:$0xff]
      %v2161 = vld [vmem:[%s3] sm:$0xff]
      %v2162 = vld [vmem:[%s3 + $0x8] sm:$0xff]
      %v2163 = vld [vmem:[%s3 + $0x10] sm:$0xff]
      %v2164 = vld [vmem:[%s3 + $0x18] sm:$0xff]
      %v2165 = vld [vmem:[%s3 + $0x20] sm:$0xff]
      %v2166 = vld [vmem:[%s3 + $0x28] sm:$0xff]
      %v2167 = vld [vmem:[%s3 + $0x30] sm:$0xff]
      %v2168 = vld [vmem:[%s3 + $0x38] sm:$0xff]
      %v2169 = vld [vmem:[#allocation4 + $0x1] sm:$0xff]
      %v2170 = vld [vmem:[#allocation4 + $0x9] sm:$0xff]
      %v2171 = vld [vmem:[#allocation4 + $0x19] sm:$0xff]
      %v2172 = vld [vmem:[#allocation4 + $0x21] sm:$0xff]
      %v2173 = vld [vmem:[#allocation4 + $0x31] sm:$0xff]
      %v2174 = vld [vmem:[#allocation4 + $0x39] sm:$0xff]
      %v2175 = vld [vmem:[#allocation4 + $0x49] sm:$0xff]
      %v2176 = vld [vmem:[#allocation4 + $0x51] sm:$0xff]
      %v2177 = vld [vmem:[#allocation4 + $0x61] sm:$0xff]
      %v2178 = vld [vmem:[#allocation4 + $0x69] sm:$0xff]
      %v2179 = vld [vmem:[#allocation4 + $0x79] sm:$0xff]
      %v2180 = vld [vmem:[#allocation4 + $0x81] sm:$0xff]
      %v2181 = vld [vmem:[#allocation4 + $0x91] sm:$0xff]
      %v2182 = vld [vmem:[#allocation4 + $0x99] sm:$0xff]
      %v2183 = vld [vmem:[#allocation4 + $0xa9] sm:$0xff]
      %v2184 = vld [vmem:[#allocation4 + $0xb1] sm:$0xff]
      %v2185 = vld [vmem:[#allocation4 + $0xc1] sm:$0xff]
      %v2186 = vld [vmem:[#allocation4 + $0xc9] sm:$0xff]
      %v2187 = vld [vmem:[#allocation4 + $0xd9] sm:$0xff]
      %v2188 = vld [vmem:[#allocation4 + $0xe1] sm:$0xff]
      %v2189 = vld [vmem:[#allocation4 + $0xf1] sm:$0xff]
      %v2190 = vld [vmem:[#allocation4 + $0xf9] sm:$0xff]
      %v2191 = vld [vmem:[#allocation4 + $0x109] sm:$0xff]
      %v2192 = vld [vmem:[#allocation4 + $0x111] sm:$0xff]
      %v2193 = vld [vmem:[#allocation4 + $0x121] sm:$0xff]
      %v2194 = vld [vmem:[#allocation4 + $0x129] sm:$0xff]
      %v2195 = vld [vmem:[#allocation4 + $0x139] sm:$0xff]
      %v2196 = vld [vmem:[#allocation4 + $0x141] sm:$0xff]
      %v2197 = vld [vmem:[#allocation4 + $0x151] sm:$0xff]
      %v2198 = vld [vmem:[#allocation4 + $0x159] sm:$0xff]
      %v2199 = vld [vmem:[#allocation4 + $0x169] sm:$0xff]
      %v2200 = vld [vmem:[#allocation4 + $0x171] sm:$0xff]
      %s2201 = scalar_lea.vmem %s3, 64
      %v2202 = vld [vmem:[%s2201] sm:$0xff]
      %v2203 = vld [vmem:[%s2201 + $0x8] sm:$0xff]
      %v2204 = vld [vmem:[%s2201 + $0x10] sm:$0xff]
      %v2205 = vld [vmem:[%s2201 + $0x18] sm:$0xff]
      %v2206 = vld [vmem:[%s2201 + $0x20] sm:$0xff]
      %v2207 = vld [vmem:[%s2201 + $0x28] sm:$0xff]
      %v2208 = vld [vmem:[%s2201 + $0x30] sm:$0xff]
      %v2209 = vld [vmem:[%s2201 + $0x38] sm:$0xff]
      %v2211 = vsel %vm1588, %v2169, 0
      %v2214 = vsel %vm1588, %v2170, 0
      %v2217 = vsel %vm1588, %v2171, 0
      %v2220 = vsel %vm1588, %v2172, 0
      %v2223 = vsel %vm1588, %v2173, 0
      %v2226 = vsel %vm1588, %v2174, 0
      %v2229 = vsel %vm1588, %v2175, 0
      %v2232 = vsel %vm1588, %v2176, 0
      %v2235 = vsel %vm1588, %v2177, 0
      %v2238 = vsel %vm1588, %v2178, 0
      %v2241 = vsel %vm1588, %v2179, 0
      %v2244 = vsel %vm1588, %v2180, 0
      %v2247 = vsel %vm1588, %v2181, 0
      %v2250 = vsel %vm1588, %v2182, 0
      %v2253 = vsel %vm1588, %v2183, 0
      %v2256 = vsel %vm1588, %v2184, 0
      %v2259 = vsel %vm1588, %v2185, 0
      %v2262 = vsel %vm1588, %v2186, 0
      %v2265 = vsel %vm1588, %v2187, 0
      %v2268 = vsel %vm1588, %v2188, 0
      %v2271 = vsel %vm1588, %v2189, 0
      %v2274 = vsel %vm1588, %v2190, 0
      %v2277 = vsel %vm1588, %v2191, 0
      %v2280 = vsel %vm1588, %v2192, 0
      %v2283 = vsel %vm1588, %v2193, 0
      %v2286 = vsel %vm1588, %v2194, 0
      %v2289 = vsel %vm1588, %v2195, 0
      %v2292 = vsel %vm1588, %v2196, 0
      %v2295 = vsel %vm1588, %v2197, 0
      %v2298 = vsel %vm1588, %v2198, 0
      %v2301 = vsel %vm1588, %v2199, 0
      %v2304 = vsel %vm1588, %v2200, 0
      %2306 = vmatprep.subr.mxu0 0.0
      %2307 = vmatpush1.msra.mxu0 %v2202
      %2308 = vmatprep.subr.mxu0 0.0
      %2309 = vmatpush1.msra.mxu0 %v2203
      %2310 = vmatprep.subr.mxu0 0.0
      %2311 = vmatpush1.msra.mxu0 %v2204
      %2312 = vmatprep.subr.mxu0 0.0
      %2313 = vmatpush1.msra.mxu0 %v2205
      %2314 = vmatprep.subr.mxu0 0.0
      %2315 = vmatpush1.msra.mxu0 %v2206
      %2316 = vmatprep.subr.mxu0 0.0
      %2317 = vmatpush1.msra.mxu0 %v2207
      %2318 = vmatprep.subr.mxu0 0.0
      %2319 = vmatpush1.msra.mxu0 %v2208
      %2320 = vmatprep.subr.mxu0 0.0
      %2321 = vmatpush1.msra.mxu0 %v2209
      %2322 = vmatprep.subr.mxu0 0.0
      %2323 = vmatpush1.msra.mxu0 0.0
      %2324 = vmatprep.subr.mxu0 0.0
      %2325 = vmatpush1.msra.mxu0 0.0
      %2326 = vmatprep.subr.mxu0 0.0
      %2327 = vmatpush1.msra.mxu0 0.0
      %2328 = vmatprep.subr.mxu0 0.0
      %2329 = vmatpush1.msra.mxu0 0.0
      %2330 = vmatprep.subr.mxu0 0.0
      %2331 = vmatpush1.msra.mxu0 0.0
      %2332 = vmatprep.subr.mxu0 0.0
      %2333 = vmatpush1.msra.mxu0 0.0
      %2334 = vmatprep.subr.mxu0 0.0
      %2335 = vmatpush1.msra.mxu0 0.0
      %2336 = vmatprep.subr.mxu0 0.0
      %2337 = vmatpush1.msra.mxu0 0.0
      %2338 = vmatprep.subr.mxu0 0.0
      %2339 = vmatpush1.msra.mxu0 0.0
      %2340 = vmatprep.subr.mxu0 0.0
      %2341 = vmatpush1.msra.mxu0 0.0
      %2342 = vmatprep.subr.mxu0 0.0
      %2343 = vmatpush1.msra.mxu0 0.0
      %2344 = vmatprep.subr.mxu0 0.0
      %2345 = vmatpush1.msra.mxu0 0.0
      %2346 = vmatprep.subr.mxu0 0.0
      %2347 = vmatpush1.msra.mxu0 0.0
      %2348 = vmatprep.subr.mxu0 0.0
      %2349 = vmatpush1.msra.mxu0 0.0
      %2350 = vmatprep.subr.mxu0 0.0
      %2351 = vmatpush1.msra.mxu0 0.0
      %2352 = vmatprep.subr.mxu0 0.0
      %2353 = vmatpush1.msra.mxu0 0.0
      %2354 = vmatprep.subr.mxu0 0.0
      %2355 = vmatpush1.msra.mxu0 0.0
      %2356 = vmatprep.subr.mxu0 0.0
      %2357 = vmatpush1.msra.mxu0 0.0
      %2358 = vmatprep.subr.mxu0 0.0
      %2359 = vmatpush1.msra.mxu0 0.0
      %2360 = vmatprep.subr.mxu0 0.0
      %2361 = vmatpush1.msra.mxu0 0.0
      %2362 = vmatprep.subr.mxu0 0.0
      %2363 = vmatpush1.msra.mxu0 0.0
      %2364 = vmatprep.subr.mxu0 0.0
      %2365 = vmatpush1.msra.mxu0 0.0
      %2366 = vmatprep.subr.mxu0 0.0
      %2367 = vmatpush1.msra.mxu0 0.0
      %2368 = vmatprep.subr.mxu0 0.0
      %2369 = vmatpush1.msra.mxu0 0.0
      %2370 = vmatprep.mubr.f32.mxu0 0.0
      %2371 = vmatmul.mubr.f32.gmra.mrb[0].mxu0 %v2211
      %v2372 = vpop.f32.mrb[0].mxu0
      %v2373 = vadd.f32 0.0, %v2372
      %v2374 = vpop.f32.mrb[0].mxu0
      %2375 = vmatprep.mubr.f32.mxu0 0.0
      %2376 = vmatmul.mubr.f32.gmra.mrb[0].mxu0 %v2214
      %v2377 = vpop.f32.mrb[0].mxu0
      %v2378 = vadd.f32 0.0, %v2377
      %v2379 = vpop.f32.mrb[0].mxu0
      %2380 = vmatprep.mubr.f32.mxu0 0.0
      %2381 = vmatmul.mubr.f32.gmra.mrb[0].mxu0 %v2217
      %v2382 = vpop.f32.mrb[0].mxu0
      %v2383 = vadd.f32 0.0, %v2382
      %v2384 = vpop.f32.mrb[0].mxu0
      %2385 = vmatprep.mubr.f32.mxu0 0.0
      %2386 = vmatmul.mubr.f32.gmra.mrb[0].mxu0 %v2220
      %v2387 = vpop.f32.mrb[0].mxu0
      %v2388 = vadd.f32 0.0, %v2387
      %v2389 = vpop.f32.mrb[0].mxu0
      %2390 = vmatprep.mubr.f32.mxu0 0.0
      %2391 = vmatmul.mubr.f32.gmra.mrb[0].mxu0 %v2223
      %v2392 = vpop.f32.mrb[0].mxu0
      %v2393 = vadd.f32 0.0, %v2392
      %v2394 = vpop.f32.mrb[0].mxu0
      %2395 = vmatprep.mubr.f32.mxu0 0.0
      %2396 = vmatmul.mubr.f32.gmra.mrb[0].mxu0 %v2226
      %v2397 = vpop.f32.mrb[0].mxu0
      %v2398 = vadd.f32 0.0, %v2397
      %v2399 = vpop.f32.mrb[0].mxu0
      %2400 = vmatprep.mubr.f32.mxu0 0.0
      %2401 = vmatmul.mubr.f32.gmra.mrb[0].mxu0 %v2229
      %v2402 = vpop.f32.mrb[0].mxu0
      %v2403 = vadd.f32 0.0, %v2402
      %v2404 = vpop.f32.mrb[0].mxu0
      %2405 = vmatprep.mubr.f32.mxu0 0.0
      %2406 = vmatmul.mubr.f32.gmra.mrb[0].mxu0 %v2232
      %v2407 = vpop.f32.mrb[0].mxu0
      %v2408 = vadd.f32 0.0, %v2407
      %v2409 = vpop.f32.mrb[0].mxu0
      %2410 = vmatprep.mubr.f32.mxu0 0.0
      %2411 = vmatmul.mubr.f32.gmra.mrb[0].mxu0 %v2235
      %v2412 = vpop.f32.mrb[0].mxu0
      %v2413 = vadd.f32 0.0, %v2412
      %v2414 = vpop.f32.mrb[0].mxu0
      %2415 = vmatprep.mubr.f32.mxu0 0.0
      %2416 = vmatmul.mubr.f32.gmra.mrb[0].mxu0 %v2238
      %v2417 = vpop.f32.mrb[0].mxu0
      %v2418 = vadd.f32 0.0, %v2417
      %v2419 = vpop.f32.mrb[0].mxu0
      %2420 = vmatprep.mubr.f32.mxu0 0.0
      %2421 = vmatmul.mubr.f32.gmra.mrb[0].mxu0 %v2241
      %v2422 = vpop.f32.mrb[0].mxu0
      %v2423 = vadd.f32 0.0, %v2422
      %v2424 = vpop.f32.mrb[0].mxu0
      %2425 = vmatprep.mubr.f32.mxu0 0.0
      %2426 = vmatmul.mubr.f32.gmra.mrb[0].mxu0 %v2244
      %v2427 = vpop.f32.mrb[0].mxu0
      %v2428 = vadd.f32 0.0, %v2427
      %v2429 = vpop.f32.mrb[0].mxu0
      %2430 = vmatprep.mubr.f32.mxu0 0.0
      %2431 = vmatmul.mubr.f32.gmra.mrb[0].mxu0 %v2247
      %v2432 = vpop.f32.mrb[0].mxu0
      %v2433 = vadd.f32 0.0, %v2432
      %v2434 = vpop.f32.mrb[0].mxu0
      %2435 = vmatprep.mubr.f32.mxu0 0.0
      %2436 = vmatmul.mubr.f32.gmra.mrb[0].mxu0 %v2250
      %v2437 = vpop.f32.mrb[0].mxu0
      %v2438 = vadd.f32 0.0, %v2437
      %v2439 = vpop.f32.mrb[0].mxu0
      %2440 = vmatprep.mubr.f32.mxu0 0.0
      %2441 = vmatmul.mubr.f32.gmra.mrb[0].mxu0 %v2253
      %v2442 = vpop.f32.mrb[0].mxu0
      %v2443 = vadd.f32 0.0, %v2442
      %v2444 = vpop.f32.mrb[0].mxu0
      %2445 = vmatprep.mubr.f32.mxu0 0.0
      %2446 = vmatmul.mubr.f32.gmra.mrb[0].mxu0 %v2256
      %v2447 = vpop.f32.mrb[0].mxu0
      %v2448 = vadd.f32 0.0, %v2447
      %v2449 = vpop.f32.mrb[0].mxu0
      %2450 = vmatprep.mubr.f32.mxu0 0.0
      %2451 = vmatmul.mubr.f32.gmra.mrb[0].mxu0 %v2259
      %v2452 = vpop.f32.mrb[0].mxu0
      %v2453 = vadd.f32 0.0, %v2452
      %v2454 = vpop.f32.mrb[0].mxu0
      %2455 = vmatprep.mubr.f32.mxu0 0.0
      %2456 = vmatmul.mubr.f32.gmra.mrb[0].mxu0 %v2262
      %v2457 = vpop.f32.mrb[0].mxu0
      %v2458 = vadd.f32 0.0, %v2457
      %v2459 = vpop.f32.mrb[0].mxu0
      %2460 = vmatprep.mubr.f32.mxu0 0.0
      %2461 = vmatmul.mubr.f32.gmra.mrb[0].mxu0 %v2265
      %v2462 = vpop.f32.mrb[0].mxu0
      %v2463 = vadd.f32 0.0, %v2462
      %v2464 = vpop.f32.mrb[0].mxu0
      %2465 = vmatprep.mubr.f32.mxu0 0.0
      %2466 = vmatmul.mubr.f32.gmra.mrb[0].mxu0 %v2268
      %v2467 = vpop.f32.mrb[0].mxu0
      %v2468 = vadd.f32 0.0, %v2467
      %v2469 = vpop.f32.mrb[0].mxu0
      %2470 = vmatprep.mubr.f32.mxu0 0.0
      %2471 = vmatmul.mubr.f32.gmra.mrb[0].mxu0 %v2271
      %v2472 = vpop.f32.mrb[0].mxu0
      %v2473 = vadd.f32 0.0, %v2472
      %v2474 = vpop.f32.mrb[0].mxu0
      %2475 = vmatprep.mubr.f32.mxu0 0.0
      %2476 = vmatmul.mubr.f32.gmra.mrb[0].mxu0 %v2274
      %v2477 = vpop.f32.mrb[0].mxu0
      %v2478 = vadd.f32 0.0, %v2477
      %v2479 = vpop.f32.mrb[0].mxu0
      %2480 = vmatprep.mubr.f32.mxu0 0.0
      %2481 = vmatmul.mubr.f32.gmra.mrb[0].mxu0 %v2277
      %v2482 = vpop.f32.mrb[0].mxu0
      %v2483 = vadd.f32 0.0, %v2482
      %v2484 = vpop.f32.mrb[0].mxu0
      %2485 = vmatprep.mubr.f32.mxu0 0.0
      %2486 = vmatmul.mubr.f32.gmra.mrb[0].mxu0 %v2280
      %v2487 = vpop.f32.mrb[0].mxu0
      %v2488 = vadd.f32 0.0, %v2487
      %v2489 = vpop.f32.mrb[0].mxu0
      %2490 = vmatprep.mubr.f32.mxu0 0.0
      %2491 = vmatmul.mubr.f32.gmra.mrb[0].mxu0 %v2283
      %v2492 = vpop.f32.mrb[0].mxu0
      %v2493 = vadd.f32 0.0, %v2492
      %v2494 = vpop.f32.mrb[0].mxu0
      %2495 = vmatprep.mubr.f32.mxu0 0.0
      %2496 = vmatmul.mubr.f32.gmra.mrb[0].mxu0 %v2286
      %v2497 = vpop.f32.mrb[0].mxu0
      %v2498 = vadd.f32 0.0, %v2497
      %v2499 = vpop.f32.mrb[0].mxu0
      %2500 = vmatprep.mubr.f32.mxu0 0.0
      %2501 = vmatmul.mubr.f32.gmra.mrb[0].mxu0 %v2289
      %v2502 = vpop.f32.mrb[0].mxu0
      %v2503 = vadd.f32 0.0, %v2502
      %v2504 = vpop.f32.mrb[0].mxu0
      %2505 = vmatprep.mubr.f32.mxu0 0.0
      %2506 = vmatmul.mubr.f32.gmra.mrb[0].mxu0 %v2292
      %v2507 = vpop.f32.mrb[0].mxu0
      %v2508 = vadd.f32 0.0, %v2507
      %v2509 = vpop.f32.mrb[0].mxu0
      %2510 = vmatprep.mubr.f32.mxu0 0.0
      %2511 = vmatmul.mubr.f32.gmra.mrb[0].mxu0 %v2295
      %v2512 = vpop.f32.mrb[0].mxu0
      %v2513 = vadd.f32 0.0, %v2512
      %v2514 = vpop.f32.mrb[0].mxu0
      %2515 = vmatprep.mubr.f32.mxu0 0.0
      %2516 = vmatmul.mubr.f32.gmra.mrb[0].mxu0 %v2298
      %v2517 = vpop.f32.mrb[0].mxu0
      %v2518 = vadd.f32 0.0, %v2517
      %v2519 = vpop.f32.mrb[0].mxu0
      %2520 = vmatprep.mubr.f32.mxu0 0.0
      %2521 = vmatmul.mubr.f32.gmra.mrb[0].mxu0 %v2301
      %v2522 = vpop.f32.mrb[0].mxu0
      %v2523 = vadd.f32 0.0, %v2522
      %v2524 = vpop.f32.mrb[0].mxu0
      %2525 = vmatprep.mubr.f32.mxu0 0.0
      %2526 = vmatmul.mubr.f32.gmra.mrb[0].mxu0 %v2304
      %v2527 = vpop.f32.mrb[0].mxu0
      %v2528 = vadd.f32 0.0, %v2527
      %v2529 = vpop.f32.mrb[0].mxu0
      %2530 = vdwg.mxu0
      %v2532 = vsel %vm1588, %v2129, 0
      %v2535 = vsel %vm1588, %v2130, 0
      %v2538 = vsel %vm1588, %v2131, 0
      %v2541 = vsel %vm1588, %v2132, 0
      %v2544 = vsel %vm1588, %v2133, 0
      %v2547 = vsel %vm1588, %v2134, 0
      %v2550 = vsel %vm1588, %v2135, 0
      %v2553 = vsel %vm1588, %v2136, 0
      %v2556 = vsel %vm1588, %v2137, 0
      %v2559 = vsel %vm1588, %v2138, 0
      %v2562 = vsel %vm1588, %v2139, 0
      %v2565 = vsel %vm1588, %v2140, 0
      %v2568 = vsel %vm1588, %v2141, 0
      %v2571 = vsel %vm1588, %v2142, 0
      %v2574 = vsel %vm1588, %v2143, 0
      %v2577 = vsel %vm1588, %v2144, 0
      %v2580 = vsel %vm1588, %v2145, 0
      %v2583 = vsel %vm1588, %v2146, 0
      %v2586 = vsel %vm1588, %v2147, 0
      %v2589 = vsel %vm1588, %v2148, 0
      %v2592 = vsel %vm1588, %v2149, 0
      %v2595 = vsel %vm1588, %v2150, 0
      %v2598 = vsel %vm1588, %v2151, 0
      %v2601 = vsel %vm1588, %v2152, 0
      %v2604 = vsel %vm1588, %v2153, 0
      %v2607 = vsel %vm1588, %v2154, 0
      %v2610 = vsel %vm1588, %v2155, 0
      %v2613 = vsel %vm1588, %v2156, 0
      %v2616 = vsel %vm1588, %v2157, 0
      %v2619 = vsel %vm1588, %v2158, 0
      %v2622 = vsel %vm1588, %v2159, 0
      %v2625 = vsel %vm1588, %v2160, 0
      %2627 = vmatprep.subr.mxu0 0.0
      %2628 = vmatpush1.msra.mxu0 %v2161
      %2629 = vmatprep.subr.mxu0 0.0
      %2630 = vmatpush1.msra.mxu0 %v2162
      %2631 = vmatprep.subr.mxu0 0.0
      %2632 = vmatpush1.msra.mxu0 %v2163
      %2633 = vmatprep.subr.mxu0 0.0
      %2634 = vmatpush1.msra.mxu0 %v2164
      %2635 = vmatprep.subr.mxu0 0.0
      %2636 = vmatpush1.msra.mxu0 %v2165
      %2637 = vmatprep.subr.mxu0 0.0
      %2638 = vmatpush1.msra.mxu0 %v2166
      %2639 = vmatprep.subr.mxu0 0.0
      %2640 = vmatpush1.msra.mxu0 %v2167
      %2641 = vmatprep.subr.mxu0 0.0
      %2642 = vmatpush1.msra.mxu0 %v2168
      %2643 = vmatprep.subr.mxu0 0.0
      %2644 = vmatpush1.msra.mxu0 0.0
      %2645 = vmatprep.subr.mxu0 0.0
      %2646 = vmatpush1.msra.mxu0 0.0
      %2647 = vmatprep.subr.mxu0 0.0
      %2648 = vmatpush1.msra.mxu0 0.0
      %2649 = vmatprep.subr.mxu0 0.0
      %2650 = vmatpush1.msra.mxu0 0.0
      %2651 = vmatprep.subr.mxu0 0.0
      %2652 = vmatpush1.msra.mxu0 0.0
      %2653 = vmatprep.subr.mxu0 0.0
      %2654 = vmatpush1.msra.mxu0 0.0
      %2655 = vmatprep.subr.mxu0 0.0
      %2656 = vmatpush1.msra.mxu0 0.0
      %2657 = vmatprep.subr.mxu0 0.0
      %2658 = vmatpush1.msra.mxu0 0.0
      %2659 = vmatprep.subr.mxu0 0.0
      %2660 = vmatpush1.msra.mxu0 0.0
      %2661 = vmatprep.subr.mxu0 0.0
      %2662 = vmatpush1.msra.mxu0 0.0
      %2663 = vmatprep.subr.mxu0 0.0
      %2664 = vmatpush1.msra.mxu0 0.0
      %2665 = vmatprep.subr.mxu0 0.0
      %2666 = vmatpush1.msra.mxu0 0.0
      %2667 = vmatprep.subr.mxu0 0.0
      %2668 = vmatpush1.msra.mxu0 0.0
      %2669 = vmatprep.subr.mxu0 0.0
      %2670 = vmatpush1.msra.mxu0 0.0
      %2671 = vmatprep.subr.mxu0 0.0
      %2672 = vmatpush1.msra.mxu0 0.0
      %2673 = vmatprep.subr.mxu0 0.0
      %2674 = vmatpush1.msra.mxu0 0.0
      %2675 = vmatprep.subr.mxu0 0.0
      %2676 = vmatpush1.msra.mxu0 0.0
      %2677 = vmatprep.subr.mxu0 0.0
      %2678 = vmatpush1.msra.mxu0 0.0
      %2679 = vmatprep.subr.mxu0 0.0
      %2680 = vmatpush1.msra.mxu0 0.0
      %2681 = vmatprep.subr.mxu0 0.0
      %2682 = vmatpush1.msra.mxu0 0.0
      %2683 = vmatprep.subr.mxu0 0.0
      %2684 = vmatpush1.msra.mxu0 0.0
      %2685 = vmatprep.subr.mxu0 0.0
      %2686 = vmatpush1.msra.mxu0 0.0
      %2687 = vmatprep.subr.mxu0 0.0
      %2688 = vmatpush1.msra.mxu0 0.0
      %2689 = vmatprep.subr.mxu0 0.0
      %2690 = vmatpush1.msra.mxu0 0.0
      %2691 = vmatprep.mubr.f32.mxu0 0.0
      %2692 = vmatmul.mubr.f32.gmra.mrb[0].mxu0 %v2532
      %v2693 = vpop.f32.mrb[0].mxu0
      %v2694 = vadd.f32 %v2373, %v2693
      %v2695 = vpop.f32.mrb[0].mxu0
      %2696 = vmatprep.mubr.f32.mxu0 0.0
      %2697 = vmatmul.mubr.f32.gmra.mrb[0].mxu0 %v2535
      %v2698 = vpop.f32.mrb[0].mxu0
      %v2699 = vadd.f32 %v2378, %v2698
      %v2700 = vpop.f32.mrb[0].mxu0
      %2701 = vmatprep.mubr.f32.mxu0 0.0
      %2702 = vmatmul.mubr.f32.gmra.mrb[0].mxu0 %v2538
      %v2703 = vpop.f32.mrb[0].mxu0
      %v2704 = vadd.f32 %v2383, %v2703
      %v2705 = vpop.f32.mrb[0].mxu0
      %2706 = vmatprep.mubr.f32.mxu0 0.0
      %2707 = vmatmul.mubr.f32.gmra.mrb[0].mxu0 %v2541
      %v2708 = vpop.f32.mrb[0].mxu0
      %v2709 = vadd.f32 %v2388, %v2708
      %v2710 = vpop.f32.mrb[0].mxu0
      %2711 = vmatprep.mubr.f32.mxu0 0.0
      %2712 = vmatmul.mubr.f32.gmra.mrb[0].mxu0 %v2544
      %v2713 = vpop.f32.mrb[0].mxu0
      %v2714 = vadd.f32 %v2393, %v2713
      %v2715 = vpop.f32.mrb[0].mxu0
      %2716 = vmatprep.mubr.f32.mxu0 0.0
      %2717 = vmatmul.mubr.f32.gmra.mrb[0].mxu0 %v2547
      %v2718 = vpop.f32.mrb[0].mxu0
      %v2719 = vadd.f32 %v2398, %v2718
      %v2720 = vpop.f32.mrb[0].mxu0
      %2721 = vmatprep.mubr.f32.mxu0 0.0
      %2722 = vmatmul.mubr.f32.gmra.mrb[0].mxu0 %v2550
      %v2723 = vpop.f32.mrb[0].mxu0
      %v2724 = vadd.f32 %v2403, %v2723
      %v2725 = vpop.f32.mrb[0].mxu0
      %2726 = vmatprep.mubr.f32.mxu0 0.0
      %2727 = vmatmul.mubr.f32.gmra.mrb[0].mxu0 %v2553
      %v2728 = vpop.f32.mrb[0].mxu0
      %v2729 = vadd.f32 %v2408, %v2728
      %v2730 = vpop.f32.mrb[0].mxu0
      %2731 = vmatprep.mubr.f32.mxu0 0.0
      %2732 = vmatmul.mubr.f32.gmra.mrb[0].mxu0 %v2556
      %v2733 = vpop.f32.mrb[0].mxu0
      %v2734 = vadd.f32 %v2413, %v2733
      %v2735 = vpop.f32.mrb[0].mxu0
      %2736 = vmatprep.mubr.f32.mxu0 0.0
      %2737 = vmatmul.mubr.f32.gmra.mrb[0].mxu0 %v2559
      %v2738 = vpop.f32.mrb[0].mxu0
      %v2739 = vadd.f32 %v2418, %v2738
      %v2740 = vpop.f32.mrb[0].mxu0
      %2741 = vmatprep.mubr.f32.mxu0 0.0
      %2742 = vmatmul.mubr.f32.gmra.mrb[0].mxu0 %v2562
      %v2743 = vpop.f32.mrb[0].mxu0
      %v2744 = vadd.f32 %v2423, %v2743
      %v2745 = vpop.f32.mrb[0].mxu0
      %2746 = vmatprep.mubr.f32.mxu0 0.0
      %2747 = vmatmul.mubr.f32.gmra.mrb[0].mxu0 %v2565
      %v2748 = vpop.f32.mrb[0].mxu0
      %v2749 = vadd.f32 %v2428, %v2748
      %v2750 = vpop.f32.mrb[0].mxu0
      %2751 = vmatprep.mubr.f32.mxu0 0.0
      %2752 = vmatmul.mubr.f32.gmra.mrb[0].mxu0 %v2568
      %v2753 = vpop.f32.mrb[0].mxu0
      %v2754 = vadd.f32 %v2433, %v2753
      %v2755 = vpop.f32.mrb[0].mxu0
      %2756 = vmatprep.mubr.f32.mxu0 0.0
      %2757 = vmatmul.mubr.f32.gmra.mrb[0].mxu0 %v2571
      %v2758 = vpop.f32.mrb[0].mxu0
      %v2759 = vadd.f32 %v2438, %v2758
      %v2760 = vpop.f32.mrb[0].mxu0
      %2761 = vmatprep.mubr.f32.mxu0 0.0
      %2762 = vmatmul.mubr.f32.gmra.mrb[0].mxu0 %v2574
      %v2763 = vpop.f32.mrb[0].mxu0
      %v2764 = vadd.f32 %v2443, %v2763
      %v2765 = vpop.f32.mrb[0].mxu0
      %2766 = vmatprep.mubr.f32.mxu0 0.0
      %2767 = vmatmul.mubr.f32.gmra.mrb[0].mxu0 %v2577
      %v2768 = vpop.f32.mrb[0].mxu0
      %v2769 = vadd.f32 %v2448, %v2768
      %v2770 = vpop.f32.mrb[0].mxu0
      %2771 = vmatprep.mubr.f32.mxu0 0.0
      %2772 = vmatmul.mubr.f32.gmra.mrb[0].mxu0 %v2580
      %v2773 = vpop.f32.mrb[0].mxu0
      %v2774 = vadd.f32 %v2453, %v2773
      %v2775 = vpop.f32.mrb[0].mxu0
      %2776 = vmatprep.mubr.f32.mxu0 0.0
      %2777 = vmatmul.mubr.f32.gmra.mrb[0].mxu0 %v2583
      %v2778 = vpop.f32.mrb[0].mxu0
      %v2779 = vadd.f32 %v2458, %v2778
      %v2780 = vpop.f32.mrb[0].mxu0
      %2781 = vmatprep.mubr.f32.mxu0 0.0
      %2782 = vmatmul.mubr.f32.gmra.mrb[0].mxu0 %v2586
      %v2783 = vpop.f32.mrb[0].mxu0
      %v2784 = vadd.f32 %v2463, %v2783
      %v2785 = vpop.f32.mrb[0].mxu0
      %2786 = vmatprep.mubr.f32.mxu0 0.0
      %2787 = vmatmul.mubr.f32.gmra.mrb[0].mxu0 %v2589
      %v2788 = vpop.f32.mrb[0].mxu0
      %v2789 = vadd.f32 %v2468, %v2788
      %v2790 = vpop.f32.mrb[0].mxu0
      %2791 = vmatprep.mubr.f32.mxu0 0.0
      %2792 = vmatmul.mubr.f32.gmra.mrb[0].mxu0 %v2592
      %v2793 = vpop.f32.mrb[0].mxu0
      %v2794 = vadd.f32 %v2473, %v2793
      %v2795 = vpop.f32.mrb[0].mxu0
      %2796 = vmatprep.mubr.f32.mxu0 0.0
      %2797 = vmatmul.mubr.f32.gmra.mrb[0].mxu0 %v2595
      %v2798 = vpop.f32.mrb[0].mxu0
      %v2799 = vadd.f32 %v2478, %v2798
      %v2800 = vpop.f32.mrb[0].mxu0
      %2801 = vmatprep.mubr.f32.mxu0 0.0
      %2802 = vmatmul.mubr.f32.gmra.mrb[0].mxu0 %v2598
      %v2803 = vpop.f32.mrb[0].mxu0
      %v2804 = vadd.f32 %v2483, %v2803
      %v2805 = vpop.f32.mrb[0].mxu0
      %2806 = vmatprep.mubr.f32.mxu0 0.0
      %2807 = vmatmul.mubr.f32.gmra.mrb[0].mxu0 %v2601
      %v2808 = vpop.f32.mrb[0].mxu0
      %v2809 = vadd.f32 %v2488, %v2808
      %v2810 = vpop.f32.mrb[0].mxu0
      %2811 = vmatprep.mubr.f32.mxu0 0.0
      %2812 = vmatmul.mubr.f32.gmra.mrb[0].mxu0 %v2604
      %v2813 = vpop.f32.mrb[0].mxu0
      %v2814 = vadd.f32 %v2493, %v2813
      %v2815 = vpop.f32.mrb[0].mxu0
      %2816 = vmatprep.mubr.f32.mxu0 0.0
      %2817 = vmatmul.mubr.f32.gmra.mrb[0].mxu0 %v2607
      %v2818 = vpop.f32.mrb[0].mxu0
      %v2819 = vadd.f32 %v2498, %v2818
      %v2820 = vpop.f32.mrb[0].mxu0
      %2821 = vmatprep.mubr.f32.mxu0 0.0
      %2822 = vmatmul.mubr.f32.gmra.mrb[0].mxu0 %v2610
      %v2823 = vpop.f32.mrb[0].mxu0
      %v2824 = vadd.f32 %v2503, %v2823
      %v2825 = vpop.f32.mrb[0].mxu0
      %2826 = vmatprep.mubr.f32.mxu0 0.0
      %2827 = vmatmul.mubr.f32.gmra.mrb[0].mxu0 %v2613
      %v2828 = vpop.f32.mrb[0].mxu0
      %v2829 = vadd.f32 %v2508, %v2828
      %v2830 = vpop.f32.mrb[0].mxu0
      %2831 = vmatprep.mubr.f32.mxu0 0.0
      %2832 = vmatmul.mubr.f32.gmra.mrb[0].mxu0 %v2616
      %v2833 = vpop.f32.mrb[0].mxu0
      %v2834 = vadd.f32 %v2513, %v2833
      %v2835 = vpop.f32.mrb[0].mxu0
      %2836 = vmatprep.mubr.f32.mxu0 0.0
      %2837 = vmatmul.mubr.f32.gmra.mrb[0].mxu0 %v2619
      %v2838 = vpop.f32.mrb[0].mxu0
      %v2839 = vadd.f32 %v2518, %v2838
      %v2840 = vpop.f32.mrb[0].mxu0
      %2841 = vmatprep.mubr.f32.mxu0 0.0
      %2842 = vmatmul.mubr.f32.gmra.mrb[0].mxu0 %v2622
      %v2843 = vpop.f32.mrb[0].mxu0
      %v2844 = vadd.f32 %v2523, %v2843
      %v2845 = vpop.f32.mrb[0].mxu0
      %2846 = vmatprep.mubr.f32.mxu0 0.0
      %2847 = vmatmul.mubr.f32.gmra.mrb[0].mxu0 %v2625
      %v2848 = vpop.f32.mrb[0].mxu0
      %v2849 = vadd.f32 %v2528, %v2848
      %v2850 = vpop.f32.mrb[0].mxu0
      %2851 = vdwg.mxu0
      %v2852 = vld [vmem:[#allocation4 + $0x2] sm:$0xff]
      %v2853 = vld [vmem:[#allocation4 + $0xa] sm:$0xff]
      %v2854 = vld [vmem:[#allocation4 + $0x1a] sm:$0xff]
      %v2855 = vld [vmem:[#allocation4 + $0x22] sm:$0xff]
      %v2856 = vld [vmem:[#allocation4 + $0x32] sm:$0xff]
      %v2857 = vld [vmem:[#allocation4 + $0x3a] sm:$0xff]
      %v2858 = vld [vmem:[#allocation4 + $0x4a] sm:$0xff]
      %v2859 = vld [vmem:[#allocation4 + $0x52] sm:$0xff]
      %v2860 = vld [vmem:[#allocation4 + $0x62] sm:$0xff]
      %v2861 = vld [vmem:[#allocation4 + $0x6a] sm:$0xff]
      %v2862 = vld [vmem:[#allocation4 + $0x7a] sm:$0xff]
      %v2863 = vld [vmem:[#allocation4 + $0x82] sm:$0xff]
      %v2864 = vld [vmem:[#allocation4 + $0x92] sm:$0xff]
      %v2865 = vld [vmem:[#allocation4 + $0x9a] sm:$0xff]
      %v2866 = vld [vmem:[#allocation4 + $0xaa] sm:$0xff]
      %v2867 = vld [vmem:[#allocation4 + $0xb2] sm:$0xff]
      %v2868 = vld [vmem:[#allocation4 + $0xc2] sm:$0xff]
      %v2869 = vld [vmem:[#allocation4 + $0xca] sm:$0xff]
      %v2870 = vld [vmem:[#allocation4 + $0xda] sm:$0xff]
      %v2871 = vld [vmem:[#allocation4 + $0xe2] sm:$0xff]
      %v2872 = vld [vmem:[#allocation4 + $0xf2] sm:$0xff]
      %v2873 = vld [vmem:[#allocation4 + $0xfa] sm:$0xff]
      %v2874 = vld [vmem:[#allocation4 + $0x10a] sm:$0xff]
      %v2875 = vld [vmem:[#allocation4 + $0x112] sm:$0xff]
      %v2876 = vld [vmem:[#allocation4 + $0x122] sm:$0xff]
      %v2877 = vld [vmem:[#allocation4 + $0x12a] sm:$0xff]
      %v2878 = vld [vmem:[#allocation4 + $0x13a] sm:$0xff]
      %v2879 = vld [vmem:[#allocation4 + $0x142] sm:$0xff]
      %v2880 = vld [vmem:[#allocation4 + $0x152] sm:$0xff]
      %v2881 = vld [vmem:[#allocation4 + $0x15a] sm:$0xff]
      %v2882 = vld [vmem:[#allocation4 + $0x16a] sm:$0xff]
      %v2883 = vld [vmem:[#allocation4 + $0x172] sm:$0xff]
      %s2884 = scalar_lea.vmem %s3, 128
      %v2885 = vld [vmem:[%s2884] sm:$0xff]
      %v2886 = vld [vmem:[%s2884 + $0x8] sm:$0xff]
      %v2887 = vld [vmem:[%s2884 + $0x10] sm:$0xff]
      %v2888 = vld [vmem:[%s2884 + $0x18] sm:$0xff]
      %v2889 = vld [vmem:[%s2884 + $0x20] sm:$0xff]
      %v2890 = vld [vmem:[%s2884 + $0x28] sm:$0xff]
      %v2891 = vld [vmem:[%s2884 + $0x30] sm:$0xff]
      %v2892 = vld [vmem:[%s2884 + $0x38] sm:$0xff]
      %v2894 = vsel %vm1588, %v2852, 0
      %v2897 = vsel %vm1588, %v2853, 0
      %v2900 = vsel %vm1588, %v2854, 0
      %v2903 = vsel %vm1588, %v2855, 0
      %v2906 = vsel %vm1588, %v2856, 0
      %v2909 = vsel %vm1588, %v2857, 0
      %v2912 = vsel %vm1588, %v2858, 0
      %v2915 = vsel %vm1588, %v2859, 0
      %v2918 = vsel %vm1588, %v2860, 0
      %v2921 = vsel %vm1588, %v2861, 0
      %v2924 = vsel %vm1588, %v2862, 0
      %v2927 = vsel %vm1588, %v2863, 0
      %v2930 = vsel %vm1588, %v2864, 0
      %v2933 = vsel %vm1588, %v2865, 0
      %v2936 = vsel %vm1588, %v2866, 0
      %v2939 = vsel %vm1588, %v2867, 0
      %v2942 = vsel %vm1588, %v2868, 0
      %v2945 = vsel %vm1588, %v2869, 0
      %v2948 = vsel %vm1588, %v2870, 0
      %v2951 = vsel %vm1588, %v2871, 0
      %v2954 = vsel %vm1588, %v2872, 0
      %v2957 = vsel %vm1588, %v2873, 0
      %v2960 = vsel %vm1588, %v2874, 0
      %v2963 = vsel %vm1588, %v2875, 0
      %v2966 = vsel %vm1588, %v2876, 0
      %v2969 = vsel %vm1588, %v2877, 0
      %v2972 = vsel %vm1588, %v2878, 0
      %v2975 = vsel %vm1588, %v2879, 0
      %v2978 = vsel %vm1588, %v2880, 0
      %v2981 = vsel %vm1588, %v2881, 0
      %v2984 = vsel %vm1588, %v2882, 0
      %v2987 = vsel %vm1588, %v2883, 0
      %2989 = vmatprep.subr.mxu0 0.0
      %2990 = vmatpush1.msra.mxu0 %v2885
      %2991 = vmatprep.subr.mxu0 0.0
      %2992 = vmatpush1.msra.mxu0 %v2886
      %2993 = vmatprep.subr.mxu0 0.0
      %2994 = vmatpush1.msra.mxu0 %v2887
      %2995 = vmatprep.subr.mxu0 0.0
      %2996 = vmatpush1.msra.mxu0 %v2888
      %2997 = vmatprep.subr.mxu0 0.0
      %2998 = vmatpush1.msra.mxu0 %v2889
      %2999 = vmatprep.subr.mxu0 0.0
      %3000 = vmatpush1.msra.mxu0 %v2890
      %3001 = vmatprep.subr.mxu0 0.0
      %3002 = vmatpush1.msra.mxu0 %v2891
      %3003 = vmatprep.subr.mxu0 0.0
      %3004 = vmatpush1.msra.mxu0 %v2892
      %3005 = vmatprep.subr.mxu0 0.0
      %3006 = vmatpush1.msra.mxu0 0.0
      %3007 = vmatprep.subr.mxu0 0.0
      %3008 = vmatpush1.msra.mxu0 0.0
      %3009 = vmatprep.subr.mxu0 0.0
      %3010 = vmatpush1.msra.mxu0 0.0
      %3011 = vmatprep.subr.mxu0 0.0
      %3012 = vmatpush1.msra.mxu0 0.0
      %3013 = vmatprep.subr.mxu0 0.0
      %3014 = vmatpush1.msra.mxu0 0.0
      %3015 = vmatprep.subr.mxu0 0.0
      %3016 = vmatpush1.msra.mxu0 0.0
      %3017 = vmatprep.subr.mxu0 0.0
      %3018 = vmatpush1.msra.mxu0 0.0
      %3019 = vmatprep.subr.mxu0 0.0
      %3020 = vmatpush1.msra.mxu0 0.0
      %3021 = vmatprep.subr.mxu0 0.0
      %3022 = vmatpush1.msra.mxu0 0.0
      %3023 = vmatprep.subr.mxu0 0.0
      %3024 = vmatpush1.msra.mxu0 0.0
      %3025 = vmatprep.subr.mxu0 0.0
      %3026 = vmatpush1.msra.mxu0 0.0
      %3027 = vmatprep.subr.mxu0 0.0
      %3028 = vmatpush1.msra.mxu0 0.0
      %3029 = vmatprep.subr.mxu0 0.0
      %3030 = vmatpush1.msra.mxu0 0.0
      %3031 = vmatprep.subr.mxu0 0.0
      %3032 = vmatpush1.msra.mxu0 0.0
      %3033 = vmatprep.subr.mxu0 0.0
      %3034 = vmatpush1.msra.mxu0 0.0
      %3035 = vmatprep.subr.mxu0 0.0
      %3036 = vmatpush1.msra.mxu0 0.0
      %3037 = vmatprep.subr.mxu0 0.0
      %3038 = vmatpush1.msra.mxu0 0.0
      %3039 = vmatprep.subr.mxu0 0.0
      %3040 = vmatpush1.msra.mxu0 0.0
      %3041 = vmatprep.subr.mxu0 0.0
      %3042 = vmatpush1.msra.mxu0 0.0
      %3043 = vmatprep.subr.mxu0 0.0
      %3044 = vmatpush1.msra.mxu0 0.0
      %3045 = vmatprep.subr.mxu0 0.0
      %3046 = vmatpush1.msra.mxu0 0.0
      %3047 = vmatprep.subr.mxu0 0.0
      %3048 = vmatpush1.msra.mxu0 0.0
      %3049 = vmatprep.subr.mxu0 0.0
      %3050 = vmatpush1.msra.mxu0 0.0
      %3051 = vmatprep.subr.mxu0 0.0
      %3052 = vmatpush1.msra.mxu0 0.0
      %3053 = vmatprep.mubr.f32.mxu0 0.0
      %3054 = vmatmul.mubr.f32.gmra.mrb[0].mxu0 %v2894
      %v3055 = vpop.f32.mrb[0].mxu0
      %v3056 = vadd.f32 0.0, %v3055
      %v3057 = vpop.f32.mrb[0].mxu0
      %3058 = vmatprep.mubr.f32.mxu0 0.0
      %3059 = vmatmul.mubr.f32.gmra.mrb[0].mxu0 %v2897
      %v3060 = vpop.f32.mrb[0].mxu0
      %v3061 = vadd.f32 0.0, %v3060
      %v3062 = vpop.f32.mrb[0].mxu0
      %3063 = vmatprep.mubr.f32.mxu0 0.0
      %3064 = vmatmul.mubr.f32.gmra.mrb[0].mxu0 %v2900
      %v3065 = vpop.f32.mrb[0].mxu0
      %v3066 = vadd.f32 0.0, %v3065
      %v3067 = vpop.f32.mrb[0].mxu0
      %3068 = vmatprep.mubr.f32.mxu0 0.0
      %3069 = vmatmul.mubr.f32.gmra.mrb[0].mxu0 %v2903
      %v3070 = vpop.f32.mrb[0].mxu0
      %v3071 = vadd.f32 0.0, %v3070
      %v3072 = vpop.f32.mrb[0].mxu0
      %3073 = vmatprep.mubr.f32.mxu0 0.0
      %3074 = vmatmul.mubr.f32.gmra.mrb[0].mxu0 %v2906
      %v3075 = vpop.f32.mrb[0].mxu0
      %v3076 = vadd.f32 0.0, %v3075
      %v3077 = vpop.f32.mrb[0].mxu0
      %3078 = vmatprep.mubr.f32.mxu0 0.0
      %3079 = vmatmul.mubr.f32.gmra.mrb[0].mxu0 %v2909
      %v3080 = vpop.f32.mrb[0].mxu0
      %v3081 = vadd.f32 0.0, %v3080
      %v3082 = vpop.f32.mrb[0].mxu0
      %3083 = vmatprep.mubr.f32.mxu0 0.0
      %3084 = vmatmul.mubr.f32.gmra.mrb[0].mxu0 %v2912
      %v3085 = vpop.f32.mrb[0].mxu0
      %v3086 = vadd.f32 0.0, %v3085
      %v3087 = vpop.f32.mrb[0].mxu0
      %3088 = vmatprep.mubr.f32.mxu0 0.0
      %3089 = vmatmul.mubr.f32.gmra.mrb[0].mxu0 %v2915
      %v3090 = vpop.f32.mrb[0].mxu0
      %v3091 = vadd.f32 0.0, %v3090
      %v3092 = vpop.f32.mrb[0].mxu0
      %3093 = vmatprep.mubr.f32.mxu0 0.0
      %3094 = vmatmul.mubr.f32.gmra.mrb[0].mxu0 %v2918
      %v3095 = vpop.f32.mrb[0].mxu0
      %v3096 = vadd.f32 0.0, %v3095
      %v3097 = vpop.f32.mrb[0].mxu0
      %3098 = vmatprep.mubr.f32.mxu0 0.0
      %3099 = vmatmul.mubr.f32.gmra.mrb[0].mxu0 %v2921
      %v3100 = vpop.f32.mrb[0].mxu0
      %v3101 = vadd.f32 0.0, %v3100
      %v3102 = vpop.f32.mrb[0].mxu0
      %3103 = vmatprep.mubr.f32.mxu0 0.0
      %3104 = vmatmul.mubr.f32.gmra.mrb[0].mxu0 %v2924
      %v3105 = vpop.f32.mrb[0].mxu0
      %v3106 = vadd.f32 0.0, %v3105
      %v3107 = vpop.f32.mrb[0].mxu0
      %3108 = vmatprep.mubr.f32.mxu0 0.0
      %3109 = vmatmul.mubr.f32.gmra.mrb[0].mxu0 %v2927
      %v3110 = vpop.f32.mrb[0].mxu0
      %v3111 = vadd.f32 0.0, %v3110
      %v3112 = vpop.f32.mrb[0].mxu0
      %3113 = vmatprep.mubr.f32.mxu0 0.0
      %3114 = vmatmul.mubr.f32.gmra.mrb[0].mxu0 %v2930
      %v3115 = vpop.f32.mrb[0].mxu0
      %v3116 = vadd.f32 0.0, %v3115
      %v3117 = vpop.f32.mrb[0].mxu0
      %3118 = vmatprep.mubr.f32.mxu0 0.0
      %3119 = vmatmul.mubr.f32.gmra.mrb[0].mxu0 %v2933
      %v3120 = vpop.f32.mrb[0].mxu0
      %v3121 = vadd.f32 0.0, %v3120
      %v3122 = vpop.f32.mrb[0].mxu0
      %3123 = vmatprep.mubr.f32.mxu0 0.0
      %3124 = vmatmul.mubr.f32.gmra.mrb[0].mxu0 %v2936
      %v3125 = vpop.f32.mrb[0].mxu0
      %v3126 = vadd.f32 0.0, %v3125
      %v3127 = vpop.f32.mrb[0].mxu0
      %3128 = vmatprep.mubr.f32.mxu0 0.0
      %3129 = vmatmul.mubr.f32.gmra.mrb[0].mxu0 %v2939
      %v3130 = vpop.f32.mrb[0].mxu0
      %v3131 = vadd.f32 0.0, %v3130
      %v3132 = vpop.f32.mrb[0].mxu0
      %3133 = vmatprep.mubr.f32.mxu0 0.0
      %3134 = vmatmul.mubr.f32.gmra.mrb[0].mxu0 %v2942
      %v3135 = vpop.f32.mrb[0].mxu0
      %v3136 = vadd.f32 0.0, %v3135
      %v3137 = vpop.f32.mrb[0].mxu0
      %3138 = vmatprep.mubr.f32.mxu0 0.0
      %3139 = vmatmul.mubr.f32.gmra.mrb[0].mxu0 %v2945
      %v3140 = vpop.f32.mrb[0].mxu0
      %v3141 = vadd.f32 0.0, %v3140
      %v3142 = vpop.f32.mrb[0].mxu0
      %3143 = vmatprep.mubr.f32.mxu0 0.0
      %3144 = vmatmul.mubr.f32.gmra.mrb[0].mxu0 %v2948
      %v3145 = vpop.f32.mrb[0].mxu0
      %v3146 = vadd.f32 0.0, %v3145
      %v3147 = vpop.f32.mrb[0].mxu0
      %3148 = vmatprep.mubr.f32.mxu0 0.0
      %3149 = vmatmul.mubr.f32.gmra.mrb[0].mxu0 %v2951
      %v3150 = vpop.f32.mrb[0].mxu0
      %v3151 = vadd.f32 0.0, %v3150
      %v3152 = vpop.f32.mrb[0].mxu0
      %3153 = vmatprep.mubr.f32.mxu0 0.0
      %3154 = vmatmul.mubr.f32.gmra.mrb[0].mxu0 %v2954
      %v3155 = vpop.f32.mrb[0].mxu0
      %v3156 = vadd.f32 0.0, %v3155
      %v3157 = vpop.f32.mrb[0].mxu0
      %3158 = vmatprep.mubr.f32.mxu0 0.0
      %3159 = vmatmul.mubr.f32.gmra.mrb[0].mxu0 %v2957
      %v3160 = vpop.f32.mrb[0].mxu0
      %v3161 = vadd.f32 0.0, %v3160
      %v3162 = vpop.f32.mrb[0].mxu0
      %3163 = vmatprep.mubr.f32.mxu0 0.0
      %3164 = vmatmul.mubr.f32.gmra.mrb[0].mxu0 %v2960
      %v3165 = vpop.f32.mrb[0].mxu0
      %v3166 = vadd.f32 0.0, %v3165
      %v3167 = vpop.f32.mrb[0].mxu0
      %3168 = vmatprep.mubr.f32.mxu0 0.0
      %3169 = vmatmul.mubr.f32.gmra.mrb[0].mxu0 %v2963
      %v3170 = vpop.f32.mrb[0].mxu0
      %v3171 = vadd.f32 0.0, %v3170
      %v3172 = vpop.f32.mrb[0].mxu0
      %3173 = vmatprep.mubr.f32.mxu0 0.0
      %3174 = vmatmul.mubr.f32.gmra.mrb[0].mxu0 %v2966
      %v3175 = vpop.f32.mrb[0].mxu0
      %v3176 = vadd.f32 0.0, %v3175
      %v3177 = vpop.f32.mrb[0].mxu0
      %3178 = vmatprep.mubr.f32.mxu0 0.0
      %3179 = vmatmul.mubr.f32.gmra.mrb[0].mxu0 %v2969
      %v3180 = vpop.f32.mrb[0].mxu0
      %v3181 = vadd.f32 0.0, %v3180
      %v3182 = vpop.f32.mrb[0].mxu0
      %3183 = vmatprep.mubr.f32.mxu0 0.0
      %3184 = vmatmul.mubr.f32.gmra.mrb[0].mxu0 %v2972
      %v3185 = vpop.f32.mrb[0].mxu0
      %v3186 = vadd.f32 0.0, %v3185
      %v3187 = vpop.f32.mrb[0].mxu0
      %3188 = vmatprep.mubr.f32.mxu0 0.0
      %3189 = vmatmul.mubr.f32.gmra.mrb[0].mxu0 %v2975
      %v3190 = vpop.f32.mrb[0].mxu0
      %v3191 = vadd.f32 0.0, %v3190
      %v3192 = vpop.f32.mrb[0].mxu0
      %3193 = vmatprep.mubr.f32.mxu0 0.0
      %3194 = vmatmul.mubr.f32.gmra.mrb[0].mxu0 %v2978
      %v3195 = vpop.f32.mrb[0].mxu0
      %v3196 = vadd.f32 0.0, %v3195
      %v3197 = vpop.f32.mrb[0].mxu0
      %3198 = vmatprep.mubr.f32.mxu0 0.0
      %3199 = vmatmul.mubr.f32.gmra.mrb[0].mxu0 %v2981
      %v3200 = vpop.f32.mrb[0].mxu0
      %v3201 = vadd.f32 0.0, %v3200
      %v3202 = vpop.f32.mrb[0].mxu0
      %3203 = vmatprep.mubr.f32.mxu0 0.0
      %3204 = vmatmul.mubr.f32.gmra.mrb[0].mxu0 %v2984
      %v3205 = vpop.f32.mrb[0].mxu0
      %v3206 = vadd.f32 0.0, %v3205
      %v3207 = vpop.f32.mrb[0].mxu0
      %3208 = vmatprep.mubr.f32.mxu0 0.0
      %3209 = vmatmul.mubr.f32.gmra.mrb[0].mxu0 %v2987
      %v3210 = vpop.f32.mrb[0].mxu0
      %v3211 = vadd.f32 0.0, %v3210
      %v3212 = vpop.f32.mrb[0].mxu0
      %3213 = vdwg.mxu0
      %v3214 = vadd.f32 %v2694, %v3056
      %v3215 = vadd.f32 %v2699, %v3061
      %v3216 = vadd.f32 %v2704, %v3066
      %v3217 = vadd.f32 %v2709, %v3071
      %v3218 = vadd.f32 %v2714, %v3076
      %v3219 = vadd.f32 %v2719, %v3081
      %v3220 = vadd.f32 %v2724, %v3086
      %v3221 = vadd.f32 %v2729, %v3091
      %v3222 = vadd.f32 %v2734, %v3096
      %v3223 = vadd.f32 %v2739, %v3101
      %v3224 = vadd.f32 %v2744, %v3106
      %v3225 = vadd.f32 %v2749, %v3111
      %v3226 = vadd.f32 %v2754, %v3116
      %v3227 = vadd.f32 %v2759, %v3121
      %v3228 = vadd.f32 %v2764, %v3126
      %v3229 = vadd.f32 %v2769, %v3131
      %v3230 = vadd.f32 %v2774, %v3136
      %v3231 = vadd.f32 %v2779, %v3141
      %v3232 = vadd.f32 %v2784, %v3146
      %v3233 = vadd.f32 %v2789, %v3151
      %v3234 = vadd.f32 %v2794, %v3156
      %v3235 = vadd.f32 %v2799, %v3161
      %v3236 = vadd.f32 %v2804, %v3166
      %v3237 = vadd.f32 %v2809, %v3171
      %v3238 = vadd.f32 %v2814, %v3176
      %v3239 = vadd.f32 %v2819, %v3181
      %v3240 = vadd.f32 %v2824, %v3186
      %v3241 = vadd.f32 %v2829, %v3191
      %v3242 = vadd.f32 %v2834, %v3196
      %v3243 = vadd.f32 %v2839, %v3201
      %v3244 = vadd.f32 %v2844, %v3206
      %v3245 = vadd.f32 %v2849, %v3211
      %s3246 = scalar_lea.vmem [#allocation4], 24
      %v3247 = vld [vmem:[%s3246] sm:$0xff]
      %v3248 = vld [vmem:[%s3246 + $0x8] sm:$0xff]
      %v3249 = vld [vmem:[%s3246 + $0x18] sm:$0xff]
      %v3250 = vld [vmem:[%s3246 + $0x20] sm:$0xff]
      %v3251 = vld [vmem:[%s3246 + $0x30] sm:$0xff]
      %v3252 = vld [vmem:[%s3246 + $0x38] sm:$0xff]
      %v3253 = vld [vmem:[%s3246 + $0x48] sm:$0xff]
      %v3254 = vld [vmem:[%s3246 + $0x50] sm:$0xff]
      %v3255 = vld [vmem:[%s3246 + $0x60] sm:$0xff]
      %v3256 = vld [vmem:[%s3246 + $0x68] sm:$0xff]
      %v3257 = vld [vmem:[%s3246 + $0x78] sm:$0xff]
      %v3258 = vld [vmem:[%s3246 + $0x80] sm:$0xff]
      %v3259 = vld [vmem:[%s3246 + $0x90] sm:$0xff]
      %v3260 = vld [vmem:[%s3246 + $0x98] sm:$0xff]
      %v3261 = vld [vmem:[%s3246 + $0xa8] sm:$0xff]
      %v3262 = vld [vmem:[%s3246 + $0xb0] sm:$0xff]
      %v3263 = vld [vmem:[%s3246 + $0xc0] sm:$0xff]
      %v3264 = vld [vmem:[%s3246 + $0xc8] sm:$0xff]
      %v3265 = vld [vmem:[%s3246 + $0xd8] sm:$0xff]
      %v3266 = vld [vmem:[%s3246 + $0xe0] sm:$0xff]
      %v3267 = vld [vmem:[%s3246 + $0xf0] sm:$0xff]
      %v3268 = vld [vmem:[%s3246 + $0xf8] sm:$0xff]
      %v3269 = vld [vmem:[%s3246 + $0x108] sm:$0xff]
      %v3270 = vld [vmem:[%s3246 + $0x110] sm:$0xff]
      %v3271 = vld [vmem:[%s3246 + $0x120] sm:$0xff]
      %v3272 = vld [vmem:[%s3246 + $0x128] sm:$0xff]
      %v3273 = vld [vmem:[%s3246 + $0x138] sm:$0xff]
      %v3274 = vld [vmem:[%s3246 + $0x140] sm:$0xff]
      %v3275 = vld [vmem:[%s3246 + $0x150] sm:$0xff]
      %v3276 = vld [vmem:[%s3246 + $0x158] sm:$0xff]
      %v3277 = vld [vmem:[%s3246 + $0x168] sm:$0xff]
      %v3278 = vld [vmem:[%s3246 + $0x170] sm:$0xff]
      %s3279 = scalar_lea.vmem %s3, 192
      %v3280 = vld [vmem:[%s3279] sm:$0xff]
      %v3281 = vld [vmem:[%s3279 + $0x8] sm:$0xff]
      %v3282 = vld [vmem:[%s3279 + $0x10] sm:$0xff]
      %v3283 = vld [vmem:[%s3279 + $0x18] sm:$0xff]
      %v3284 = vld [vmem:[%s3279 + $0x20] sm:$0xff]
      %v3285 = vld [vmem:[%s3279 + $0x28] sm:$0xff]
      %v3286 = vld [vmem:[%s3279 + $0x30] sm:$0xff]
      %v3287 = vld [vmem:[%s3279 + $0x38] sm:$0xff]
      %v3289 = vsel %vm1588, %v3247, 0
      %v3292 = vsel %vm1588, %v3248, 0
      %v3295 = vsel %vm1588, %v3249, 0
      %v3298 = vsel %vm1588, %v3250, 0
      %v3301 = vsel %vm1588, %v3251, 0
      %v3304 = vsel %vm1588, %v3252, 0
      %v3307 = vsel %vm1588, %v3253, 0
      %v3310 = vsel %vm1588, %v3254, 0
      %v3313 = vsel %vm1588, %v3255, 0
      %v3316 = vsel %vm1588, %v3256, 0
      %v3319 = vsel %vm1588, %v3257, 0
      %v3322 = vsel %vm1588, %v3258, 0
      %v3325 = vsel %vm1588, %v3259, 0
      %v3328 = vsel %vm1588, %v3260, 0
      %v3331 = vsel %vm1588, %v3261, 0
      %v3334 = vsel %vm1588, %v3262, 0
      %v3337 = vsel %vm1588, %v3263, 0
      %v3340 = vsel %vm1588, %v3264, 0
      %v3343 = vsel %vm1588, %v3265, 0
      %v3346 = vsel %vm1588, %v3266, 0
      %v3349 = vsel %vm1588, %v3267, 0
      %v3352 = vsel %vm1588, %v3268, 0
      %v3355 = vsel %vm1588, %v3269, 0
      %v3358 = vsel %vm1588, %v3270, 0
      %v3361 = vsel %vm1588, %v3271, 0
      %v3364 = vsel %vm1588, %v3272, 0
      %v3367 = vsel %vm1588, %v3273, 0
      %v3370 = vsel %vm1588, %v3274, 0
      %v3373 = vsel %vm1588, %v3275, 0
      %v3376 = vsel %vm1588, %v3276, 0
      %v3379 = vsel %vm1588, %v3277, 0
      %v3382 = vsel %vm1588, %v3278, 0
      %3384 = vmatprep.subr.mxu0 0.0
      %3385 = vmatpush1.msra.mxu0 %v3280
      %3386 = vmatprep.subr.mxu0 0.0
      %3387 = vmatpush1.msra.mxu0 %v3281
      %3388 = vmatprep.subr.mxu0 0.0
      %3389 = vmatpush1.msra.mxu0 %v3282
      %3390 = vmatprep.subr.mxu0 0.0
      %3391 = vmatpush1.msra.mxu0 %v3283
      %3392 = vmatprep.subr.mxu0 0.0
      %3393 = vmatpush1.msra.mxu0 %v3284
      %3394 = vmatprep.subr.mxu0 0.0
      %3395 = vmatpush1.msra.mxu0 %v3285
      %3396 = vmatprep.subr.mxu0 0.0
      %3397 = vmatpush1.msra.mxu0 %v3286
      %3398 = vmatprep.subr.mxu0 0.0
      %3399 = vmatpush1.msra.mxu0 %v3287
      %3400 = vmatprep.subr.mxu0 0.0
      %3401 = vmatpush1.msra.mxu0 0.0
      %3402 = vmatprep.subr.mxu0 0.0
      %3403 = vmatpush1.msra.mxu0 0.0
      %3404 = vmatprep.subr.mxu0 0.0
      %3405 = vmatpush1.msra.mxu0 0.0
      %3406 = vmatprep.subr.mxu0 0.0
      %3407 = vmatpush1.msra.mxu0 0.0
      %3408 = vmatprep.subr.mxu0 0.0
      %3409 = vmatpush1.msra.mxu0 0.0
      %3410 = vmatprep.subr.mxu0 0.0
      %3411 = vmatpush1.msra.mxu0 0.0
      %3412 = vmatprep.subr.mxu0 0.0
      %3413 = vmatpush1.msra.mxu0 0.0
      %3414 = vmatprep.subr.mxu0 0.0
      %3415 = vmatpush1.msra.mxu0 0.0
      %3416 = vmatprep.subr.mxu0 0.0
      %3417 = vmatpush1.msra.mxu0 0.0
      %3418 = vmatprep.subr.mxu0 0.0
      %3419 = vmatpush1.msra.mxu0 0.0
      %3420 = vmatprep.subr.mxu0 0.0
      %3421 = vmatpush1.msra.mxu0 0.0
      %3422 = vmatprep.subr.mxu0 0.0
      %3423 = vmatpush1.msra.mxu0 0.0
      %3424 = vmatprep.subr.mxu0 0.0
      %3425 = vmatpush1.msra.mxu0 0.0
      %3426 = vmatprep.subr.mxu0 0.0
      %3427 = vmatpush1.msra.mxu0 0.0
      %3428 = vmatprep.subr.mxu0 0.0
      %3429 = vmatpush1.msra.mxu0 0.0
      %3430 = vmatprep.subr.mxu0 0.0
      %3431 = vmatpush1.msra.mxu0 0.0
      %3432 = vmatprep.subr.mxu0 0.0
      %3433 = vmatpush1.msra.mxu0 0.0
      %3434 = vmatprep.subr.mxu0 0.0
      %3435 = vmatpush1.msra.mxu0 0.0
      %3436 = vmatprep.subr.mxu0 0.0
      %3437 = vmatpush1.msra.mxu0 0.0
      %3438 = vmatprep.subr.mxu0 0.0
      %3439 = vmatpush1.msra.mxu0 0.0
      %3440 = vmatprep.subr.mxu0 0.0
      %3441 = vmatpush1.msra.mxu0 0.0
      %3442 = vmatprep.subr.mxu0 0.0
      %3443 = vmatpush1.msra.mxu0 0.0
      %3444 = vmatprep.subr.mxu0 0.0
      %3445 = vmatpush1.msra.mxu0 0.0
      %3446 = vmatprep.subr.mxu0 0.0
      %3447 = vmatpush1.msra.mxu0 0.0
      %3448 = vmatprep.mubr.f32.mxu0 0.0
      %3449 = vmatmul.mubr.f32.gmra.mrb[0].mxu0 %v3289
      %v3450 = vpop.f32.mrb[0].mxu0
      %v3451 = vadd.f32 0.0, %v3450
      %v3452 = vpop.f32.mrb[0].mxu0
      %3453 = vmatprep.mubr.f32.mxu0 0.0
      %3454 = vmatmul.mubr.f32.gmra.mrb[0].mxu0 %v3292
      %v3455 = vpop.f32.mrb[0].mxu0
      %v3456 = vadd.f32 0.0, %v3455
      %v3457 = vpop.f32.mrb[0].mxu0
      %3458 = vmatprep.mubr.f32.mxu0 0.0
      %3459 = vmatmul.mubr.f32.gmra.mrb[0].mxu0 %v3295
      %v3460 = vpop.f32.mrb[0].mxu0
      %v3461 = vadd.f32 0.0, %v3460
      %v3462 = vpop.f32.mrb[0].mxu0
      %3463 = vmatprep.mubr.f32.mxu0 0.0
      %3464 = vmatmul.mubr.f32.gmra.mrb[0].mxu0 %v3298
      %v3465 = vpop.f32.mrb[0].mxu0
      %v3466 = vadd.f32 0.0, %v3465
      %v3467 = vpop.f32.mrb[0].mxu0
      %3468 = vmatprep.mubr.f32.mxu0 0.0
      %3469 = vmatmul.mubr.f32.gmra.mrb[0].mxu0 %v3301
      %v3470 = vpop.f32.mrb[0].mxu0
      %v3471 = vadd.f32 0.0, %v3470
      %v3472 = vpop.f32.mrb[0].mxu0
      %3473 = vmatprep.mubr.f32.mxu0 0.0
      %3474 = vmatmul.mubr.f32.gmra.mrb[0].mxu0 %v3304
      %v3475 = vpop.f32.mrb[0].mxu0
      %v3476 = vadd.f32 0.0, %v3475
      %v3477 = vpop.f32.mrb[0].mxu0
      %3478 = vmatprep.mubr.f32.mxu0 0.0
      %3479 = vmatmul.mubr.f32.gmra.mrb[0].mxu0 %v3307
      %v3480 = vpop.f32.mrb[0].mxu0
      %v3481 = vadd.f32 0.0, %v3480
      %v3482 = vpop.f32.mrb[0].mxu0
      %3483 = vmatprep.mubr.f32.mxu0 0.0
      %3484 = vmatmul.mubr.f32.gmra.mrb[0].mxu0 %v3310
      %v3485 = vpop.f32.mrb[0].mxu0
      %v3486 = vadd.f32 0.0, %v3485
      %v3487 = vpop.f32.mrb[0].mxu0
      %3488 = vmatprep.mubr.f32.mxu0 0.0
      %3489 = vmatmul.mubr.f32.gmra.mrb[0].mxu0 %v3313
      %v3490 = vpop.f32.mrb[0].mxu0
      %v3491 = vadd.f32 0.0, %v3490
      %v3492 = vpop.f32.mrb[0].mxu0
      %3493 = vmatprep.mubr.f32.mxu0 0.0
      %3494 = vmatmul.mubr.f32.gmra.mrb[0].mxu0 %v3316
      %v3495 = vpop.f32.mrb[0].mxu0
      %v3496 = vadd.f32 0.0, %v3495
      %v3497 = vpop.f32.mrb[0].mxu0
      %3498 = vmatprep.mubr.f32.mxu0 0.0
      %3499 = vmatmul.mubr.f32.gmra.mrb[0].mxu0 %v3319
      %v3500 = vpop.f32.mrb[0].mxu0
      %v3501 = vadd.f32 0.0, %v3500
      %v3502 = vpop.f32.mrb[0].mxu0
      %3503 = vmatprep.mubr.f32.mxu0 0.0
      %3504 = vmatmul.mubr.f32.gmra.mrb[0].mxu0 %v3322
      %v3505 = vpop.f32.mrb[0].mxu0
      %v3506 = vadd.f32 0.0, %v3505
      %v3507 = vpop.f32.mrb[0].mxu0
      %3508 = vmatprep.mubr.f32.mxu0 0.0
      %3509 = vmatmul.mubr.f32.gmra.mrb[0].mxu0 %v3325
      %v3510 = vpop.f32.mrb[0].mxu0
      %v3511 = vadd.f32 0.0, %v3510
      %v3512 = vpop.f32.mrb[0].mxu0
      %3513 = vmatprep.mubr.f32.mxu0 0.0
      %3514 = vmatmul.mubr.f32.gmra.mrb[0].mxu0 %v3328
      %v3515 = vpop.f32.mrb[0].mxu0
      %v3516 = vadd.f32 0.0, %v3515
      %v3517 = vpop.f32.mrb[0].mxu0
      %3518 = vmatprep.mubr.f32.mxu0 0.0
      %3519 = vmatmul.mubr.f32.gmra.mrb[0].mxu0 %v3331
      %v3520 = vpop.f32.mrb[0].mxu0
      %v3521 = vadd.f32 0.0, %v3520
      %v3522 = vpop.f32.mrb[0].mxu0
      %3523 = vmatprep.mubr.f32.mxu0 0.0
      %3524 = vmatmul.mubr.f32.gmra.mrb[0].mxu0 %v3334
      %v3525 = vpop.f32.mrb[0].mxu0
      %v3526 = vadd.f32 0.0, %v3525
      %v3527 = vpop.f32.mrb[0].mxu0
      %3528 = vmatprep.mubr.f32.mxu0 0.0
      %3529 = vmatmul.mubr.f32.gmra.mrb[0].mxu0 %v3337
      %v3530 = vpop.f32.mrb[0].mxu0
      %v3531 = vadd.f32 0.0, %v3530
      %v3532 = vpop.f32.mrb[0].mxu0
      %3533 = vmatprep.mubr.f32.mxu0 0.0
      %3534 = vmatmul.mubr.f32.gmra.mrb[0].mxu0 %v3340
      %v3535 = vpop.f32.mrb[0].mxu0
      %v3536 = vadd.f32 0.0, %v3535
      %v3537 = vpop.f32.mrb[0].mxu0
      %3538 = vmatprep.mubr.f32.mxu0 0.0
      %3539 = vmatmul.mubr.f32.gmra.mrb[0].mxu0 %v3343
      %v3540 = vpop.f32.mrb[0].mxu0
      %v3541 = vadd.f32 0.0, %v3540
      %v3542 = vpop.f32.mrb[0].mxu0
      %3543 = vmatprep.mubr.f32.mxu0 0.0
      %3544 = vmatmul.mubr.f32.gmra.mrb[0].mxu0 %v3346
      %v3545 = vpop.f32.mrb[0].mxu0
      %v3546 = vadd.f32 0.0, %v3545
      %v3547 = vpop.f32.mrb[0].mxu0
      %3548 = vmatprep.mubr.f32.mxu0 0.0
      %3549 = vmatmul.mubr.f32.gmra.mrb[0].mxu0 %v3349
      %v3550 = vpop.f32.mrb[0].mxu0
      %v3551 = vadd.f32 0.0, %v3550
      %v3552 = vpop.f32.mrb[0].mxu0
      %3553 = vmatprep.mubr.f32.mxu0 0.0
      %3554 = vmatmul.mubr.f32.gmra.mrb[0].mxu0 %v3352
      %v3555 = vpop.f32.mrb[0].mxu0
      %v3556 = vadd.f32 0.0, %v3555
      %v3557 = vpop.f32.mrb[0].mxu0
      %3558 = vmatprep.mubr.f32.mxu0 0.0
      %3559 = vmatmul.mubr.f32.gmra.mrb[0].mxu0 %v3355
      %v3560 = vpop.f32.mrb[0].mxu0
      %v3561 = vadd.f32 0.0, %v3560
      %v3562 = vpop.f32.mrb[0].mxu0
      %3563 = vmatprep.mubr.f32.mxu0 0.0
      %3564 = vmatmul.mubr.f32.gmra.mrb[0].mxu0 %v3358
      %v3565 = vpop.f32.mrb[0].mxu0
      %v3566 = vadd.f32 0.0, %v3565
      %v3567 = vpop.f32.mrb[0].mxu0
      %3568 = vmatprep.mubr.f32.mxu0 0.0
      %3569 = vmatmul.mubr.f32.gmra.mrb[0].mxu0 %v3361
      %v3570 = vpop.f32.mrb[0].mxu0
      %v3571 = vadd.f32 0.0, %v3570
      %v3572 = vpop.f32.mrb[0].mxu0
      %3573 = vmatprep.mubr.f32.mxu0 0.0
      %3574 = vmatmul.mubr.f32.gmra.mrb[0].mxu0 %v3364
      %v3575 = vpop.f32.mrb[0].mxu0
      %v3576 = vadd.f32 0.0, %v3575
      %v3577 = vpop.f32.mrb[0].mxu0
      %3578 = vmatprep.mubr.f32.mxu0 0.0
      %3579 = vmatmul.mubr.f32.gmra.mrb[0].mxu0 %v3367
      %v3580 = vpop.f32.mrb[0].mxu0
      %v3581 = vadd.f32 0.0, %v3580
      %v3582 = vpop.f32.mrb[0].mxu0
      %3583 = vmatprep.mubr.f32.mxu0 0.0
      %3584 = vmatmul.mubr.f32.gmra.mrb[0].mxu0 %v3370
      %v3585 = vpop.f32.mrb[0].mxu0
      %v3586 = vadd.f32 0.0, %v3585
      %v3587 = vpop.f32.mrb[0].mxu0
      %3588 = vmatprep.mubr.f32.mxu0 0.0
      %3589 = vmatmul.mubr.f32.gmra.mrb[0].mxu0 %v3373
      %v3590 = vpop.f32.mrb[0].mxu0
      %v3591 = vadd.f32 0.0, %v3590
      %v3592 = vpop.f32.mrb[0].mxu0
      %3593 = vmatprep.mubr.f32.mxu0 0.0
      %3594 = vmatmul.mubr.f32.gmra.mrb[0].mxu0 %v3376
      %v3595 = vpop.f32.mrb[0].mxu0
      %v3596 = vadd.f32 0.0, %v3595
      %v3597 = vpop.f32.mrb[0].mxu0
      %3598 = vmatprep.mubr.f32.mxu0 0.0
      %3599 = vmatmul.mubr.f32.gmra.mrb[0].mxu0 %v3379
      %v3600 = vpop.f32.mrb[0].mxu0
      %v3601 = vadd.f32 0.0, %v3600
      %v3602 = vpop.f32.mrb[0].mxu0
      %3603 = vmatprep.mubr.f32.mxu0 0.0
      %3604 = vmatmul.mubr.f32.gmra.mrb[0].mxu0 %v3382
      %v3605 = vpop.f32.mrb[0].mxu0
      %v3606 = vadd.f32 0.0, %v3605
      %v3607 = vpop.f32.mrb[0].mxu0
      %3608 = vdwg.mxu0
      %v3609 = vadd.f32 %v3214, %v3451
      %v3610 = vadd.f32 %v3215, %v3456
      %v3611 = vadd.f32 %v3216, %v3461
      %v3612 = vadd.f32 %v3217, %v3466
      %v3613 = vadd.f32 %v3218, %v3471
      %v3614 = vadd.f32 %v3219, %v3476
      %v3615 = vadd.f32 %v3220, %v3481
      %v3616 = vadd.f32 %v3221, %v3486
      %v3617 = vadd.f32 %v3222, %v3491
      %v3618 = vadd.f32 %v3223, %v3496
      %v3619 = vadd.f32 %v3224, %v3501
      %v3620 = vadd.f32 %v3225, %v3506
      %v3621 = vadd.f32 %v3226, %v3511
      %v3622 = vadd.f32 %v3227, %v3516
      %v3623 = vadd.f32 %v3228, %v3521
      %v3624 = vadd.f32 %v3229, %v3526
      %v3625 = vadd.f32 %v3230, %v3531
      %v3626 = vadd.f32 %v3231, %v3536
      %v3627 = vadd.f32 %v3232, %v3541
      %v3628 = vadd.f32 %v3233, %v3546
      %v3629 = vadd.f32 %v3234, %v3551
      %v3630 = vadd.f32 %v3235, %v3556
      %v3631 = vadd.f32 %v3236, %v3561
      %v3632 = vadd.f32 %v3237, %v3566
      %v3633 = vadd.f32 %v3238, %v3571
      %v3634 = vadd.f32 %v3239, %v3576
      %v3635 = vadd.f32 %v3240, %v3581
      %v3636 = vadd.f32 %v3241, %v3586
      %v3637 = vadd.f32 %v3242, %v3591
      %v3638 = vadd.f32 %v3243, %v3596
      %v3639 = vadd.f32 %v3244, %v3601
      %v3640 = vadd.f32 %v3245, %v3606
      %v3641 = vld [vmem:[%s3246 + $0x1] sm:$0xff]
      %v3642 = vld [vmem:[%s3246 + $0x9] sm:$0xff]
      %v3643 = vld [vmem:[%s3246 + $0x19] sm:$0xff]
      %v3644 = vld [vmem:[%s3246 + $0x21] sm:$0xff]
      %v3645 = vld [vmem:[%s3246 + $0x31] sm:$0xff]
      %v3646 = vld [vmem:[%s3246 + $0x39] sm:$0xff]
      %v3647 = vld [vmem:[%s3246 + $0x49] sm:$0xff]
      %v3648 = vld [vmem:[%s3246 + $0x51] sm:$0xff]
      %v3649 = vld [vmem:[%s3246 + $0x61] sm:$0xff]
      %v3650 = vld [vmem:[%s3246 + $0x69] sm:$0xff]
      %v3651 = vld [vmem:[%s3246 + $0x79] sm:$0xff]
      %v3652 = vld [vmem:[%s3246 + $0x81] sm:$0xff]
      %v3653 = vld [vmem:[%s3246 + $0x91] sm:$0xff]
      %v3654 = vld [vmem:[%s3246 + $0x99] sm:$0xff]
      %v3655 = vld [vmem:[%s3246 + $0xa9] sm:$0xff]
      %v3656 = vld [vmem:[%s3246 + $0xb1] sm:$0xff]
      %v3657 = vld [vmem:[%s3246 + $0xc1] sm:$0xff]
      %v3658 = vld [vmem:[%s3246 + $0xc9] sm:$0xff]
      %v3659 = vld [vmem:[%s3246 + $0xd9] sm:$0xff]
      %v3660 = vld [vmem:[%s3246 + $0xe1] sm:$0xff]
      %v3661 = vld [vmem:[%s3246 + $0xf1] sm:$0xff]
      %v3662 = vld [vmem:[%s3246 + $0xf9] sm:$0xff]
      %v3663 = vld [vmem:[%s3246 + $0x109] sm:$0xff]
      %v3664 = vld [vmem:[%s3246 + $0x111] sm:$0xff]
      %v3665 = vld [vmem:[%s3246 + $0x121] sm:$0xff]
      %v3666 = vld [vmem:[%s3246 + $0x129] sm:$0xff]
      %v3667 = vld [vmem:[%s3246 + $0x139] sm:$0xff]
      %v3668 = vld [vmem:[%s3246 + $0x141] sm:$0xff]
      %v3669 = vld [vmem:[%s3246 + $0x151] sm:$0xff]
      %v3670 = vld [vmem:[%s3246 + $0x159] sm:$0xff]
      %v3671 = vld [vmem:[%s3246 + $0x169] sm:$0xff]
      %v3672 = vld [vmem:[%s3246 + $0x171] sm:$0xff]
      %s3673 = scalar_lea.vmem %s3, 256
      %v3674 = vld [vmem:[%s3673] sm:$0xff]
      %v3675 = vld [vmem:[%s3673 + $0x8] sm:$0xff]
      %v3676 = vld [vmem:[%s3673 + $0x10] sm:$0xff]
      %v3677 = vld [vmem:[%s3673 + $0x18] sm:$0xff]
      %v3678 = vld [vmem:[%s3673 + $0x20] sm:$0xff]
      %v3679 = vld [vmem:[%s3673 + $0x28] sm:$0xff]
      %v3680 = vld [vmem:[%s3673 + $0x30] sm:$0xff]
      %v3681 = vld [vmem:[%s3673 + $0x38] sm:$0xff]
      %v3683 = vsel %vm1588, %v3641, 0
      %v3686 = vsel %vm1588, %v3642, 0
      %v3689 = vsel %vm1588, %v3643, 0
      %v3692 = vsel %vm1588, %v3644, 0
      %v3695 = vsel %vm1588, %v3645, 0
      %v3698 = vsel %vm1588, %v3646, 0
      %v3701 = vsel %vm1588, %v3647, 0
      %v3704 = vsel %vm1588, %v3648, 0
      %v3707 = vsel %vm1588, %v3649, 0
      %v3710 = vsel %vm1588, %v3650, 0
      %v3713 = vsel %vm1588, %v3651, 0
      %v3716 = vsel %vm1588, %v3652, 0
      %v3719 = vsel %vm1588, %v3653, 0
      %v3722 = vsel %vm1588, %v3654, 0
      %v3725 = vsel %vm1588, %v3655, 0
      %v3728 = vsel %vm1588, %v3656, 0
      %v3731 = vsel %vm1588, %v3657, 0
      %v3734 = vsel %vm1588, %v3658, 0
      %v3737 = vsel %vm1588, %v3659, 0
      %v3740 = vsel %vm1588, %v3660, 0
      %v3743 = vsel %vm1588, %v3661, 0
      %v3746 = vsel %vm1588, %v3662, 0
      %v3749 = vsel %vm1588, %v3663, 0
      %v3752 = vsel %vm1588, %v3664, 0
      %v3755 = vsel %vm1588, %v3665, 0
      %v3758 = vsel %vm1588, %v3666, 0
      %v3761 = vsel %vm1588, %v3667, 0
      %v3764 = vsel %vm1588, %v3668, 0
      %v3767 = vsel %vm1588, %v3669, 0
      %v3770 = vsel %vm1588, %v3670, 0
      %v3773 = vsel %vm1588, %v3671, 0
      %v3776 = vsel %vm1588, %v3672, 0
      %3778 = vmatprep.subr.mxu0 0.0
      %3779 = vmatpush1.msra.mxu0 %v3674
      %3780 = vmatprep.subr.mxu0 0.0
      %3781 = vmatpush1.msra.mxu0 %v3675
      %3782 = vmatprep.subr.mxu0 0.0
      %3783 = vmatpush1.msra.mxu0 %v3676
      %3784 = vmatprep.subr.mxu0 0.0
      %3785 = vmatpush1.msra.mxu0 %v3677
      %3786 = vmatprep.subr.mxu0 0.0
      %3787 = vmatpush1.msra.mxu0 %v3678
      %3788 = vmatprep.subr.mxu0 0.0
      %3789 = vmatpush1.msra.mxu0 %v3679
      %3790 = vmatprep.subr.mxu0 0.0
      %3791 = vmatpush1.msra.mxu0 %v3680
      %3792 = vmatprep.subr.mxu0 0.0
      %3793 = vmatpush1.msra.mxu0 %v3681
      %3794 = vmatprep.subr.mxu0 0.0
      %3795 = vmatpush1.msra.mxu0 0.0
      %3796 = vmatprep.subr.mxu0 0.0
      %3797 = vmatpush1.msra.mxu0 0.0
      %3798 = vmatprep.subr.mxu0 0.0
      %3799 = vmatpush1.msra.mxu0 0.0
      %3800 = vmatprep.subr.mxu0 0.0
      %3801 = vmatpush1.msra.mxu0 0.0
      %3802 = vmatprep.subr.mxu0 0.0
      %3803 = vmatpush1.msra.mxu0 0.0
      %3804 = vmatprep.subr.mxu0 0.0
      %3805 = vmatpush1.msra.mxu0 0.0
      %3806 = vmatprep.subr.mxu0 0.0
      %3807 = vmatpush1.msra.mxu0 0.0
      %3808 = vmatprep.subr.mxu0 0.0
      %3809 = vmatpush1.msra.mxu0 0.0
      %3810 = vmatprep.subr.mxu0 0.0
      %3811 = vmatpush1.msra.mxu0 0.0
      %3812 = vmatprep.subr.mxu0 0.0
      %3813 = vmatpush1.msra.mxu0 0.0
      %3814 = vmatprep.subr.mxu0 0.0
      %3815 = vmatpush1.msra.mxu0 0.0
      %3816 = vmatprep.subr.mxu0 0.0
      %3817 = vmatpush1.msra.mxu0 0.0
      %3818 = vmatprep.subr.mxu0 0.0
      %3819 = vmatpush1.msra.mxu0 0.0
      %3820 = vmatprep.subr.mxu0 0.0
      %3821 = vmatpush1.msra.mxu0 0.0
      %3822 = vmatprep.subr.mxu0 0.0
      %3823 = vmatpush1.msra.mxu0 0.0
      %3824 = vmatprep.subr.mxu0 0.0
      %3825 = vmatpush1.msra.mxu0 0.0
      %3826 = vmatprep.subr.mxu0 0.0
      %3827 = vmatpush1.msra.mxu0 0.0
      %3828 = vmatprep.subr.mxu0 0.0
      %3829 = vmatpush1.msra.mxu0 0.0
      %3830 = vmatprep.subr.mxu0 0.0
      %3831 = vmatpush1.msra.mxu0 0.0
      %3832 = vmatprep.subr.mxu0 0.0
      %3833 = vmatpush1.msra.mxu0 0.0
      %3834 = vmatprep.subr.mxu0 0.0
      %3835 = vmatpush1.msra.mxu0 0.0
      %3836 = vmatprep.subr.mxu0 0.0
      %3837 = vmatpush1.msra.mxu0 0.0
      %3838 = vmatprep.subr.mxu0 0.0
      %3839 = vmatpush1.msra.mxu0 0.0
      %3840 = vmatprep.subr.mxu0 0.0
      %3841 = vmatpush1.msra.mxu0 0.0
      %3842 = vmatprep.mubr.f32.mxu0 0.0
      %3843 = vmatmul.mubr.f32.gmra.mrb[0].mxu0 %v3683
      %v3844 = vpop.f32.mrb[0].mxu0
      %v3845 = vadd.f32 0.0, %v3844
      %v3846 = vpop.f32.mrb[0].mxu0
      %3847 = vmatprep.mubr.f32.mxu0 0.0
      %3848 = vmatmul.mubr.f32.gmra.mrb[0].mxu0 %v3686
      %v3849 = vpop.f32.mrb[0].mxu0
      %v3850 = vadd.f32 0.0, %v3849
      %v3851 = vpop.f32.mrb[0].mxu0
      %3852 = vmatprep.mubr.f32.mxu0 0.0
      %3853 = vmatmul.mubr.f32.gmra.mrb[0].mxu0 %v3689
      %v3854 = vpop.f32.mrb[0].mxu0
      %v3855 = vadd.f32 0.0, %v3854
      %v3856 = vpop.f32.mrb[0].mxu0
      %3857 = vmatprep.mubr.f32.mxu0 0.0
      %3858 = vmatmul.mubr.f32.gmra.mrb[0].mxu0 %v3692
      %v3859 = vpop.f32.mrb[0].mxu0
      %v3860 = vadd.f32 0.0, %v3859
      %v3861 = vpop.f32.mrb[0].mxu0
      %3862 = vmatprep.mubr.f32.mxu0 0.0
      %3863 = vmatmul.mubr.f32.gmra.mrb[0].mxu0 %v3695
      %v3864 = vpop.f32.mrb[0].mxu0
      %v3865 = vadd.f32 0.0, %v3864
      %v3866 = vpop.f32.mrb[0].mxu0
      %3867 = vmatprep.mubr.f32.mxu0 0.0
      %3868 = vmatmul.mubr.f32.gmra.mrb[0].mxu0 %v3698
      %v3869 = vpop.f32.mrb[0].mxu0
      %v3870 = vadd.f32 0.0, %v3869
      %v3871 = vpop.f32.mrb[0].mxu0
      %3872 = vmatprep.mubr.f32.mxu0 0.0
      %3873 = vmatmul.mubr.f32.gmra.mrb[0].mxu0 %v3701
      %v3874 = vpop.f32.mrb[0].mxu0
      %v3875 = vadd.f32 0.0, %v3874
      %v3876 = vpop.f32.mrb[0].mxu0
      %3877 = vmatprep.mubr.f32.mxu0 0.0
      %3878 = vmatmul.mubr.f32.gmra.mrb[0].mxu0 %v3704
      %v3879 = vpop.f32.mrb[0].mxu0
      %v3880 = vadd.f32 0.0, %v3879
      %v3881 = vpop.f32.mrb[0].mxu0
      %3882 = vmatprep.mubr.f32.mxu0 0.0
      %3883 = vmatmul.mubr.f32.gmra.mrb[0].mxu0 %v3707
      %v3884 = vpop.f32.mrb[0].mxu0
      %v3885 = vadd.f32 0.0, %v3884
      %v3886 = vpop.f32.mrb[0].mxu0
      %3887 = vmatprep.mubr.f32.mxu0 0.0
      %3888 = vmatmul.mubr.f32.gmra.mrb[0].mxu0 %v3710
      %v3889 = vpop.f32.mrb[0].mxu0
      %v3890 = vadd.f32 0.0, %v3889
      %v3891 = vpop.f32.mrb[0].mxu0
      %3892 = vmatprep.mubr.f32.mxu0 0.0
      %3893 = vmatmul.mubr.f32.gmra.mrb[0].mxu0 %v3713
      %v3894 = vpop.f32.mrb[0].mxu0
      %v3895 = vadd.f32 0.0, %v3894
      %v3896 = vpop.f32.mrb[0].mxu0
      %3897 = vmatprep.mubr.f32.mxu0 0.0
      %3898 = vmatmul.mubr.f32.gmra.mrb[0].mxu0 %v3716
      %v3899 = vpop.f32.mrb[0].mxu0
      %v3900 = vadd.f32 0.0, %v3899
      %v3901 = vpop.f32.mrb[0].mxu0
      %3902 = vmatprep.mubr.f32.mxu0 0.0
      %3903 = vmatmul.mubr.f32.gmra.mrb[0].mxu0 %v3719
      %v3904 = vpop.f32.mrb[0].mxu0
      %v3905 = vadd.f32 0.0, %v3904
      %v3906 = vpop.f32.mrb[0].mxu0
      %3907 = vmatprep.mubr.f32.mxu0 0.0
      %3908 = vmatmul.mubr.f32.gmra.mrb[0].mxu0 %v3722
      %v3909 = vpop.f32.mrb[0].mxu0
      %v3910 = vadd.f32 0.0, %v3909
      %v3911 = vpop.f32.mrb[0].mxu0
      %3912 = vmatprep.mubr.f32.mxu0 0.0
      %3913 = vmatmul.mubr.f32.gmra.mrb[0].mxu0 %v3725
      %v3914 = vpop.f32.mrb[0].mxu0
      %v3915 = vadd.f32 0.0, %v3914
      %v3916 = vpop.f32.mrb[0].mxu0
      %3917 = vmatprep.mubr.f32.mxu0 0.0
      %3918 = vmatmul.mubr.f32.gmra.mrb[0].mxu0 %v3728
      %v3919 = vpop.f32.mrb[0].mxu0
      %v3920 = vadd.f32 0.0, %v3919
      %v3921 = vpop.f32.mrb[0].mxu0
      %3922 = vmatprep.mubr.f32.mxu0 0.0
      %3923 = vmatmul.mubr.f32.gmra.mrb[0].mxu0 %v3731
      %v3924 = vpop.f32.mrb[0].mxu0
      %v3925 = vadd.f32 0.0, %v3924
      %v3926 = vpop.f32.mrb[0].mxu0
      %3927 = vmatprep.mubr.f32.mxu0 0.0
      %3928 = vmatmul.mubr.f32.gmra.mrb[0].mxu0 %v3734
      %v3929 = vpop.f32.mrb[0].mxu0
      %v3930 = vadd.f32 0.0, %v3929
      %v3931 = vpop.f32.mrb[0].mxu0
      %3932 = vmatprep.mubr.f32.mxu0 0.0
      %3933 = vmatmul.mubr.f32.gmra.mrb[0].mxu0 %v3737
      %v3934 = vpop.f32.mrb[0].mxu0
      %v3935 = vadd.f32 0.0, %v3934
      %v3936 = vpop.f32.mrb[0].mxu0
      %3937 = vmatprep.mubr.f32.mxu0 0.0
      %3938 = vmatmul.mubr.f32.gmra.mrb[0].mxu0 %v3740
      %v3939 = vpop.f32.mrb[0].mxu0
      %v3940 = vadd.f32 0.0, %v3939
      %v3941 = vpop.f32.mrb[0].mxu0
      %3942 = vmatprep.mubr.f32.mxu0 0.0
      %3943 = vmatmul.mubr.f32.gmra.mrb[0].mxu0 %v3743
      %v3944 = vpop.f32.mrb[0].mxu0
      %v3945 = vadd.f32 0.0, %v3944
      %v3946 = vpop.f32.mrb[0].mxu0
      %3947 = vmatprep.mubr.f32.mxu0 0.0
      %3948 = vmatmul.mubr.f32.gmra.mrb[0].mxu0 %v3746
      %v3949 = vpop.f32.mrb[0].mxu0
      %v3950 = vadd.f32 0.0, %v3949
      %v3951 = vpop.f32.mrb[0].mxu0
      %3952 = vmatprep.mubr.f32.mxu0 0.0
      %3953 = vmatmul.mubr.f32.gmra.mrb[0].mxu0 %v3749
      %v3954 = vpop.f32.mrb[0].mxu0
      %v3955 = vadd.f32 0.0, %v3954
      %v3956 = vpop.f32.mrb[0].mxu0
      %3957 = vmatprep.mubr.f32.mxu0 0.0
      %3958 = vmatmul.mubr.f32.gmra.mrb[0].mxu0 %v3752
      %v3959 = vpop.f32.mrb[0].mxu0
      %v3960 = vadd.f32 0.0, %v3959
      %v3961 = vpop.f32.mrb[0].mxu0
      %3962 = vmatprep.mubr.f32.mxu0 0.0
      %3963 = vmatmul.mubr.f32.gmra.mrb[0].mxu0 %v3755
      %v3964 = vpop.f32.mrb[0].mxu0
      %v3965 = vadd.f32 0.0, %v3964
      %v3966 = vpop.f32.mrb[0].mxu0
      %3967 = vmatprep.mubr.f32.mxu0 0.0
      %3968 = vmatmul.mubr.f32.gmra.mrb[0].mxu0 %v3758
      %v3969 = vpop.f32.mrb[0].mxu0
      %v3970 = vadd.f32 0.0, %v3969
      %v3971 = vpop.f32.mrb[0].mxu0
      %3972 = vmatprep.mubr.f32.mxu0 0.0
      %3973 = vmatmul.mubr.f32.gmra.mrb[0].mxu0 %v3761
      %v3974 = vpop.f32.mrb[0].mxu0
      %v3975 = vadd.f32 0.0, %v3974
      %v3976 = vpop.f32.mrb[0].mxu0
      %3977 = vmatprep.mubr.f32.mxu0 0.0
      %3978 = vmatmul.mubr.f32.gmra.mrb[0].mxu0 %v3764
      %v3979 = vpop.f32.mrb[0].mxu0
      %v3980 = vadd.f32 0.0, %v3979
      %v3981 = vpop.f32.mrb[0].mxu0
      %3982 = vmatprep.mubr.f32.mxu0 0.0
      %3983 = vmatmul.mubr.f32.gmra.mrb[0].mxu0 %v3767
      %v3984 = vpop.f32.mrb[0].mxu0
      %v3985 = vadd.f32 0.0, %v3984
      %v3986 = vpop.f32.mrb[0].mxu0
      %3987 = vmatprep.mubr.f32.mxu0 0.0
      %3988 = vmatmul.mubr.f32.gmra.mrb[0].mxu0 %v3770
      %v3989 = vpop.f32.mrb[0].mxu0
      %v3990 = vadd.f32 0.0, %v3989
      %v3991 = vpop.f32.mrb[0].mxu0
      %3992 = vmatprep.mubr.f32.mxu0 0.0
      %3993 = vmatmul.mubr.f32.gmra.mrb[0].mxu0 %v3773
      %v3994 = vpop.f32.mrb[0].mxu0
      %v3995 = vadd.f32 0.0, %v3994
      %v3996 = vpop.f32.mrb[0].mxu0
      %3997 = vmatprep.mubr.f32.mxu0 0.0
      %3998 = vmatmul.mubr.f32.gmra.mrb[0].mxu0 %v3776
      %v3999 = vpop.f32.mrb[0].mxu0
      %v4000 = vadd.f32 0.0, %v3999
      %v4001 = vpop.f32.mrb[0].mxu0
      %4002 = vdwg.mxu0
      %v4003 = vadd.f32 %v3609, %v3845
      %v4004 = vadd.f32 %v3610, %v3850
      %v4005 = vadd.f32 %v3611, %v3855
      %v4006 = vadd.f32 %v3612, %v3860
      %v4007 = vadd.f32 %v3613, %v3865
      %v4008 = vadd.f32 %v3614, %v3870
      %v4009 = vadd.f32 %v3615, %v3875
      %v4010 = vadd.f32 %v3616, %v3880
      %v4011 = vadd.f32 %v3617, %v3885
      %v4012 = vadd.f32 %v3618, %v3890
      %v4013 = vadd.f32 %v3619, %v3895
      %v4014 = vadd.f32 %v3620, %v3900
      %v4015 = vadd.f32 %v3621, %v3905
      %v4016 = vadd.f32 %v3622, %v3910
      %v4017 = vadd.f32 %v3623, %v3915
      %v4018 = vadd.f32 %v3624, %v3920
      %v4019 = vadd.f32 %v3625, %v3925
      %v4020 = vadd.f32 %v3626, %v3930
      %v4021 = vadd.f32 %v3627, %v3935
      %v4022 = vadd.f32 %v3628, %v3940
      %v4023 = vadd.f32 %v3629, %v3945
      %v4024 = vadd.f32 %v3630, %v3950
      %v4025 = vadd.f32 %v3631, %v3955
      %v4026 = vadd.f32 %v3632, %v3960
      %v4027 = vadd.f32 %v3633, %v3965
      %v4028 = vadd.f32 %v3634, %v3970
      %v4029 = vadd.f32 %v3635, %v3975
      %v4030 = vadd.f32 %v3636, %v3980
      %v4031 = vadd.f32 %v3637, %v3985
      %v4032 = vadd.f32 %v3638, %v3990
      %v4033 = vadd.f32 %v3639, %v3995
      %v4034 = vadd.f32 %v3640, %v4000
      %v4035 = vld [vmem:[%s3246 + $0x2] sm:$0xff]
      %v4036 = vld [vmem:[%s3246 + $0xa] sm:$0xff]
      %v4037 = vld [vmem:[%s3246 + $0x1a] sm:$0xff]
      %v4038 = vld [vmem:[%s3246 + $0x22] sm:$0xff]
      %v4039 = vld [vmem:[%s3246 + $0x32] sm:$0xff]
      %v4040 = vld [vmem:[%s3246 + $0x3a] sm:$0xff]
      %v4041 = vld [vmem:[%s3246 + $0x4a] sm:$0xff]
      %v4042 = vld [vmem:[%s3246 + $0x52] sm:$0xff]
      %v4043 = vld [vmem:[%s3246 + $0x62] sm:$0xff]
      %v4044 = vld [vmem:[%s3246 + $0x6a] sm:$0xff]
      %v4045 = vld [vmem:[%s3246 + $0x7a] sm:$0xff]
      %v4046 = vld [vmem:[%s3246 + $0x82] sm:$0xff]
      %v4047 = vld [vmem:[%s3246 + $0x92] sm:$0xff]
      %v4048 = vld [vmem:[%s3246 + $0x9a] sm:$0xff]
      %v4049 = vld [vmem:[%s3246 + $0xaa] sm:$0xff]
      %v4050 = vld [vmem:[%s3246 + $0xb2] sm:$0xff]
      %v4051 = vld [vmem:[%s3246 + $0xc2] sm:$0xff]
      %v4052 = vld [vmem:[%s3246 + $0xca] sm:$0xff]
      %v4053 = vld [vmem:[%s3246 + $0xda] sm:$0xff]
      %v4054 = vld [vmem:[%s3246 + $0xe2] sm:$0xff]
      %v4055 = vld [vmem:[%s3246 + $0xf2] sm:$0xff]
      %v4056 = vld [vmem:[%s3246 + $0xfa] sm:$0xff]
      %v4057 = vld [vmem:[%s3246 + $0x10a] sm:$0xff]
      %v4058 = vld [vmem:[%s3246 + $0x112] sm:$0xff]
      %v4059 = vld [vmem:[%s3246 + $0x122] sm:$0xff]
      %v4060 = vld [vmem:[%s3246 + $0x12a] sm:$0xff]
      %v4061 = vld [vmem:[%s3246 + $0x13a] sm:$0xff]
      %v4062 = vld [vmem:[%s3246 + $0x142] sm:$0xff]
      %v4063 = vld [vmem:[%s3246 + $0x152] sm:$0xff]
      %v4064 = vld [vmem:[%s3246 + $0x15a] sm:$0xff]
      %v4065 = vld [vmem:[%s3246 + $0x16a] sm:$0xff]
      %v4066 = vld [vmem:[%s3246 + $0x172] sm:$0xff]
      %s4067 = scalar_lea.vmem %s3, 320
      %v4068 = vld [vmem:[%s4067] sm:$0xff]
      %v4069 = vld [vmem:[%s4067 + $0x8] sm:$0xff]
      %v4070 = vld [vmem:[%s4067 + $0x10] sm:$0xff]
      %v4071 = vld [vmem:[%s4067 + $0x18] sm:$0xff]
      %v4072 = vld [vmem:[%s4067 + $0x20] sm:$0xff]
      %v4073 = vld [vmem:[%s4067 + $0x28] sm:$0xff]
      %v4074 = vld [vmem:[%s4067 + $0x30] sm:$0xff]
      %v4075 = vld [vmem:[%s4067 + $0x38] sm:$0xff]
      %v4077 = vsel %vm1588, %v4035, 0
      %v4080 = vsel %vm1588, %v4036, 0
      %v4083 = vsel %vm1588, %v4037, 0
      %v4086 = vsel %vm1588, %v4038, 0
      %v4089 = vsel %vm1588, %v4039, 0
      %v4092 = vsel %vm1588, %v4040, 0
      %v4095 = vsel %vm1588, %v4041, 0
      %v4098 = vsel %vm1588, %v4042, 0
      %v4101 = vsel %vm1588, %v4043, 0
      %v4104 = vsel %vm1588, %v4044, 0
      %v4107 = vsel %vm1588, %v4045, 0
      %v4110 = vsel %vm1588, %v4046, 0
      %v4113 = vsel %vm1588, %v4047, 0
      %v4116 = vsel %vm1588, %v4048, 0
      %v4119 = vsel %vm1588, %v4049, 0
      %v4122 = vsel %vm1588, %v4050, 0
      %v4125 = vsel %vm1588, %v4051, 0
      %v4128 = vsel %vm1588, %v4052, 0
      %v4131 = vsel %vm1588, %v4053, 0
      %v4134 = vsel %vm1588, %v4054, 0
      %v4137 = vsel %vm1588, %v4055, 0
      %v4140 = vsel %vm1588, %v4056, 0
      %v4143 = vsel %vm1588, %v4057, 0
      %v4146 = vsel %vm1588, %v4058, 0
      %v4149 = vsel %vm1588, %v4059, 0
      %v4152 = vsel %vm1588, %v4060, 0
      %v4155 = vsel %vm1588, %v4061, 0
      %v4158 = vsel %vm1588, %v4062, 0
      %v4161 = vsel %vm1588, %v4063, 0
      %v4164 = vsel %vm1588, %v4064, 0
      %v4167 = vsel %vm1588, %v4065, 0
      %v4170 = vsel %vm1588, %v4066, 0
      %4172 = vmatprep.subr.mxu0 0.0
      %4173 = vmatpush1.msra.mxu0 %v4068
      %4174 = vmatprep.subr.mxu0 0.0
      %4175 = vmatpush1.msra.mxu0 %v4069
      %4176 = vmatprep.subr.mxu0 0.0
      %4177 = vmatpush1.msra.mxu0 %v4070
      %4178 = vmatprep.subr.mxu0 0.0
      %4179 = vmatpush1.msra.mxu0 %v4071
      %4180 = vmatprep.subr.mxu0 0.0
      %4181 = vmatpush1.msra.mxu0 %v4072
      %4182 = vmatprep.subr.mxu0 0.0
      %4183 = vmatpush1.msra.mxu0 %v4073
      %4184 = vmatprep.subr.mxu0 0.0
      %4185 = vmatpush1.msra.mxu0 %v4074
      %4186 = vmatprep.subr.mxu0 0.0
      %4187 = vmatpush1.msra.mxu0 %v4075
      %4188 = vmatprep.subr.mxu0 0.0
      %4189 = vmatpush1.msra.mxu0 0.0
      %4190 = vmatprep.subr.mxu0 0.0
      %4191 = vmatpush1.msra.mxu0 0.0
      %4192 = vmatprep.subr.mxu0 0.0
      %4193 = vmatpush1.msra.mxu0 0.0
      %4194 = vmatprep.subr.mxu0 0.0
      %4195 = vmatpush1.msra.mxu0 0.0
      %4196 = vmatprep.subr.mxu0 0.0
      %4197 = vmatpush1.msra.mxu0 0.0
      %4198 = vmatprep.subr.mxu0 0.0
      %4199 = vmatpush1.msra.mxu0 0.0
      %4200 = vmatprep.subr.mxu0 0.0
      %4201 = vmatpush1.msra.mxu0 0.0
      %4202 = vmatprep.subr.mxu0 0.0
      %4203 = vmatpush1.msra.mxu0 0.0
      %4204 = vmatprep.subr.mxu0 0.0
      %4205 = vmatpush1.msra.mxu0 0.0
      %4206 = vmatprep.subr.mxu0 0.0
      %4207 = vmatpush1.msra.mxu0 0.0
      %4208 = vmatprep.subr.mxu0 0.0
      %4209 = vmatpush1.msra.mxu0 0.0
      %4210 = vmatprep.subr.mxu0 0.0
      %4211 = vmatpush1.msra.mxu0 0.0
      %4212 = vmatprep.subr.mxu0 0.0
      %4213 = vmatpush1.msra.mxu0 0.0
      %4214 = vmatprep.subr.mxu0 0.0
      %4215 = vmatpush1.msra.mxu0 0.0
      %4216 = vmatprep.subr.mxu0 0.0
      %4217 = vmatpush1.msra.mxu0 0.0
      %4218 = vmatprep.subr.mxu0 0.0
      %4219 = vmatpush1.msra.mxu0 0.0
      %4220 = vmatprep.subr.mxu0 0.0
      %4221 = vmatpush1.msra.mxu0 0.0
      %4222 = vmatprep.subr.mxu0 0.0
      %4223 = vmatpush1.msra.mxu0 0.0
      %4224 = vmatprep.subr.mxu0 0.0
      %4225 = vmatpush1.msra.mxu0 0.0
      %4226 = vmatprep.subr.mxu0 0.0
      %4227 = vmatpush1.msra.mxu0 0.0
      %4228 = vmatprep.subr.mxu0 0.0
      %4229 = vmatpush1.msra.mxu0 0.0
      %4230 = vmatprep.subr.mxu0 0.0
      %4231 = vmatpush1.msra.mxu0 0.0
      %4232 = vmatprep.subr.mxu0 0.0
      %4233 = vmatpush1.msra.mxu0 0.0
      %4234 = vmatprep.subr.mxu0 0.0
      %4235 = vmatpush1.msra.mxu0 0.0
      %4236 = vmatprep.mubr.f32.mxu0 0.0
      %4237 = vmatmul.mubr.f32.gmra.mrb[0].mxu0 %v4077
      %v4238 = vpop.f32.mrb[0].mxu0
      %v4239 = vadd.f32 0.0, %v4238
      %v4240 = vpop.f32.mrb[0].mxu0
      %4241 = vmatprep.mubr.f32.mxu0 0.0
      %4242 = vmatmul.mubr.f32.gmra.mrb[0].mxu0 %v4080
      %v4243 = vpop.f32.mrb[0].mxu0
      %v4244 = vadd.f32 0.0, %v4243
      %v4245 = vpop.f32.mrb[0].mxu0
      %4246 = vmatprep.mubr.f32.mxu0 0.0
      %4247 = vmatmul.mubr.f32.gmra.mrb[0].mxu0 %v4083
      %v4248 = vpop.f32.mrb[0].mxu0
      %v4249 = vadd.f32 0.0, %v4248
      %v4250 = vpop.f32.mrb[0].mxu0
      %4251 = vmatprep.mubr.f32.mxu0 0.0
      %4252 = vmatmul.mubr.f32.gmra.mrb[0].mxu0 %v4086
      %v4253 = vpop.f32.mrb[0].mxu0
      %v4254 = vadd.f32 0.0, %v4253
      %v4255 = vpop.f32.mrb[0].mxu0
      %4256 = vmatprep.mubr.f32.mxu0 0.0
      %4257 = vmatmul.mubr.f32.gmra.mrb[0].mxu0 %v4089
      %v4258 = vpop.f32.mrb[0].mxu0
      %v4259 = vadd.f32 0.0, %v4258
      %v4260 = vpop.f32.mrb[0].mxu0
      %4261 = vmatprep.mubr.f32.mxu0 0.0
      %4262 = vmatmul.mubr.f32.gmra.mrb[0].mxu0 %v4092
      %v4263 = vpop.f32.mrb[0].mxu0
      %v4264 = vadd.f32 0.0, %v4263
      %v4265 = vpop.f32.mrb[0].mxu0
      %4266 = vmatprep.mubr.f32.mxu0 0.0
      %4267 = vmatmul.mubr.f32.gmra.mrb[0].mxu0 %v4095
      %v4268 = vpop.f32.mrb[0].mxu0
      %v4269 = vadd.f32 0.0, %v4268
      %v4270 = vpop.f32.mrb[0].mxu0
      %4271 = vmatprep.mubr.f32.mxu0 0.0
      %4272 = vmatmul.mubr.f32.gmra.mrb[0].mxu0 %v4098
      %v4273 = vpop.f32.mrb[0].mxu0
      %v4274 = vadd.f32 0.0, %v4273
      %v4275 = vpop.f32.mrb[0].mxu0
      %4276 = vmatprep.mubr.f32.mxu0 0.0
      %4277 = vmatmul.mubr.f32.gmra.mrb[0].mxu0 %v4101
      %v4278 = vpop.f32.mrb[0].mxu0
      %v4279 = vadd.f32 0.0, %v4278
      %v4280 = vpop.f32.mrb[0].mxu0
      %4281 = vmatprep.mubr.f32.mxu0 0.0
      %4282 = vmatmul.mubr.f32.gmra.mrb[0].mxu0 %v4104
      %v4283 = vpop.f32.mrb[0].mxu0
      %v4284 = vadd.f32 0.0, %v4283
      %v4285 = vpop.f32.mrb[0].mxu0
      %4286 = vmatprep.mubr.f32.mxu0 0.0
      %4287 = vmatmul.mubr.f32.gmra.mrb[0].mxu0 %v4107
      %v4288 = vpop.f32.mrb[0].mxu0
      %v4289 = vadd.f32 0.0, %v4288
      %v4290 = vpop.f32.mrb[0].mxu0
      %4291 = vmatprep.mubr.f32.mxu0 0.0
      %4292 = vmatmul.mubr.f32.gmra.mrb[0].mxu0 %v4110
      %v4293 = vpop.f32.mrb[0].mxu0
      %v4294 = vadd.f32 0.0, %v4293
      %v4295 = vpop.f32.mrb[0].mxu0
      %4296 = vmatprep.mubr.f32.mxu0 0.0
      %4297 = vmatmul.mubr.f32.gmra.mrb[0].mxu0 %v4113
      %v4298 = vpop.f32.mrb[0].mxu0
      %v4299 = vadd.f32 0.0, %v4298
      %v4300 = vpop.f32.mrb[0].mxu0
      %4301 = vmatprep.mubr.f32.mxu0 0.0
      %4302 = vmatmul.mubr.f32.gmra.mrb[0].mxu0 %v4116
      %v4303 = vpop.f32.mrb[0].mxu0
      %v4304 = vadd.f32 0.0, %v4303
      %v4305 = vpop.f32.mrb[0].mxu0
      %4306 = vmatprep.mubr.f32.mxu0 0.0
      %4307 = vmatmul.mubr.f32.gmra.mrb[0].mxu0 %v4119
      %v4308 = vpop.f32.mrb[0].mxu0
      %v4309 = vadd.f32 0.0, %v4308
      %v4310 = vpop.f32.mrb[0].mxu0
      %4311 = vmatprep.mubr.f32.mxu0 0.0
      %4312 = vmatmul.mubr.f32.gmra.mrb[0].mxu0 %v4122
      %v4313 = vpop.f32.mrb[0].mxu0
      %v4314 = vadd.f32 0.0, %v4313
      %v4315 = vpop.f32.mrb[0].mxu0
      %4316 = vmatprep.mubr.f32.mxu0 0.0
      %4317 = vmatmul.mubr.f32.gmra.mrb[0].mxu0 %v4125
      %v4318 = vpop.f32.mrb[0].mxu0
      %v4319 = vadd.f32 0.0, %v4318
      %v4320 = vpop.f32.mrb[0].mxu0
      %4321 = vmatprep.mubr.f32.mxu0 0.0
      %4322 = vmatmul.mubr.f32.gmra.mrb[0].mxu0 %v4128
      %v4323 = vpop.f32.mrb[0].mxu0
      %v4324 = vadd.f32 0.0, %v4323
      %v4325 = vpop.f32.mrb[0].mxu0
      %4326 = vmatprep.mubr.f32.mxu0 0.0
      %4327 = vmatmul.mubr.f32.gmra.mrb[0].mxu0 %v4131
      %v4328 = vpop.f32.mrb[0].mxu0
      %v4329 = vadd.f32 0.0, %v4328
      %v4330 = vpop.f32.mrb[0].mxu0
      %4331 = vmatprep.mubr.f32.mxu0 0.0
      %4332 = vmatmul.mubr.f32.gmra.mrb[0].mxu0 %v4134
      %v4333 = vpop.f32.mrb[0].mxu0
      %v4334 = vadd.f32 0.0, %v4333
      %v4335 = vpop.f32.mrb[0].mxu0
      %4336 = vmatprep.mubr.f32.mxu0 0.0
      %4337 = vmatmul.mubr.f32.gmra.mrb[0].mxu0 %v4137
      %v4338 = vpop.f32.mrb[0].mxu0
      %v4339 = vadd.f32 0.0, %v4338
      %v4340 = vpop.f32.mrb[0].mxu0
      %4341 = vmatprep.mubr.f32.mxu0 0.0
      %4342 = vmatmul.mubr.f32.gmra.mrb[0].mxu0 %v4140
      %v4343 = vpop.f32.mrb[0].mxu0
      %v4344 = vadd.f32 0.0, %v4343
      %v4345 = vpop.f32.mrb[0].mxu0
      %4346 = vmatprep.mubr.f32.mxu0 0.0
      %4347 = vmatmul.mubr.f32.gmra.mrb[0].mxu0 %v4143
      %v4348 = vpop.f32.mrb[0].mxu0
      %v4349 = vadd.f32 0.0, %v4348
      %v4350 = vpop.f32.mrb[0].mxu0
      %4351 = vmatprep.mubr.f32.mxu0 0.0
      %4352 = vmatmul.mubr.f32.gmra.mrb[0].mxu0 %v4146
      %v4353 = vpop.f32.mrb[0].mxu0
      %v4354 = vadd.f32 0.0, %v4353
      %v4355 = vpop.f32.mrb[0].mxu0
      %4356 = vmatprep.mubr.f32.mxu0 0.0
      %4357 = vmatmul.mubr.f32.gmra.mrb[0].mxu0 %v4149
      %v4358 = vpop.f32.mrb[0].mxu0
      %v4359 = vadd.f32 0.0, %v4358
      %v4360 = vpop.f32.mrb[0].mxu0
      %4361 = vmatprep.mubr.f32.mxu0 0.0
      %4362 = vmatmul.mubr.f32.gmra.mrb[0].mxu0 %v4152
      %v4363 = vpop.f32.mrb[0].mxu0
      %v4364 = vadd.f32 0.0, %v4363
      %v4365 = vpop.f32.mrb[0].mxu0
      %4366 = vmatprep.mubr.f32.mxu0 0.0
      %4367 = vmatmul.mubr.f32.gmra.mrb[0].mxu0 %v4155
      %v4368 = vpop.f32.mrb[0].mxu0
      %v4369 = vadd.f32 0.0, %v4368
      %v4370 = vpop.f32.mrb[0].mxu0
      %4371 = vmatprep.mubr.f32.mxu0 0.0
      %4372 = vmatmul.mubr.f32.gmra.mrb[0].mxu0 %v4158
      %v4373 = vpop.f32.mrb[0].mxu0
      %v4374 = vadd.f32 0.0, %v4373
      %v4375 = vpop.f32.mrb[0].mxu0
      %4376 = vmatprep.mubr.f32.mxu0 0.0
      %4377 = vmatmul.mubr.f32.gmra.mrb[0].mxu0 %v4161
      %v4378 = vpop.f32.mrb[0].mxu0
      %v4379 = vadd.f32 0.0, %v4378
      %v4380 = vpop.f32.mrb[0].mxu0
      %4381 = vmatprep.mubr.f32.mxu0 0.0
      %4382 = vmatmul.mubr.f32.gmra.mrb[0].mxu0 %v4164
      %v4383 = vpop.f32.mrb[0].mxu0
      %v4384 = vadd.f32 0.0, %v4383
      %v4385 = vpop.f32.mrb[0].mxu0
      %4386 = vmatprep.mubr.f32.mxu0 0.0
      %4387 = vmatmul.mubr.f32.gmra.mrb[0].mxu0 %v4167
      %v4388 = vpop.f32.mrb[0].mxu0
      %v4389 = vadd.f32 0.0, %v4388
      %v4390 = vpop.f32.mrb[0].mxu0
      %4391 = vmatprep.mubr.f32.mxu0 0.0
      %4392 = vmatmul.mubr.f32.gmra.mrb[0].mxu0 %v4170
      %v4393 = vpop.f32.mrb[0].mxu0
      %v4394 = vadd.f32 0.0, %v4393
      %v4395 = vpop.f32.mrb[0].mxu0
      %4396 = vdwg.mxu0
      %v4397 = vadd.f32 %v4003, %v4239
      %v4398 = vadd.f32 %v4004, %v4244
      %v4399 = vadd.f32 %v4005, %v4249
      %v4400 = vadd.f32 %v4006, %v4254
      %v4401 = vadd.f32 %v4007, %v4259
      %v4402 = vadd.f32 %v4008, %v4264
      %v4403 = vadd.f32 %v4009, %v4269
      %v4404 = vadd.f32 %v4010, %v4274
      %v4405 = vadd.f32 %v4011, %v4279
      %v4406 = vadd.f32 %v4012, %v4284
      %v4407 = vadd.f32 %v4013, %v4289
      %v4408 = vadd.f32 %v4014, %v4294
      %v4409 = vadd.f32 %v4015, %v4299
      %v4410 = vadd.f32 %v4016, %v4304
      %v4411 = vadd.f32 %v4017, %v4309
      %v4412 = vadd.f32 %v4018, %v4314
      %v4413 = vadd.f32 %v4019, %v4319
      %v4414 = vadd.f32 %v4020, %v4324
      %v4415 = vadd.f32 %v4021, %v4329
      %v4416 = vadd.f32 %v4022, %v4334
      %v4417 = vadd.f32 %v4023, %v4339
      %v4418 = vadd.f32 %v4024, %v4344
      %v4419 = vadd.f32 %v4025, %v4349
      %v4420 = vadd.f32 %v4026, %v4354
      %v4421 = vadd.f32 %v4027, %v4359
      %v4422 = vadd.f32 %v4028, %v4364
      %v4423 = vadd.f32 %v4029, %v4369
      %v4424 = vadd.f32 %v4030, %v4374
      %v4425 = vadd.f32 %v4031, %v4379
      %v4426 = vadd.f32 %v4032, %v4384
      %v4427 = vadd.f32 %v4033, %v4389
      %v4428 = vadd.f32 %v4034, %v4394
      %s4429 = scalar_lea.vmem [#allocation4], 48
      %v4430 = vld [vmem:[%s4429] sm:$0xff]
      %v4431 = vld [vmem:[%s4429 + $0x8] sm:$0xff]
      %v4432 = vld [vmem:[%s4429 + $0x18] sm:$0xff]
      %v4433 = vld [vmem:[%s4429 + $0x20] sm:$0xff]
      %v4434 = vld [vmem:[%s4429 + $0x30] sm:$0xff]
      %v4435 = vld [vmem:[%s4429 + $0x38] sm:$0xff]
      %v4436 = vld [vmem:[%s4429 + $0x48] sm:$0xff]
      %v4437 = vld [vmem:[%s4429 + $0x50] sm:$0xff]
      %v4438 = vld [vmem:[%s4429 + $0x60] sm:$0xff]
      %v4439 = vld [vmem:[%s4429 + $0x68] sm:$0xff]
      %v4440 = vld [vmem:[%s4429 + $0x78] sm:$0xff]
      %v4441 = vld [vmem:[%s4429 + $0x80] sm:$0xff]
      %v4442 = vld [vmem:[%s4429 + $0x90] sm:$0xff]
      %v4443 = vld [vmem:[%s4429 + $0x98] sm:$0xff]
      %v4444 = vld [vmem:[%s4429 + $0xa8] sm:$0xff]
      %v4445 = vld [vmem:[%s4429 + $0xb0] sm:$0xff]
      %v4446 = vld [vmem:[%s4429 + $0xc0] sm:$0xff]
      %v4447 = vld [vmem:[%s4429 + $0xc8] sm:$0xff]
      %v4448 = vld [vmem:[%s4429 + $0xd8] sm:$0xff]
      %v4449 = vld [vmem:[%s4429 + $0xe0] sm:$0xff]
      %v4450 = vld [vmem:[%s4429 + $0xf0] sm:$0xff]
      %v4451 = vld [vmem:[%s4429 + $0xf8] sm:$0xff]
      %v4452 = vld [vmem:[%s4429 + $0x108] sm:$0xff]
      %v4453 = vld [vmem:[%s4429 + $0x110] sm:$0xff]
      %v4454 = vld [vmem:[%s4429 + $0x120] sm:$0xff]
      %v4455 = vld [vmem:[%s4429 + $0x128] sm:$0xff]
      %v4456 = vld [vmem:[%s4429 + $0x138] sm:$0xff]
      %v4457 = vld [vmem:[%s4429 + $0x140] sm:$0xff]
      %v4458 = vld [vmem:[%s4429 + $0x150] sm:$0xff]
      %v4459 = vld [vmem:[%s4429 + $0x158] sm:$0xff]
      %v4460 = vld [vmem:[%s4429 + $0x168] sm:$0xff]
      %v4461 = vld [vmem:[%s4429 + $0x170] sm:$0xff]
      %s4462 = scalar_lea.vmem %s3, 384
      %v4463 = vld [vmem:[%s4462] sm:$0xff]
      %v4464 = vld [vmem:[%s4462 + $0x8] sm:$0xff]
      %v4465 = vld [vmem:[%s4462 + $0x10] sm:$0xff]
      %v4466 = vld [vmem:[%s4462 + $0x18] sm:$0xff]
      %v4467 = vld [vmem:[%s4462 + $0x20] sm:$0xff]
      %v4468 = vld [vmem:[%s4462 + $0x28] sm:$0xff]
      %v4469 = vld [vmem:[%s4462 + $0x30] sm:$0xff]
      %v4470 = vld [vmem:[%s4462 + $0x38] sm:$0xff]
      %v4472 = vsel %vm1588, %v4430, 0
      %v4475 = vsel %vm1588, %v4431, 0
      %v4478 = vsel %vm1588, %v4432, 0
      %v4481 = vsel %vm1588, %v4433, 0
      %v4484 = vsel %vm1588, %v4434, 0
      %v4487 = vsel %vm1588, %v4435, 0
      %v4490 = vsel %vm1588, %v4436, 0
      %v4493 = vsel %vm1588, %v4437, 0
      %v4496 = vsel %vm1588, %v4438, 0
      %v4499 = vsel %vm1588, %v4439, 0
      %v4502 = vsel %vm1588, %v4440, 0
      %v4505 = vsel %vm1588, %v4441, 0
      %v4508 = vsel %vm1588, %v4442, 0
      %v4511 = vsel %vm1588, %v4443, 0
      %v4514 = vsel %vm1588, %v4444, 0
      %v4517 = vsel %vm1588, %v4445, 0
      %v4520 = vsel %vm1588, %v4446, 0
      %v4523 = vsel %vm1588, %v4447, 0
      %v4526 = vsel %vm1588, %v4448, 0
      %v4529 = vsel %vm1588, %v4449, 0
      %v4532 = vsel %vm1588, %v4450, 0
      %v4535 = vsel %vm1588, %v4451, 0
      %v4538 = vsel %vm1588, %v4452, 0
      %v4541 = vsel %vm1588, %v4453, 0
      %v4544 = vsel %vm1588, %v4454, 0
      %v4547 = vsel %vm1588, %v4455, 0
      %v4550 = vsel %vm1588, %v4456, 0
      %v4553 = vsel %vm1588, %v4457, 0
      %v4556 = vsel %vm1588, %v4458, 0
      %v4559 = vsel %vm1588, %v4459, 0
      %v4562 = vsel %vm1588, %v4460, 0
      %v4565 = vsel %vm1588, %v4461, 0
      %4567 = vmatprep.subr.mxu0 0.0
      %4568 = vmatpush1.msra.mxu0 %v4463
      %4569 = vmatprep.subr.mxu0 0.0
      %4570 = vmatpush1.msra.mxu0 %v4464
      %4571 = vmatprep.subr.mxu0 0.0
      %4572 = vmatpush1.msra.mxu0 %v4465
      %4573 = vmatprep.subr.mxu0 0.0
      %4574 = vmatpush1.msra.mxu0 %v4466
      %4575 = vmatprep.subr.mxu0 0.0
      %4576 = vmatpush1.msra.mxu0 %v4467
      %4577 = vmatprep.subr.mxu0 0.0
      %4578 = vmatpush1.msra.mxu0 %v4468
      %4579 = vmatprep.subr.mxu0 0.0
      %4580 = vmatpush1.msra.mxu0 %v4469
      %4581 = vmatprep.subr.mxu0 0.0
      %4582 = vmatpush1.msra.mxu0 %v4470
      %4583 = vmatprep.subr.mxu0 0.0
      %4584 = vmatpush1.msra.mxu0 0.0
      %4585 = vmatprep.subr.mxu0 0.0
      %4586 = vmatpush1.msra.mxu0 0.0
      %4587 = vmatprep.subr.mxu0 0.0
      %4588 = vmatpush1.msra.mxu0 0.0
      %4589 = vmatprep.subr.mxu0 0.0
      %4590 = vmatpush1.msra.mxu0 0.0
      %4591 = vmatprep.subr.mxu0 0.0
      %4592 = vmatpush1.msra.mxu0 0.0
      %4593 = vmatprep.subr.mxu0 0.0
      %4594 = vmatpush1.msra.mxu0 0.0
      %4595 = vmatprep.subr.mxu0 0.0
      %4596 = vmatpush1.msra.mxu0 0.0
      %4597 = vmatprep.subr.mxu0 0.0
      %4598 = vmatpush1.msra.mxu0 0.0
      %4599 = vmatprep.subr.mxu0 0.0
      %4600 = vmatpush1.msra.mxu0 0.0
      %4601 = vmatprep.subr.mxu0 0.0
      %4602 = vmatpush1.msra.mxu0 0.0
      %4603 = vmatprep.subr.mxu0 0.0
      %4604 = vmatpush1.msra.mxu0 0.0
      %4605 = vmatprep.subr.mxu0 0.0
      %4606 = vmatpush1.msra.mxu0 0.0
      %4607 = vmatprep.subr.mxu0 0.0
      %4608 = vmatpush1.msra.mxu0 0.0
      %4609 = vmatprep.subr.mxu0 0.0
      %4610 = vmatpush1.msra.mxu0 0.0
      %4611 = vmatprep.subr.mxu0 0.0
      %4612 = vmatpush1.msra.mxu0 0.0
      %4613 = vmatprep.subr.mxu0 0.0
      %4614 = vmatpush1.msra.mxu0 0.0
      %4615 = vmatprep.subr.mxu0 0.0
      %4616 = vmatpush1.msra.mxu0 0.0
      %4617 = vmatprep.subr.mxu0 0.0
      %4618 = vmatpush1.msra.mxu0 0.0
      %4619 = vmatprep.subr.mxu0 0.0
      %4620 = vmatpush1.msra.mxu0 0.0
      %4621 = vmatprep.subr.mxu0 0.0
      %4622 = vmatpush1.msra.mxu0 0.0
      %4623 = vmatprep.subr.mxu0 0.0
      %4624 = vmatpush1.msra.mxu0 0.0
      %4625 = vmatprep.subr.mxu0 0.0
      %4626 = vmatpush1.msra.mxu0 0.0
      %4627 = vmatprep.subr.mxu0 0.0
      %4628 = vmatpush1.msra.mxu0 0.0
      %4629 = vmatprep.subr.mxu0 0.0
      %4630 = vmatpush1.msra.mxu0 0.0
      %4631 = vmatprep.mubr.f32.mxu0 0.0
      %4632 = vmatmul.mubr.f32.gmra.mrb[0].mxu0 %v4472
      %v4633 = vpop.f32.mrb[0].mxu0
      %v4634 = vadd.f32 0.0, %v4633
      %v4635 = vpop.f32.mrb[0].mxu0
      %4636 = vmatprep.mubr.f32.mxu0 0.0
      %4637 = vmatmul.mubr.f32.gmra.mrb[0].mxu0 %v4475
      %v4638 = vpop.f32.mrb[0].mxu0
      %v4639 = vadd.f32 0.0, %v4638
      %v4640 = vpop.f32.mrb[0].mxu0
      %4641 = vmatprep.mubr.f32.mxu0 0.0
      %4642 = vmatmul.mubr.f32.gmra.mrb[0].mxu0 %v4478
      %v4643 = vpop.f32.mrb[0].mxu0
      %v4644 = vadd.f32 0.0, %v4643
      %v4645 = vpop.f32.mrb[0].mxu0
      %4646 = vmatprep.mubr.f32.mxu0 0.0
      %4647 = vmatmul.mubr.f32.gmra.mrb[0].mxu0 %v4481
      %v4648 = vpop.f32.mrb[0].mxu0
      %v4649 = vadd.f32 0.0, %v4648
      %v4650 = vpop.f32.mrb[0].mxu0
      %4651 = vmatprep.mubr.f32.mxu0 0.0
      %4652 = vmatmul.mubr.f32.gmra.mrb[0].mxu0 %v4484
      %v4653 = vpop.f32.mrb[0].mxu0
      %v4654 = vadd.f32 0.0, %v4653
      %v4655 = vpop.f32.mrb[0].mxu0
      %4656 = vmatprep.mubr.f32.mxu0 0.0
      %4657 = vmatmul.mubr.f32.gmra.mrb[0].mxu0 %v4487
      %v4658 = vpop.f32.mrb[0].mxu0
      %v4659 = vadd.f32 0.0, %v4658
      %v4660 = vpop.f32.mrb[0].mxu0
      %4661 = vmatprep.mubr.f32.mxu0 0.0
      %4662 = vmatmul.mubr.f32.gmra.mrb[0].mxu0 %v4490
      %v4663 = vpop.f32.mrb[0].mxu0
      %v4664 = vadd.f32 0.0, %v4663
      %v4665 = vpop.f32.mrb[0].mxu0
      %4666 = vmatprep.mubr.f32.mxu0 0.0
      %4667 = vmatmul.mubr.f32.gmra.mrb[0].mxu0 %v4493
      %v4668 = vpop.f32.mrb[0].mxu0
      %v4669 = vadd.f32 0.0, %v4668
      %v4670 = vpop.f32.mrb[0].mxu0
      %4671 = vmatprep.mubr.f32.mxu0 0.0
      %4672 = vmatmul.mubr.f32.gmra.mrb[0].mxu0 %v4496
      %v4673 = vpop.f32.mrb[0].mxu0
      %v4674 = vadd.f32 0.0, %v4673
      %v4675 = vpop.f32.mrb[0].mxu0
      %4676 = vmatprep.mubr.f32.mxu0 0.0
      %4677 = vmatmul.mubr.f32.gmra.mrb[0].mxu0 %v4499
      %v4678 = vpop.f32.mrb[0].mxu0
      %v4679 = vadd.f32 0.0, %v4678
      %v4680 = vpop.f32.mrb[0].mxu0
      %4681 = vmatprep.mubr.f32.mxu0 0.0
      %4682 = vmatmul.mubr.f32.gmra.mrb[0].mxu0 %v4502
      %v4683 = vpop.f32.mrb[0].mxu0
      %v4684 = vadd.f32 0.0, %v4683
      %v4685 = vpop.f32.mrb[0].mxu0
      %4686 = vmatprep.mubr.f32.mxu0 0.0
      %4687 = vmatmul.mubr.f32.gmra.mrb[0].mxu0 %v4505
      %v4688 = vpop.f32.mrb[0].mxu0
      %v4689 = vadd.f32 0.0, %v4688
      %v4690 = vpop.f32.mrb[0].mxu0
      %4691 = vmatprep.mubr.f32.mxu0 0.0
      %4692 = vmatmul.mubr.f32.gmra.mrb[0].mxu0 %v4508
      %v4693 = vpop.f32.mrb[0].mxu0
      %v4694 = vadd.f32 0.0, %v4693
      %v4695 = vpop.f32.mrb[0].mxu0
      %4696 = vmatprep.mubr.f32.mxu0 0.0
      %4697 = vmatmul.mubr.f32.gmra.mrb[0].mxu0 %v4511
      %v4698 = vpop.f32.mrb[0].mxu0
      %v4699 = vadd.f32 0.0, %v4698
      %v4700 = vpop.f32.mrb[0].mxu0
      %4701 = vmatprep.mubr.f32.mxu0 0.0
      %4702 = vmatmul.mubr.f32.gmra.mrb[0].mxu0 %v4514
      %v4703 = vpop.f32.mrb[0].mxu0
      %v4704 = vadd.f32 0.0, %v4703
      %v4705 = vpop.f32.mrb[0].mxu0
      %4706 = vmatprep.mubr.f32.mxu0 0.0
      %4707 = vmatmul.mubr.f32.gmra.mrb[0].mxu0 %v4517
      %v4708 = vpop.f32.mrb[0].mxu0
      %v4709 = vadd.f32 0.0, %v4708
      %v4710 = vpop.f32.mrb[0].mxu0
      %4711 = vmatprep.mubr.f32.mxu0 0.0
      %4712 = vmatmul.mubr.f32.gmra.mrb[0].mxu0 %v4520
      %v4713 = vpop.f32.mrb[0].mxu0
      %v4714 = vadd.f32 0.0, %v4713
      %v4715 = vpop.f32.mrb[0].mxu0
      %4716 = vmatprep.mubr.f32.mxu0 0.0
      %4717 = vmatmul.mubr.f32.gmra.mrb[0].mxu0 %v4523
      %v4718 = vpop.f32.mrb[0].mxu0
      %v4719 = vadd.f32 0.0, %v4718
      %v4720 = vpop.f32.mrb[0].mxu0
      %4721 = vmatprep.mubr.f32.mxu0 0.0
      %4722 = vmatmul.mubr.f32.gmra.mrb[0].mxu0 %v4526
      %v4723 = vpop.f32.mrb[0].mxu0
      %v4724 = vadd.f32 0.0, %v4723
      %v4725 = vpop.f32.mrb[0].mxu0
      %4726 = vmatprep.mubr.f32.mxu0 0.0
      %4727 = vmatmul.mubr.f32.gmra.mrb[0].mxu0 %v4529
      %v4728 = vpop.f32.mrb[0].mxu0
      %v4729 = vadd.f32 0.0, %v4728
      %v4730 = vpop.f32.mrb[0].mxu0
      %4731 = vmatprep.mubr.f32.mxu0 0.0
      %4732 = vmatmul.mubr.f32.gmra.mrb[0].mxu0 %v4532
      %v4733 = vpop.f32.mrb[0].mxu0
      %v4734 = vadd.f32 0.0, %v4733
      %v4735 = vpop.f32.mrb[0].mxu0
      %4736 = vmatprep.mubr.f32.mxu0 0.0
      %4737 = vmatmul.mubr.f32.gmra.mrb[0].mxu0 %v4535
      %v4738 = vpop.f32.mrb[0].mxu0
      %v4739 = vadd.f32 0.0, %v4738
      %v4740 = vpop.f32.mrb[0].mxu0
      %4741 = vmatprep.mubr.f32.mxu0 0.0
      %4742 = vmatmul.mubr.f32.gmra.mrb[0].mxu0 %v4538
      %v4743 = vpop.f32.mrb[0].mxu0
      %v4744 = vadd.f32 0.0, %v4743
      %v4745 = vpop.f32.mrb[0].mxu0
      %4746 = vmatprep.mubr.f32.mxu0 0.0
      %4747 = vmatmul.mubr.f32.gmra.mrb[0].mxu0 %v4541
      %v4748 = vpop.f32.mrb[0].mxu0
      %v4749 = vadd.f32 0.0, %v4748
      %v4750 = vpop.f32.mrb[0].mxu0
      %4751 = vmatprep.mubr.f32.mxu0 0.0
      %4752 = vmatmul.mubr.f32.gmra.mrb[0].mxu0 %v4544
      %v4753 = vpop.f32.mrb[0].mxu0
      %v4754 = vadd.f32 0.0, %v4753
      %v4755 = vpop.f32.mrb[0].mxu0
      %4756 = vmatprep.mubr.f32.mxu0 0.0
      %4757 = vmatmul.mubr.f32.gmra.mrb[0].mxu0 %v4547
      %v4758 = vpop.f32.mrb[0].mxu0
      %v4759 = vadd.f32 0.0, %v4758
      %v4760 = vpop.f32.mrb[0].mxu0
      %4761 = vmatprep.mubr.f32.mxu0 0.0
      %4762 = vmatmul.mubr.f32.gmra.mrb[0].mxu0 %v4550
      %v4763 = vpop.f32.mrb[0].mxu0
      %v4764 = vadd.f32 0.0, %v4763
      %v4765 = vpop.f32.mrb[0].mxu0
      %4766 = vmatprep.mubr.f32.mxu0 0.0
      %4767 = vmatmul.mubr.f32.gmra.mrb[0].mxu0 %v4553
      %v4768 = vpop.f32.mrb[0].mxu0
      %v4769 = vadd.f32 0.0, %v4768
      %v4770 = vpop.f32.mrb[0].mxu0
      %4771 = vmatprep.mubr.f32.mxu0 0.0
      %4772 = vmatmul.mubr.f32.gmra.mrb[0].mxu0 %v4556
      %v4773 = vpop.f32.mrb[0].mxu0
      %v4774 = vadd.f32 0.0, %v4773
      %v4775 = vpop.f32.mrb[0].mxu0
      %4776 = vmatprep.mubr.f32.mxu0 0.0
      %4777 = vmatmul.mubr.f32.gmra.mrb[0].mxu0 %v4559
      %v4778 = vpop.f32.mrb[0].mxu0
      %v4779 = vadd.f32 0.0, %v4778
      %v4780 = vpop.f32.mrb[0].mxu0
      %4781 = vmatprep.mubr.f32.mxu0 0.0
      %4782 = vmatmul.mubr.f32.gmra.mrb[0].mxu0 %v4562
      %v4783 = vpop.f32.mrb[0].mxu0
      %v4784 = vadd.f32 0.0, %v4783
      %v4785 = vpop.f32.mrb[0].mxu0
      %4786 = vmatprep.mubr.f32.mxu0 0.0
      %4787 = vmatmul.mubr.f32.gmra.mrb[0].mxu0 %v4565
      %v4788 = vpop.f32.mrb[0].mxu0
      %v4789 = vadd.f32 0.0, %v4788
      %v4790 = vpop.f32.mrb[0].mxu0
      %4791 = vdwg.mxu0
      %v4792 = vadd.f32 %v4397, %v4634
      %v4793 = vadd.f32 %v4398, %v4639
      %v4794 = vadd.f32 %v4399, %v4644
      %v4795 = vadd.f32 %v4400, %v4649
      %v4796 = vadd.f32 %v4401, %v4654
      %v4797 = vadd.f32 %v4402, %v4659
      %v4798 = vadd.f32 %v4403, %v4664
      %v4799 = vadd.f32 %v4404, %v4669
      %v4800 = vadd.f32 %v4405, %v4674
      %v4801 = vadd.f32 %v4406, %v4679
      %v4802 = vadd.f32 %v4407, %v4684
      %v4803 = vadd.f32 %v4408, %v4689
      %v4804 = vadd.f32 %v4409, %v4694
      %v4805 = vadd.f32 %v4410, %v4699
      %v4806 = vadd.f32 %v4411, %v4704
      %v4807 = vadd.f32 %v4412, %v4709
      %v4808 = vadd.f32 %v4413, %v4714
      %v4809 = vadd.f32 %v4414, %v4719
      %v4810 = vadd.f32 %v4415, %v4724
      %v4811 = vadd.f32 %v4416, %v4729
      %v4812 = vadd.f32 %v4417, %v4734
      %v4813 = vadd.f32 %v4418, %v4739
      %v4814 = vadd.f32 %v4419, %v4744
      %v4815 = vadd.f32 %v4420, %v4749
      %v4816 = vadd.f32 %v4421, %v4754
      %v4817 = vadd.f32 %v4422, %v4759
      %v4818 = vadd.f32 %v4423, %v4764
      %v4819 = vadd.f32 %v4424, %v4769
      %v4820 = vadd.f32 %v4425, %v4774
      %v4821 = vadd.f32 %v4426, %v4779
      %v4822 = vadd.f32 %v4427, %v4784
      %v4823 = vadd.f32 %v4428, %v4789
      %v4824 = vld [vmem:[%s4429 + $0x1] sm:$0xff]
      %v4825 = vld [vmem:[%s4429 + $0x9] sm:$0xff]
      %v4826 = vld [vmem:[%s4429 + $0x19] sm:$0xff]
      %v4827 = vld [vmem:[%s4429 + $0x21] sm:$0xff]
      %v4828 = vld [vmem:[%s4429 + $0x31] sm:$0xff]
      %v4829 = vld [vmem:[%s4429 + $0x39] sm:$0xff]
      %v4830 = vld [vmem:[%s4429 + $0x49] sm:$0xff]
      %v4831 = vld [vmem:[%s4429 + $0x51] sm:$0xff]
      %v4832 = vld [vmem:[%s4429 + $0x61] sm:$0xff]
      %v4833 = vld [vmem:[%s4429 + $0x69] sm:$0xff]
      %v4834 = vld [vmem:[%s4429 + $0x79] sm:$0xff]
      %v4835 = vld [vmem:[%s4429 + $0x81] sm:$0xff]
      %v4836 = vld [vmem:[%s4429 + $0x91] sm:$0xff]
      %v4837 = vld [vmem:[%s4429 + $0x99] sm:$0xff]
      %v4838 = vld [vmem:[%s4429 + $0xa9] sm:$0xff]
      %v4839 = vld [vmem:[%s4429 + $0xb1] sm:$0xff]
      %v4840 = vld [vmem:[%s4429 + $0xc1] sm:$0xff]
      %v4841 = vld [vmem:[%s4429 + $0xc9] sm:$0xff]
      %v4842 = vld [vmem:[%s4429 + $0xd9] sm:$0xff]
      %v4843 = vld [vmem:[%s4429 + $0xe1] sm:$0xff]
      %v4844 = vld [vmem:[%s4429 + $0xf1] sm:$0xff]
      %v4845 = vld [vmem:[%s4429 + $0xf9] sm:$0xff]
      %v4846 = vld [vmem:[%s4429 + $0x109] sm:$0xff]
      %v4847 = vld [vmem:[%s4429 + $0x111] sm:$0xff]
      %v4848 = vld [vmem:[%s4429 + $0x121] sm:$0xff]
      %v4849 = vld [vmem:[%s4429 + $0x129] sm:$0xff]
      %v4850 = vld [vmem:[%s4429 + $0x139] sm:$0xff]
      %v4851 = vld [vmem:[%s4429 + $0x141] sm:$0xff]
      %v4852 = vld [vmem:[%s4429 + $0x151] sm:$0xff]
      %v4853 = vld [vmem:[%s4429 + $0x159] sm:$0xff]
      %v4854 = vld [vmem:[%s4429 + $0x169] sm:$0xff]
      %v4855 = vld [vmem:[%s4429 + $0x171] sm:$0xff]
      %s4856 = scalar_lea.vmem %s3, 448
      %v4857 = vld [vmem:[%s4856] sm:$0xff]
      %v4858 = vld [vmem:[%s4856 + $0x8] sm:$0xff]
      %v4859 = vld [vmem:[%s4856 + $0x10] sm:$0xff]
      %v4860 = vld [vmem:[%s4856 + $0x18] sm:$0xff]
      %v4861 = vld [vmem:[%s4856 + $0x20] sm:$0xff]
      %v4862 = vld [vmem:[%s4856 + $0x28] sm:$0xff]
      %v4863 = vld [vmem:[%s4856 + $0x30] sm:$0xff]
      %v4864 = vld [vmem:[%s4856 + $0x38] sm:$0xff]
      %v4866 = vsel %vm1588, %v4824, 0
      %v4869 = vsel %vm1588, %v4825, 0
      %v4872 = vsel %vm1588, %v4826, 0
      %v4875 = vsel %vm1588, %v4827, 0
      %v4878 = vsel %vm1588, %v4828, 0
      %v4881 = vsel %vm1588, %v4829, 0
      %v4884 = vsel %vm1588, %v4830, 0
      %v4887 = vsel %vm1588, %v4831, 0
      %v4890 = vsel %vm1588, %v4832, 0
      %v4893 = vsel %vm1588, %v4833, 0
      %v4896 = vsel %vm1588, %v4834, 0
      %v4899 = vsel %vm1588, %v4835, 0
      %v4902 = vsel %vm1588, %v4836, 0
      %v4905 = vsel %vm1588, %v4837, 0
      %v4908 = vsel %vm1588, %v4838, 0
      %v4911 = vsel %vm1588, %v4839, 0
      %v4914 = vsel %vm1588, %v4840, 0
      %v4917 = vsel %vm1588, %v4841, 0
      %v4920 = vsel %vm1588, %v4842, 0
      %v4923 = vsel %vm1588, %v4843, 0
      %v4926 = vsel %vm1588, %v4844, 0
      %v4929 = vsel %vm1588, %v4845, 0
      %v4932 = vsel %vm1588, %v4846, 0
      %v4935 = vsel %vm1588, %v4847, 0
      %v4938 = vsel %vm1588, %v4848, 0
      %v4941 = vsel %vm1588, %v4849, 0
      %v4944 = vsel %vm1588, %v4850, 0
      %v4947 = vsel %vm1588, %v4851, 0
      %v4950 = vsel %vm1588, %v4852, 0
      %v4953 = vsel %vm1588, %v4853, 0
      %v4956 = vsel %vm1588, %v4854, 0
      %v4959 = vsel %vm1588, %v4855, 0
      %4961 = vmatprep.subr.mxu0 0.0
      %4962 = vmatpush1.msra.mxu0 %v4857
      %4963 = vmatprep.subr.mxu0 0.0
      %4964 = vmatpush1.msra.mxu0 %v4858
      %4965 = vmatprep.subr.mxu0 0.0
      %4966 = vmatpush1.msra.mxu0 %v4859
      %4967 = vmatprep.subr.mxu0 0.0
      %4968 = vmatpush1.msra.mxu0 %v4860
      %4969 = vmatprep.subr.mxu0 0.0
      %4970 = vmatpush1.msra.mxu0 %v4861
      %4971 = vmatprep.subr.mxu0 0.0
      %4972 = vmatpush1.msra.mxu0 %v4862
      %4973 = vmatprep.subr.mxu0 0.0
      %4974 = vmatpush1.msra.mxu0 %v4863
      %4975 = vmatprep.subr.mxu0 0.0
      %4976 = vmatpush1.msra.mxu0 %v4864
      %4977 = vmatprep.subr.mxu0 0.0
      %4978 = vmatpush1.msra.mxu0 0.0
      %4979 = vmatprep.subr.mxu0 0.0
      %4980 = vmatpush1.msra.mxu0 0.0
      %4981 = vmatprep.subr.mxu0 0.0
      %4982 = vmatpush1.msra.mxu0 0.0
      %4983 = vmatprep.subr.mxu0 0.0
      %4984 = vmatpush1.msra.mxu0 0.0
      %4985 = vmatprep.subr.mxu0 0.0
      %4986 = vmatpush1.msra.mxu0 0.0
      %4987 = vmatprep.subr.mxu0 0.0
      %4988 = vmatpush1.msra.mxu0 0.0
      %4989 = vmatprep.subr.mxu0 0.0
      %4990 = vmatpush1.msra.mxu0 0.0
      %4991 = vmatprep.subr.mxu0 0.0
      %4992 = vmatpush1.msra.mxu0 0.0
      %4993 = vmatprep.subr.mxu0 0.0
      %4994 = vmatpush1.msra.mxu0 0.0
      %4995 = vmatprep.subr.mxu0 0.0
      %4996 = vmatpush1.msra.mxu0 0.0
      %4997 = vmatprep.subr.mxu0 0.0
      %4998 = vmatpush1.msra.mxu0 0.0
      %4999 = vmatprep.subr.mxu0 0.0
      %5000 = vmatpush1.msra.mxu0 0.0
      %5001 = vmatprep.subr.mxu0 0.0
      %5002 = vmatpush1.msra.mxu0 0.0
      %5003 = vmatprep.subr.mxu0 0.0
      %5004 = vmatpush1.msra.mxu0 0.0
      %5005 = vmatprep.subr.mxu0 0.0
      %5006 = vmatpush1.msra.mxu0 0.0
      %5007 = vmatprep.subr.mxu0 0.0
      %5008 = vmatpush1.msra.mxu0 0.0
      %5009 = vmatprep.subr.mxu0 0.0
      %5010 = vmatpush1.msra.mxu0 0.0
      %5011 = vmatprep.subr.mxu0 0.0
      %5012 = vmatpush1.msra.mxu0 0.0
      %5013 = vmatprep.subr.mxu0 0.0
      %5014 = vmatpush1.msra.mxu0 0.0
      %5015 = vmatprep.subr.mxu0 0.0
      %5016 = vmatpush1.msra.mxu0 0.0
      %5017 = vmatprep.subr.mxu0 0.0
      %5018 = vmatpush1.msra.mxu0 0.0
      %5019 = vmatprep.subr.mxu0 0.0
      %5020 = vmatpush1.msra.mxu0 0.0
      %5021 = vmatprep.subr.mxu0 0.0
      %5022 = vmatpush1.msra.mxu0 0.0
      %5023 = vmatprep.subr.mxu0 0.0
      %5024 = vmatpush1.msra.mxu0 0.0
      %5025 = vmatprep.mubr.f32.mxu0 0.0
      %5026 = vmatmul.mubr.f32.gmra.mrb[0].mxu0 %v4866
      %v5027 = vpop.f32.mrb[0].mxu0
      %v5028 = vadd.f32 0.0, %v5027
      %v5029 = vpop.f32.mrb[0].mxu0
      %5030 = vmatprep.mubr.f32.mxu0 0.0
      %5031 = vmatmul.mubr.f32.gmra.mrb[0].mxu0 %v4869
      %v5032 = vpop.f32.mrb[0].mxu0
      %v5033 = vadd.f32 0.0, %v5032
      %v5034 = vpop.f32.mrb[0].mxu0
      %5035 = vmatprep.mubr.f32.mxu0 0.0
      %5036 = vmatmul.mubr.f32.gmra.mrb[0].mxu0 %v4872
      %v5037 = vpop.f32.mrb[0].mxu0
      %v5038 = vadd.f32 0.0, %v5037
      %v5039 = vpop.f32.mrb[0].mxu0
      %5040 = vmatprep.mubr.f32.mxu0 0.0
      %5041 = vmatmul.mubr.f32.gmra.mrb[0].mxu0 %v4875
      %v5042 = vpop.f32.mrb[0].mxu0
      %v5043 = vadd.f32 0.0, %v5042
      %v5044 = vpop.f32.mrb[0].mxu0
      %5045 = vmatprep.mubr.f32.mxu0 0.0
      %5046 = vmatmul.mubr.f32.gmra.mrb[0].mxu0 %v4878
      %v5047 = vpop.f32.mrb[0].mxu0
      %v5048 = vadd.f32 0.0, %v5047
      %v5049 = vpop.f32.mrb[0].mxu0
      %5050 = vmatprep.mubr.f32.mxu0 0.0
      %5051 = vmatmul.mubr.f32.gmra.mrb[0].mxu0 %v4881
      %v5052 = vpop.f32.mrb[0].mxu0
      %v5053 = vadd.f32 0.0, %v5052
      %v5054 = vpop.f32.mrb[0].mxu0
      %5055 = vmatprep.mubr.f32.mxu0 0.0
      %5056 = vmatmul.mubr.f32.gmra.mrb[0].mxu0 %v4884
      %v5057 = vpop.f32.mrb[0].mxu0
      %v5058 = vadd.f32 0.0, %v5057
      %v5059 = vpop.f32.mrb[0].mxu0
      %5060 = vmatprep.mubr.f32.mxu0 0.0
      %5061 = vmatmul.mubr.f32.gmra.mrb[0].mxu0 %v4887
      %v5062 = vpop.f32.mrb[0].mxu0
      %v5063 = vadd.f32 0.0, %v5062
      %v5064 = vpop.f32.mrb[0].mxu0
      %5065 = vmatprep.mubr.f32.mxu0 0.0
      %5066 = vmatmul.mubr.f32.gmra.mrb[0].mxu0 %v4890
      %v5067 = vpop.f32.mrb[0].mxu0
      %v5068 = vadd.f32 0.0, %v5067
      %v5069 = vpop.f32.mrb[0].mxu0
      %5070 = vmatprep.mubr.f32.mxu0 0.0
      %5071 = vmatmul.mubr.f32.gmra.mrb[0].mxu0 %v4893
      %v5072 = vpop.f32.mrb[0].mxu0
      %v5073 = vadd.f32 0.0, %v5072
      %v5074 = vpop.f32.mrb[0].mxu0
      %5075 = vmatprep.mubr.f32.mxu0 0.0
      %5076 = vmatmul.mubr.f32.gmra.mrb[0].mxu0 %v4896
      %v5077 = vpop.f32.mrb[0].mxu0
      %v5078 = vadd.f32 0.0, %v5077
      %v5079 = vpop.f32.mrb[0].mxu0
      %5080 = vmatprep.mubr.f32.mxu0 0.0
      %5081 = vmatmul.mubr.f32.gmra.mrb[0].mxu0 %v4899
      %v5082 = vpop.f32.mrb[0].mxu0
      %v5083 = vadd.f32 0.0, %v5082
      %v5084 = vpop.f32.mrb[0].mxu0
      %5085 = vmatprep.mubr.f32.mxu0 0.0
      %5086 = vmatmul.mubr.f32.gmra.mrb[0].mxu0 %v4902
      %v5087 = vpop.f32.mrb[0].mxu0
      %v5088 = vadd.f32 0.0, %v5087
      %v5089 = vpop.f32.mrb[0].mxu0
      %5090 = vmatprep.mubr.f32.mxu0 0.0
      %5091 = vmatmul.mubr.f32.gmra.mrb[0].mxu0 %v4905
      %v5092 = vpop.f32.mrb[0].mxu0
      %v5093 = vadd.f32 0.0, %v5092
      %v5094 = vpop.f32.mrb[0].mxu0
      %5095 = vmatprep.mubr.f32.mxu0 0.0
      %5096 = vmatmul.mubr.f32.gmra.mrb[0].mxu0 %v4908
      %v5097 = vpop.f32.mrb[0].mxu0
      %v5098 = vadd.f32 0.0, %v5097
      %v5099 = vpop.f32.mrb[0].mxu0
      %5100 = vmatprep.mubr.f32.mxu0 0.0
      %5101 = vmatmul.mubr.f32.gmra.mrb[0].mxu0 %v4911
      %v5102 = vpop.f32.mrb[0].mxu0
      %v5103 = vadd.f32 0.0, %v5102
      %v5104 = vpop.f32.mrb[0].mxu0
      %5105 = vmatprep.mubr.f32.mxu0 0.0
      %5106 = vmatmul.mubr.f32.gmra.mrb[0].mxu0 %v4914
      %v5107 = vpop.f32.mrb[0].mxu0
      %v5108 = vadd.f32 0.0, %v5107
      %v5109 = vpop.f32.mrb[0].mxu0
      %5110 = vmatprep.mubr.f32.mxu0 0.0
      %5111 = vmatmul.mubr.f32.gmra.mrb[0].mxu0 %v4917
      %v5112 = vpop.f32.mrb[0].mxu0
      %v5113 = vadd.f32 0.0, %v5112
      %v5114 = vpop.f32.mrb[0].mxu0
      %5115 = vmatprep.mubr.f32.mxu0 0.0
      %5116 = vmatmul.mubr.f32.gmra.mrb[0].mxu0 %v4920
      %v5117 = vpop.f32.mrb[0].mxu0
      %v5118 = vadd.f32 0.0, %v5117
      %v5119 = vpop.f32.mrb[0].mxu0
      %5120 = vmatprep.mubr.f32.mxu0 0.0
      %5121 = vmatmul.mubr.f32.gmra.mrb[0].mxu0 %v4923
      %v5122 = vpop.f32.mrb[0].mxu0
      %v5123 = vadd.f32 0.0, %v5122
      %v5124 = vpop.f32.mrb[0].mxu0
      %5125 = vmatprep.mubr.f32.mxu0 0.0
      %5126 = vmatmul.mubr.f32.gmra.mrb[0].mxu0 %v4926
      %v5127 = vpop.f32.mrb[0].mxu0
      %v5128 = vadd.f32 0.0, %v5127
      %v5129 = vpop.f32.mrb[0].mxu0
      %5130 = vmatprep.mubr.f32.mxu0 0.0
      %5131 = vmatmul.mubr.f32.gmra.mrb[0].mxu0 %v4929
      %v5132 = vpop.f32.mrb[0].mxu0
      %v5133 = vadd.f32 0.0, %v5132
      %v5134 = vpop.f32.mrb[0].mxu0
      %5135 = vmatprep.mubr.f32.mxu0 0.0
      %5136 = vmatmul.mubr.f32.gmra.mrb[0].mxu0 %v4932
      %v5137 = vpop.f32.mrb[0].mxu0
      %v5138 = vadd.f32 0.0, %v5137
      %v5139 = vpop.f32.mrb[0].mxu0
      %5140 = vmatprep.mubr.f32.mxu0 0.0
      %5141 = vmatmul.mubr.f32.gmra.mrb[0].mxu0 %v4935
      %v5142 = vpop.f32.mrb[0].mxu0
      %v5143 = vadd.f32 0.0, %v5142
      %v5144 = vpop.f32.mrb[0].mxu0
      %5145 = vmatprep.mubr.f32.mxu0 0.0
      %5146 = vmatmul.mubr.f32.gmra.mrb[0].mxu0 %v4938
      %v5147 = vpop.f32.mrb[0].mxu0
      %v5148 = vadd.f32 0.0, %v5147
      %v5149 = vpop.f32.mrb[0].mxu0
      %5150 = vmatprep.mubr.f32.mxu0 0.0
      %5151 = vmatmul.mubr.f32.gmra.mrb[0].mxu0 %v4941
      %v5152 = vpop.f32.mrb[0].mxu0
      %v5153 = vadd.f32 0.0, %v5152
      %v5154 = vpop.f32.mrb[0].mxu0
      %5155 = vmatprep.mubr.f32.mxu0 0.0
      %5156 = vmatmul.mubr.f32.gmra.mrb[0].mxu0 %v4944
      %v5157 = vpop.f32.mrb[0].mxu0
      %v5158 = vadd.f32 0.0, %v5157
      %v5159 = vpop.f32.mrb[0].mxu0
      %5160 = vmatprep.mubr.f32.mxu0 0.0
      %5161 = vmatmul.mubr.f32.gmra.mrb[0].mxu0 %v4947
      %v5162 = vpop.f32.mrb[0].mxu0
      %v5163 = vadd.f32 0.0, %v5162
      %v5164 = vpop.f32.mrb[0].mxu0
      %5165 = vmatprep.mubr.f32.mxu0 0.0
      %5166 = vmatmul.mubr.f32.gmra.mrb[0].mxu0 %v4950
      %v5167 = vpop.f32.mrb[0].mxu0
      %v5168 = vadd.f32 0.0, %v5167
      %v5169 = vpop.f32.mrb[0].mxu0
      %5170 = vmatprep.mubr.f32.mxu0 0.0
      %5171 = vmatmul.mubr.f32.gmra.mrb[0].mxu0 %v4953
      %v5172 = vpop.f32.mrb[0].mxu0
      %v5173 = vadd.f32 0.0, %v5172
      %v5174 = vpop.f32.mrb[0].mxu0
      %5175 = vmatprep.mubr.f32.mxu0 0.0
      %5176 = vmatmul.mubr.f32.gmra.mrb[0].mxu0 %v4956
      %v5177 = vpop.f32.mrb[0].mxu0
      %v5178 = vadd.f32 0.0, %v5177
      %v5179 = vpop.f32.mrb[0].mxu0
      %5180 = vmatprep.mubr.f32.mxu0 0.0
      %5181 = vmatmul.mubr.f32.gmra.mrb[0].mxu0 %v4959
      %v5182 = vpop.f32.mrb[0].mxu0
      %v5183 = vadd.f32 0.0, %v5182
      %v5184 = vpop.f32.mrb[0].mxu0
      %5185 = vdwg.mxu0
      %v5186 = vadd.f32 %v4792, %v5028
      %v5187 = vadd.f32 %v4793, %v5033
      %v5188 = vadd.f32 %v4794, %v5038
      %v5189 = vadd.f32 %v4795, %v5043
      %v5190 = vadd.f32 %v4796, %v5048
      %v5191 = vadd.f32 %v4797, %v5053
      %v5192 = vadd.f32 %v4798, %v5058
      %v5193 = vadd.f32 %v4799, %v5063
      %v5194 = vadd.f32 %v4800, %v5068
      %v5195 = vadd.f32 %v4801, %v5073
      %v5196 = vadd.f32 %v4802, %v5078
      %v5197 = vadd.f32 %v4803, %v5083
      %v5198 = vadd.f32 %v4804, %v5088
      %v5199 = vadd.f32 %v4805, %v5093
      %v5200 = vadd.f32 %v4806, %v5098
      %v5201 = vadd.f32 %v4807, %v5103
      %v5202 = vadd.f32 %v4808, %v5108
      %v5203 = vadd.f32 %v4809, %v5113
      %v5204 = vadd.f32 %v4810, %v5118
      %v5205 = vadd.f32 %v4811, %v5123
      %v5206 = vadd.f32 %v4812, %v5128
      %v5207 = vadd.f32 %v4813, %v5133
      %v5208 = vadd.f32 %v4814, %v5138
      %v5209 = vadd.f32 %v4815, %v5143
      %v5210 = vadd.f32 %v4816, %v5148
      %v5211 = vadd.f32 %v4817, %v5153
      %v5212 = vadd.f32 %v4818, %v5158
      %v5213 = vadd.f32 %v4819, %v5163
      %v5214 = vadd.f32 %v4820, %v5168
      %v5215 = vadd.f32 %v4821, %v5173
      %v5216 = vadd.f32 %v4822, %v5178
      %v5217 = vadd.f32 %v4823, %v5183
      %v5218 = vld [vmem:[%s4429 + $0x2] sm:$0xff]
      %v5219 = vld [vmem:[%s4429 + $0xa] sm:$0xff]
      %v5220 = vld [vmem:[%s4429 + $0x1a] sm:$0xff]
      %v5221 = vld [vmem:[%s4429 + $0x22] sm:$0xff]
      %v5222 = vld [vmem:[%s4429 + $0x32] sm:$0xff]
      %v5223 = vld [vmem:[%s4429 + $0x3a] sm:$0xff]
      %v5224 = vld [vmem:[%s4429 + $0x4a] sm:$0xff]
      %v5225 = vld [vmem:[%s4429 + $0x52] sm:$0xff]
      %v5226 = vld [vmem:[%s4429 + $0x62] sm:$0xff]
      %v5227 = vld [vmem:[%s4429 + $0x6a] sm:$0xff]
      %v5228 = vld [vmem:[%s4429 + $0x7a] sm:$0xff]
      %v5229 = vld [vmem:[%s4429 + $0x82] sm:$0xff]
      %v5230 = vld [vmem:[%s4429 + $0x92] sm:$0xff]
      %v5231 = vld [vmem:[%s4429 + $0x9a] sm:$0xff]
      %v5232 = vld [vmem:[%s4429 + $0xaa] sm:$0xff]
      %v5233 = vld [vmem:[%s4429 + $0xb2] sm:$0xff]
      %v5234 = vld [vmem:[%s4429 + $0xc2] sm:$0xff]
      %v5235 = vld [vmem:[%s4429 + $0xca] sm:$0xff]
      %v5236 = vld [vmem:[%s4429 + $0xda] sm:$0xff]
      %v5237 = vld [vmem:[%s4429 + $0xe2] sm:$0xff]
      %v5238 = vld [vmem:[%s4429 + $0xf2] sm:$0xff]
      %v5239 = vld [vmem:[%s4429 + $0xfa] sm:$0xff]
      %v5240 = vld [vmem:[%s4429 + $0x10a] sm:$0xff]
      %v5241 = vld [vmem:[%s4429 + $0x112] sm:$0xff]
      %v5242 = vld [vmem:[%s4429 + $0x122] sm:$0xff]
      %v5243 = vld [vmem:[%s4429 + $0x12a] sm:$0xff]
      %v5244 = vld [vmem:[%s4429 + $0x13a] sm:$0xff]
      %v5245 = vld [vmem:[%s4429 + $0x142] sm:$0xff]
      %v5246 = vld [vmem:[%s4429 + $0x152] sm:$0xff]
      %v5247 = vld [vmem:[%s4429 + $0x15a] sm:$0xff]
      %v5248 = vld [vmem:[%s4429 + $0x16a] sm:$0xff]
      %v5249 = vld [vmem:[%s4429 + $0x172] sm:$0xff]
      %s5250 = scalar_lea.vmem %s3, 512
      %v5251 = vld [vmem:[%s5250] sm:$0xff]
      %v5252 = vld [vmem:[%s5250 + $0x8] sm:$0xff]
      %v5253 = vld [vmem:[%s5250 + $0x10] sm:$0xff]
      %v5254 = vld [vmem:[%s5250 + $0x18] sm:$0xff]
      %v5255 = vld [vmem:[%s5250 + $0x20] sm:$0xff]
      %v5256 = vld [vmem:[%s5250 + $0x28] sm:$0xff]
      %v5257 = vld [vmem:[%s5250 + $0x30] sm:$0xff]
      %v5258 = vld [vmem:[%s5250 + $0x38] sm:$0xff]
      %v5260 = vsel %vm1588, %v5218, 0
      %v5263 = vsel %vm1588, %v5219, 0
      %v5266 = vsel %vm1588, %v5220, 0
      %v5269 = vsel %vm1588, %v5221, 0
      %v5272 = vsel %vm1588, %v5222, 0
      %v5275 = vsel %vm1588, %v5223, 0
      %v5278 = vsel %vm1588, %v5224, 0
      %v5281 = vsel %vm1588, %v5225, 0
      %v5284 = vsel %vm1588, %v5226, 0
      %v5287 = vsel %vm1588, %v5227, 0
      %v5290 = vsel %vm1588, %v5228, 0
      %v5293 = vsel %vm1588, %v5229, 0
      %v5296 = vsel %vm1588, %v5230, 0
      %v5299 = vsel %vm1588, %v5231, 0
      %v5302 = vsel %vm1588, %v5232, 0
      %v5305 = vsel %vm1588, %v5233, 0
      %v5308 = vsel %vm1588, %v5234, 0
      %v5311 = vsel %vm1588, %v5235, 0
      %v5314 = vsel %vm1588, %v5236, 0
      %v5317 = vsel %vm1588, %v5237, 0
      %v5320 = vsel %vm1588, %v5238, 0
      %v5323 = vsel %vm1588, %v5239, 0
      %v5326 = vsel %vm1588, %v5240, 0
      %v5329 = vsel %vm1588, %v5241, 0
      %v5332 = vsel %vm1588, %v5242, 0
      %v5335 = vsel %vm1588, %v5243, 0
      %v5338 = vsel %vm1588, %v5244, 0
      %v5341 = vsel %vm1588, %v5245, 0
      %v5344 = vsel %vm1588, %v5246, 0
      %v5347 = vsel %vm1588, %v5247, 0
      %v5350 = vsel %vm1588, %v5248, 0
      %v5353 = vsel %vm1588, %v5249, 0
      %5355 = vmatprep.subr.mxu0 0.0
      %5356 = vmatpush1.msra.mxu0 %v5251
      %5357 = vmatprep.subr.mxu0 0.0
      %5358 = vmatpush1.msra.mxu0 %v5252
      %5359 = vmatprep.subr.mxu0 0.0
      %5360 = vmatpush1.msra.mxu0 %v5253
      %5361 = vmatprep.subr.mxu0 0.0
      %5362 = vmatpush1.msra.mxu0 %v5254
      %5363 = vmatprep.subr.mxu0 0.0
      %5364 = vmatpush1.msra.mxu0 %v5255
      %5365 = vmatprep.subr.mxu0 0.0
      %5366 = vmatpush1.msra.mxu0 %v5256
      %5367 = vmatprep.subr.mxu0 0.0
      %5368 = vmatpush1.msra.mxu0 %v5257
      %5369 = vmatprep.subr.mxu0 0.0
      %5370 = vmatpush1.msra.mxu0 %v5258
      %5371 = vmatprep.subr.mxu0 0.0
      %5372 = vmatpush1.msra.mxu0 0.0
      %5373 = vmatprep.subr.mxu0 0.0
      %5374 = vmatpush1.msra.mxu0 0.0
      %5375 = vmatprep.subr.mxu0 0.0
      %5376 = vmatpush1.msra.mxu0 0.0
      %5377 = vmatprep.subr.mxu0 0.0
      %5378 = vmatpush1.msra.mxu0 0.0
      %5379 = vmatprep.subr.mxu0 0.0
      %5380 = vmatpush1.msra.mxu0 0.0
      %5381 = vmatprep.subr.mxu0 0.0
      %5382 = vmatpush1.msra.mxu0 0.0
      %5383 = vmatprep.subr.mxu0 0.0
      %5384 = vmatpush1.msra.mxu0 0.0
      %5385 = vmatprep.subr.mxu0 0.0
      %5386 = vmatpush1.msra.mxu0 0.0
      %5387 = vmatprep.subr.mxu0 0.0
      %5388 = vmatpush1.msra.mxu0 0.0
      %5389 = vmatprep.subr.mxu0 0.0
      %5390 = vmatpush1.msra.mxu0 0.0
      %5391 = vmatprep.subr.mxu0 0.0
      %5392 = vmatpush1.msra.mxu0 0.0
      %5393 = vmatprep.subr.mxu0 0.0
      %5394 = vmatpush1.msra.mxu0 0.0
      %5395 = vmatprep.subr.mxu0 0.0
      %5396 = vmatpush1.msra.mxu0 0.0
      %5397 = vmatprep.subr.mxu0 0.0
      %5398 = vmatpush1.msra.mxu0 0.0
      %5399 = vmatprep.subr.mxu0 0.0
      %5400 = vmatpush1.msra.mxu0 0.0
      %5401 = vmatprep.subr.mxu0 0.0
      %5402 = vmatpush1.msra.mxu0 0.0
      %5403 = vmatprep.subr.mxu0 0.0
      %5404 = vmatpush1.msra.mxu0 0.0
      %5405 = vmatprep.subr.mxu0 0.0
      %5406 = vmatpush1.msra.mxu0 0.0
      %5407 = vmatprep.subr.mxu0 0.0
      %5408 = vmatpush1.msra.mxu0 0.0
      %5409 = vmatprep.subr.mxu0 0.0
      %5410 = vmatpush1.msra.mxu0 0.0
      %5411 = vmatprep.subr.mxu0 0.0
      %5412 = vmatpush1.msra.mxu0 0.0
      %5413 = vmatprep.subr.mxu0 0.0
      %5414 = vmatpush1.msra.mxu0 0.0
      %5415 = vmatprep.subr.mxu0 0.0
      %5416 = vmatpush1.msra.mxu0 0.0
      %5417 = vmatprep.subr.mxu0 0.0
      %5418 = vmatpush1.msra.mxu0 0.0
      %5419 = vmatprep.mubr.f32.mxu0 0.0
      %5420 = vmatmul.mubr.f32.gmra.mrb[0].mxu0 %v5260
      %v5421 = vpop.f32.mrb[0].mxu0
      %v5422 = vadd.f32 0.0, %v5421
      %v5423 = vpop.f32.mrb[0].mxu0
      %5424 = vmatprep.mubr.f32.mxu0 0.0
      %5425 = vmatmul.mubr.f32.gmra.mrb[0].mxu0 %v5263
      %v5426 = vpop.f32.mrb[0].mxu0
      %v5427 = vadd.f32 0.0, %v5426
      %v5428 = vpop.f32.mrb[0].mxu0
      %5429 = vmatprep.mubr.f32.mxu0 0.0
      %5430 = vmatmul.mubr.f32.gmra.mrb[0].mxu0 %v5266
      %v5431 = vpop.f32.mrb[0].mxu0
      %v5432 = vadd.f32 0.0, %v5431
      %v5433 = vpop.f32.mrb[0].mxu0
      %5434 = vmatprep.mubr.f32.mxu0 0.0
      %5435 = vmatmul.mubr.f32.gmra.mrb[0].mxu0 %v5269
      %v5436 = vpop.f32.mrb[0].mxu0
      %v5437 = vadd.f32 0.0, %v5436
      %v5438 = vpop.f32.mrb[0].mxu0
      %5439 = vmatprep.mubr.f32.mxu0 0.0
      %5440 = vmatmul.mubr.f32.gmra.mrb[0].mxu0 %v5272
      %v5441 = vpop.f32.mrb[0].mxu0
      %v5442 = vadd.f32 0.0, %v5441
      %v5443 = vpop.f32.mrb[0].mxu0
      %5444 = vmatprep.mubr.f32.mxu0 0.0
      %5445 = vmatmul.mubr.f32.gmra.mrb[0].mxu0 %v5275
      %v5446 = vpop.f32.mrb[0].mxu0
      %v5447 = vadd.f32 0.0, %v5446
      %v5448 = vpop.f32.mrb[0].mxu0
      %5449 = vmatprep.mubr.f32.mxu0 0.0
      %5450 = vmatmul.mubr.f32.gmra.mrb[0].mxu0 %v5278
      %v5451 = vpop.f32.mrb[0].mxu0
      %v5452 = vadd.f32 0.0, %v5451
      %v5453 = vpop.f32.mrb[0].mxu0
      %5454 = vmatprep.mubr.f32.mxu0 0.0
      %5455 = vmatmul.mubr.f32.gmra.mrb[0].mxu0 %v5281
      %v5456 = vpop.f32.mrb[0].mxu0
      %v5457 = vadd.f32 0.0, %v5456
      %v5458 = vpop.f32.mrb[0].mxu0
      %5459 = vmatprep.mubr.f32.mxu0 0.0
      %5460 = vmatmul.mubr.f32.gmra.mrb[0].mxu0 %v5284
      %v5461 = vpop.f32.mrb[0].mxu0
      %v5462 = vadd.f32 0.0, %v5461
      %v5463 = vpop.f32.mrb[0].mxu0
      %5464 = vmatprep.mubr.f32.mxu0 0.0
      %5465 = vmatmul.mubr.f32.gmra.mrb[0].mxu0 %v5287
      %v5466 = vpop.f32.mrb[0].mxu0
      %v5467 = vadd.f32 0.0, %v5466
      %v5468 = vpop.f32.mrb[0].mxu0
      %5469 = vmatprep.mubr.f32.mxu0 0.0
      %5470 = vmatmul.mubr.f32.gmra.mrb[0].mxu0 %v5290
      %v5471 = vpop.f32.mrb[0].mxu0
      %v5472 = vadd.f32 0.0, %v5471
      %v5473 = vpop.f32.mrb[0].mxu0
      %5474 = vmatprep.mubr.f32.mxu0 0.0
      %5475 = vmatmul.mubr.f32.gmra.mrb[0].mxu0 %v5293
      %v5476 = vpop.f32.mrb[0].mxu0
      %v5477 = vadd.f32 0.0, %v5476
      %v5478 = vpop.f32.mrb[0].mxu0
      %5479 = vmatprep.mubr.f32.mxu0 0.0
      %5480 = vmatmul.mubr.f32.gmra.mrb[0].mxu0 %v5296
      %v5481 = vpop.f32.mrb[0].mxu0
      %v5482 = vadd.f32 0.0, %v5481
      %v5483 = vpop.f32.mrb[0].mxu0
      %5484 = vmatprep.mubr.f32.mxu0 0.0
      %5485 = vmatmul.mubr.f32.gmra.mrb[0].mxu0 %v5299
      %v5486 = vpop.f32.mrb[0].mxu0
      %v5487 = vadd.f32 0.0, %v5486
      %v5488 = vpop.f32.mrb[0].mxu0
      %5489 = vmatprep.mubr.f32.mxu0 0.0
      %5490 = vmatmul.mubr.f32.gmra.mrb[0].mxu0 %v5302
      %v5491 = vpop.f32.mrb[0].mxu0
      %v5492 = vadd.f32 0.0, %v5491
      %v5493 = vpop.f32.mrb[0].mxu0
      %5494 = vmatprep.mubr.f32.mxu0 0.0
      %5495 = vmatmul.mubr.f32.gmra.mrb[0].mxu0 %v5305
      %v5496 = vpop.f32.mrb[0].mxu0
      %v5497 = vadd.f32 0.0, %v5496
      %v5498 = vpop.f32.mrb[0].mxu0
      %5499 = vmatprep.mubr.f32.mxu0 0.0
      %5500 = vmatmul.mubr.f32.gmra.mrb[0].mxu0 %v5308
      %v5501 = vpop.f32.mrb[0].mxu0
      %v5502 = vadd.f32 0.0, %v5501
      %v5503 = vpop.f32.mrb[0].mxu0
      %5504 = vmatprep.mubr.f32.mxu0 0.0
      %5505 = vmatmul.mubr.f32.gmra.mrb[0].mxu0 %v5311
      %v5506 = vpop.f32.mrb[0].mxu0
      %v5507 = vadd.f32 0.0, %v5506
      %v5508 = vpop.f32.mrb[0].mxu0
      %5509 = vmatprep.mubr.f32.mxu0 0.0
      %5510 = vmatmul.mubr.f32.gmra.mrb[0].mxu0 %v5314
      %v5511 = vpop.f32.mrb[0].mxu0
      %v5512 = vadd.f32 0.0, %v5511
      %v5513 = vpop.f32.mrb[0].mxu0
      %5514 = vmatprep.mubr.f32.mxu0 0.0
      %5515 = vmatmul.mubr.f32.gmra.mrb[0].mxu0 %v5317
      %v5516 = vpop.f32.mrb[0].mxu0
      %v5517 = vadd.f32 0.0, %v5516
      %v5518 = vpop.f32.mrb[0].mxu0
      %5519 = vmatprep.mubr.f32.mxu0 0.0
      %5520 = vmatmul.mubr.f32.gmra.mrb[0].mxu0 %v5320
      %v5521 = vpop.f32.mrb[0].mxu0
      %v5522 = vadd.f32 0.0, %v5521
      %v5523 = vpop.f32.mrb[0].mxu0
      %5524 = vmatprep.mubr.f32.mxu0 0.0
      %5525 = vmatmul.mubr.f32.gmra.mrb[0].mxu0 %v5323
      %v5526 = vpop.f32.mrb[0].mxu0
      %v5527 = vadd.f32 0.0, %v5526
      %v5528 = vpop.f32.mrb[0].mxu0
      %5529 = vmatprep.mubr.f32.mxu0 0.0
      %5530 = vmatmul.mubr.f32.gmra.mrb[0].mxu0 %v5326
      %v5531 = vpop.f32.mrb[0].mxu0
      %v5532 = vadd.f32 0.0, %v5531
      %v5533 = vpop.f32.mrb[0].mxu0
      %5534 = vmatprep.mubr.f32.mxu0 0.0
      %5535 = vmatmul.mubr.f32.gmra.mrb[0].mxu0 %v5329
      %v5536 = vpop.f32.mrb[0].mxu0
      %v5537 = vadd.f32 0.0, %v5536
      %v5538 = vpop.f32.mrb[0].mxu0
      %5539 = vmatprep.mubr.f32.mxu0 0.0
      %5540 = vmatmul.mubr.f32.gmra.mrb[0].mxu0 %v5332
      %v5541 = vpop.f32.mrb[0].mxu0
      %v5542 = vadd.f32 0.0, %v5541
      %v5543 = vpop.f32.mrb[0].mxu0
      %5544 = vmatprep.mubr.f32.mxu0 0.0
      %5545 = vmatmul.mubr.f32.gmra.mrb[0].mxu0 %v5335
      %v5546 = vpop.f32.mrb[0].mxu0
      %v5547 = vadd.f32 0.0, %v5546
      %v5548 = vpop.f32.mrb[0].mxu0
      %5549 = vmatprep.mubr.f32.mxu0 0.0
      %5550 = vmatmul.mubr.f32.gmra.mrb[0].mxu0 %v5338
      %v5551 = vpop.f32.mrb[0].mxu0
      %v5552 = vadd.f32 0.0, %v5551
      %v5553 = vpop.f32.mrb[0].mxu0
      %5554 = vmatprep.mubr.f32.mxu0 0.0
      %5555 = vmatmul.mubr.f32.gmra.mrb[0].mxu0 %v5341
      %v5556 = vpop.f32.mrb[0].mxu0
      %v5557 = vadd.f32 0.0, %v5556
      %v5558 = vpop.f32.mrb[0].mxu0
      %5559 = vmatprep.mubr.f32.mxu0 0.0
      %5560 = vmatmul.mubr.f32.gmra.mrb[0].mxu0 %v5344
      %v5561 = vpop.f32.mrb[0].mxu0
      %v5562 = vadd.f32 0.0, %v5561
      %v5563 = vpop.f32.mrb[0].mxu0
      %5564 = vmatprep.mubr.f32.mxu0 0.0
      %5565 = vmatmul.mubr.f32.gmra.mrb[0].mxu0 %v5347
      %v5566 = vpop.f32.mrb[0].mxu0
      %v5567 = vadd.f32 0.0, %v5566
      %v5568 = vpop.f32.mrb[0].mxu0
      %5569 = vmatprep.mubr.f32.mxu0 0.0
      %5570 = vmatmul.mubr.f32.gmra.mrb[0].mxu0 %v5350
      %v5571 = vpop.f32.mrb[0].mxu0
      %v5572 = vadd.f32 0.0, %v5571
      %v5573 = vpop.f32.mrb[0].mxu0
      %5574 = vmatprep.mubr.f32.mxu0 0.0
      %5575 = vmatmul.mubr.f32.gmra.mrb[0].mxu0 %v5353
      %v5576 = vpop.f32.mrb[0].mxu0
      %v5577 = vadd.f32 0.0, %v5576
      %v5578 = vpop.f32.mrb[0].mxu0
      %5579 = vdwg.mxu0
      %v5580 = vadd.f32 %v5186, %v5422
      %v5581 = vadd.f32 %v5187, %v5427
      %v5582 = vadd.f32 %v5188, %v5432
      %v5583 = vadd.f32 %v5189, %v5437
      %v5584 = vadd.f32 %v5190, %v5442
      %v5585 = vadd.f32 %v5191, %v5447
      %v5586 = vadd.f32 %v5192, %v5452
      %v5587 = vadd.f32 %v5193, %v5457
      %v5588 = vadd.f32 %v5194, %v5462
      %v5589 = vadd.f32 %v5195, %v5467
      %v5590 = vadd.f32 %v5196, %v5472
      %v5591 = vadd.f32 %v5197, %v5477
      %v5592 = vadd.f32 %v5198, %v5482
      %v5593 = vadd.f32 %v5199, %v5487
      %v5594 = vadd.f32 %v5200, %v5492
      %v5595 = vadd.f32 %v5201, %v5497
      %v5596 = vadd.f32 %v5202, %v5502
      %v5597 = vadd.f32 %v5203, %v5507
      %v5598 = vadd.f32 %v5204, %v5512
      %v5599 = vadd.f32 %v5205, %v5517
      %v5600 = vadd.f32 %v5206, %v5522
      %v5601 = vadd.f32 %v5207, %v5527
      %v5602 = vadd.f32 %v5208, %v5532
      %v5603 = vadd.f32 %v5209, %v5537
      %v5604 = vadd.f32 %v5210, %v5542
      %v5605 = vadd.f32 %v5211, %v5547
      %v5606 = vadd.f32 %v5212, %v5552
      %v5607 = vadd.f32 %v5213, %v5557
      %v5608 = vadd.f32 %v5214, %v5562
      %v5609 = vadd.f32 %v5215, %v5567
      %v5610 = vadd.f32 %v5216, %v5572
      %v5611 = vadd.f32 %v5217, %v5577
      %v5612 = vld [vmem:[%s4] sm:$0x1]
      %v5614 = vlaneseq
      %v5615 = vshrl.u32 %v5614, 7
      %v5616 = vsub.s32 0, %v5615
      %v5617 = vrot.slane %v5612, %v5616
      %v5619 = vadd.f32 %v5580, %v5617
      %v5620 = vadd.f32 %v5581, %v5617
      %v5621 = vadd.f32 %v5582, %v5617
      %v5622 = vadd.f32 %v5583, %v5617
      %v5623 = vadd.f32 %v5584, %v5617
      %v5624 = vadd.f32 %v5585, %v5617
      %v5625 = vadd.f32 %v5586, %v5617
      %v5626 = vadd.f32 %v5587, %v5617
      %v5627 = vadd.f32 %v5588, %v5617
      %v5628 = vadd.f32 %v5589, %v5617
      %v5629 = vadd.f32 %v5590, %v5617
      %v5630 = vadd.f32 %v5591, %v5617
      %v5631 = vadd.f32 %v5592, %v5617
      %v5632 = vadd.f32 %v5593, %v5617
      %v5633 = vadd.f32 %v5594, %v5617
      %v5634 = vadd.f32 %v5595, %v5617
      %v5635 = vadd.f32 %v5596, %v5617
      %v5636 = vadd.f32 %v5597, %v5617
      %v5637 = vadd.f32 %v5598, %v5617
      %v5638 = vadd.f32 %v5599, %v5617
      %v5639 = vadd.f32 %v5600, %v5617
      %v5640 = vadd.f32 %v5601, %v5617
      %v5641 = vadd.f32 %v5602, %v5617
      %v5642 = vadd.f32 %v5603, %v5617
      %v5643 = vadd.f32 %v5604, %v5617
      %v5644 = vadd.f32 %v5605, %v5617
      %v5645 = vadd.f32 %v5606, %v5617
      %v5646 = vadd.f32 %v5607, %v5617
      %v5647 = vadd.f32 %v5608, %v5617
      %v5648 = vadd.f32 %v5609, %v5617
      %v5649 = vadd.f32 %v5610, %v5617
      %v5650 = vadd.f32 %v5611, %v5617
      %v5651 = vmax.f32 %v5619, 0.0
      %v5652 = vmax.f32 %v5620, 0.0
      %v5653 = vmax.f32 %v5621, 0.0
      %v5654 = vmax.f32 %v5622, 0.0
      %v5655 = vmax.f32 %v5623, 0.0
      %v5656 = vmax.f32 %v5624, 0.0
      %v5657 = vmax.f32 %v5625, 0.0
      %v5658 = vmax.f32 %v5626, 0.0
      %v5659 = vmax.f32 %v5627, 0.0
      %v5660 = vmax.f32 %v5628, 0.0
      %v5661 = vmax.f32 %v5629, 0.0
      %v5662 = vmax.f32 %v5630, 0.0
      %v5663 = vmax.f32 %v5631, 0.0
      %v5664 = vmax.f32 %v5632, 0.0
      %v5665 = vmax.f32 %v5633, 0.0
      %v5666 = vmax.f32 %v5634, 0.0
      %v5667 = vmax.f32 %v5635, 0.0
      %v5668 = vmax.f32 %v5636, 0.0
      %v5669 = vmax.f32 %v5637, 0.0
      %v5670 = vmax.f32 %v5638, 0.0
      %v5671 = vmax.f32 %v5639, 0.0
      %v5672 = vmax.f32 %v5640, 0.0
      %v5673 = vmax.f32 %v5641, 0.0
      %v5674 = vmax.f32 %v5642, 0.0
      %v5675 = vmax.f32 %v5643, 0.0
      %v5676 = vmax.f32 %v5644, 0.0
      %v5677 = vmax.f32 %v5645, 0.0
      %v5678 = vmax.f32 %v5646, 0.0
      %v5679 = vmax.f32 %v5647, 0.0
      %v5680 = vmax.f32 %v5648, 0.0
      %v5681 = vmax.f32 %v5649, 0.0
      %v5682 = vmax.f32 %v5650, 0.0
      %s5683 = scalar_lea.vmem [#allocation5], 24
      %5684 = vst.msk [vmem:[%s5683 + $0x1] sm:$0xff] %vm1588, %v5651
      %5685 = vst.msk [vmem:[%s5683 + $0x9] sm:$0xff] %vm1588, %v5652
      %5686 = vst.msk [vmem:[%s5683 + $0x19] sm:$0xff] %vm1588, %v5653
      %5687 = vst.msk [vmem:[%s5683 + $0x21] sm:$0xff] %vm1588, %v5654
      %5688 = vst.msk [vmem:[%s5683 + $0x31] sm:$0xff] %vm1588, %v5655
      %5689 = vst.msk [vmem:[%s5683 + $0x39] sm:$0xff] %vm1588, %v5656
      %5690 = vst.msk [vmem:[%s5683 + $0x49] sm:$0xff] %vm1588, %v5657
      %5691 = vst.msk [vmem:[%s5683 + $0x51] sm:$0xff] %vm1588, %v5658
      %5692 = vst.msk [vmem:[%s5683 + $0x61] sm:$0xff] %vm1588, %v5659
      %5693 = vst.msk [vmem:[%s5683 + $0x69] sm:$0xff] %vm1588, %v5660
      %5694 = vst.msk [vmem:[%s5683 + $0x79] sm:$0xff] %vm1588, %v5661
      %5695 = vst.msk [vmem:[%s5683 + $0x81] sm:$0xff] %vm1588, %v5662
      %5696 = vst.msk [vmem:[%s5683 + $0x91] sm:$0xff] %vm1588, %v5663
      %5697 = vst.msk [vmem:[%s5683 + $0x99] sm:$0xff] %vm1588, %v5664
      %5698 = vst.msk [vmem:[%s5683 + $0xa9] sm:$0xff] %vm1588, %v5665
      %5699 = vst.msk [vmem:[%s5683 + $0xb1] sm:$0xff] %vm1588, %v5666
      %5700 = vst.msk [vmem:[%s5683 + $0xc1] sm:$0xff] %vm1588, %v5667
      %5701 = vst.msk [vmem:[%s5683 + $0xc9] sm:$0xff] %vm1588, %v5668
      %5702 = vst.msk [vmem:[%s5683 + $0xd9] sm:$0xff] %vm1588, %v5669
      %5703 = vst.msk [vmem:[%s5683 + $0xe1] sm:$0xff] %vm1588, %v5670
      %5704 = vst.msk [vmem:[%s5683 + $0xf1] sm:$0xff] %vm1588, %v5671
      %5705 = vst.msk [vmem:[%s5683 + $0xf9] sm:$0xff] %vm1588, %v5672
      %5706 = vst.msk [vmem:[%s5683 + $0x109] sm:$0xff] %vm1588, %v5673
      %5707 = vst.msk [vmem:[%s5683 + $0x111] sm:$0xff] %vm1588, %v5674
      %5708 = vst.msk [vmem:[%s5683 + $0x121] sm:$0xff] %vm1588, %v5675
      %5709 = vst.msk [vmem:[%s5683 + $0x129] sm:$0xff] %vm1588, %v5676
      %5710 = vst.msk [vmem:[%s5683 + $0x139] sm:$0xff] %vm1588, %v5677
      %5711 = vst.msk [vmem:[%s5683 + $0x141] sm:$0xff] %vm1588, %v5678
      %5712 = vst.msk [vmem:[%s5683 + $0x151] sm:$0xff] %vm1588, %v5679
      %5713 = vst.msk [vmem:[%s5683 + $0x159] sm:$0xff] %vm1588, %v5680
      %5714 = vst.msk [vmem:[%s5683 + $0x169] sm:$0xff] %vm1588, %v5681
      %5715 = vst.msk [vmem:[%s5683 + $0x171] sm:$0xff] %vm1588, %v5682
      %5716 = vst.msk [vmem:[#allocation5 + $0x1] sm:$0xff] %vm1588, %v5653
      %5717 = vst.msk [vmem:[#allocation5 + $0x9] sm:$0xff] %vm1588, %v5654
      %s5718 = scalar_lea.vmem [#allocation5], 408
      %5719 = vst.msk [vmem:[%s5718 + $0x1] sm:$0xff] %vm1588, %v5679
      %5720 = vst.msk [vmem:[%s5718 + $0x9] sm:$0xff] %vm1588, %v5680
      %v5721 = vld [vmem:[#allocation5 + $0x2] sm:$0x1]
      %v5722 = vld [vmem:[#allocation5 + $0x1a] sm:$0x1]
      %v5723 = vld [vmem:[#allocation5 + $0x32] sm:$0x1]
      %v5724 = vld [vmem:[#allocation5 + $0x4a] sm:$0x1]
      %v5725 = vld [vmem:[#allocation5 + $0x62] sm:$0x1]
      %v5726 = vld [vmem:[#allocation5 + $0x7a] sm:$0x1]
      %v5727 = vld [vmem:[#allocation5 + $0x92] sm:$0x1]
      %v5728 = vld [vmem:[#allocation5 + $0xaa] sm:$0x1]
      %v5729 = vld [vmem:[#allocation5 + $0xc2] sm:$0x1]
      %v5730 = vld [vmem:[#allocation5 + $0xda] sm:$0x1]
      %v5731 = vld [vmem:[#allocation5 + $0xf2] sm:$0x1]
      %v5732 = vld [vmem:[#allocation5 + $0x10a] sm:$0x1]
      %v5733 = vld [vmem:[#allocation5 + $0x122] sm:$0x1]
      %v5734 = vld [vmem:[#allocation5 + $0x13a] sm:$0x1]
      %v5735 = vld [vmem:[#allocation5 + $0x152] sm:$0x1]
      %v5736 = vld [vmem:[#allocation5 + $0x16a] sm:$0x1]
      %v5737 = vld [vmem:[#allocation5 + $0x182] sm:$0x1]
      %v5738 = vld [vmem:[#allocation5 + $0x19a] sm:$0x1]
      %5739 = vst.msk [vmem:[#allocation5] sm:$0x1] %vm1642, %v5721
      %5740 = vst.msk [vmem:[#allocation5 + $0x18] sm:$0x1] %vm1642, %v5722
      %5741 = vst.msk [vmem:[#allocation5 + $0x30] sm:$0x1] %vm1642, %v5723
      %5742 = vst.msk [vmem:[#allocation5 + $0x48] sm:$0x1] %vm1642, %v5724
      %5743 = vst.msk [vmem:[#allocation5 + $0x60] sm:$0x1] %vm1642, %v5725
      %5744 = vst.msk [vmem:[#allocation5 + $0x78] sm:$0x1] %vm1642, %v5726
      %5745 = vst.msk [vmem:[#allocation5 + $0x90] sm:$0x1] %vm1642, %v5727
      %5746 = vst.msk [vmem:[#allocation5 + $0xa8] sm:$0x1] %vm1642, %v5728
      %5747 = vst.msk [vmem:[#allocation5 + $0xc0] sm:$0x1] %vm1642, %v5729
      %5748 = vst.msk [vmem:[#allocation5 + $0xd8] sm:$0x1] %vm1642, %v5730
      %5749 = vst.msk [vmem:[#allocation5 + $0xf0] sm:$0x1] %vm1642, %v5731
      %5750 = vst.msk [vmem:[#allocation5 + $0x108] sm:$0x1] %vm1642, %v5732
      %5751 = vst.msk [vmem:[#allocation5 + $0x120] sm:$0x1] %vm1642, %v5733
      %5752 = vst.msk [vmem:[#allocation5 + $0x138] sm:$0x1] %vm1642, %v5734
      %5753 = vst.msk [vmem:[#allocation5 + $0x150] sm:$0x1] %vm1642, %v5735
      %5754 = vst.msk [vmem:[#allocation5 + $0x168] sm:$0x1] %vm1642, %v5736
      %5755 = vst.msk [vmem:[#allocation5 + $0x180] sm:$0x1] %vm1642, %v5737
      %5756 = vst.msk [vmem:[#allocation5 + $0x198] sm:$0x1] %vm1642, %v5738
      %v5757 = vld [vmem:[#allocation5 + $0xf] sm:$0x1]
      %v5758 = vld [vmem:[#allocation5 + $0x27] sm:$0x1]
      %v5759 = vld [vmem:[#allocation5 + $0x3f] sm:$0x1]
      %v5760 = vld [vmem:[#allocation5 + $0x57] sm:$0x1]
      %v5761 = vld [vmem:[#allocation5 + $0x6f] sm:$0x1]
      %v5762 = vld [vmem:[#allocation5 + $0x87] sm:$0x1]
      %v5763 = vld [vmem:[#allocation5 + $0x9f] sm:$0x1]
      %v5764 = vld [vmem:[#allocation5 + $0xb7] sm:$0x1]
      %v5765 = vld [vmem:[#allocation5 + $0xcf] sm:$0x1]
      %v5766 = vld [vmem:[#allocation5 + $0xe7] sm:$0x1]
      %v5767 = vld [vmem:[#allocation5 + $0xff] sm:$0x1]
      %v5768 = vld [vmem:[#allocation5 + $0x117] sm:$0x1]
      %v5769 = vld [vmem:[#allocation5 + $0x12f] sm:$0x1]
      %v5770 = vld [vmem:[#allocation5 + $0x147] sm:$0x1]
      %v5771 = vld [vmem:[#allocation5 + $0x15f] sm:$0x1]
      %v5772 = vld [vmem:[#allocation5 + $0x177] sm:$0x1]
      %v5773 = vld [vmem:[#allocation5 + $0x18f] sm:$0x1]
      %v5774 = vld [vmem:[#allocation5 + $0x1a7] sm:$0x1]
      %5775 = vst.msk [vmem:[#allocation5 + $0x11] sm:$0x1] %vm1642, %v5757
      %5776 = vst.msk [vmem:[#allocation5 + $0x29] sm:$0x1] %vm1642, %v5758
      %5777 = vst.msk [vmem:[#allocation5 + $0x41] sm:$0x1] %vm1642, %v5759
      %5778 = vst.msk [vmem:[#allocation5 + $0x59] sm:$0x1] %vm1642, %v5760
      %5779 = vst.msk [vmem:[#allocation5 + $0x71] sm:$0x1] %vm1642, %v5761
      %5780 = vst.msk [vmem:[#allocation5 + $0x89] sm:$0x1] %vm1642, %v5762
      %5781 = vst.msk [vmem:[#allocation5 + $0xa1] sm:$0x1] %vm1642, %v5763
      %5782 = vst.msk [vmem:[#allocation5 + $0xb9] sm:$0x1] %vm1642, %v5764
      %5783 = vst.msk [vmem:[#allocation5 + $0xd1] sm:$0x1] %vm1642, %v5765
      %5784 = vst.msk [vmem:[#allocation5 + $0xe9] sm:$0x1] %vm1642, %v5766
      %5785 = vst.msk [vmem:[#allocation5 + $0x101] sm:$0x1] %vm1642, %v5767
      %5786 = vst.msk [vmem:[#allocation5 + $0x119] sm:$0x1] %vm1642, %v5768
      %5787 = vst.msk [vmem:[#allocation5 + $0x131] sm:$0x1] %vm1642, %v5769
      %5788 = vst.msk [vmem:[#allocation5 + $0x149] sm:$0x1] %vm1642, %v5770
      %5789 = vst.msk [vmem:[#allocation5 + $0x161] sm:$0x1] %vm1642, %v5771
      %5790 = vst.msk [vmem:[#allocation5 + $0x179] sm:$0x1] %vm1642, %v5772
      %5791 = vst.msk [vmem:[#allocation5 + $0x191] sm:$0x1] %vm1642, %v5773
      %5792 = vst.msk [vmem:[#allocation5 + $0x1a9] sm:$0x1] %vm1642, %v5774
      %v5793 = vld [vmem:[#allocation5] sm:$0xff]
      %v5794 = vld [vmem:[#allocation5 + $0x8] sm:$0xff]
      %v5795 = vld [vmem:[#allocation5 + $0x18] sm:$0xff]
      %v5796 = vld [vmem:[#allocation5 + $0x20] sm:$0xff]
      %v5797 = vld [vmem:[#allocation5 + $0x30] sm:$0xff]
      %v5798 = vld [vmem:[#allocation5 + $0x38] sm:$0xff]
      %v5799 = vld [vmem:[#allocation5 + $0x48] sm:$0xff]
      %v5800 = vld [vmem:[#allocation5 + $0x50] sm:$0xff]
      %v5801 = vld [vmem:[#allocation5 + $0x60] sm:$0xff]
      %v5802 = vld [vmem:[#allocation5 + $0x68] sm:$0xff]
      %v5803 = vld [vmem:[#allocation5 + $0x78] sm:$0xff]
      %v5804 = vld [vmem:[#allocation5 + $0x80] sm:$0xff]
      %v5805 = vld [vmem:[#allocation5 + $0x90] sm:$0xff]
      %v5806 = vld [vmem:[#allocation5 + $0x98] sm:$0xff]
      %v5807 = vld [vmem:[#allocation5 + $0xa8] sm:$0xff]
      %v5808 = vld [vmem:[#allocation5 + $0xb0] sm:$0xff]
      %v5809 = vld [vmem:[#allocation5 + $0xc0] sm:$0xff]
      %v5810 = vld [vmem:[#allocation5 + $0xc8] sm:$0xff]
      %v5811 = vld [vmem:[#allocation5 + $0xd8] sm:$0xff]
      %v5812 = vld [vmem:[#allocation5 + $0xe0] sm:$0xff]
      %v5813 = vld [vmem:[#allocation5 + $0xf0] sm:$0xff]
      %v5814 = vld [vmem:[#allocation5 + $0xf8] sm:$0xff]
      %v5815 = vld [vmem:[#allocation5 + $0x108] sm:$0xff]
      %v5816 = vld [vmem:[#allocation5 + $0x110] sm:$0xff]
      %v5817 = vld [vmem:[#allocation5 + $0x120] sm:$0xff]
      %v5818 = vld [vmem:[#allocation5 + $0x128] sm:$0xff]
      %v5819 = vld [vmem:[#allocation5 + $0x138] sm:$0xff]
      %v5820 = vld [vmem:[#allocation5 + $0x140] sm:$0xff]
      %v5821 = vld [vmem:[#allocation5 + $0x150] sm:$0xff]
      %v5822 = vld [vmem:[#allocation5 + $0x158] sm:$0xff]
      %v5823 = vld [vmem:[#allocation5 + $0x168] sm:$0xff]
      %v5824 = vld [vmem:[#allocation5 + $0x170] sm:$0xff]
      %v5825 = vld [vmem:[%s5] sm:$0xff]
      %v5826 = vld [vmem:[%s5 + $0x8] sm:$0xff]
      %v5827 = vld [vmem:[%s5 + $0x10] sm:$0xff]
      %v5828 = vld [vmem:[%s5 + $0x18] sm:$0xff]
      %v5829 = vld [vmem:[%s5 + $0x20] sm:$0xff]
      %v5830 = vld [vmem:[%s5 + $0x28] sm:$0xff]
      %v5831 = vld [vmem:[%s5 + $0x30] sm:$0xff]
      %v5832 = vld [vmem:[%s5 + $0x38] sm:$0xff]
      %v5833 = vld [vmem:[#allocation5 + $0x1] sm:$0xff]
      %v5834 = vld [vmem:[#allocation5 + $0x9] sm:$0xff]
      %v5835 = vld [vmem:[#allocation5 + $0x19] sm:$0xff]
      %v5836 = vld [vmem:[#allocation5 + $0x21] sm:$0xff]
      %v5837 = vld [vmem:[#allocation5 + $0x31] sm:$0xff]
      %v5838 = vld [vmem:[#allocation5 + $0x39] sm:$0xff]
      %v5839 = vld [vmem:[#allocation5 + $0x49] sm:$0xff]
      %v5840 = vld [vmem:[#allocation5 + $0x51] sm:$0xff]
      %v5841 = vld [vmem:[#allocation5 + $0x61] sm:$0xff]
      %v5842 = vld [vmem:[#allocation5 + $0x69] sm:$0xff]
      %v5843 = vld [vmem:[#allocation5 + $0x79] sm:$0xff]
      %v5844 = vld [vmem:[#allocation5 + $0x81] sm:$0xff]
      %v5845 = vld [vmem:[#allocation5 + $0x91] sm:$0xff]
      %v5846 = vld [vmem:[#allocation5 + $0x99] sm:$0xff]
      %v5847 = vld [vmem:[#allocation5 + $0xa9] sm:$0xff]
      %v5848 = vld [vmem:[#allocation5 + $0xb1] sm:$0xff]
      %v5849 = vld [vmem:[#allocation5 + $0xc1] sm:$0xff]
      %v5850 = vld [vmem:[#allocation5 + $0xc9] sm:$0xff]
      %v5851 = vld [vmem:[#allocation5 + $0xd9] sm:$0xff]
      %v5852 = vld [vmem:[#allocation5 + $0xe1] sm:$0xff]
      %v5853 = vld [vmem:[#allocation5 + $0xf1] sm:$0xff]
      %v5854 = vld [vmem:[#allocation5 + $0xf9] sm:$0xff]
      %v5855 = vld [vmem:[#allocation5 + $0x109] sm:$0xff]
      %v5856 = vld [vmem:[#allocation5 + $0x111] sm:$0xff]
      %v5857 = vld [vmem:[#allocation5 + $0x121] sm:$0xff]
      %v5858 = vld [vmem:[#allocation5 + $0x129] sm:$0xff]
      %v5859 = vld [vmem:[#allocation5 + $0x139] sm:$0xff]
      %v5860 = vld [vmem:[#allocation5 + $0x141] sm:$0xff]
      %v5861 = vld [vmem:[#allocation5 + $0x151] sm:$0xff]
      %v5862 = vld [vmem:[#allocation5 + $0x159] sm:$0xff]
      %v5863 = vld [vmem:[#allocation5 + $0x169] sm:$0xff]
      %v5864 = vld [vmem:[#allocation5 + $0x171] sm:$0xff]
      %s5865 = scalar_lea.vmem %s5, 64
      %v5866 = vld [vmem:[%s5865] sm:$0xff]
      %v5867 = vld [vmem:[%s5865 + $0x8] sm:$0xff]
      %v5868 = vld [vmem:[%s5865 + $0x10] sm:$0xff]
      %v5869 = vld [vmem:[%s5865 + $0x18] sm:$0xff]
      %v5870 = vld [vmem:[%s5865 + $0x20] sm:$0xff]
      %v5871 = vld [vmem:[%s5865 + $0x28] sm:$0xff]
      %v5872 = vld [vmem:[%s5865 + $0x30] sm:$0xff]
      %v5873 = vld [vmem:[%s5865 + $0x38] sm:$0xff]
      %v5875 = vsel %vm1588, %v5833, 0
      %v5878 = vsel %vm1588, %v5834, 0
      %v5881 = vsel %vm1588, %v5835, 0
      %v5884 = vsel %vm1588, %v5836, 0
      %v5887 = vsel %vm1588, %v5837, 0
      %v5890 = vsel %vm1588, %v5838, 0
      %v5893 = vsel %vm1588, %v5839, 0
      %v5896 = vsel %vm1588, %v5840, 0
      %v5899 = vsel %vm1588, %v5841, 0
      %v5902 = vsel %vm1588, %v5842, 0
      %v5905 = vsel %vm1588, %v5843, 0
      %v5908 = vsel %vm1588, %v5844, 0
      %v5911 = vsel %vm1588, %v5845, 0
      %v5914 = vsel %vm1588, %v5846, 0
      %v5917 = vsel %vm1588, %v5847, 0
      %v5920 = vsel %vm1588, %v5848, 0
      %v5923 = vsel %vm1588, %v5849, 0
      %v5926 = vsel %vm1588, %v5850, 0
      %v5929 = vsel %vm1588, %v5851, 0
      %v5932 = vsel %vm1588, %v5852, 0
      %v5935 = vsel %vm1588, %v5853, 0
      %v5938 = vsel %vm1588, %v5854, 0
      %v5941 = vsel %vm1588, %v5855, 0
      %v5944 = vsel %vm1588, %v5856, 0
      %v5947 = vsel %vm1588, %v5857, 0
      %v5950 = vsel %vm1588, %v5858, 0
      %v5953 = vsel %vm1588, %v5859, 0
      %v5956 = vsel %vm1588, %v5860, 0
      %v5959 = vsel %vm1588, %v5861, 0
      %v5962 = vsel %vm1588, %v5862, 0
      %v5965 = vsel %vm1588, %v5863, 0
      %v5968 = vsel %vm1588, %v5864, 0
      %5970 = vmatprep.subr.mxu0 0.0
      %5971 = vmatpush1.msra.mxu0 %v5866
      %5972 = vmatprep.subr.mxu0 0.0
      %5973 = vmatpush1.msra.mxu0 %v5867
      %5974 = vmatprep.subr.mxu0 0.0
      %5975 = vmatpush1.msra.mxu0 %v5868
      %5976 = vmatprep.subr.mxu0 0.0
      %5977 = vmatpush1.msra.mxu0 %v5869
      %5978 = vmatprep.subr.mxu0 0.0
      %5979 = vmatpush1.msra.mxu0 %v5870
      %5980 = vmatprep.subr.mxu0 0.0
      %5981 = vmatpush1.msra.mxu0 %v5871
      %5982 = vmatprep.subr.mxu0 0.0
      %5983 = vmatpush1.msra.mxu0 %v5872
      %5984 = vmatprep.subr.mxu0 0.0
      %5985 = vmatpush1.msra.mxu0 %v5873
      %5986 = vmatprep.subr.mxu0 0.0
      %5987 = vmatpush1.msra.mxu0 0.0
      %5988 = vmatprep.subr.mxu0 0.0
      %5989 = vmatpush1.msra.mxu0 0.0
      %5990 = vmatprep.subr.mxu0 0.0
      %5991 = vmatpush1.msra.mxu0 0.0
      %5992 = vmatprep.subr.mxu0 0.0
      %5993 = vmatpush1.msra.mxu0 0.0
      %5994 = vmatprep.subr.mxu0 0.0
      %5995 = vmatpush1.msra.mxu0 0.0
      %5996 = vmatprep.subr.mxu0 0.0
      %5997 = vmatpush1.msra.mxu0 0.0
      %5998 = vmatprep.subr.mxu0 0.0
      %5999 = vmatpush1.msra.mxu0 0.0
      %6000 = vmatprep.subr.mxu0 0.0
      %6001 = vmatpush1.msra.mxu0 0.0
      %6002 = vmatprep.subr.mxu0 0.0
      %6003 = vmatpush1.msra.mxu0 0.0
      %6004 = vmatprep.subr.mxu0 0.0
      %6005 = vmatpush1.msra.mxu0 0.0
      %6006 = vmatprep.subr.mxu0 0.0
      %6007 = vmatpush1.msra.mxu0 0.0
      %6008 = vmatprep.subr.mxu0 0.0
      %6009 = vmatpush1.msra.mxu0 0.0
      %6010 = vmatprep.subr.mxu0 0.0
      %6011 = vmatpush1.msra.mxu0 0.0
      %6012 = vmatprep.subr.mxu0 0.0
      %6013 = vmatpush1.msra.mxu0 0.0
      %6014 = vmatprep.subr.mxu0 0.0
      %6015 = vmatpush1.msra.mxu0 0.0
      %6016 = vmatprep.subr.mxu0 0.0
      %6017 = vmatpush1.msra.mxu0 0.0
      %6018 = vmatprep.subr.mxu0 0.0
      %6019 = vmatpush1.msra.mxu0 0.0
      %6020 = vmatprep.subr.mxu0 0.0
      %6021 = vmatpush1.msra.mxu0 0.0
      %6022 = vmatprep.subr.mxu0 0.0
      %6023 = vmatpush1.msra.mxu0 0.0
      %6024 = vmatprep.subr.mxu0 0.0
      %6025 = vmatpush1.msra.mxu0 0.0
      %6026 = vmatprep.subr.mxu0 0.0
      %6027 = vmatpush1.msra.mxu0 0.0
      %6028 = vmatprep.subr.mxu0 0.0
      %6029 = vmatpush1.msra.mxu0 0.0
      %6030 = vmatprep.subr.mxu0 0.0
      %6031 = vmatpush1.msra.mxu0 0.0
      %6032 = vmatprep.subr.mxu0 0.0
      %6033 = vmatpush1.msra.mxu0 0.0
      %6034 = vmatprep.mubr.f32.mxu0 0.0
      %6035 = vmatmul.mubr.f32.gmra.mrb[0].mxu0 %v5875
      %v6036 = vpop.f32.mrb[0].mxu0
      %v6037 = vadd.f32 0.0, %v6036
      %v6038 = vpop.f32.mrb[0].mxu0
      %6039 = vmatprep.mubr.f32.mxu0 0.0
      %6040 = vmatmul.mubr.f32.gmra.mrb[0].mxu0 %v5878
      %v6041 = vpop.f32.mrb[0].mxu0
      %v6042 = vadd.f32 0.0, %v6041
      %v6043 = vpop.f32.mrb[0].mxu0
      %6044 = vmatprep.mubr.f32.mxu0 0.0
      %6045 = vmatmul.mubr.f32.gmra.mrb[0].mxu0 %v5881
      %v6046 = vpop.f32.mrb[0].mxu0
      %v6047 = vadd.f32 0.0, %v6046
      %v6048 = vpop.f32.mrb[0].mxu0
      %6049 = vmatprep.mubr.f32.mxu0 0.0
      %6050 = vmatmul.mubr.f32.gmra.mrb[0].mxu0 %v5884
      %v6051 = vpop.f32.mrb[0].mxu0
      %v6052 = vadd.f32 0.0, %v6051
      %v6053 = vpop.f32.mrb[0].mxu0
      %6054 = vmatprep.mubr.f32.mxu0 0.0
      %6055 = vmatmul.mubr.f32.gmra.mrb[0].mxu0 %v5887
      %v6056 = vpop.f32.mrb[0].mxu0
      %v6057 = vadd.f32 0.0, %v6056
      %v6058 = vpop.f32.mrb[0].mxu0
      %6059 = vmatprep.mubr.f32.mxu0 0.0
      %6060 = vmatmul.mubr.f32.gmra.mrb[0].mxu0 %v5890
      %v6061 = vpop.f32.mrb[0].mxu0
      %v6062 = vadd.f32 0.0, %v6061
      %v6063 = vpop.f32.mrb[0].mxu0
      %6064 = vmatprep.mubr.f32.mxu0 0.0
      %6065 = vmatmul.mubr.f32.gmra.mrb[0].mxu0 %v5893
      %v6066 = vpop.f32.mrb[0].mxu0
      %v6067 = vadd.f32 0.0, %v6066
      %v6068 = vpop.f32.mrb[0].mxu0
      %6069 = vmatprep.mubr.f32.mxu0 0.0
      %6070 = vmatmul.mubr.f32.gmra.mrb[0].mxu0 %v5896
      %v6071 = vpop.f32.mrb[0].mxu0
      %v6072 = vadd.f32 0.0, %v6071
      %v6073 = vpop.f32.mrb[0].mxu0
      %6074 = vmatprep.mubr.f32.mxu0 0.0
      %6075 = vmatmul.mubr.f32.gmra.mrb[0].mxu0 %v5899
      %v6076 = vpop.f32.mrb[0].mxu0
      %v6077 = vadd.f32 0.0, %v6076
      %v6078 = vpop.f32.mrb[0].mxu0
      %6079 = vmatprep.mubr.f32.mxu0 0.0
      %6080 = vmatmul.mubr.f32.gmra.mrb[0].mxu0 %v5902
      %v6081 = vpop.f32.mrb[0].mxu0
      %v6082 = vadd.f32 0.0, %v6081
      %v6083 = vpop.f32.mrb[0].mxu0
      %6084 = vmatprep.mubr.f32.mxu0 0.0
      %6085 = vmatmul.mubr.f32.gmra.mrb[0].mxu0 %v5905
      %v6086 = vpop.f32.mrb[0].mxu0
      %v6087 = vadd.f32 0.0, %v6086
      %v6088 = vpop.f32.mrb[0].mxu0
      %6089 = vmatprep.mubr.f32.mxu0 0.0
      %6090 = vmatmul.mubr.f32.gmra.mrb[0].mxu0 %v5908
      %v6091 = vpop.f32.mrb[0].mxu0
      %v6092 = vadd.f32 0.0, %v6091
      %v6093 = vpop.f32.mrb[0].mxu0
      %6094 = vmatprep.mubr.f32.mxu0 0.0
      %6095 = vmatmul.mubr.f32.gmra.mrb[0].mxu0 %v5911
      %v6096 = vpop.f32.mrb[0].mxu0
      %v6097 = vadd.f32 0.0, %v6096
      %v6098 = vpop.f32.mrb[0].mxu0
      %6099 = vmatprep.mubr.f32.mxu0 0.0
      %6100 = vmatmul.mubr.f32.gmra.mrb[0].mxu0 %v5914
      %v6101 = vpop.f32.mrb[0].mxu0
      %v6102 = vadd.f32 0.0, %v6101
      %v6103 = vpop.f32.mrb[0].mxu0
      %6104 = vmatprep.mubr.f32.mxu0 0.0
      %6105 = vmatmul.mubr.f32.gmra.mrb[0].mxu0 %v5917
      %v6106 = vpop.f32.mrb[0].mxu0
      %v6107 = vadd.f32 0.0, %v6106
      %v6108 = vpop.f32.mrb[0].mxu0
      %6109 = vmatprep.mubr.f32.mxu0 0.0
      %6110 = vmatmul.mubr.f32.gmra.mrb[0].mxu0 %v5920
      %v6111 = vpop.f32.mrb[0].mxu0
      %v6112 = vadd.f32 0.0, %v6111
      %v6113 = vpop.f32.mrb[0].mxu0
      %6114 = vmatprep.mubr.f32.mxu0 0.0
      %6115 = vmatmul.mubr.f32.gmra.mrb[0].mxu0 %v5923
      %v6116 = vpop.f32.mrb[0].mxu0
      %v6117 = vadd.f32 0.0, %v6116
      %v6118 = vpop.f32.mrb[0].mxu0
      %6119 = vmatprep.mubr.f32.mxu0 0.0
      %6120 = vmatmul.mubr.f32.gmra.mrb[0].mxu0 %v5926
      %v6121 = vpop.f32.mrb[0].mxu0
      %v6122 = vadd.f32 0.0, %v6121
      %v6123 = vpop.f32.mrb[0].mxu0
      %6124 = vmatprep.mubr.f32.mxu0 0.0
      %6125 = vmatmul.mubr.f32.gmra.mrb[0].mxu0 %v5929
      %v6126 = vpop.f32.mrb[0].mxu0
      %v6127 = vadd.f32 0.0, %v6126
      %v6128 = vpop.f32.mrb[0].mxu0
      %6129 = vmatprep.mubr.f32.mxu0 0.0
      %6130 = vmatmul.mubr.f32.gmra.mrb[0].mxu0 %v5932
      %v6131 = vpop.f32.mrb[0].mxu0
      %v6132 = vadd.f32 0.0, %v6131
      %v6133 = vpop.f32.mrb[0].mxu0
      %6134 = vmatprep.mubr.f32.mxu0 0.0
      %6135 = vmatmul.mubr.f32.gmra.mrb[0].mxu0 %v5935
      %v6136 = vpop.f32.mrb[0].mxu0
      %v6137 = vadd.f32 0.0, %v6136
      %v6138 = vpop.f32.mrb[0].mxu0
      %6139 = vmatprep.mubr.f32.mxu0 0.0
      %6140 = vmatmul.mubr.f32.gmra.mrb[0].mxu0 %v5938
      %v6141 = vpop.f32.mrb[0].mxu0
      %v6142 = vadd.f32 0.0, %v6141
      %v6143 = vpop.f32.mrb[0].mxu0
      %6144 = vmatprep.mubr.f32.mxu0 0.0
      %6145 = vmatmul.mubr.f32.gmra.mrb[0].mxu0 %v5941
      %v6146 = vpop.f32.mrb[0].mxu0
      %v6147 = vadd.f32 0.0, %v6146
      %v6148 = vpop.f32.mrb[0].mxu0
      %6149 = vmatprep.mubr.f32.mxu0 0.0
      %6150 = vmatmul.mubr.f32.gmra.mrb[0].mxu0 %v5944
      %v6151 = vpop.f32.mrb[0].mxu0
      %v6152 = vadd.f32 0.0, %v6151
      %v6153 = vpop.f32.mrb[0].mxu0
      %6154 = vmatprep.mubr.f32.mxu0 0.0
      %6155 = vmatmul.mubr.f32.gmra.mrb[0].mxu0 %v5947
      %v6156 = vpop.f32.mrb[0].mxu0
      %v6157 = vadd.f32 0.0, %v6156
      %v6158 = vpop.f32.mrb[0].mxu0
      %6159 = vmatprep.mubr.f32.mxu0 0.0
      %6160 = vmatmul.mubr.f32.gmra.mrb[0].mxu0 %v5950
      %v6161 = vpop.f32.mrb[0].mxu0
      %v6162 = vadd.f32 0.0, %v6161
      %v6163 = vpop.f32.mrb[0].mxu0
      %6164 = vmatprep.mubr.f32.mxu0 0.0
      %6165 = vmatmul.mubr.f32.gmra.mrb[0].mxu0 %v5953
      %v6166 = vpop.f32.mrb[0].mxu0
      %v6167 = vadd.f32 0.0, %v6166
      %v6168 = vpop.f32.mrb[0].mxu0
      %6169 = vmatprep.mubr.f32.mxu0 0.0
      %6170 = vmatmul.mubr.f32.gmra.mrb[0].mxu0 %v5956
      %v6171 = vpop.f32.mrb[0].mxu0
      %v6172 = vadd.f32 0.0, %v6171
      %v6173 = vpop.f32.mrb[0].mxu0
      %6174 = vmatprep.mubr.f32.mxu0 0.0
      %6175 = vmatmul.mubr.f32.gmra.mrb[0].mxu0 %v5959
      %v6176 = vpop.f32.mrb[0].mxu0
      %v6177 = vadd.f32 0.0, %v6176
      %v6178 = vpop.f32.mrb[0].mxu0
      %6179 = vmatprep.mubr.f32.mxu0 0.0
      %6180 = vmatmul.mubr.f32.gmra.mrb[0].mxu0 %v5962
      %v6181 = vpop.f32.mrb[0].mxu0
      %v6182 = vadd.f32 0.0, %v6181
      %v6183 = vpop.f32.mrb[0].mxu0
      %6184 = vmatprep.mubr.f32.mxu0 0.0
      %6185 = vmatmul.mubr.f32.gmra.mrb[0].mxu0 %v5965
      %v6186 = vpop.f32.mrb[0].mxu0
      %v6187 = vadd.f32 0.0, %v6186
      %v6188 = vpop.f32.mrb[0].mxu0
      %6189 = vmatprep.mubr.f32.mxu0 0.0
      %6190 = vmatmul.mubr.f32.gmra.mrb[0].mxu0 %v5968
      %v6191 = vpop.f32.mrb[0].mxu0
      %v6192 = vadd.f32 0.0, %v6191
      %v6193 = vpop.f32.mrb[0].mxu0
      %6194 = vdwg.mxu0
      %v6196 = vsel %vm1588, %v5793, 0
      %v6199 = vsel %vm1588, %v5794, 0
      %v6202 = vsel %vm1588, %v5795, 0
      %v6205 = vsel %vm1588, %v5796, 0
      %v6208 = vsel %vm1588, %v5797, 0
      %v6211 = vsel %vm1588, %v5798, 0
      %v6214 = vsel %vm1588, %v5799, 0
      %v6217 = vsel %vm1588, %v5800, 0
      %v6220 = vsel %vm1588, %v5801, 0
      %v6223 = vsel %vm1588, %v5802, 0
      %v6226 = vsel %vm1588, %v5803, 0
      %v6229 = vsel %vm1588, %v5804, 0
      %v6232 = vsel %vm1588, %v5805, 0
      %v6235 = vsel %vm1588, %v5806, 0
      %v6238 = vsel %vm1588, %v5807, 0
      %v6241 = vsel %vm1588, %v5808, 0
      %v6244 = vsel %vm1588, %v5809, 0
      %v6247 = vsel %vm1588, %v5810, 0
      %v6250 = vsel %vm1588, %v5811, 0
      %v6253 = vsel %vm1588, %v5812, 0
      %v6256 = vsel %vm1588, %v5813, 0
      %v6259 = vsel %vm1588, %v5814, 0
      %v6262 = vsel %vm1588, %v5815, 0
      %v6265 = vsel %vm1588, %v5816, 0
      %v6268 = vsel %vm1588, %v5817, 0
      %v6271 = vsel %vm1588, %v5818, 0
      %v6274 = vsel %vm1588, %v5819, 0
      %v6277 = vsel %vm1588, %v5820, 0
      %v6280 = vsel %vm1588, %v5821, 0
      %v6283 = vsel %vm1588, %v5822, 0
      %v6286 = vsel %vm1588, %v5823, 0
      %v6289 = vsel %vm1588, %v5824, 0
      %6291 = vmatprep.subr.mxu0 0.0
      %6292 = vmatpush1.msra.mxu0 %v5825
      %6293 = vmatprep.subr.mxu0 0.0
      %6294 = vmatpush1.msra.mxu0 %v5826
      %6295 = vmatprep.subr.mxu0 0.0
      %6296 = vmatpush1.msra.mxu0 %v5827
      %6297 = vmatprep.subr.mxu0 0.0
      %6298 = vmatpush1.msra.mxu0 %v5828
      %6299 = vmatprep.subr.mxu0 0.0
      %6300 = vmatpush1.msra.mxu0 %v5829
      %6301 = vmatprep.subr.mxu0 0.0
      %6302 = vmatpush1.msra.mxu0 %v5830
      %6303 = vmatprep.subr.mxu0 0.0
      %6304 = vmatpush1.msra.mxu0 %v5831
      %6305 = vmatprep.subr.mxu0 0.0
      %6306 = vmatpush1.msra.mxu0 %v5832
      %6307 = vmatprep.subr.mxu0 0.0
      %6308 = vmatpush1.msra.mxu0 0.0
      %6309 = vmatprep.subr.mxu0 0.0
      %6310 = vmatpush1.msra.mxu0 0.0
      %6311 = vmatprep.subr.mxu0 0.0
      %6312 = vmatpush1.msra.mxu0 0.0
      %6313 = vmatprep.subr.mxu0 0.0
      %6314 = vmatpush1.msra.mxu0 0.0
      %6315 = vmatprep.subr.mxu0 0.0
      %6316 = vmatpush1.msra.mxu0 0.0
      %6317 = vmatprep.subr.mxu0 0.0
      %6318 = vmatpush1.msra.mxu0 0.0
      %6319 = vmatprep.subr.mxu0 0.0
      %6320 = vmatpush1.msra.mxu0 0.0
      %6321 = vmatprep.subr.mxu0 0.0
      %6322 = vmatpush1.msra.mxu0 0.0
      %6323 = vmatprep.subr.mxu0 0.0
      %6324 = vmatpush1.msra.mxu0 0.0
      %6325 = vmatprep.subr.mxu0 0.0
      %6326 = vmatpush1.msra.mxu0 0.0
      %6327 = vmatprep.subr.mxu0 0.0
      %6328 = vmatpush1.msra.mxu0 0.0
      %6329 = vmatprep.subr.mxu0 0.0
      %6330 = vmatpush1.msra.mxu0 0.0
      %6331 = vmatprep.subr.mxu0 0.0
      %6332 = vmatpush1.msra.mxu0 0.0
      %6333 = vmatprep.subr.mxu0 0.0
      %6334 = vmatpush1.msra.mxu0 0.0
      %6335 = vmatprep.subr.mxu0 0.0
      %6336 = vmatpush1.msra.mxu0 0.0
      %6337 = vmatprep.subr.mxu0 0.0
      %6338 = vmatpush1.msra.mxu0 0.0
      %6339 = vmatprep.subr.mxu0 0.0
      %6340 = vmatpush1.msra.mxu0 0.0
      %6341 = vmatprep.subr.mxu0 0.0
      %6342 = vmatpush1.msra.mxu0 0.0
      %6343 = vmatprep.subr.mxu0 0.0
      %6344 = vmatpush1.msra.mxu0 0.0
      %6345 = vmatprep.subr.mxu0 0.0
      %6346 = vmatpush1.msra.mxu0 0.0
      %6347 = vmatprep.subr.mxu0 0.0
      %6348 = vmatpush1.msra.mxu0 0.0
      %6349 = vmatprep.subr.mxu0 0.0
      %6350 = vmatpush1.msra.mxu0 0.0
      %6351 = vmatprep.subr.mxu0 0.0
      %6352 = vmatpush1.msra.mxu0 0.0
      %6353 = vmatprep.subr.mxu0 0.0
      %6354 = vmatpush1.msra.mxu0 0.0
      %6355 = vmatprep.mubr.f32.mxu0 0.0
      %6356 = vmatmul.mubr.f32.gmra.mrb[0].mxu0 %v6196
      %v6357 = vpop.f32.mrb[0].mxu0
      %v6358 = vadd.f32 %v6037, %v6357
      %v6359 = vpop.f32.mrb[0].mxu0
      %6360 = vmatprep.mubr.f32.mxu0 0.0
      %6361 = vmatmul.mubr.f32.gmra.mrb[0].mxu0 %v6199
      %v6362 = vpop.f32.mrb[0].mxu0
      %v6363 = vadd.f32 %v6042, %v6362
      %v6364 = vpop.f32.mrb[0].mxu0
      %6365 = vmatprep.mubr.f32.mxu0 0.0
      %6366 = vmatmul.mubr.f32.gmra.mrb[0].mxu0 %v6202
      %v6367 = vpop.f32.mrb[0].mxu0
      %v6368 = vadd.f32 %v6047, %v6367
      %v6369 = vpop.f32.mrb[0].mxu0
      %6370 = vmatprep.mubr.f32.mxu0 0.0
      %6371 = vmatmul.mubr.f32.gmra.mrb[0].mxu0 %v6205
      %v6372 = vpop.f32.mrb[0].mxu0
      %v6373 = vadd.f32 %v6052, %v6372
      %v6374 = vpop.f32.mrb[0].mxu0
      %6375 = vmatprep.mubr.f32.mxu0 0.0
      %6376 = vmatmul.mubr.f32.gmra.mrb[0].mxu0 %v6208
      %v6377 = vpop.f32.mrb[0].mxu0
      %v6378 = vadd.f32 %v6057, %v6377
      %v6379 = vpop.f32.mrb[0].mxu0
      %6380 = vmatprep.mubr.f32.mxu0 0.0
      %6381 = vmatmul.mubr.f32.gmra.mrb[0].mxu0 %v6211
      %v6382 = vpop.f32.mrb[0].mxu0
      %v6383 = vadd.f32 %v6062, %v6382
      %v6384 = vpop.f32.mrb[0].mxu0
      %6385 = vmatprep.mubr.f32.mxu0 0.0
      %6386 = vmatmul.mubr.f32.gmra.mrb[0].mxu0 %v6214
      %v6387 = vpop.f32.mrb[0].mxu0
      %v6388 = vadd.f32 %v6067, %v6387
      %v6389 = vpop.f32.mrb[0].mxu0
      %6390 = vmatprep.mubr.f32.mxu0 0.0
      %6391 = vmatmul.mubr.f32.gmra.mrb[0].mxu0 %v6217
      %v6392 = vpop.f32.mrb[0].mxu0
      %v6393 = vadd.f32 %v6072, %v6392
      %v6394 = vpop.f32.mrb[0].mxu0
      %6395 = vmatprep.mubr.f32.mxu0 0.0
      %6396 = vmatmul.mubr.f32.gmra.mrb[0].mxu0 %v6220
      %v6397 = vpop.f32.mrb[0].mxu0
      %v6398 = vadd.f32 %v6077, %v6397
      %v6399 = vpop.f32.mrb[0].mxu0
      %6400 = vmatprep.mubr.f32.mxu0 0.0
      %6401 = vmatmul.mubr.f32.gmra.mrb[0].mxu0 %v6223
      %v6402 = vpop.f32.mrb[0].mxu0
      %v6403 = vadd.f32 %v6082, %v6402
      %v6404 = vpop.f32.mrb[0].mxu0
      %6405 = vmatprep.mubr.f32.mxu0 0.0
      %6406 = vmatmul.mubr.f32.gmra.mrb[0].mxu0 %v6226
      %v6407 = vpop.f32.mrb[0].mxu0
      %v6408 = vadd.f32 %v6087, %v6407
      %v6409 = vpop.f32.mrb[0].mxu0
      %6410 = vmatprep.mubr.f32.mxu0 0.0
      %6411 = vmatmul.mubr.f32.gmra.mrb[0].mxu0 %v6229
      %v6412 = vpop.f32.mrb[0].mxu0
      %v6413 = vadd.f32 %v6092, %v6412
      %v6414 = vpop.f32.mrb[0].mxu0
      %6415 = vmatprep.mubr.f32.mxu0 0.0
      %6416 = vmatmul.mubr.f32.gmra.mrb[0].mxu0 %v6232
      %v6417 = vpop.f32.mrb[0].mxu0
      %v6418 = vadd.f32 %v6097, %v6417
      %v6419 = vpop.f32.mrb[0].mxu0
      %6420 = vmatprep.mubr.f32.mxu0 0.0
      %6421 = vmatmul.mubr.f32.gmra.mrb[0].mxu0 %v6235
      %v6422 = vpop.f32.mrb[0].mxu0
      %v6423 = vadd.f32 %v6102, %v6422
      %v6424 = vpop.f32.mrb[0].mxu0
      %6425 = vmatprep.mubr.f32.mxu0 0.0
      %6426 = vmatmul.mubr.f32.gmra.mrb[0].mxu0 %v6238
      %v6427 = vpop.f32.mrb[0].mxu0
      %v6428 = vadd.f32 %v6107, %v6427
      %v6429 = vpop.f32.mrb[0].mxu0
      %6430 = vmatprep.mubr.f32.mxu0 0.0
      %6431 = vmatmul.mubr.f32.gmra.mrb[0].mxu0 %v6241
      %v6432 = vpop.f32.mrb[0].mxu0
      %v6433 = vadd.f32 %v6112, %v6432
      %v6434 = vpop.f32.mrb[0].mxu0
      %6435 = vmatprep.mubr.f32.mxu0 0.0
      %6436 = vmatmul.mubr.f32.gmra.mrb[0].mxu0 %v6244
      %v6437 = vpop.f32.mrb[0].mxu0
      %v6438 = vadd.f32 %v6117, %v6437
      %v6439 = vpop.f32.mrb[0].mxu0
      %6440 = vmatprep.mubr.f32.mxu0 0.0
      %6441 = vmatmul.mubr.f32.gmra.mrb[0].mxu0 %v6247
      %v6442 = vpop.f32.mrb[0].mxu0
      %v6443 = vadd.f32 %v6122, %v6442
      %v6444 = vpop.f32.mrb[0].mxu0
      %6445 = vmatprep.mubr.f32.mxu0 0.0
      %6446 = vmatmul.mubr.f32.gmra.mrb[0].mxu0 %v6250
      %v6447 = vpop.f32.mrb[0].mxu0
      %v6448 = vadd.f32 %v6127, %v6447
      %v6449 = vpop.f32.mrb[0].mxu0
      %6450 = vmatprep.mubr.f32.mxu0 0.0
      %6451 = vmatmul.mubr.f32.gmra.mrb[0].mxu0 %v6253
      %v6452 = vpop.f32.mrb[0].mxu0
      %v6453 = vadd.f32 %v6132, %v6452
      %v6454 = vpop.f32.mrb[0].mxu0
      %6455 = vmatprep.mubr.f32.mxu0 0.0
      %6456 = vmatmul.mubr.f32.gmra.mrb[0].mxu0 %v6256
      %v6457 = vpop.f32.mrb[0].mxu0
      %v6458 = vadd.f32 %v6137, %v6457
      %v6459 = vpop.f32.mrb[0].mxu0
      %6460 = vmatprep.mubr.f32.mxu0 0.0
      %6461 = vmatmul.mubr.f32.gmra.mrb[0].mxu0 %v6259
      %v6462 = vpop.f32.mrb[0].mxu0
      %v6463 = vadd.f32 %v6142, %v6462
      %v6464 = vpop.f32.mrb[0].mxu0
      %6465 = vmatprep.mubr.f32.mxu0 0.0
      %6466 = vmatmul.mubr.f32.gmra.mrb[0].mxu0 %v6262
      %v6467 = vpop.f32.mrb[0].mxu0
      %v6468 = vadd.f32 %v6147, %v6467
      %v6469 = vpop.f32.mrb[0].mxu0
      %6470 = vmatprep.mubr.f32.mxu0 0.0
      %6471 = vmatmul.mubr.f32.gmra.mrb[0].mxu0 %v6265
      %v6472 = vpop.f32.mrb[0].mxu0
      %v6473 = vadd.f32 %v6152, %v6472
      %v6474 = vpop.f32.mrb[0].mxu0
      %6475 = vmatprep.mubr.f32.mxu0 0.0
      %6476 = vmatmul.mubr.f32.gmra.mrb[0].mxu0 %v6268
      %v6477 = vpop.f32.mrb[0].mxu0
      %v6478 = vadd.f32 %v6157, %v6477
      %v6479 = vpop.f32.mrb[0].mxu0
      %6480 = vmatprep.mubr.f32.mxu0 0.0
      %6481 = vmatmul.mubr.f32.gmra.mrb[0].mxu0 %v6271
      %v6482 = vpop.f32.mrb[0].mxu0
      %v6483 = vadd.f32 %v6162, %v6482
      %v6484 = vpop.f32.mrb[0].mxu0
      %6485 = vmatprep.mubr.f32.mxu0 0.0
      %6486 = vmatmul.mubr.f32.gmra.mrb[0].mxu0 %v6274
      %v6487 = vpop.f32.mrb[0].mxu0
      %v6488 = vadd.f32 %v6167, %v6487
      %v6489 = vpop.f32.mrb[0].mxu0
      %6490 = vmatprep.mubr.f32.mxu0 0.0
      %6491 = vmatmul.mubr.f32.gmra.mrb[0].mxu0 %v6277
      %v6492 = vpop.f32.mrb[0].mxu0
      %v6493 = vadd.f32 %v6172, %v6492
      %v6494 = vpop.f32.mrb[0].mxu0
      %6495 = vmatprep.mubr.f32.mxu0 0.0
      %6496 = vmatmul.mubr.f32.gmra.mrb[0].mxu0 %v6280
      %v6497 = vpop.f32.mrb[0].mxu0
      %v6498 = vadd.f32 %v6177, %v6497
      %v6499 = vpop.f32.mrb[0].mxu0
      %6500 = vmatprep.mubr.f32.mxu0 0.0
      %6501 = vmatmul.mubr.f32.gmra.mrb[0].mxu0 %v6283
      %v6502 = vpop.f32.mrb[0].mxu0
      %v6503 = vadd.f32 %v6182, %v6502
      %v6504 = vpop.f32.mrb[0].mxu0
      %6505 = vmatprep.mubr.f32.mxu0 0.0
      %6506 = vmatmul.mubr.f32.gmra.mrb[0].mxu0 %v6286
      %v6507 = vpop.f32.mrb[0].mxu0
      %v6508 = vadd.f32 %v6187, %v6507
      %v6509 = vpop.f32.mrb[0].mxu0
      %6510 = vmatprep.mubr.f32.mxu0 0.0
      %6511 = vmatmul.mubr.f32.gmra.mrb[0].mxu0 %v6289
      %v6512 = vpop.f32.mrb[0].mxu0
      %v6513 = vadd.f32 %v6192, %v6512
      %v6514 = vpop.f32.mrb[0].mxu0
      %6515 = vdwg.mxu0
      %v6516 = vld [vmem:[#allocation5 + $0x2] sm:$0xff]
      %v6517 = vld [vmem:[#allocation5 + $0xa] sm:$0xff]
      %v6518 = vld [vmem:[#allocation5 + $0x1a] sm:$0xff]
      %v6519 = vld [vmem:[#allocation5 + $0x22] sm:$0xff]
      %v6520 = vld [vmem:[#allocation5 + $0x32] sm:$0xff]
      %v6521 = vld [vmem:[#allocation5 + $0x3a] sm:$0xff]
      %v6522 = vld [vmem:[#allocation5 + $0x4a] sm:$0xff]
      %v6523 = vld [vmem:[#allocation5 + $0x52] sm:$0xff]
      %v6524 = vld [vmem:[#allocation5 + $0x62] sm:$0xff]
      %v6525 = vld [vmem:[#allocation5 + $0x6a] sm:$0xff]
      %v6526 = vld [vmem:[#allocation5 + $0x7a] sm:$0xff]
      %v6527 = vld [vmem:[#allocation5 + $0x82] sm:$0xff]
      %v6528 = vld [vmem:[#allocation5 + $0x92] sm:$0xff]
      %v6529 = vld [vmem:[#allocation5 + $0x9a] sm:$0xff]
      %v6530 = vld [vmem:[#allocation5 + $0xaa] sm:$0xff]
      %v6531 = vld [vmem:[#allocation5 + $0xb2] sm:$0xff]
      %v6532 = vld [vmem:[#allocation5 + $0xc2] sm:$0xff]
      %v6533 = vld [vmem:[#allocation5 + $0xca] sm:$0xff]
      %v6534 = vld [vmem:[#allocation5 + $0xda] sm:$0xff]
      %v6535 = vld [vmem:[#allocation5 + $0xe2] sm:$0xff]
      %v6536 = vld [vmem:[#allocation5 + $0xf2] sm:$0xff]
      %v6537 = vld [vmem:[#allocation5 + $0xfa] sm:$0xff]
      %v6538 = vld [vmem:[#allocation5 + $0x10a] sm:$0xff]
      %v6539 = vld [vmem:[#allocation5 + $0x112] sm:$0xff]
      %v6540 = vld [vmem:[#allocation5 + $0x122] sm:$0xff]
      %v6541 = vld [vmem:[#allocation5 + $0x12a] sm:$0xff]
      %v6542 = vld [vmem:[#allocation5 + $0x13a] sm:$0xff]
      %v6543 = vld [vmem:[#allocation5 + $0x142] sm:$0xff]
      %v6544 = vld [vmem:[#allocation5 + $0x152] sm:$0xff]
      %v6545 = vld [vmem:[#allocation5 + $0x15a] sm:$0xff]
      %v6546 = vld [vmem:[#allocation5 + $0x16a] sm:$0xff]
      %v6547 = vld [vmem:[#allocation5 + $0x172] sm:$0xff]
      %s6548 = scalar_lea.vmem %s5, 128
      %v6549 = vld [vmem:[%s6548] sm:$0xff]
      %v6550 = vld [vmem:[%s6548 + $0x8] sm:$0xff]
      %v6551 = vld [vmem:[%s6548 + $0x10] sm:$0xff]
      %v6552 = vld [vmem:[%s6548 + $0x18] sm:$0xff]
      %v6553 = vld [vmem:[%s6548 + $0x20] sm:$0xff]
      %v6554 = vld [vmem:[%s6548 + $0x28] sm:$0xff]
      %v6555 = vld [vmem:[%s6548 + $0x30] sm:$0xff]
      %v6556 = vld [vmem:[%s6548 + $0x38] sm:$0xff]
      %v6558 = vsel %vm1588, %v6516, 0
      %v6561 = vsel %vm1588, %v6517, 0
      %v6564 = vsel %vm1588, %v6518, 0
      %v6567 = vsel %vm1588, %v6519, 0
      %v6570 = vsel %vm1588, %v6520, 0
      %v6573 = vsel %vm1588, %v6521, 0
      %v6576 = vsel %vm1588, %v6522, 0
      %v6579 = vsel %vm1588, %v6523, 0
      %v6582 = vsel %vm1588, %v6524, 0
      %v6585 = vsel %vm1588, %v6525, 0
      %v6588 = vsel %vm1588, %v6526, 0
      %v6591 = vsel %vm1588, %v6527, 0
      %v6594 = vsel %vm1588, %v6528, 0
      %v6597 = vsel %vm1588, %v6529, 0
      %v6600 = vsel %vm1588, %v6530, 0
      %v6603 = vsel %vm1588, %v6531, 0
      %v6606 = vsel %vm1588, %v6532, 0
      %v6609 = vsel %vm1588, %v6533, 0
      %v6612 = vsel %vm1588, %v6534, 0
      %v6615 = vsel %vm1588, %v6535, 0
      %v6618 = vsel %vm1588, %v6536, 0
      %v6621 = vsel %vm1588, %v6537, 0
      %v6624 = vsel %vm1588, %v6538, 0
      %v6627 = vsel %vm1588, %v6539, 0
      %v6630 = vsel %vm1588, %v6540, 0
      %v6633 = vsel %vm1588, %v6541, 0
      %v6636 = vsel %vm1588, %v6542, 0
      %v6639 = vsel %vm1588, %v6543, 0
      %v6642 = vsel %vm1588, %v6544, 0
      %v6645 = vsel %vm1588, %v6545, 0
      %v6648 = vsel %vm1588, %v6546, 0
      %v6651 = vsel %vm1588, %v6547, 0
      %6653 = vmatprep.subr.mxu0 0.0
      %6654 = vmatpush1.msra.mxu0 %v6549
      %6655 = vmatprep.subr.mxu0 0.0
      %6656 = vmatpush1.msra.mxu0 %v6550
      %6657 = vmatprep.subr.mxu0 0.0
      %6658 = vmatpush1.msra.mxu0 %v6551
      %6659 = vmatprep.subr.mxu0 0.0
      %6660 = vmatpush1.msra.mxu0 %v6552
      %6661 = vmatprep.subr.mxu0 0.0
      %6662 = vmatpush1.msra.mxu0 %v6553
      %6663 = vmatprep.subr.mxu0 0.0
      %6664 = vmatpush1.msra.mxu0 %v6554
      %6665 = vmatprep.subr.mxu0 0.0
      %6666 = vmatpush1.msra.mxu0 %v6555
      %6667 = vmatprep.subr.mxu0 0.0
      %6668 = vmatpush1.msra.mxu0 %v6556
      %6669 = vmatprep.subr.mxu0 0.0
      %6670 = vmatpush1.msra.mxu0 0.0
      %6671 = vmatprep.subr.mxu0 0.0
      %6672 = vmatpush1.msra.mxu0 0.0
      %6673 = vmatprep.subr.mxu0 0.0
      %6674 = vmatpush1.msra.mxu0 0.0
      %6675 = vmatprep.subr.mxu0 0.0
      %6676 = vmatpush1.msra.mxu0 0.0
      %6677 = vmatprep.subr.mxu0 0.0
      %6678 = vmatpush1.msra.mxu0 0.0
      %6679 = vmatprep.subr.mxu0 0.0
      %6680 = vmatpush1.msra.mxu0 0.0
      %6681 = vmatprep.subr.mxu0 0.0
      %6682 = vmatpush1.msra.mxu0 0.0
      %6683 = vmatprep.subr.mxu0 0.0
      %6684 = vmatpush1.msra.mxu0 0.0
      %6685 = vmatprep.subr.mxu0 0.0
      %6686 = vmatpush1.msra.mxu0 0.0
      %6687 = vmatprep.subr.mxu0 0.0
      %6688 = vmatpush1.msra.mxu0 0.0
      %6689 = vmatprep.subr.mxu0 0.0
      %6690 = vmatpush1.msra.mxu0 0.0
      %6691 = vmatprep.subr.mxu0 0.0
      %6692 = vmatpush1.msra.mxu0 0.0
      %6693 = vmatprep.subr.mxu0 0.0
      %6694 = vmatpush1.msra.mxu0 0.0
      %6695 = vmatprep.subr.mxu0 0.0
      %6696 = vmatpush1.msra.mxu0 0.0
      %6697 = vmatprep.subr.mxu0 0.0
      %6698 = vmatpush1.msra.mxu0 0.0
      %6699 = vmatprep.subr.mxu0 0.0
      %6700 = vmatpush1.msra.mxu0 0.0
      %6701 = vmatprep.subr.mxu0 0.0
      %6702 = vmatpush1.msra.mxu0 0.0
      %6703 = vmatprep.subr.mxu0 0.0
      %6704 = vmatpush1.msra.mxu0 0.0
      %6705 = vmatprep.subr.mxu0 0.0
      %6706 = vmatpush1.msra.mxu0 0.0
      %6707 = vmatprep.subr.mxu0 0.0
      %6708 = vmatpush1.msra.mxu0 0.0
      %6709 = vmatprep.subr.mxu0 0.0
      %6710 = vmatpush1.msra.mxu0 0.0
      %6711 = vmatprep.subr.mxu0 0.0
      %6712 = vmatpush1.msra.mxu0 0.0
      %6713 = vmatprep.subr.mxu0 0.0
      %6714 = vmatpush1.msra.mxu0 0.0
      %6715 = vmatprep.subr.mxu0 0.0
      %6716 = vmatpush1.msra.mxu0 0.0
      %6717 = vmatprep.mubr.f32.mxu0 0.0
      %6718 = vmatmul.mubr.f32.gmra.mrb[0].mxu0 %v6558
      %v6719 = vpop.f32.mrb[0].mxu0
      %v6720 = vadd.f32 0.0, %v6719
      %v6721 = vpop.f32.mrb[0].mxu0
      %6722 = vmatprep.mubr.f32.mxu0 0.0
      %6723 = vmatmul.mubr.f32.gmra.mrb[0].mxu0 %v6561
      %v6724 = vpop.f32.mrb[0].mxu0
      %v6725 = vadd.f32 0.0, %v6724
      %v6726 = vpop.f32.mrb[0].mxu0
      %6727 = vmatprep.mubr.f32.mxu0 0.0
      %6728 = vmatmul.mubr.f32.gmra.mrb[0].mxu0 %v6564
      %v6729 = vpop.f32.mrb[0].mxu0
      %v6730 = vadd.f32 0.0, %v6729
      %v6731 = vpop.f32.mrb[0].mxu0
      %6732 = vmatprep.mubr.f32.mxu0 0.0
      %6733 = vmatmul.mubr.f32.gmra.mrb[0].mxu0 %v6567
      %v6734 = vpop.f32.mrb[0].mxu0
      %v6735 = vadd.f32 0.0, %v6734
      %v6736 = vpop.f32.mrb[0].mxu0
      %6737 = vmatprep.mubr.f32.mxu0 0.0
      %6738 = vmatmul.mubr.f32.gmra.mrb[0].mxu0 %v6570
      %v6739 = vpop.f32.mrb[0].mxu0
      %v6740 = vadd.f32 0.0, %v6739
      %v6741 = vpop.f32.mrb[0].mxu0
      %6742 = vmatprep.mubr.f32.mxu0 0.0
      %6743 = vmatmul.mubr.f32.gmra.mrb[0].mxu0 %v6573
      %v6744 = vpop.f32.mrb[0].mxu0
      %v6745 = vadd.f32 0.0, %v6744
      %v6746 = vpop.f32.mrb[0].mxu0
      %6747 = vmatprep.mubr.f32.mxu0 0.0
      %6748 = vmatmul.mubr.f32.gmra.mrb[0].mxu0 %v6576
      %v6749 = vpop.f32.mrb[0].mxu0
      %v6750 = vadd.f32 0.0, %v6749
      %v6751 = vpop.f32.mrb[0].mxu0
      %6752 = vmatprep.mubr.f32.mxu0 0.0
      %6753 = vmatmul.mubr.f32.gmra.mrb[0].mxu0 %v6579
      %v6754 = vpop.f32.mrb[0].mxu0
      %v6755 = vadd.f32 0.0, %v6754
      %v6756 = vpop.f32.mrb[0].mxu0
      %6757 = vmatprep.mubr.f32.mxu0 0.0
      %6758 = vmatmul.mubr.f32.gmra.mrb[0].mxu0 %v6582
      %v6759 = vpop.f32.mrb[0].mxu0
      %v6760 = vadd.f32 0.0, %v6759
      %v6761 = vpop.f32.mrb[0].mxu0
      %6762 = vmatprep.mubr.f32.mxu0 0.0
      %6763 = vmatmul.mubr.f32.gmra.mrb[0].mxu0 %v6585
      %v6764 = vpop.f32.mrb[0].mxu0
      %v6765 = vadd.f32 0.0, %v6764
      %v6766 = vpop.f32.mrb[0].mxu0
      %6767 = vmatprep.mubr.f32.mxu0 0.0
      %6768 = vmatmul.mubr.f32.gmra.mrb[0].mxu0 %v6588
      %v6769 = vpop.f32.mrb[0].mxu0
      %v6770 = vadd.f32 0.0, %v6769
      %v6771 = vpop.f32.mrb[0].mxu0
      %6772 = vmatprep.mubr.f32.mxu0 0.0
      %6773 = vmatmul.mubr.f32.gmra.mrb[0].mxu0 %v6591
      %v6774 = vpop.f32.mrb[0].mxu0
      %v6775 = vadd.f32 0.0, %v6774
      %v6776 = vpop.f32.mrb[0].mxu0
      %6777 = vmatprep.mubr.f32.mxu0 0.0
      %6778 = vmatmul.mubr.f32.gmra.mrb[0].mxu0 %v6594
      %v6779 = vpop.f32.mrb[0].mxu0
      %v6780 = vadd.f32 0.0, %v6779
      %v6781 = vpop.f32.mrb[0].mxu0
      %6782 = vmatprep.mubr.f32.mxu0 0.0
      %6783 = vmatmul.mubr.f32.gmra.mrb[0].mxu0 %v6597
      %v6784 = vpop.f32.mrb[0].mxu0
      %v6785 = vadd.f32 0.0, %v6784
      %v6786 = vpop.f32.mrb[0].mxu0
      %6787 = vmatprep.mubr.f32.mxu0 0.0
      %6788 = vmatmul.mubr.f32.gmra.mrb[0].mxu0 %v6600
      %v6789 = vpop.f32.mrb[0].mxu0
      %v6790 = vadd.f32 0.0, %v6789
      %v6791 = vpop.f32.mrb[0].mxu0
      %6792 = vmatprep.mubr.f32.mxu0 0.0
      %6793 = vmatmul.mubr.f32.gmra.mrb[0].mxu0 %v6603
      %v6794 = vpop.f32.mrb[0].mxu0
      %v6795 = vadd.f32 0.0, %v6794
      %v6796 = vpop.f32.mrb[0].mxu0
      %6797 = vmatprep.mubr.f32.mxu0 0.0
      %6798 = vmatmul.mubr.f32.gmra.mrb[0].mxu0 %v6606
      %v6799 = vpop.f32.mrb[0].mxu0
      %v6800 = vadd.f32 0.0, %v6799
      %v6801 = vpop.f32.mrb[0].mxu0
      %6802 = vmatprep.mubr.f32.mxu0 0.0
      %6803 = vmatmul.mubr.f32.gmra.mrb[0].mxu0 %v6609
      %v6804 = vpop.f32.mrb[0].mxu0
      %v6805 = vadd.f32 0.0, %v6804
      %v6806 = vpop.f32.mrb[0].mxu0
      %6807 = vmatprep.mubr.f32.mxu0 0.0
      %6808 = vmatmul.mubr.f32.gmra.mrb[0].mxu0 %v6612
      %v6809 = vpop.f32.mrb[0].mxu0
      %v6810 = vadd.f32 0.0, %v6809
      %v6811 = vpop.f32.mrb[0].mxu0
      %6812 = vmatprep.mubr.f32.mxu0 0.0
      %6813 = vmatmul.mubr.f32.gmra.mrb[0].mxu0 %v6615
      %v6814 = vpop.f32.mrb[0].mxu0
      %v6815 = vadd.f32 0.0, %v6814
      %v6816 = vpop.f32.mrb[0].mxu0
      %6817 = vmatprep.mubr.f32.mxu0 0.0
      %6818 = vmatmul.mubr.f32.gmra.mrb[0].mxu0 %v6618
      %v6819 = vpop.f32.mrb[0].mxu0
      %v6820 = vadd.f32 0.0, %v6819
      %v6821 = vpop.f32.mrb[0].mxu0
      %6822 = vmatprep.mubr.f32.mxu0 0.0
      %6823 = vmatmul.mubr.f32.gmra.mrb[0].mxu0 %v6621
      %v6824 = vpop.f32.mrb[0].mxu0
      %v6825 = vadd.f32 0.0, %v6824
      %v6826 = vpop.f32.mrb[0].mxu0
      %6827 = vmatprep.mubr.f32.mxu0 0.0
      %6828 = vmatmul.mubr.f32.gmra.mrb[0].mxu0 %v6624
      %v6829 = vpop.f32.mrb[0].mxu0
      %v6830 = vadd.f32 0.0, %v6829
      %v6831 = vpop.f32.mrb[0].mxu0
      %6832 = vmatprep.mubr.f32.mxu0 0.0
      %6833 = vmatmul.mubr.f32.gmra.mrb[0].mxu0 %v6627
      %v6834 = vpop.f32.mrb[0].mxu0
      %v6835 = vadd.f32 0.0, %v6834
      %v6836 = vpop.f32.mrb[0].mxu0
      %6837 = vmatprep.mubr.f32.mxu0 0.0
      %6838 = vmatmul.mubr.f32.gmra.mrb[0].mxu0 %v6630
      %v6839 = vpop.f32.mrb[0].mxu0
      %v6840 = vadd.f32 0.0, %v6839
      %v6841 = vpop.f32.mrb[0].mxu0
      %6842 = vmatprep.mubr.f32.mxu0 0.0
      %6843 = vmatmul.mubr.f32.gmra.mrb[0].mxu0 %v6633
      %v6844 = vpop.f32.mrb[0].mxu0
      %v6845 = vadd.f32 0.0, %v6844
      %v6846 = vpop.f32.mrb[0].mxu0
      %6847 = vmatprep.mubr.f32.mxu0 0.0
      %6848 = vmatmul.mubr.f32.gmra.mrb[0].mxu0 %v6636
      %v6849 = vpop.f32.mrb[0].mxu0
      %v6850 = vadd.f32 0.0, %v6849
      %v6851 = vpop.f32.mrb[0].mxu0
      %6852 = vmatprep.mubr.f32.mxu0 0.0
      %6853 = vmatmul.mubr.f32.gmra.mrb[0].mxu0 %v6639
      %v6854 = vpop.f32.mrb[0].mxu0
      %v6855 = vadd.f32 0.0, %v6854
      %v6856 = vpop.f32.mrb[0].mxu0
      %6857 = vmatprep.mubr.f32.mxu0 0.0
      %6858 = vmatmul.mubr.f32.gmra.mrb[0].mxu0 %v6642
      %v6859 = vpop.f32.mrb[0].mxu0
      %v6860 = vadd.f32 0.0, %v6859
      %v6861 = vpop.f32.mrb[0].mxu0
      %6862 = vmatprep.mubr.f32.mxu0 0.0
      %6863 = vmatmul.mubr.f32.gmra.mrb[0].mxu0 %v6645
      %v6864 = vpop.f32.mrb[0].mxu0
      %v6865 = vadd.f32 0.0, %v6864
      %v6866 = vpop.f32.mrb[0].mxu0
      %6867 = vmatprep.mubr.f32.mxu0 0.0
      %6868 = vmatmul.mubr.f32.gmra.mrb[0].mxu0 %v6648
      %v6869 = vpop.f32.mrb[0].mxu0
      %v6870 = vadd.f32 0.0, %v6869
      %v6871 = vpop.f32.mrb[0].mxu0
      %6872 = vmatprep.mubr.f32.mxu0 0.0
      %6873 = vmatmul.mubr.f32.gmra.mrb[0].mxu0 %v6651
      %v6874 = vpop.f32.mrb[0].mxu0
      %v6875 = vadd.f32 0.0, %v6874
      %v6876 = vpop.f32.mrb[0].mxu0
      %6877 = vdwg.mxu0
      %v6878 = vadd.f32 %v6358, %v6720
      %v6879 = vadd.f32 %v6363, %v6725
      %v6880 = vadd.f32 %v6368, %v6730
      %v6881 = vadd.f32 %v6373, %v6735
      %v6882 = vadd.f32 %v6378, %v6740
      %v6883 = vadd.f32 %v6383, %v6745
      %v6884 = vadd.f32 %v6388, %v6750
      %v6885 = vadd.f32 %v6393, %v6755
      %v6886 = vadd.f32 %v6398, %v6760
      %v6887 = vadd.f32 %v6403, %v6765
      %v6888 = vadd.f32 %v6408, %v6770
      %v6889 = vadd.f32 %v6413, %v6775
      %v6890 = vadd.f32 %v6418, %v6780
      %v6891 = vadd.f32 %v6423, %v6785
      %v6892 = vadd.f32 %v6428, %v6790
      %v6893 = vadd.f32 %v6433, %v6795
      %v6894 = vadd.f32 %v6438, %v6800
      %v6895 = vadd.f32 %v6443, %v6805
      %v6896 = vadd.f32 %v6448, %v6810
      %v6897 = vadd.f32 %v6453, %v6815
      %v6898 = vadd.f32 %v6458, %v6820
      %v6899 = vadd.f32 %v6463, %v6825
      %v6900 = vadd.f32 %v6468, %v6830
      %v6901 = vadd.f32 %v6473, %v6835
      %v6902 = vadd.f32 %v6478, %v6840
      %v6903 = vadd.f32 %v6483, %v6845
      %v6904 = vadd.f32 %v6488, %v6850
      %v6905 = vadd.f32 %v6493, %v6855
      %v6906 = vadd.f32 %v6498, %v6860
      %v6907 = vadd.f32 %v6503, %v6865
      %v6908 = vadd.f32 %v6508, %v6870
      %v6909 = vadd.f32 %v6513, %v6875
      %v6910 = vld [vmem:[%s5683] sm:$0xff]
      %v6911 = vld [vmem:[%s5683 + $0x8] sm:$0xff]
      %v6912 = vld [vmem:[%s5683 + $0x18] sm:$0xff]
      %v6913 = vld [vmem:[%s5683 + $0x20] sm:$0xff]
      %v6914 = vld [vmem:[%s5683 + $0x30] sm:$0xff]
      %v6915 = vld [vmem:[%s5683 + $0x38] sm:$0xff]
      %v6916 = vld [vmem:[%s5683 + $0x48] sm:$0xff]
      %v6917 = vld [vmem:[%s5683 + $0x50] sm:$0xff]
      %v6918 = vld [vmem:[%s5683 + $0x60] sm:$0xff]
      %v6919 = vld [vmem:[%s5683 + $0x68] sm:$0xff]
      %v6920 = vld [vmem:[%s5683 + $0x78] sm:$0xff]
      %v6921 = vld [vmem:[%s5683 + $0x80] sm:$0xff]
      %v6922 = vld [vmem:[%s5683 + $0x90] sm:$0xff]
      %v6923 = vld [vmem:[%s5683 + $0x98] sm:$0xff]
      %v6924 = vld [vmem:[%s5683 + $0xa8] sm:$0xff]
      %v6925 = vld [vmem:[%s5683 + $0xb0] sm:$0xff]
      %v6926 = vld [vmem:[%s5683 + $0xc0] sm:$0xff]
      %v6927 = vld [vmem:[%s5683 + $0xc8] sm:$0xff]
      %v6928 = vld [vmem:[%s5683 + $0xd8] sm:$0xff]
      %v6929 = vld [vmem:[%s5683 + $0xe0] sm:$0xff]
      %v6930 = vld [vmem:[%s5683 + $0xf0] sm:$0xff]
      %v6931 = vld [vmem:[%s5683 + $0xf8] sm:$0xff]
      %v6932 = vld [vmem:[%s5683 + $0x108] sm:$0xff]
      %v6933 = vld [vmem:[%s5683 + $0x110] sm:$0xff]
      %v6934 = vld [vmem:[%s5683 + $0x120] sm:$0xff]
      %v6935 = vld [vmem:[%s5683 + $0x128] sm:$0xff]
      %v6936 = vld [vmem:[%s5683 + $0x138] sm:$0xff]
      %v6937 = vld [vmem:[%s5683 + $0x140] sm:$0xff]
      %v6938 = vld [vmem:[%s5683 + $0x150] sm:$0xff]
      %v6939 = vld [vmem:[%s5683 + $0x158] sm:$0xff]
      %v6940 = vld [vmem:[%s5683 + $0x168] sm:$0xff]
      %v6941 = vld [vmem:[%s5683 + $0x170] sm:$0xff]
      %s6942 = scalar_lea.vmem %s5, 192
      %v6943 = vld [vmem:[%s6942] sm:$0xff]
      %v6944 = vld [vmem:[%s6942 + $0x8] sm:$0xff]
      %v6945 = vld [vmem:[%s6942 + $0x10] sm:$0xff]
      %v6946 = vld [vmem:[%s6942 + $0x18] sm:$0xff]
      %v6947 = vld [vmem:[%s6942 + $0x20] sm:$0xff]
      %v6948 = vld [vmem:[%s6942 + $0x28] sm:$0xff]
      %v6949 = vld [vmem:[%s6942 + $0x30] sm:$0xff]
      %v6950 = vld [vmem:[%s6942 + $0x38] sm:$0xff]
      %v6952 = vsel %vm1588, %v6910, 0
      %v6955 = vsel %vm1588, %v6911, 0
      %v6958 = vsel %vm1588, %v6912, 0
      %v6961 = vsel %vm1588, %v6913, 0
      %v6964 = vsel %vm1588, %v6914, 0
      %v6967 = vsel %vm1588, %v6915, 0
      %v6970 = vsel %vm1588, %v6916, 0
      %v6973 = vsel %vm1588, %v6917, 0
      %v6976 = vsel %vm1588, %v6918, 0
      %v6979 = vsel %vm1588, %v6919, 0
      %v6982 = vsel %vm1588, %v6920, 0
      %v6985 = vsel %vm1588, %v6921, 0
      %v6988 = vsel %vm1588, %v6922, 0
      %v6991 = vsel %vm1588, %v6923, 0
      %v6994 = vsel %vm1588, %v6924, 0
      %v6997 = vsel %vm1588, %v6925, 0
      %v7000 = vsel %vm1588, %v6926, 0
      %v7003 = vsel %vm1588, %v6927, 0
      %v7006 = vsel %vm1588, %v6928, 0
      %v7009 = vsel %vm1588, %v6929, 0
      %v7012 = vsel %vm1588, %v6930, 0
      %v7015 = vsel %vm1588, %v6931, 0
      %v7018 = vsel %vm1588, %v6932, 0
      %v7021 = vsel %vm1588, %v6933, 0
      %v7024 = vsel %vm1588, %v6934, 0
      %v7027 = vsel %vm1588, %v6935, 0
      %v7030 = vsel %vm1588, %v6936, 0
      %v7033 = vsel %vm1588, %v6937, 0
      %v7036 = vsel %vm1588, %v6938, 0
      %v7039 = vsel %vm1588, %v6939, 0
      %v7042 = vsel %vm1588, %v6940, 0
      %v7045 = vsel %vm1588, %v6941, 0
      %7047 = vmatprep.subr.mxu0 0.0
      %7048 = vmatpush1.msra.mxu0 %v6943
      %7049 = vmatprep.subr.mxu0 0.0
      %7050 = vmatpush1.msra.mxu0 %v6944
      %7051 = vmatprep.subr.mxu0 0.0
      %7052 = vmatpush1.msra.mxu0 %v6945
      %7053 = vmatprep.subr.mxu0 0.0
      %7054 = vmatpush1.msra.mxu0 %v6946
      %7055 = vmatprep.subr.mxu0 0.0
      %7056 = vmatpush1.msra.mxu0 %v6947
      %7057 = vmatprep.subr.mxu0 0.0
      %7058 = vmatpush1.msra.mxu0 %v6948
      %7059 = vmatprep.subr.mxu0 0.0
      %7060 = vmatpush1.msra.mxu0 %v6949
      %7061 = vmatprep.subr.mxu0 0.0
      %7062 = vmatpush1.msra.mxu0 %v6950
      %7063 = vmatprep.subr.mxu0 0.0
      %7064 = vmatpush1.msra.mxu0 0.0
      %7065 = vmatprep.subr.mxu0 0.0
      %7066 = vmatpush1.msra.mxu0 0.0
      %7067 = vmatprep.subr.mxu0 0.0
      %7068 = vmatpush1.msra.mxu0 0.0
      %7069 = vmatprep.subr.mxu0 0.0
      %7070 = vmatpush1.msra.mxu0 0.0
      %7071 = vmatprep.subr.mxu0 0.0
      %7072 = vmatpush1.msra.mxu0 0.0
      %7073 = vmatprep.subr.mxu0 0.0
      %7074 = vmatpush1.msra.mxu0 0.0
      %7075 = vmatprep.subr.mxu0 0.0
      %7076 = vmatpush1.msra.mxu0 0.0
      %7077 = vmatprep.subr.mxu0 0.0
      %7078 = vmatpush1.msra.mxu0 0.0
      %7079 = vmatprep.subr.mxu0 0.0
      %7080 = vmatpush1.msra.mxu0 0.0
      %7081 = vmatprep.subr.mxu0 0.0
      %7082 = vmatpush1.msra.mxu0 0.0
      %7083 = vmatprep.subr.mxu0 0.0
      %7084 = vmatpush1.msra.mxu0 0.0
      %7085 = vmatprep.subr.mxu0 0.0
      %7086 = vmatpush1.msra.mxu0 0.0
      %7087 = vmatprep.subr.mxu0 0.0
      %7088 = vmatpush1.msra.mxu0 0.0
      %7089 = vmatprep.subr.mxu0 0.0
      %7090 = vmatpush1.msra.mxu0 0.0
      %7091 = vmatprep.subr.mxu0 0.0
      %7092 = vmatpush1.msra.mxu0 0.0
      %7093 = vmatprep.subr.mxu0 0.0
      %7094 = vmatpush1.msra.mxu0 0.0
      %7095 = vmatprep.subr.mxu0 0.0
      %7096 = vmatpush1.msra.mxu0 0.0
      %7097 = vmatprep.subr.mxu0 0.0
      %7098 = vmatpush1.msra.mxu0 0.0
      %7099 = vmatprep.subr.mxu0 0.0
      %7100 = vmatpush1.msra.mxu0 0.0
      %7101 = vmatprep.subr.mxu0 0.0
      %7102 = vmatpush1.msra.mxu0 0.0
      %7103 = vmatprep.subr.mxu0 0.0
      %7104 = vmatpush1.msra.mxu0 0.0
      %7105 = vmatprep.subr.mxu0 0.0
      %7106 = vmatpush1.msra.mxu0 0.0
      %7107 = vmatprep.subr.mxu0 0.0
      %7108 = vmatpush1.msra.mxu0 0.0
      %7109 = vmatprep.subr.mxu0 0.0
      %7110 = vmatpush1.msra.mxu0 0.0
      %7111 = vmatprep.mubr.f32.mxu0 0.0
      %7112 = vmatmul.mubr.f32.gmra.mrb[0].mxu0 %v6952
      %v7113 = vpop.f32.mrb[0].mxu0
      %v7114 = vadd.f32 0.0, %v7113
      %v7115 = vpop.f32.mrb[0].mxu0
      %7116 = vmatprep.mubr.f32.mxu0 0.0
      %7117 = vmatmul.mubr.f32.gmra.mrb[0].mxu0 %v6955
      %v7118 = vpop.f32.mrb[0].mxu0
      %v7119 = vadd.f32 0.0, %v7118
      %v7120 = vpop.f32.mrb[0].mxu0
      %7121 = vmatprep.mubr.f32.mxu0 0.0
      %7122 = vmatmul.mubr.f32.gmra.mrb[0].mxu0 %v6958
      %v7123 = vpop.f32.mrb[0].mxu0
      %v7124 = vadd.f32 0.0, %v7123
      %v7125 = vpop.f32.mrb[0].mxu0
      %7126 = vmatprep.mubr.f32.mxu0 0.0
      %7127 = vmatmul.mubr.f32.gmra.mrb[0].mxu0 %v6961
      %v7128 = vpop.f32.mrb[0].mxu0
      %v7129 = vadd.f32 0.0, %v7128
      %v7130 = vpop.f32.mrb[0].mxu0
      %7131 = vmatprep.mubr.f32.mxu0 0.0
      %7132 = vmatmul.mubr.f32.gmra.mrb[0].mxu0 %v6964
      %v7133 = vpop.f32.mrb[0].mxu0
      %v7134 = vadd.f32 0.0, %v7133
      %v7135 = vpop.f32.mrb[0].mxu0
      %7136 = vmatprep.mubr.f32.mxu0 0.0
      %7137 = vmatmul.mubr.f32.gmra.mrb[0].mxu0 %v6967
      %v7138 = vpop.f32.mrb[0].mxu0
      %v7139 = vadd.f32 0.0, %v7138
      %v7140 = vpop.f32.mrb[0].mxu0
      %7141 = vmatprep.mubr.f32.mxu0 0.0
      %7142 = vmatmul.mubr.f32.gmra.mrb[0].mxu0 %v6970
      %v7143 = vpop.f32.mrb[0].mxu0
      %v7144 = vadd.f32 0.0, %v7143
      %v7145 = vpop.f32.mrb[0].mxu0
      %7146 = vmatprep.mubr.f32.mxu0 0.0
      %7147 = vmatmul.mubr.f32.gmra.mrb[0].mxu0 %v6973
      %v7148 = vpop.f32.mrb[0].mxu0
      %v7149 = vadd.f32 0.0, %v7148
      %v7150 = vpop.f32.mrb[0].mxu0
      %7151 = vmatprep.mubr.f32.mxu0 0.0
      %7152 = vmatmul.mubr.f32.gmra.mrb[0].mxu0 %v6976
      %v7153 = vpop.f32.mrb[0].mxu0
      %v7154 = vadd.f32 0.0, %v7153
      %v7155 = vpop.f32.mrb[0].mxu0
      %7156 = vmatprep.mubr.f32.mxu0 0.0
      %7157 = vmatmul.mubr.f32.gmra.mrb[0].mxu0 %v6979
      %v7158 = vpop.f32.mrb[0].mxu0
      %v7159 = vadd.f32 0.0, %v7158
      %v7160 = vpop.f32.mrb[0].mxu0
      %7161 = vmatprep.mubr.f32.mxu0 0.0
      %7162 = vmatmul.mubr.f32.gmra.mrb[0].mxu0 %v6982
      %v7163 = vpop.f32.mrb[0].mxu0
      %v7164 = vadd.f32 0.0, %v7163
      %v7165 = vpop.f32.mrb[0].mxu0
      %7166 = vmatprep.mubr.f32.mxu0 0.0
      %7167 = vmatmul.mubr.f32.gmra.mrb[0].mxu0 %v6985
      %v7168 = vpop.f32.mrb[0].mxu0
      %v7169 = vadd.f32 0.0, %v7168
      %v7170 = vpop.f32.mrb[0].mxu0
      %7171 = vmatprep.mubr.f32.mxu0 0.0
      %7172 = vmatmul.mubr.f32.gmra.mrb[0].mxu0 %v6988
      %v7173 = vpop.f32.mrb[0].mxu0
      %v7174 = vadd.f32 0.0, %v7173
      %v7175 = vpop.f32.mrb[0].mxu0
      %7176 = vmatprep.mubr.f32.mxu0 0.0
      %7177 = vmatmul.mubr.f32.gmra.mrb[0].mxu0 %v6991
      %v7178 = vpop.f32.mrb[0].mxu0
      %v7179 = vadd.f32 0.0, %v7178
      %v7180 = vpop.f32.mrb[0].mxu0
      %7181 = vmatprep.mubr.f32.mxu0 0.0
      %7182 = vmatmul.mubr.f32.gmra.mrb[0].mxu0 %v6994
      %v7183 = vpop.f32.mrb[0].mxu0
      %v7184 = vadd.f32 0.0, %v7183
      %v7185 = vpop.f32.mrb[0].mxu0
      %7186 = vmatprep.mubr.f32.mxu0 0.0
      %7187 = vmatmul.mubr.f32.gmra.mrb[0].mxu0 %v6997
      %v7188 = vpop.f32.mrb[0].mxu0
      %v7189 = vadd.f32 0.0, %v7188
      %v7190 = vpop.f32.mrb[0].mxu0
      %7191 = vmatprep.mubr.f32.mxu0 0.0
      %7192 = vmatmul.mubr.f32.gmra.mrb[0].mxu0 %v7000
      %v7193 = vpop.f32.mrb[0].mxu0
      %v7194 = vadd.f32 0.0, %v7193
      %v7195 = vpop.f32.mrb[0].mxu0
      %7196 = vmatprep.mubr.f32.mxu0 0.0
      %7197 = vmatmul.mubr.f32.gmra.mrb[0].mxu0 %v7003
      %v7198 = vpop.f32.mrb[0].mxu0
      %v7199 = vadd.f32 0.0, %v7198
      %v7200 = vpop.f32.mrb[0].mxu0
      %7201 = vmatprep.mubr.f32.mxu0 0.0
      %7202 = vmatmul.mubr.f32.gmra.mrb[0].mxu0 %v7006
      %v7203 = vpop.f32.mrb[0].mxu0
      %v7204 = vadd.f32 0.0, %v7203
      %v7205 = vpop.f32.mrb[0].mxu0
      %7206 = vmatprep.mubr.f32.mxu0 0.0
      %7207 = vmatmul.mubr.f32.gmra.mrb[0].mxu0 %v7009
      %v7208 = vpop.f32.mrb[0].mxu0
      %v7209 = vadd.f32 0.0, %v7208
      %v7210 = vpop.f32.mrb[0].mxu0
      %7211 = vmatprep.mubr.f32.mxu0 0.0
      %7212 = vmatmul.mubr.f32.gmra.mrb[0].mxu0 %v7012
      %v7213 = vpop.f32.mrb[0].mxu0
      %v7214 = vadd.f32 0.0, %v7213
      %v7215 = vpop.f32.mrb[0].mxu0
      %7216 = vmatprep.mubr.f32.mxu0 0.0
      %7217 = vmatmul.mubr.f32.gmra.mrb[0].mxu0 %v7015
      %v7218 = vpop.f32.mrb[0].mxu0
      %v7219 = vadd.f32 0.0, %v7218
      %v7220 = vpop.f32.mrb[0].mxu0
      %7221 = vmatprep.mubr.f32.mxu0 0.0
      %7222 = vmatmul.mubr.f32.gmra.mrb[0].mxu0 %v7018
      %v7223 = vpop.f32.mrb[0].mxu0
      %v7224 = vadd.f32 0.0, %v7223
      %v7225 = vpop.f32.mrb[0].mxu0
      %7226 = vmatprep.mubr.f32.mxu0 0.0
      %7227 = vmatmul.mubr.f32.gmra.mrb[0].mxu0 %v7021
      %v7228 = vpop.f32.mrb[0].mxu0
      %v7229 = vadd.f32 0.0, %v7228
      %v7230 = vpop.f32.mrb[0].mxu0
      %7231 = vmatprep.mubr.f32.mxu0 0.0
      %7232 = vmatmul.mubr.f32.gmra.mrb[0].mxu0 %v7024
      %v7233 = vpop.f32.mrb[0].mxu0
      %v7234 = vadd.f32 0.0, %v7233
      %v7235 = vpop.f32.mrb[0].mxu0
      %7236 = vmatprep.mubr.f32.mxu0 0.0
      %7237 = vmatmul.mubr.f32.gmra.mrb[0].mxu0 %v7027
      %v7238 = vpop.f32.mrb[0].mxu0
      %v7239 = vadd.f32 0.0, %v7238
      %v7240 = vpop.f32.mrb[0].mxu0
      %7241 = vmatprep.mubr.f32.mxu0 0.0
      %7242 = vmatmul.mubr.f32.gmra.mrb[0].mxu0 %v7030
      %v7243 = vpop.f32.mrb[0].mxu0
      %v7244 = vadd.f32 0.0, %v7243
      %v7245 = vpop.f32.mrb[0].mxu0
      %7246 = vmatprep.mubr.f32.mxu0 0.0
      %7247 = vmatmul.mubr.f32.gmra.mrb[0].mxu0 %v7033
      %v7248 = vpop.f32.mrb[0].mxu0
      %v7249 = vadd.f32 0.0, %v7248
      %v7250 = vpop.f32.mrb[0].mxu0
      %7251 = vmatprep.mubr.f32.mxu0 0.0
      %7252 = vmatmul.mubr.f32.gmra.mrb[0].mxu0 %v7036
      %v7253 = vpop.f32.mrb[0].mxu0
      %v7254 = vadd.f32 0.0, %v7253
      %v7255 = vpop.f32.mrb[0].mxu0
      %7256 = vmatprep.mubr.f32.mxu0 0.0
      %7257 = vmatmul.mubr.f32.gmra.mrb[0].mxu0 %v7039
      %v7258 = vpop.f32.mrb[0].mxu0
      %v7259 = vadd.f32 0.0, %v7258
      %v7260 = vpop.f32.mrb[0].mxu0
      %7261 = vmatprep.mubr.f32.mxu0 0.0
      %7262 = vmatmul.mubr.f32.gmra.mrb[0].mxu0 %v7042
      %v7263 = vpop.f32.mrb[0].mxu0
      %v7264 = vadd.f32 0.0, %v7263
      %v7265 = vpop.f32.mrb[0].mxu0
      %7266 = vmatprep.mubr.f32.mxu0 0.0
      %7267 = vmatmul.mubr.f32.gmra.mrb[0].mxu0 %v7045
      %v7268 = vpop.f32.mrb[0].mxu0
      %v7269 = vadd.f32 0.0, %v7268
      %v7270 = vpop.f32.mrb[0].mxu0
      %7271 = vdwg.mxu0
      %v7272 = vadd.f32 %v6878, %v7114
      %v7273 = vadd.f32 %v6879, %v7119
      %v7274 = vadd.f32 %v6880, %v7124
      %v7275 = vadd.f32 %v6881, %v7129
      %v7276 = vadd.f32 %v6882, %v7134
      %v7277 = vadd.f32 %v6883, %v7139
      %v7278 = vadd.f32 %v6884, %v7144
      %v7279 = vadd.f32 %v6885, %v7149
      %v7280 = vadd.f32 %v6886, %v7154
      %v7281 = vadd.f32 %v6887, %v7159
      %v7282 = vadd.f32 %v6888, %v7164
      %v7283 = vadd.f32 %v6889, %v7169
      %v7284 = vadd.f32 %v6890, %v7174
      %v7285 = vadd.f32 %v6891, %v7179
      %v7286 = vadd.f32 %v6892, %v7184
      %v7287 = vadd.f32 %v6893, %v7189
      %v7288 = vadd.f32 %v6894, %v7194
      %v7289 = vadd.f32 %v6895, %v7199
      %v7290 = vadd.f32 %v6896, %v7204
      %v7291 = vadd.f32 %v6897, %v7209
      %v7292 = vadd.f32 %v6898, %v7214
      %v7293 = vadd.f32 %v6899, %v7219
      %v7294 = vadd.f32 %v6900, %v7224
      %v7295 = vadd.f32 %v6901, %v7229
      %v7296 = vadd.f32 %v6902, %v7234
      %v7297 = vadd.f32 %v6903, %v7239
      %v7298 = vadd.f32 %v6904, %v7244
      %v7299 = vadd.f32 %v6905, %v7249
      %v7300 = vadd.f32 %v6906, %v7254
      %v7301 = vadd.f32 %v6907, %v7259
      %v7302 = vadd.f32 %v6908, %v7264
      %v7303 = vadd.f32 %v6909, %v7269
      %v7304 = vld [vmem:[%s5683 + $0x1] sm:$0xff]
      %v7305 = vld [vmem:[%s5683 + $0x9] sm:$0xff]
      %v7306 = vld [vmem:[%s5683 + $0x19] sm:$0xff]
      %v7307 = vld [vmem:[%s5683 + $0x21] sm:$0xff]
      %v7308 = vld [vmem:[%s5683 + $0x31] sm:$0xff]
      %v7309 = vld [vmem:[%s5683 + $0x39] sm:$0xff]
      %v7310 = vld [vmem:[%s5683 + $0x49] sm:$0xff]
      %v7311 = vld [vmem:[%s5683 + $0x51] sm:$0xff]
      %v7312 = vld [vmem:[%s5683 + $0x61] sm:$0xff]
      %v7313 = vld [vmem:[%s5683 + $0x69] sm:$0xff]
      %v7314 = vld [vmem:[%s5683 + $0x79] sm:$0xff]
      %v7315 = vld [vmem:[%s5683 + $0x81] sm:$0xff]
      %v7316 = vld [vmem:[%s5683 + $0x91] sm:$0xff]
      %v7317 = vld [vmem:[%s5683 + $0x99] sm:$0xff]
      %v7318 = vld [vmem:[%s5683 + $0xa9] sm:$0xff]
      %v7319 = vld [vmem:[%s5683 + $0xb1] sm:$0xff]
      %v7320 = vld [vmem:[%s5683 + $0xc1] sm:$0xff]
      %v7321 = vld [vmem:[%s5683 + $0xc9] sm:$0xff]
      %v7322 = vld [vmem:[%s5683 + $0xd9] sm:$0xff]
      %v7323 = vld [vmem:[%s5683 + $0xe1] sm:$0xff]
      %v7324 = vld [vmem:[%s5683 + $0xf1] sm:$0xff]
      %v7325 = vld [vmem:[%s5683 + $0xf9] sm:$0xff]
      %v7326 = vld [vmem:[%s5683 + $0x109] sm:$0xff]
      %v7327 = vld [vmem:[%s5683 + $0x111] sm:$0xff]
      %v7328 = vld [vmem:[%s5683 + $0x121] sm:$0xff]
      %v7329 = vld [vmem:[%s5683 + $0x129] sm:$0xff]
      %v7330 = vld [vmem:[%s5683 + $0x139] sm:$0xff]
      %v7331 = vld [vmem:[%s5683 + $0x141] sm:$0xff]
      %v7332 = vld [vmem:[%s5683 + $0x151] sm:$0xff]
      %v7333 = vld [vmem:[%s5683 + $0x159] sm:$0xff]
      %v7334 = vld [vmem:[%s5683 + $0x169] sm:$0xff]
      %v7335 = vld [vmem:[%s5683 + $0x171] sm:$0xff]
      %s7336 = scalar_lea.vmem %s5, 256
      %v7337 = vld [vmem:[%s7336] sm:$0xff]
      %v7338 = vld [vmem:[%s7336 + $0x8] sm:$0xff]
      %v7339 = vld [vmem:[%s7336 + $0x10] sm:$0xff]
      %v7340 = vld [vmem:[%s7336 + $0x18] sm:$0xff]
      %v7341 = vld [vmem:[%s7336 + $0x20] sm:$0xff]
      %v7342 = vld [vmem:[%s7336 + $0x28] sm:$0xff]
      %v7343 = vld [vmem:[%s7336 + $0x30] sm:$0xff]
      %v7344 = vld [vmem:[%s7336 + $0x38] sm:$0xff]
      %v7346 = vsel %vm1588, %v7304, 0
      %v7349 = vsel %vm1588, %v7305, 0
      %v7352 = vsel %vm1588, %v7306, 0
      %v7355 = vsel %vm1588, %v7307, 0
      %v7358 = vsel %vm1588, %v7308, 0
      %v7361 = vsel %vm1588, %v7309, 0
      %v7364 = vsel %vm1588, %v7310, 0
      %v7367 = vsel %vm1588, %v7311, 0
      %v7370 = vsel %vm1588, %v7312, 0
      %v7373 = vsel %vm1588, %v7313, 0
      %v7376 = vsel %vm1588, %v7314, 0
      %v7379 = vsel %vm1588, %v7315, 0
      %v7382 = vsel %vm1588, %v7316, 0
      %v7385 = vsel %vm1588, %v7317, 0
      %v7388 = vsel %vm1588, %v7318, 0
      %v7391 = vsel %vm1588, %v7319, 0
      %v7394 = vsel %vm1588, %v7320, 0
      %v7397 = vsel %vm1588, %v7321, 0
      %v7400 = vsel %vm1588, %v7322, 0
      %v7403 = vsel %vm1588, %v7323, 0
      %v7406 = vsel %vm1588, %v7324, 0
      %v7409 = vsel %vm1588, %v7325, 0
      %v7412 = vsel %vm1588, %v7326, 0
      %v7415 = vsel %vm1588, %v7327, 0
      %v7418 = vsel %vm1588, %v7328, 0
      %v7421 = vsel %vm1588, %v7329, 0
      %v7424 = vsel %vm1588, %v7330, 0
      %v7427 = vsel %vm1588, %v7331, 0
      %v7430 = vsel %vm1588, %v7332, 0
      %v7433 = vsel %vm1588, %v7333, 0
      %v7436 = vsel %vm1588, %v7334, 0
      %v7439 = vsel %vm1588, %v7335, 0
      %7441 = vmatprep.subr.mxu0 0.0
      %7442 = vmatpush1.msra.mxu0 %v7337
      %7443 = vmatprep.subr.mxu0 0.0
      %7444 = vmatpush1.msra.mxu0 %v7338
      %7445 = vmatprep.subr.mxu0 0.0
      %7446 = vmatpush1.msra.mxu0 %v7339
      %7447 = vmatprep.subr.mxu0 0.0
      %7448 = vmatpush1.msra.mxu0 %v7340
      %7449 = vmatprep.subr.mxu0 0.0
      %7450 = vmatpush1.msra.mxu0 %v7341
      %7451 = vmatprep.subr.mxu0 0.0
      %7452 = vmatpush1.msra.mxu0 %v7342
      %7453 = vmatprep.subr.mxu0 0.0
      %7454 = vmatpush1.msra.mxu0 %v7343
      %7455 = vmatprep.subr.mxu0 0.0
      %7456 = vmatpush1.msra.mxu0 %v7344
      %7457 = vmatprep.subr.mxu0 0.0
      %7458 = vmatpush1.msra.mxu0 0.0
      %7459 = vmatprep.subr.mxu0 0.0
      %7460 = vmatpush1.msra.mxu0 0.0
      %7461 = vmatprep.subr.mxu0 0.0
      %7462 = vmatpush1.msra.mxu0 0.0
      %7463 = vmatprep.subr.mxu0 0.0
      %7464 = vmatpush1.msra.mxu0 0.0
      %7465 = vmatprep.subr.mxu0 0.0
      %7466 = vmatpush1.msra.mxu0 0.0
      %7467 = vmatprep.subr.mxu0 0.0
      %7468 = vmatpush1.msra.mxu0 0.0
      %7469 = vmatprep.subr.mxu0 0.0
      %7470 = vmatpush1.msra.mxu0 0.0
      %7471 = vmatprep.subr.mxu0 0.0
      %7472 = vmatpush1.msra.mxu0 0.0
      %7473 = vmatprep.subr.mxu0 0.0
      %7474 = vmatpush1.msra.mxu0 0.0
      %7475 = vmatprep.subr.mxu0 0.0
      %7476 = vmatpush1.msra.mxu0 0.0
      %7477 = vmatprep.subr.mxu0 0.0
      %7478 = vmatpush1.msra.mxu0 0.0
      %7479 = vmatprep.subr.mxu0 0.0
      %7480 = vmatpush1.msra.mxu0 0.0
      %7481 = vmatprep.subr.mxu0 0.0
      %7482 = vmatpush1.msra.mxu0 0.0
      %7483 = vmatprep.subr.mxu0 0.0
      %7484 = vmatpush1.msra.mxu0 0.0
      %7485 = vmatprep.subr.mxu0 0.0
      %7486 = vmatpush1.msra.mxu0 0.0
      %7487 = vmatprep.subr.mxu0 0.0
      %7488 = vmatpush1.msra.mxu0 0.0
      %7489 = vmatprep.subr.mxu0 0.0
      %7490 = vmatpush1.msra.mxu0 0.0
      %7491 = vmatprep.subr.mxu0 0.0
      %7492 = vmatpush1.msra.mxu0 0.0
      %7493 = vmatprep.subr.mxu0 0.0
      %7494 = vmatpush1.msra.mxu0 0.0
      %7495 = vmatprep.subr.mxu0 0.0
      %7496 = vmatpush1.msra.mxu0 0.0
      %7497 = vmatprep.subr.mxu0 0.0
      %7498 = vmatpush1.msra.mxu0 0.0
      %7499 = vmatprep.subr.mxu0 0.0
      %7500 = vmatpush1.msra.mxu0 0.0
      %7501 = vmatprep.subr.mxu0 0.0
      %7502 = vmatpush1.msra.mxu0 0.0
      %7503 = vmatprep.subr.mxu0 0.0
      %7504 = vmatpush1.msra.mxu0 0.0
      %7505 = vmatprep.mubr.f32.mxu0 0.0
      %7506 = vmatmul.mubr.f32.gmra.mrb[0].mxu0 %v7346
      %v7507 = vpop.f32.mrb[0].mxu0
      %v7508 = vadd.f32 0.0, %v7507
      %v7509 = vpop.f32.mrb[0].mxu0
      %7510 = vmatprep.mubr.f32.mxu0 0.0
      %7511 = vmatmul.mubr.f32.gmra.mrb[0].mxu0 %v7349
      %v7512 = vpop.f32.mrb[0].mxu0
      %v7513 = vadd.f32 0.0, %v7512
      %v7514 = vpop.f32.mrb[0].mxu0
      %7515 = vmatprep.mubr.f32.mxu0 0.0
      %7516 = vmatmul.mubr.f32.gmra.mrb[0].mxu0 %v7352
      %v7517 = vpop.f32.mrb[0].mxu0
      %v7518 = vadd.f32 0.0, %v7517
      %v7519 = vpop.f32.mrb[0].mxu0
      %7520 = vmatprep.mubr.f32.mxu0 0.0
      %7521 = vmatmul.mubr.f32.gmra.mrb[0].mxu0 %v7355
      %v7522 = vpop.f32.mrb[0].mxu0
      %v7523 = vadd.f32 0.0, %v7522
      %v7524 = vpop.f32.mrb[0].mxu0
      %7525 = vmatprep.mubr.f32.mxu0 0.0
      %7526 = vmatmul.mubr.f32.gmra.mrb[0].mxu0 %v7358
      %v7527 = vpop.f32.mrb[0].mxu0
      %v7528 = vadd.f32 0.0, %v7527
      %v7529 = vpop.f32.mrb[0].mxu0
      %7530 = vmatprep.mubr.f32.mxu0 0.0
      %7531 = vmatmul.mubr.f32.gmra.mrb[0].mxu0 %v7361
      %v7532 = vpop.f32.mrb[0].mxu0
      %v7533 = vadd.f32 0.0, %v7532
      %v7534 = vpop.f32.mrb[0].mxu0
      %7535 = vmatprep.mubr.f32.mxu0 0.0
      %7536 = vmatmul.mubr.f32.gmra.mrb[0].mxu0 %v7364
      %v7537 = vpop.f32.mrb[0].mxu0
      %v7538 = vadd.f32 0.0, %v7537
      %v7539 = vpop.f32.mrb[0].mxu0
      %7540 = vmatprep.mubr.f32.mxu0 0.0
      %7541 = vmatmul.mubr.f32.gmra.mrb[0].mxu0 %v7367
      %v7542 = vpop.f32.mrb[0].mxu0
      %v7543 = vadd.f32 0.0, %v7542
      %v7544 = vpop.f32.mrb[0].mxu0
      %7545 = vmatprep.mubr.f32.mxu0 0.0
      %7546 = vmatmul.mubr.f32.gmra.mrb[0].mxu0 %v7370
      %v7547 = vpop.f32.mrb[0].mxu0
      %v7548 = vadd.f32 0.0, %v7547
      %v7549 = vpop.f32.mrb[0].mxu0
      %7550 = vmatprep.mubr.f32.mxu0 0.0
      %7551 = vmatmul.mubr.f32.gmra.mrb[0].mxu0 %v7373
      %v7552 = vpop.f32.mrb[0].mxu0
      %v7553 = vadd.f32 0.0, %v7552
      %v7554 = vpop.f32.mrb[0].mxu0
      %7555 = vmatprep.mubr.f32.mxu0 0.0
      %7556 = vmatmul.mubr.f32.gmra.mrb[0].mxu0 %v7376
      %v7557 = vpop.f32.mrb[0].mxu0
      %v7558 = vadd.f32 0.0, %v7557
      %v7559 = vpop.f32.mrb[0].mxu0
      %7560 = vmatprep.mubr.f32.mxu0 0.0
      %7561 = vmatmul.mubr.f32.gmra.mrb[0].mxu0 %v7379
      %v7562 = vpop.f32.mrb[0].mxu0
      %v7563 = vadd.f32 0.0, %v7562
      %v7564 = vpop.f32.mrb[0].mxu0
      %7565 = vmatprep.mubr.f32.mxu0 0.0
      %7566 = vmatmul.mubr.f32.gmra.mrb[0].mxu0 %v7382
      %v7567 = vpop.f32.mrb[0].mxu0
      %v7568 = vadd.f32 0.0, %v7567
      %v7569 = vpop.f32.mrb[0].mxu0
      %7570 = vmatprep.mubr.f32.mxu0 0.0
      %7571 = vmatmul.mubr.f32.gmra.mrb[0].mxu0 %v7385
      %v7572 = vpop.f32.mrb[0].mxu0
      %v7573 = vadd.f32 0.0, %v7572
      %v7574 = vpop.f32.mrb[0].mxu0
      %7575 = vmatprep.mubr.f32.mxu0 0.0
      %7576 = vmatmul.mubr.f32.gmra.mrb[0].mxu0 %v7388
      %v7577 = vpop.f32.mrb[0].mxu0
      %v7578 = vadd.f32 0.0, %v7577
      %v7579 = vpop.f32.mrb[0].mxu0
      %7580 = vmatprep.mubr.f32.mxu0 0.0
      %7581 = vmatmul.mubr.f32.gmra.mrb[0].mxu0 %v7391
      %v7582 = vpop.f32.mrb[0].mxu0
      %v7583 = vadd.f32 0.0, %v7582
      %v7584 = vpop.f32.mrb[0].mxu0
      %7585 = vmatprep.mubr.f32.mxu0 0.0
      %7586 = vmatmul.mubr.f32.gmra.mrb[0].mxu0 %v7394
      %v7587 = vpop.f32.mrb[0].mxu0
      %v7588 = vadd.f32 0.0, %v7587
      %v7589 = vpop.f32.mrb[0].mxu0
      %7590 = vmatprep.mubr.f32.mxu0 0.0
      %7591 = vmatmul.mubr.f32.gmra.mrb[0].mxu0 %v7397
      %v7592 = vpop.f32.mrb[0].mxu0
      %v7593 = vadd.f32 0.0, %v7592
      %v7594 = vpop.f32.mrb[0].mxu0
      %7595 = vmatprep.mubr.f32.mxu0 0.0
      %7596 = vmatmul.mubr.f32.gmra.mrb[0].mxu0 %v7400
      %v7597 = vpop.f32.mrb[0].mxu0
      %v7598 = vadd.f32 0.0, %v7597
      %v7599 = vpop.f32.mrb[0].mxu0
      %7600 = vmatprep.mubr.f32.mxu0 0.0
      %7601 = vmatmul.mubr.f32.gmra.mrb[0].mxu0 %v7403
      %v7602 = vpop.f32.mrb[0].mxu0
      %v7603 = vadd.f32 0.0, %v7602
      %v7604 = vpop.f32.mrb[0].mxu0
      %7605 = vmatprep.mubr.f32.mxu0 0.0
      %7606 = vmatmul.mubr.f32.gmra.mrb[0].mxu0 %v7406
      %v7607 = vpop.f32.mrb[0].mxu0
      %v7608 = vadd.f32 0.0, %v7607
      %v7609 = vpop.f32.mrb[0].mxu0
      %7610 = vmatprep.mubr.f32.mxu0 0.0
      %7611 = vmatmul.mubr.f32.gmra.mrb[0].mxu0 %v7409
      %v7612 = vpop.f32.mrb[0].mxu0
      %v7613 = vadd.f32 0.0, %v7612
      %v7614 = vpop.f32.mrb[0].mxu0
      %7615 = vmatprep.mubr.f32.mxu0 0.0
      %7616 = vmatmul.mubr.f32.gmra.mrb[0].mxu0 %v7412
      %v7617 = vpop.f32.mrb[0].mxu0
      %v7618 = vadd.f32 0.0, %v7617
      %v7619 = vpop.f32.mrb[0].mxu0
      %7620 = vmatprep.mubr.f32.mxu0 0.0
      %7621 = vmatmul.mubr.f32.gmra.mrb[0].mxu0 %v7415
      %v7622 = vpop.f32.mrb[0].mxu0
      %v7623 = vadd.f32 0.0, %v7622
      %v7624 = vpop.f32.mrb[0].mxu0
      %7625 = vmatprep.mubr.f32.mxu0 0.0
      %7626 = vmatmul.mubr.f32.gmra.mrb[0].mxu0 %v7418
      %v7627 = vpop.f32.mrb[0].mxu0
      %v7628 = vadd.f32 0.0, %v7627
      %v7629 = vpop.f32.mrb[0].mxu0
      %7630 = vmatprep.mubr.f32.mxu0 0.0
      %7631 = vmatmul.mubr.f32.gmra.mrb[0].mxu0 %v7421
      %v7632 = vpop.f32.mrb[0].mxu0
      %v7633 = vadd.f32 0.0, %v7632
      %v7634 = vpop.f32.mrb[0].mxu0
      %7635 = vmatprep.mubr.f32.mxu0 0.0
      %7636 = vmatmul.mubr.f32.gmra.mrb[0].mxu0 %v7424
      %v7637 = vpop.f32.mrb[0].mxu0
      %v7638 = vadd.f32 0.0, %v7637
      %v7639 = vpop.f32.mrb[0].mxu0
      %7640 = vmatprep.mubr.f32.mxu0 0.0
      %7641 = vmatmul.mubr.f32.gmra.mrb[0].mxu0 %v7427
      %v7642 = vpop.f32.mrb[0].mxu0
      %v7643 = vadd.f32 0.0, %v7642
      %v7644 = vpop.f32.mrb[0].mxu0
      %7645 = vmatprep.mubr.f32.mxu0 0.0
      %7646 = vmatmul.mubr.f32.gmra.mrb[0].mxu0 %v7430
      %v7647 = vpop.f32.mrb[0].mxu0
      %v7648 = vadd.f32 0.0, %v7647
      %v7649 = vpop.f32.mrb[0].mxu0
      %7650 = vmatprep.mubr.f32.mxu0 0.0
      %7651 = vmatmul.mubr.f32.gmra.mrb[0].mxu0 %v7433
      %v7652 = vpop.f32.mrb[0].mxu0
      %v7653 = vadd.f32 0.0, %v7652
      %v7654 = vpop.f32.mrb[0].mxu0
      %7655 = vmatprep.mubr.f32.mxu0 0.0
      %7656 = vmatmul.mubr.f32.gmra.mrb[0].mxu0 %v7436
      %v7657 = vpop.f32.mrb[0].mxu0
      %v7658 = vadd.f32 0.0, %v7657
      %v7659 = vpop.f32.mrb[0].mxu0
      %7660 = vmatprep.mubr.f32.mxu0 0.0
      %7661 = vmatmul.mubr.f32.gmra.mrb[0].mxu0 %v7439
      %v7662 = vpop.f32.mrb[0].mxu0
      %v7663 = vadd.f32 0.0, %v7662
      %v7664 = vpop.f32.mrb[0].mxu0
      %7665 = vdwg.mxu0
      %v7666 = vadd.f32 %v7272, %v7508
      %v7667 = vadd.f32 %v7273, %v7513
      %v7668 = vadd.f32 %v7274, %v7518
      %v7669 = vadd.f32 %v7275, %v7523
      %v7670 = vadd.f32 %v7276, %v7528
      %v7671 = vadd.f32 %v7277, %v7533
      %v7672 = vadd.f32 %v7278, %v7538
      %v7673 = vadd.f32 %v7279, %v7543
      %v7674 = vadd.f32 %v7280, %v7548
      %v7675 = vadd.f32 %v7281, %v7553
      %v7676 = vadd.f32 %v7282, %v7558
      %v7677 = vadd.f32 %v7283, %v7563
      %v7678 = vadd.f32 %v7284, %v7568
      %v7679 = vadd.f32 %v7285, %v7573
      %v7680 = vadd.f32 %v7286, %v7578
      %v7681 = vadd.f32 %v7287, %v7583
      %v7682 = vadd.f32 %v7288, %v7588
      %v7683 = vadd.f32 %v7289, %v7593
      %v7684 = vadd.f32 %v7290, %v7598
      %v7685 = vadd.f32 %v7291, %v7603
      %v7686 = vadd.f32 %v7292, %v7608
      %v7687 = vadd.f32 %v7293, %v7613
      %v7688 = vadd.f32 %v7294, %v7618
      %v7689 = vadd.f32 %v7295, %v7623
      %v7690 = vadd.f32 %v7296, %v7628
      %v7691 = vadd.f32 %v7297, %v7633
      %v7692 = vadd.f32 %v7298, %v7638
      %v7693 = vadd.f32 %v7299, %v7643
      %v7694 = vadd.f32 %v7300, %v7648
      %v7695 = vadd.f32 %v7301, %v7653
      %v7696 = vadd.f32 %v7302, %v7658
      %v7697 = vadd.f32 %v7303, %v7663
      %v7698 = vld [vmem:[%s5683 + $0x2] sm:$0xff]
      %v7699 = vld [vmem:[%s5683 + $0xa] sm:$0xff]
      %v7700 = vld [vmem:[%s5683 + $0x1a] sm:$0xff]
      %v7701 = vld [vmem:[%s5683 + $0x22] sm:$0xff]
      %v7702 = vld [vmem:[%s5683 + $0x32] sm:$0xff]
      %v7703 = vld [vmem:[%s5683 + $0x3a] sm:$0xff]
      %v7704 = vld [vmem:[%s5683 + $0x4a] sm:$0xff]
      %v7705 = vld [vmem:[%s5683 + $0x52] sm:$0xff]
      %v7706 = vld [vmem:[%s5683 + $0x62] sm:$0xff]
      %v7707 = vld [vmem:[%s5683 + $0x6a] sm:$0xff]
      %v7708 = vld [vmem:[%s5683 + $0x7a] sm:$0xff]
      %v7709 = vld [vmem:[%s5683 + $0x82] sm:$0xff]
      %v7710 = vld [vmem:[%s5683 + $0x92] sm:$0xff]
      %v7711 = vld [vmem:[%s5683 + $0x9a] sm:$0xff]
      %v7712 = vld [vmem:[%s5683 + $0xaa] sm:$0xff]
      %v7713 = vld [vmem:[%s5683 + $0xb2] sm:$0xff]
      %v7714 = vld [vmem:[%s5683 + $0xc2] sm:$0xff]
      %v7715 = vld [vmem:[%s5683 + $0xca] sm:$0xff]
      %v7716 = vld [vmem:[%s5683 + $0xda] sm:$0xff]
      %v7717 = vld [vmem:[%s5683 + $0xe2] sm:$0xff]
      %v7718 = vld [vmem:[%s5683 + $0xf2] sm:$0xff]
      %v7719 = vld [vmem:[%s5683 + $0xfa] sm:$0xff]
      %v7720 = vld [vmem:[%s5683 + $0x10a] sm:$0xff]
      %v7721 = vld [vmem:[%s5683 + $0x112] sm:$0xff]
      %v7722 = vld [vmem:[%s5683 + $0x122] sm:$0xff]
      %v7723 = vld [vmem:[%s5683 + $0x12a] sm:$0xff]
      %v7724 = vld [vmem:[%s5683 + $0x13a] sm:$0xff]
      %v7725 = vld [vmem:[%s5683 + $0x142] sm:$0xff]
      %v7726 = vld [vmem:[%s5683 + $0x152] sm:$0xff]
      %v7727 = vld [vmem:[%s5683 + $0x15a] sm:$0xff]
      %v7728 = vld [vmem:[%s5683 + $0x16a] sm:$0xff]
      %v7729 = vld [vmem:[%s5683 + $0x172] sm:$0xff]
      %s7730 = scalar_lea.vmem %s5, 320
      %v7731 = vld [vmem:[%s7730] sm:$0xff]
      %v7732 = vld [vmem:[%s7730 + $0x8] sm:$0xff]
      %v7733 = vld [vmem:[%s7730 + $0x10] sm:$0xff]
      %v7734 = vld [vmem:[%s7730 + $0x18] sm:$0xff]
      %v7735 = vld [vmem:[%s7730 + $0x20] sm:$0xff]
      %v7736 = vld [vmem:[%s7730 + $0x28] sm:$0xff]
      %v7737 = vld [vmem:[%s7730 + $0x30] sm:$0xff]
      %v7738 = vld [vmem:[%s7730 + $0x38] sm:$0xff]
      %v7740 = vsel %vm1588, %v7698, 0
      %v7743 = vsel %vm1588, %v7699, 0
      %v7746 = vsel %vm1588, %v7700, 0
      %v7749 = vsel %vm1588, %v7701, 0
      %v7752 = vsel %vm1588, %v7702, 0
      %v7755 = vsel %vm1588, %v7703, 0
      %v7758 = vsel %vm1588, %v7704, 0
      %v7761 = vsel %vm1588, %v7705, 0
      %v7764 = vsel %vm1588, %v7706, 0
      %v7767 = vsel %vm1588, %v7707, 0
      %v7770 = vsel %vm1588, %v7708, 0
      %v7773 = vsel %vm1588, %v7709, 0
      %v7776 = vsel %vm1588, %v7710, 0
      %v7779 = vsel %vm1588, %v7711, 0
      %v7782 = vsel %vm1588, %v7712, 0
      %v7785 = vsel %vm1588, %v7713, 0
      %v7788 = vsel %vm1588, %v7714, 0
      %v7791 = vsel %vm1588, %v7715, 0
      %v7794 = vsel %vm1588, %v7716, 0
      %v7797 = vsel %vm1588, %v7717, 0
      %v7800 = vsel %vm1588, %v7718, 0
      %v7803 = vsel %vm1588, %v7719, 0
      %v7806 = vsel %vm1588, %v7720, 0
      %v7809 = vsel %vm1588, %v7721, 0
      %v7812 = vsel %vm1588, %v7722, 0
      %v7815 = vsel %vm1588, %v7723, 0
      %v7818 = vsel %vm1588, %v7724, 0
      %v7821 = vsel %vm1588, %v7725, 0
      %v7824 = vsel %vm1588, %v7726, 0
      %v7827 = vsel %vm1588, %v7727, 0
      %v7830 = vsel %vm1588, %v7728, 0
      %v7833 = vsel %vm1588, %v7729, 0
      %7835 = vmatprep.subr.mxu0 0.0
      %7836 = vmatpush1.msra.mxu0 %v7731
      %7837 = vmatprep.subr.mxu0 0.0
      %7838 = vmatpush1.msra.mxu0 %v7732
      %7839 = vmatprep.subr.mxu0 0.0
      %7840 = vmatpush1.msra.mxu0 %v7733
      %7841 = vmatprep.subr.mxu0 0.0
      %7842 = vmatpush1.msra.mxu0 %v7734
      %7843 = vmatprep.subr.mxu0 0.0
      %7844 = vmatpush1.msra.mxu0 %v7735
      %7845 = vmatprep.subr.mxu0 0.0
      %7846 = vmatpush1.msra.mxu0 %v7736
      %7847 = vmatprep.subr.mxu0 0.0
      %7848 = vmatpush1.msra.mxu0 %v7737
      %7849 = vmatprep.subr.mxu0 0.0
      %7850 = vmatpush1.msra.mxu0 %v7738
      %7851 = vmatprep.subr.mxu0 0.0
      %7852 = vmatpush1.msra.mxu0 0.0
      %7853 = vmatprep.subr.mxu0 0.0
      %7854 = vmatpush1.msra.mxu0 0.0
      %7855 = vmatprep.subr.mxu0 0.0
      %7856 = vmatpush1.msra.mxu0 0.0
      %7857 = vmatprep.subr.mxu0 0.0
      %7858 = vmatpush1.msra.mxu0 0.0
      %7859 = vmatprep.subr.mxu0 0.0
      %7860 = vmatpush1.msra.mxu0 0.0
      %7861 = vmatprep.subr.mxu0 0.0
      %7862 = vmatpush1.msra.mxu0 0.0
      %7863 = vmatprep.subr.mxu0 0.0
      %7864 = vmatpush1.msra.mxu0 0.0
      %7865 = vmatprep.subr.mxu0 0.0
      %7866 = vmatpush1.msra.mxu0 0.0
      %7867 = vmatprep.subr.mxu0 0.0
      %7868 = vmatpush1.msra.mxu0 0.0
      %7869 = vmatprep.subr.mxu0 0.0
      %7870 = vmatpush1.msra.mxu0 0.0
      %7871 = vmatprep.subr.mxu0 0.0
      %7872 = vmatpush1.msra.mxu0 0.0
      %7873 = vmatprep.subr.mxu0 0.0
      %7874 = vmatpush1.msra.mxu0 0.0
      %7875 = vmatprep.subr.mxu0 0.0
      %7876 = vmatpush1.msra.mxu0 0.0
      %7877 = vmatprep.subr.mxu0 0.0
      %7878 = vmatpush1.msra.mxu0 0.0
      %7879 = vmatprep.subr.mxu0 0.0
      %7880 = vmatpush1.msra.mxu0 0.0
      %7881 = vmatprep.subr.mxu0 0.0
      %7882 = vmatpush1.msra.mxu0 0.0
      %7883 = vmatprep.subr.mxu0 0.0
      %7884 = vmatpush1.msra.mxu0 0.0
      %7885 = vmatprep.subr.mxu0 0.0
      %7886 = vmatpush1.msra.mxu0 0.0
      %7887 = vmatprep.subr.mxu0 0.0
      %7888 = vmatpush1.msra.mxu0 0.0
      %7889 = vmatprep.subr.mxu0 0.0
      %7890 = vmatpush1.msra.mxu0 0.0
      %7891 = vmatprep.subr.mxu0 0.0
      %7892 = vmatpush1.msra.mxu0 0.0
      %7893 = vmatprep.subr.mxu0 0.0
      %7894 = vmatpush1.msra.mxu0 0.0
      %7895 = vmatprep.subr.mxu0 0.0
      %7896 = vmatpush1.msra.mxu0 0.0
      %7897 = vmatprep.subr.mxu0 0.0
      %7898 = vmatpush1.msra.mxu0 0.0
      %7899 = vmatprep.mubr.f32.mxu0 0.0
      %7900 = vmatmul.mubr.f32.gmra.mrb[0].mxu0 %v7740
      %v7901 = vpop.f32.mrb[0].mxu0
      %v7902 = vadd.f32 0.0, %v7901
      %v7903 = vpop.f32.mrb[0].mxu0
      %7904 = vmatprep.mubr.f32.mxu0 0.0
      %7905 = vmatmul.mubr.f32.gmra.mrb[0].mxu0 %v7743
      %v7906 = vpop.f32.mrb[0].mxu0
      %v7907 = vadd.f32 0.0, %v7906
      %v7908 = vpop.f32.mrb[0].mxu0
      %7909 = vmatprep.mubr.f32.mxu0 0.0
      %7910 = vmatmul.mubr.f32.gmra.mrb[0].mxu0 %v7746
      %v7911 = vpop.f32.mrb[0].mxu0
      %v7912 = vadd.f32 0.0, %v7911
      %v7913 = vpop.f32.mrb[0].mxu0
      %7914 = vmatprep.mubr.f32.mxu0 0.0
      %7915 = vmatmul.mubr.f32.gmra.mrb[0].mxu0 %v7749
      %v7916 = vpop.f32.mrb[0].mxu0
      %v7917 = vadd.f32 0.0, %v7916
      %v7918 = vpop.f32.mrb[0].mxu0
      %7919 = vmatprep.mubr.f32.mxu0 0.0
      %7920 = vmatmul.mubr.f32.gmra.mrb[0].mxu0 %v7752
      %v7921 = vpop.f32.mrb[0].mxu0
      %v7922 = vadd.f32 0.0, %v7921
      %v7923 = vpop.f32.mrb[0].mxu0
      %7924 = vmatprep.mubr.f32.mxu0 0.0
      %7925 = vmatmul.mubr.f32.gmra.mrb[0].mxu0 %v7755
      %v7926 = vpop.f32.mrb[0].mxu0
      %v7927 = vadd.f32 0.0, %v7926
      %v7928 = vpop.f32.mrb[0].mxu0
      %7929 = vmatprep.mubr.f32.mxu0 0.0
      %7930 = vmatmul.mubr.f32.gmra.mrb[0].mxu0 %v7758
      %v7931 = vpop.f32.mrb[0].mxu0
      %v7932 = vadd.f32 0.0, %v7931
      %v7933 = vpop.f32.mrb[0].mxu0
      %7934 = vmatprep.mubr.f32.mxu0 0.0
      %7935 = vmatmul.mubr.f32.gmra.mrb[0].mxu0 %v7761
      %v7936 = vpop.f32.mrb[0].mxu0
      %v7937 = vadd.f32 0.0, %v7936
      %v7938 = vpop.f32.mrb[0].mxu0
      %7939 = vmatprep.mubr.f32.mxu0 0.0
      %7940 = vmatmul.mubr.f32.gmra.mrb[0].mxu0 %v7764
      %v7941 = vpop.f32.mrb[0].mxu0
      %v7942 = vadd.f32 0.0, %v7941
      %v7943 = vpop.f32.mrb[0].mxu0
      %7944 = vmatprep.mubr.f32.mxu0 0.0
      %7945 = vmatmul.mubr.f32.gmra.mrb[0].mxu0 %v7767
      %v7946 = vpop.f32.mrb[0].mxu0
      %v7947 = vadd.f32 0.0, %v7946
      %v7948 = vpop.f32.mrb[0].mxu0
      %7949 = vmatprep.mubr.f32.mxu0 0.0
      %7950 = vmatmul.mubr.f32.gmra.mrb[0].mxu0 %v7770
      %v7951 = vpop.f32.mrb[0].mxu0
      %v7952 = vadd.f32 0.0, %v7951
      %v7953 = vpop.f32.mrb[0].mxu0
      %7954 = vmatprep.mubr.f32.mxu0 0.0
      %7955 = vmatmul.mubr.f32.gmra.mrb[0].mxu0 %v7773
      %v7956 = vpop.f32.mrb[0].mxu0
      %v7957 = vadd.f32 0.0, %v7956
      %v7958 = vpop.f32.mrb[0].mxu0
      %7959 = vmatprep.mubr.f32.mxu0 0.0
      %7960 = vmatmul.mubr.f32.gmra.mrb[0].mxu0 %v7776
      %v7961 = vpop.f32.mrb[0].mxu0
      %v7962 = vadd.f32 0.0, %v7961
      %v7963 = vpop.f32.mrb[0].mxu0
      %7964 = vmatprep.mubr.f32.mxu0 0.0
      %7965 = vmatmul.mubr.f32.gmra.mrb[0].mxu0 %v7779
      %v7966 = vpop.f32.mrb[0].mxu0
      %v7967 = vadd.f32 0.0, %v7966
      %v7968 = vpop.f32.mrb[0].mxu0
      %7969 = vmatprep.mubr.f32.mxu0 0.0
      %7970 = vmatmul.mubr.f32.gmra.mrb[0].mxu0 %v7782
      %v7971 = vpop.f32.mrb[0].mxu0
      %v7972 = vadd.f32 0.0, %v7971
      %v7973 = vpop.f32.mrb[0].mxu0
      %7974 = vmatprep.mubr.f32.mxu0 0.0
      %7975 = vmatmul.mubr.f32.gmra.mrb[0].mxu0 %v7785
      %v7976 = vpop.f32.mrb[0].mxu0
      %v7977 = vadd.f32 0.0, %v7976
      %v7978 = vpop.f32.mrb[0].mxu0
      %7979 = vmatprep.mubr.f32.mxu0 0.0
      %7980 = vmatmul.mubr.f32.gmra.mrb[0].mxu0 %v7788
      %v7981 = vpop.f32.mrb[0].mxu0
      %v7982 = vadd.f32 0.0, %v7981
      %v7983 = vpop.f32.mrb[0].mxu0
      %7984 = vmatprep.mubr.f32.mxu0 0.0
      %7985 = vmatmul.mubr.f32.gmra.mrb[0].mxu0 %v7791
      %v7986 = vpop.f32.mrb[0].mxu0
      %v7987 = vadd.f32 0.0, %v7986
      %v7988 = vpop.f32.mrb[0].mxu0
      %7989 = vmatprep.mubr.f32.mxu0 0.0
      %7990 = vmatmul.mubr.f32.gmra.mrb[0].mxu0 %v7794
      %v7991 = vpop.f32.mrb[0].mxu0
      %v7992 = vadd.f32 0.0, %v7991
      %v7993 = vpop.f32.mrb[0].mxu0
      %7994 = vmatprep.mubr.f32.mxu0 0.0
      %7995 = vmatmul.mubr.f32.gmra.mrb[0].mxu0 %v7797
      %v7996 = vpop.f32.mrb[0].mxu0
      %v7997 = vadd.f32 0.0, %v7996
      %v7998 = vpop.f32.mrb[0].mxu0
      %7999 = vmatprep.mubr.f32.mxu0 0.0
      %8000 = vmatmul.mubr.f32.gmra.mrb[0].mxu0 %v7800
      %v8001 = vpop.f32.mrb[0].mxu0
      %v8002 = vadd.f32 0.0, %v8001
      %v8003 = vpop.f32.mrb[0].mxu0
      %8004 = vmatprep.mubr.f32.mxu0 0.0
      %8005 = vmatmul.mubr.f32.gmra.mrb[0].mxu0 %v7803
      %v8006 = vpop.f32.mrb[0].mxu0
      %v8007 = vadd.f32 0.0, %v8006
      %v8008 = vpop.f32.mrb[0].mxu0
      %8009 = vmatprep.mubr.f32.mxu0 0.0
      %8010 = vmatmul.mubr.f32.gmra.mrb[0].mxu0 %v7806
      %v8011 = vpop.f32.mrb[0].mxu0
      %v8012 = vadd.f32 0.0, %v8011
      %v8013 = vpop.f32.mrb[0].mxu0
      %8014 = vmatprep.mubr.f32.mxu0 0.0
      %8015 = vmatmul.mubr.f32.gmra.mrb[0].mxu0 %v7809
      %v8016 = vpop.f32.mrb[0].mxu0
      %v8017 = vadd.f32 0.0, %v8016
      %v8018 = vpop.f32.mrb[0].mxu0
      %8019 = vmatprep.mubr.f32.mxu0 0.0
      %8020 = vmatmul.mubr.f32.gmra.mrb[0].mxu0 %v7812
      %v8021 = vpop.f32.mrb[0].mxu0
      %v8022 = vadd.f32 0.0, %v8021
      %v8023 = vpop.f32.mrb[0].mxu0
      %8024 = vmatprep.mubr.f32.mxu0 0.0
      %8025 = vmatmul.mubr.f32.gmra.mrb[0].mxu0 %v7815
      %v8026 = vpop.f32.mrb[0].mxu0
      %v8027 = vadd.f32 0.0, %v8026
      %v8028 = vpop.f32.mrb[0].mxu0
      %8029 = vmatprep.mubr.f32.mxu0 0.0
      %8030 = vmatmul.mubr.f32.gmra.mrb[0].mxu0 %v7818
      %v8031 = vpop.f32.mrb[0].mxu0
      %v8032 = vadd.f32 0.0, %v8031
      %v8033 = vpop.f32.mrb[0].mxu0
      %8034 = vmatprep.mubr.f32.mxu0 0.0
      %8035 = vmatmul.mubr.f32.gmra.mrb[0].mxu0 %v7821
      %v8036 = vpop.f32.mrb[0].mxu0
      %v8037 = vadd.f32 0.0, %v8036
      %v8038 = vpop.f32.mrb[0].mxu0
      %8039 = vmatprep.mubr.f32.mxu0 0.0
      %8040 = vmatmul.mubr.f32.gmra.mrb[0].mxu0 %v7824
      %v8041 = vpop.f32.mrb[0].mxu0
      %v8042 = vadd.f32 0.0, %v8041
      %v8043 = vpop.f32.mrb[0].mxu0
      %8044 = vmatprep.mubr.f32.mxu0 0.0
      %8045 = vmatmul.mubr.f32.gmra.mrb[0].mxu0 %v7827
      %v8046 = vpop.f32.mrb[0].mxu0
      %v8047 = vadd.f32 0.0, %v8046
      %v8048 = vpop.f32.mrb[0].mxu0
      %8049 = vmatprep.mubr.f32.mxu0 0.0
      %8050 = vmatmul.mubr.f32.gmra.mrb[0].mxu0 %v7830
      %v8051 = vpop.f32.mrb[0].mxu0
      %v8052 = vadd.f32 0.0, %v8051
      %v8053 = vpop.f32.mrb[0].mxu0
      %8054 = vmatprep.mubr.f32.mxu0 0.0
      %8055 = vmatmul.mubr.f32.gmra.mrb[0].mxu0 %v7833
      %v8056 = vpop.f32.mrb[0].mxu0
      %v8057 = vadd.f32 0.0, %v8056
      %v8058 = vpop.f32.mrb[0].mxu0
      %8059 = vdwg.mxu0
      %v8060 = vadd.f32 %v7666, %v7902
      %v8061 = vadd.f32 %v7667, %v7907
      %v8062 = vadd.f32 %v7668, %v7912
      %v8063 = vadd.f32 %v7669, %v7917
      %v8064 = vadd.f32 %v7670, %v7922
      %v8065 = vadd.f32 %v7671, %v7927
      %v8066 = vadd.f32 %v7672, %v7932
      %v8067 = vadd.f32 %v7673, %v7937
      %v8068 = vadd.f32 %v7674, %v7942
      %v8069 = vadd.f32 %v7675, %v7947
      %v8070 = vadd.f32 %v7676, %v7952
      %v8071 = vadd.f32 %v7677, %v7957
      %v8072 = vadd.f32 %v7678, %v7962
      %v8073 = vadd.f32 %v7679, %v7967
      %v8074 = vadd.f32 %v7680, %v7972
      %v8075 = vadd.f32 %v7681, %v7977
      %v8076 = vadd.f32 %v7682, %v7982
      %v8077 = vadd.f32 %v7683, %v7987
      %v8078 = vadd.f32 %v7684, %v7992
      %v8079 = vadd.f32 %v7685, %v7997
      %v8080 = vadd.f32 %v7686, %v8002
      %v8081 = vadd.f32 %v7687, %v8007
      %v8082 = vadd.f32 %v7688, %v8012
      %v8083 = vadd.f32 %v7689, %v8017
      %v8084 = vadd.f32 %v7690, %v8022
      %v8085 = vadd.f32 %v7691, %v8027
      %v8086 = vadd.f32 %v7692, %v8032
      %v8087 = vadd.f32 %v7693, %v8037
      %v8088 = vadd.f32 %v7694, %v8042
      %v8089 = vadd.f32 %v7695, %v8047
      %v8090 = vadd.f32 %v7696, %v8052
      %v8091 = vadd.f32 %v7697, %v8057
      %s8092 = scalar_lea.vmem [#allocation5], 48
      %v8093 = vld [vmem:[%s8092] sm:$0xff]
      %v8094 = vld [vmem:[%s8092 + $0x8] sm:$0xff]
      %v8095 = vld [vmem:[%s8092 + $0x18] sm:$0xff]
      %v8096 = vld [vmem:[%s8092 + $0x20] sm:$0xff]
      %v8097 = vld [vmem:[%s8092 + $0x30] sm:$0xff]
      %v8098 = vld [vmem:[%s8092 + $0x38] sm:$0xff]
      %v8099 = vld [vmem:[%s8092 + $0x48] sm:$0xff]
      %v8100 = vld [vmem:[%s8092 + $0x50] sm:$0xff]
      %v8101 = vld [vmem:[%s8092 + $0x60] sm:$0xff]
      %v8102 = vld [vmem:[%s8092 + $0x68] sm:$0xff]
      %v8103 = vld [vmem:[%s8092 + $0x78] sm:$0xff]
      %v8104 = vld [vmem:[%s8092 + $0x80] sm:$0xff]
      %v8105 = vld [vmem:[%s8092 + $0x90] sm:$0xff]
      %v8106 = vld [vmem:[%s8092 + $0x98] sm:$0xff]
      %v8107 = vld [vmem:[%s8092 + $0xa8] sm:$0xff]
      %v8108 = vld [vmem:[%s8092 + $0xb0] sm:$0xff]
      %v8109 = vld [vmem:[%s8092 + $0xc0] sm:$0xff]
      %v8110 = vld [vmem:[%s8092 + $0xc8] sm:$0xff]
      %v8111 = vld [vmem:[%s8092 + $0xd8] sm:$0xff]
      %v8112 = vld [vmem:[%s8092 + $0xe0] sm:$0xff]
      %v8113 = vld [vmem:[%s8092 + $0xf0] sm:$0xff]
      %v8114 = vld [vmem:[%s8092 + $0xf8] sm:$0xff]
      %v8115 = vld [vmem:[%s8092 + $0x108] sm:$0xff]
      %v8116 = vld [vmem:[%s8092 + $0x110] sm:$0xff]
      %v8117 = vld [vmem:[%s8092 + $0x120] sm:$0xff]
      %v8118 = vld [vmem:[%s8092 + $0x128] sm:$0xff]
      %v8119 = vld [vmem:[%s8092 + $0x138] sm:$0xff]
      %v8120 = vld [vmem:[%s8092 + $0x140] sm:$0xff]
      %v8121 = vld [vmem:[%s8092 + $0x150] sm:$0xff]
      %v8122 = vld [vmem:[%s8092 + $0x158] sm:$0xff]
      %v8123 = vld [vmem:[%s8092 + $0x168] sm:$0xff]
      %v8124 = vld [vmem:[%s8092 + $0x170] sm:$0xff]
      %s8125 = scalar_lea.vmem %s5, 384
      %v8126 = vld [vmem:[%s8125] sm:$0xff]
      %v8127 = vld [vmem:[%s8125 + $0x8] sm:$0xff]
      %v8128 = vld [vmem:[%s8125 + $0x10] sm:$0xff]
      %v8129 = vld [vmem:[%s8125 + $0x18] sm:$0xff]
      %v8130 = vld [vmem:[%s8125 + $0x20] sm:$0xff]
      %v8131 = vld [vmem:[%s8125 + $0x28] sm:$0xff]
      %v8132 = vld [vmem:[%s8125 + $0x30] sm:$0xff]
      %v8133 = vld [vmem:[%s8125 + $0x38] sm:$0xff]
      %v8135 = vsel %vm1588, %v8093, 0
      %v8138 = vsel %vm1588, %v8094, 0
      %v8141 = vsel %vm1588, %v8095, 0
      %v8144 = vsel %vm1588, %v8096, 0
      %v8147 = vsel %vm1588, %v8097, 0
      %v8150 = vsel %vm1588, %v8098, 0
      %v8153 = vsel %vm1588, %v8099, 0
      %v8156 = vsel %vm1588, %v8100, 0
      %v8159 = vsel %vm1588, %v8101, 0
      %v8162 = vsel %vm1588, %v8102, 0
      %v8165 = vsel %vm1588, %v8103, 0
      %v8168 = vsel %vm1588, %v8104, 0
      %v8171 = vsel %vm1588, %v8105, 0
      %v8174 = vsel %vm1588, %v8106, 0
      %v8177 = vsel %vm1588, %v8107, 0
      %v8180 = vsel %vm1588, %v8108, 0
      %v8183 = vsel %vm1588, %v8109, 0
      %v8186 = vsel %vm1588, %v8110, 0
      %v8189 = vsel %vm1588, %v8111, 0
      %v8192 = vsel %vm1588, %v8112, 0
      %v8195 = vsel %vm1588, %v8113, 0
      %v8198 = vsel %vm1588, %v8114, 0
      %v8201 = vsel %vm1588, %v8115, 0
      %v8204 = vsel %vm1588, %v8116, 0
      %v8207 = vsel %vm1588, %v8117, 0
      %v8210 = vsel %vm1588, %v8118, 0
      %v8213 = vsel %vm1588, %v8119, 0
      %v8216 = vsel %vm1588, %v8120, 0
      %v8219 = vsel %vm1588, %v8121, 0
      %v8222 = vsel %vm1588, %v8122, 0
      %v8225 = vsel %vm1588, %v8123, 0
      %v8228 = vsel %vm1588, %v8124, 0
      %8230 = vmatprep.subr.mxu0 0.0
      %8231 = vmatpush1.msra.mxu0 %v8126
      %8232 = vmatprep.subr.mxu0 0.0
      %8233 = vmatpush1.msra.mxu0 %v8127
      %8234 = vmatprep.subr.mxu0 0.0
      %8235 = vmatpush1.msra.mxu0 %v8128
      %8236 = vmatprep.subr.mxu0 0.0
      %8237 = vmatpush1.msra.mxu0 %v8129
      %8238 = vmatprep.subr.mxu0 0.0
      %8239 = vmatpush1.msra.mxu0 %v8130
      %8240 = vmatprep.subr.mxu0 0.0
      %8241 = vmatpush1.msra.mxu0 %v8131
      %8242 = vmatprep.subr.mxu0 0.0
      %8243 = vmatpush1.msra.mxu0 %v8132
      %8244 = vmatprep.subr.mxu0 0.0
      %8245 = vmatpush1.msra.mxu0 %v8133
      %8246 = vmatprep.subr.mxu0 0.0
      %8247 = vmatpush1.msra.mxu0 0.0
      %8248 = vmatprep.subr.mxu0 0.0
      %8249 = vmatpush1.msra.mxu0 0.0
      %8250 = vmatprep.subr.mxu0 0.0
      %8251 = vmatpush1.msra.mxu0 0.0
      %8252 = vmatprep.subr.mxu0 0.0
      %8253 = vmatpush1.msra.mxu0 0.0
      %8254 = vmatprep.subr.mxu0 0.0
      %8255 = vmatpush1.msra.mxu0 0.0
      %8256 = vmatprep.subr.mxu0 0.0
      %8257 = vmatpush1.msra.mxu0 0.0
      %8258 = vmatprep.subr.mxu0 0.0
      %8259 = vmatpush1.msra.mxu0 0.0
      %8260 = vmatprep.subr.mxu0 0.0
      %8261 = vmatpush1.msra.mxu0 0.0
      %8262 = vmatprep.subr.mxu0 0.0
      %8263 = vmatpush1.msra.mxu0 0.0
      %8264 = vmatprep.subr.mxu0 0.0
      %8265 = vmatpush1.msra.mxu0 0.0
      %8266 = vmatprep.subr.mxu0 0.0
      %8267 = vmatpush1.msra.mxu0 0.0
      %8268 = vmatprep.subr.mxu0 0.0
      %8269 = vmatpush1.msra.mxu0 0.0
      %8270 = vmatprep.subr.mxu0 0.0
      %8271 = vmatpush1.msra.mxu0 0.0
      %8272 = vmatprep.subr.mxu0 0.0
      %8273 = vmatpush1.msra.mxu0 0.0
      %8274 = vmatprep.subr.mxu0 0.0
      %8275 = vmatpush1.msra.mxu0 0.0
      %8276 = vmatprep.subr.mxu0 0.0
      %8277 = vmatpush1.msra.mxu0 0.0
      %8278 = vmatprep.subr.mxu0 0.0
      %8279 = vmatpush1.msra.mxu0 0.0
      %8280 = vmatprep.subr.mxu0 0.0
      %8281 = vmatpush1.msra.mxu0 0.0
      %8282 = vmatprep.subr.mxu0 0.0
      %8283 = vmatpush1.msra.mxu0 0.0
      %8284 = vmatprep.subr.mxu0 0.0
      %8285 = vmatpush1.msra.mxu0 0.0
      %8286 = vmatprep.subr.mxu0 0.0
      %8287 = vmatpush1.msra.mxu0 0.0
      %8288 = vmatprep.subr.mxu0 0.0
      %8289 = vmatpush1.msra.mxu0 0.0
      %8290 = vmatprep.subr.mxu0 0.0
      %8291 = vmatpush1.msra.mxu0 0.0
      %8292 = vmatprep.subr.mxu0 0.0
      %8293 = vmatpush1.msra.mxu0 0.0
      %8294 = vmatprep.mubr.f32.mxu0 0.0
      %8295 = vmatmul.mubr.f32.gmra.mrb[0].mxu0 %v8135
      %v8296 = vpop.f32.mrb[0].mxu0
      %v8297 = vadd.f32 0.0, %v8296
      %v8298 = vpop.f32.mrb[0].mxu0
      %8299 = vmatprep.mubr.f32.mxu0 0.0
      %8300 = vmatmul.mubr.f32.gmra.mrb[0].mxu0 %v8138
      %v8301 = vpop.f32.mrb[0].mxu0
      %v8302 = vadd.f32 0.0, %v8301
      %v8303 = vpop.f32.mrb[0].mxu0
      %8304 = vmatprep.mubr.f32.mxu0 0.0
      %8305 = vmatmul.mubr.f32.gmra.mrb[0].mxu0 %v8141
      %v8306 = vpop.f32.mrb[0].mxu0
      %v8307 = vadd.f32 0.0, %v8306
      %v8308 = vpop.f32.mrb[0].mxu0
      %8309 = vmatprep.mubr.f32.mxu0 0.0
      %8310 = vmatmul.mubr.f32.gmra.mrb[0].mxu0 %v8144
      %v8311 = vpop.f32.mrb[0].mxu0
      %v8312 = vadd.f32 0.0, %v8311
      %v8313 = vpop.f32.mrb[0].mxu0
      %8314 = vmatprep.mubr.f32.mxu0 0.0
      %8315 = vmatmul.mubr.f32.gmra.mrb[0].mxu0 %v8147
      %v8316 = vpop.f32.mrb[0].mxu0
      %v8317 = vadd.f32 0.0, %v8316
      %v8318 = vpop.f32.mrb[0].mxu0
      %8319 = vmatprep.mubr.f32.mxu0 0.0
      %8320 = vmatmul.mubr.f32.gmra.mrb[0].mxu0 %v8150
      %v8321 = vpop.f32.mrb[0].mxu0
      %v8322 = vadd.f32 0.0, %v8321
      %v8323 = vpop.f32.mrb[0].mxu0
      %8324 = vmatprep.mubr.f32.mxu0 0.0
      %8325 = vmatmul.mubr.f32.gmra.mrb[0].mxu0 %v8153
      %v8326 = vpop.f32.mrb[0].mxu0
      %v8327 = vadd.f32 0.0, %v8326
      %v8328 = vpop.f32.mrb[0].mxu0
      %8329 = vmatprep.mubr.f32.mxu0 0.0
      %8330 = vmatmul.mubr.f32.gmra.mrb[0].mxu0 %v8156
      %v8331 = vpop.f32.mrb[0].mxu0
      %v8332 = vadd.f32 0.0, %v8331
      %v8333 = vpop.f32.mrb[0].mxu0
      %8334 = vmatprep.mubr.f32.mxu0 0.0
      %8335 = vmatmul.mubr.f32.gmra.mrb[0].mxu0 %v8159
      %v8336 = vpop.f32.mrb[0].mxu0
      %v8337 = vadd.f32 0.0, %v8336
      %v8338 = vpop.f32.mrb[0].mxu0
      %8339 = vmatprep.mubr.f32.mxu0 0.0
      %8340 = vmatmul.mubr.f32.gmra.mrb[0].mxu0 %v8162
      %v8341 = vpop.f32.mrb[0].mxu0
      %v8342 = vadd.f32 0.0, %v8341
      %v8343 = vpop.f32.mrb[0].mxu0
      %8344 = vmatprep.mubr.f32.mxu0 0.0
      %8345 = vmatmul.mubr.f32.gmra.mrb[0].mxu0 %v8165
      %v8346 = vpop.f32.mrb[0].mxu0
      %v8347 = vadd.f32 0.0, %v8346
      %v8348 = vpop.f32.mrb[0].mxu0
      %8349 = vmatprep.mubr.f32.mxu0 0.0
      %8350 = vmatmul.mubr.f32.gmra.mrb[0].mxu0 %v8168
      %v8351 = vpop.f32.mrb[0].mxu0
      %v8352 = vadd.f32 0.0, %v8351
      %v8353 = vpop.f32.mrb[0].mxu0
      %8354 = vmatprep.mubr.f32.mxu0 0.0
      %8355 = vmatmul.mubr.f32.gmra.mrb[0].mxu0 %v8171
      %v8356 = vpop.f32.mrb[0].mxu0
      %v8357 = vadd.f32 0.0, %v8356
      %v8358 = vpop.f32.mrb[0].mxu0
      %8359 = vmatprep.mubr.f32.mxu0 0.0
      %8360 = vmatmul.mubr.f32.gmra.mrb[0].mxu0 %v8174
      %v8361 = vpop.f32.mrb[0].mxu0
      %v8362 = vadd.f32 0.0, %v8361
      %v8363 = vpop.f32.mrb[0].mxu0
      %8364 = vmatprep.mubr.f32.mxu0 0.0
      %8365 = vmatmul.mubr.f32.gmra.mrb[0].mxu0 %v8177
      %v8366 = vpop.f32.mrb[0].mxu0
      %v8367 = vadd.f32 0.0, %v8366
      %v8368 = vpop.f32.mrb[0].mxu0
      %8369 = vmatprep.mubr.f32.mxu0 0.0
      %8370 = vmatmul.mubr.f32.gmra.mrb[0].mxu0 %v8180
      %v8371 = vpop.f32.mrb[0].mxu0
      %v8372 = vadd.f32 0.0, %v8371
      %v8373 = vpop.f32.mrb[0].mxu0
      %8374 = vmatprep.mubr.f32.mxu0 0.0
      %8375 = vmatmul.mubr.f32.gmra.mrb[0].mxu0 %v8183
      %v8376 = vpop.f32.mrb[0].mxu0
      %v8377 = vadd.f32 0.0, %v8376
      %v8378 = vpop.f32.mrb[0].mxu0
      %8379 = vmatprep.mubr.f32.mxu0 0.0
      %8380 = vmatmul.mubr.f32.gmra.mrb[0].mxu0 %v8186
      %v8381 = vpop.f32.mrb[0].mxu0
      %v8382 = vadd.f32 0.0, %v8381
      %v8383 = vpop.f32.mrb[0].mxu0
      %8384 = vmatprep.mubr.f32.mxu0 0.0
      %8385 = vmatmul.mubr.f32.gmra.mrb[0].mxu0 %v8189
      %v8386 = vpop.f32.mrb[0].mxu0
      %v8387 = vadd.f32 0.0, %v8386
      %v8388 = vpop.f32.mrb[0].mxu0
      %8389 = vmatprep.mubr.f32.mxu0 0.0
      %8390 = vmatmul.mubr.f32.gmra.mrb[0].mxu0 %v8192
      %v8391 = vpop.f32.mrb[0].mxu0
      %v8392 = vadd.f32 0.0, %v8391
      %v8393 = vpop.f32.mrb[0].mxu0
      %8394 = vmatprep.mubr.f32.mxu0 0.0
      %8395 = vmatmul.mubr.f32.gmra.mrb[0].mxu0 %v8195
      %v8396 = vpop.f32.mrb[0].mxu0
      %v8397 = vadd.f32 0.0, %v8396
      %v8398 = vpop.f32.mrb[0].mxu0
      %8399 = vmatprep.mubr.f32.mxu0 0.0
      %8400 = vmatmul.mubr.f32.gmra.mrb[0].mxu0 %v8198
      %v8401 = vpop.f32.mrb[0].mxu0
      %v8402 = vadd.f32 0.0, %v8401
      %v8403 = vpop.f32.mrb[0].mxu0
      %8404 = vmatprep.mubr.f32.mxu0 0.0
      %8405 = vmatmul.mubr.f32.gmra.mrb[0].mxu0 %v8201
      %v8406 = vpop.f32.mrb[0].mxu0
      %v8407 = vadd.f32 0.0, %v8406
      %v8408 = vpop.f32.mrb[0].mxu0
      %8409 = vmatprep.mubr.f32.mxu0 0.0
      %8410 = vmatmul.mubr.f32.gmra.mrb[0].mxu0 %v8204
      %v8411 = vpop.f32.mrb[0].mxu0
      %v8412 = vadd.f32 0.0, %v8411
      %v8413 = vpop.f32.mrb[0].mxu0
      %8414 = vmatprep.mubr.f32.mxu0 0.0
      %8415 = vmatmul.mubr.f32.gmra.mrb[0].mxu0 %v8207
      %v8416 = vpop.f32.mrb[0].mxu0
      %v8417 = vadd.f32 0.0, %v8416
      %v8418 = vpop.f32.mrb[0].mxu0
      %8419 = vmatprep.mubr.f32.mxu0 0.0
      %8420 = vmatmul.mubr.f32.gmra.mrb[0].mxu0 %v8210
      %v8421 = vpop.f32.mrb[0].mxu0
      %v8422 = vadd.f32 0.0, %v8421
      %v8423 = vpop.f32.mrb[0].mxu0
      %8424 = vmatprep.mubr.f32.mxu0 0.0
      %8425 = vmatmul.mubr.f32.gmra.mrb[0].mxu0 %v8213
      %v8426 = vpop.f32.mrb[0].mxu0
      %v8427 = vadd.f32 0.0, %v8426
      %v8428 = vpop.f32.mrb[0].mxu0
      %8429 = vmatprep.mubr.f32.mxu0 0.0
      %8430 = vmatmul.mubr.f32.gmra.mrb[0].mxu0 %v8216
      %v8431 = vpop.f32.mrb[0].mxu0
      %v8432 = vadd.f32 0.0, %v8431
      %v8433 = vpop.f32.mrb[0].mxu0
      %8434 = vmatprep.mubr.f32.mxu0 0.0
      %8435 = vmatmul.mubr.f32.gmra.mrb[0].mxu0 %v8219
      %v8436 = vpop.f32.mrb[0].mxu0
      %v8437 = vadd.f32 0.0, %v8436
      %v8438 = vpop.f32.mrb[0].mxu0
      %8439 = vmatprep.mubr.f32.mxu0 0.0
      %8440 = vmatmul.mubr.f32.gmra.mrb[0].mxu0 %v8222
      %v8441 = vpop.f32.mrb[0].mxu0
      %v8442 = vadd.f32 0.0, %v8441
      %v8443 = vpop.f32.mrb[0].mxu0
      %8444 = vmatprep.mubr.f32.mxu0 0.0
      %8445 = vmatmul.mubr.f32.gmra.mrb[0].mxu0 %v8225
      %v8446 = vpop.f32.mrb[0].mxu0
      %v8447 = vadd.f32 0.0, %v8446
      %v8448 = vpop.f32.mrb[0].mxu0
      %8449 = vmatprep.mubr.f32.mxu0 0.0
      %8450 = vmatmul.mubr.f32.gmra.mrb[0].mxu0 %v8228
      %v8451 = vpop.f32.mrb[0].mxu0
      %v8452 = vadd.f32 0.0, %v8451
      %v8453 = vpop.f32.mrb[0].mxu0
      %8454 = vdwg.mxu0
      %v8455 = vadd.f32 %v8060, %v8297
      %v8456 = vadd.f32 %v8061, %v8302
      %v8457 = vadd.f32 %v8062, %v8307
      %v8458 = vadd.f32 %v8063, %v8312
      %v8459 = vadd.f32 %v8064, %v8317
      %v8460 = vadd.f32 %v8065, %v8322
      %v8461 = vadd.f32 %v8066, %v8327
      %v8462 = vadd.f32 %v8067, %v8332
      %v8463 = vadd.f32 %v8068, %v8337
      %v8464 = vadd.f32 %v8069, %v8342
      %v8465 = vadd.f32 %v8070, %v8347
      %v8466 = vadd.f32 %v8071, %v8352
      %v8467 = vadd.f32 %v8072, %v8357
      %v8468 = vadd.f32 %v8073, %v8362
      %v8469 = vadd.f32 %v8074, %v8367
      %v8470 = vadd.f32 %v8075, %v8372
      %v8471 = vadd.f32 %v8076, %v8377
      %v8472 = vadd.f32 %v8077, %v8382
      %v8473 = vadd.f32 %v8078, %v8387
      %v8474 = vadd.f32 %v8079, %v8392
      %v8475 = vadd.f32 %v8080, %v8397
      %v8476 = vadd.f32 %v8081, %v8402
      %v8477 = vadd.f32 %v8082, %v8407
      %v8478 = vadd.f32 %v8083, %v8412
      %v8479 = vadd.f32 %v8084, %v8417
      %v8480 = vadd.f32 %v8085, %v8422
      %v8481 = vadd.f32 %v8086, %v8427
      %v8482 = vadd.f32 %v8087, %v8432
      %v8483 = vadd.f32 %v8088, %v8437
      %v8484 = vadd.f32 %v8089, %v8442
      %v8485 = vadd.f32 %v8090, %v8447
      %v8486 = vadd.f32 %v8091, %v8452
      %v8487 = vld [vmem:[%s8092 + $0x1] sm:$0xff]
      %v8488 = vld [vmem:[%s8092 + $0x9] sm:$0xff]
      %v8489 = vld [vmem:[%s8092 + $0x19] sm:$0xff]
      %v8490 = vld [vmem:[%s8092 + $0x21] sm:$0xff]
      %v8491 = vld [vmem:[%s8092 + $0x31] sm:$0xff]
      %v8492 = vld [vmem:[%s8092 + $0x39] sm:$0xff]
      %v8493 = vld [vmem:[%s8092 + $0x49] sm:$0xff]
      %v8494 = vld [vmem:[%s8092 + $0x51] sm:$0xff]
      %v8495 = vld [vmem:[%s8092 + $0x61] sm:$0xff]
      %v8496 = vld [vmem:[%s8092 + $0x69] sm:$0xff]
      %v8497 = vld [vmem:[%s8092 + $0x79] sm:$0xff]
      %v8498 = vld [vmem:[%s8092 + $0x81] sm:$0xff]
      %v8499 = vld [vmem:[%s8092 + $0x91] sm:$0xff]
      %v8500 = vld [vmem:[%s8092 + $0x99] sm:$0xff]
      %v8501 = vld [vmem:[%s8092 + $0xa9] sm:$0xff]
      %v8502 = vld [vmem:[%s8092 + $0xb1] sm:$0xff]
      %v8503 = vld [vmem:[%s8092 + $0xc1] sm:$0xff]
      %v8504 = vld [vmem:[%s8092 + $0xc9] sm:$0xff]
      %v8505 = vld [vmem:[%s8092 + $0xd9] sm:$0xff]
      %v8506 = vld [vmem:[%s8092 + $0xe1] sm:$0xff]
      %v8507 = vld [vmem:[%s8092 + $0xf1] sm:$0xff]
      %v8508 = vld [vmem:[%s8092 + $0xf9] sm:$0xff]
      %v8509 = vld [vmem:[%s8092 + $0x109] sm:$0xff]
      %v8510 = vld [vmem:[%s8092 + $0x111] sm:$0xff]
      %v8511 = vld [vmem:[%s8092 + $0x121] sm:$0xff]
      %v8512 = vld [vmem:[%s8092 + $0x129] sm:$0xff]
      %v8513 = vld [vmem:[%s8092 + $0x139] sm:$0xff]
      %v8514 = vld [vmem:[%s8092 + $0x141] sm:$0xff]
      %v8515 = vld [vmem:[%s8092 + $0x151] sm:$0xff]
      %v8516 = vld [vmem:[%s8092 + $0x159] sm:$0xff]
      %v8517 = vld [vmem:[%s8092 + $0x169] sm:$0xff]
      %v8518 = vld [vmem:[%s8092 + $0x171] sm:$0xff]
      %s8519 = scalar_lea.vmem %s5, 448
      %v8520 = vld [vmem:[%s8519] sm:$0xff]
      %v8521 = vld [vmem:[%s8519 + $0x8] sm:$0xff]
      %v8522 = vld [vmem:[%s8519 + $0x10] sm:$0xff]
      %v8523 = vld [vmem:[%s8519 + $0x18] sm:$0xff]
      %v8524 = vld [vmem:[%s8519 + $0x20] sm:$0xff]
      %v8525 = vld [vmem:[%s8519 + $0x28] sm:$0xff]
      %v8526 = vld [vmem:[%s8519 + $0x30] sm:$0xff]
      %v8527 = vld [vmem:[%s8519 + $0x38] sm:$0xff]
      %v8529 = vsel %vm1588, %v8487, 0
      %v8532 = vsel %vm1588, %v8488, 0
      %v8535 = vsel %vm1588, %v8489, 0
      %v8538 = vsel %vm1588, %v8490, 0
      %v8541 = vsel %vm1588, %v8491, 0
      %v8544 = vsel %vm1588, %v8492, 0
      %v8547 = vsel %vm1588, %v8493, 0
      %v8550 = vsel %vm1588, %v8494, 0
      %v8553 = vsel %vm1588, %v8495, 0
      %v8556 = vsel %vm1588, %v8496, 0
      %v8559 = vsel %vm1588, %v8497, 0
      %v8562 = vsel %vm1588, %v8498, 0
      %v8565 = vsel %vm1588, %v8499, 0
      %v8568 = vsel %vm1588, %v8500, 0
      %v8571 = vsel %vm1588, %v8501, 0
      %v8574 = vsel %vm1588, %v8502, 0
      %v8577 = vsel %vm1588, %v8503, 0
      %v8580 = vsel %vm1588, %v8504, 0
      %v8583 = vsel %vm1588, %v8505, 0
      %v8586 = vsel %vm1588, %v8506, 0
      %v8589 = vsel %vm1588, %v8507, 0
      %v8592 = vsel %vm1588, %v8508, 0
      %v8595 = vsel %vm1588, %v8509, 0
      %v8598 = vsel %vm1588, %v8510, 0
      %v8601 = vsel %vm1588, %v8511, 0
      %v8604 = vsel %vm1588, %v8512, 0
      %v8607 = vsel %vm1588, %v8513, 0
      %v8610 = vsel %vm1588, %v8514, 0
      %v8613 = vsel %vm1588, %v8515, 0
      %v8616 = vsel %vm1588, %v8516, 0
      %v8619 = vsel %vm1588, %v8517, 0
      %v8622 = vsel %vm1588, %v8518, 0
      %8624 = vmatprep.subr.mxu0 0.0
      %8625 = vmatpush1.msra.mxu0 %v8520
      %8626 = vmatprep.subr.mxu0 0.0
      %8627 = vmatpush1.msra.mxu0 %v8521
      %8628 = vmatprep.subr.mxu0 0.0
      %8629 = vmatpush1.msra.mxu0 %v8522
      %8630 = vmatprep.subr.mxu0 0.0
      %8631 = vmatpush1.msra.mxu0 %v8523
      %8632 = vmatprep.subr.mxu0 0.0
      %8633 = vmatpush1.msra.mxu0 %v8524
      %8634 = vmatprep.subr.mxu0 0.0
      %8635 = vmatpush1.msra.mxu0 %v8525
      %8636 = vmatprep.subr.mxu0 0.0
      %8637 = vmatpush1.msra.mxu0 %v8526
      %8638 = vmatprep.subr.mxu0 0.0
      %8639 = vmatpush1.msra.mxu0 %v8527
      %8640 = vmatprep.subr.mxu0 0.0
      %8641 = vmatpush1.msra.mxu0 0.0
      %8642 = vmatprep.subr.mxu0 0.0
      %8643 = vmatpush1.msra.mxu0 0.0
      %8644 = vmatprep.subr.mxu0 0.0
      %8645 = vmatpush1.msra.mxu0 0.0
      %8646 = vmatprep.subr.mxu0 0.0
      %8647 = vmatpush1.msra.mxu0 0.0
      %8648 = vmatprep.subr.mxu0 0.0
      %8649 = vmatpush1.msra.mxu0 0.0
      %8650 = vmatprep.subr.mxu0 0.0
      %8651 = vmatpush1.msra.mxu0 0.0
      %8652 = vmatprep.subr.mxu0 0.0
      %8653 = vmatpush1.msra.mxu0 0.0
      %8654 = vmatprep.subr.mxu0 0.0
      %8655 = vmatpush1.msra.mxu0 0.0
      %8656 = vmatprep.subr.mxu0 0.0
      %8657 = vmatpush1.msra.mxu0 0.0
      %8658 = vmatprep.subr.mxu0 0.0
      %8659 = vmatpush1.msra.mxu0 0.0
      %8660 = vmatprep.subr.mxu0 0.0
      %8661 = vmatpush1.msra.mxu0 0.0
      %8662 = vmatprep.subr.mxu0 0.0
      %8663 = vmatpush1.msra.mxu0 0.0
      %8664 = vmatprep.subr.mxu0 0.0
      %8665 = vmatpush1.msra.mxu0 0.0
      %8666 = vmatprep.subr.mxu0 0.0
      %8667 = vmatpush1.msra.mxu0 0.0
      %8668 = vmatprep.subr.mxu0 0.0
      %8669 = vmatpush1.msra.mxu0 0.0
      %8670 = vmatprep.subr.mxu0 0.0
      %8671 = vmatpush1.msra.mxu0 0.0
      %8672 = vmatprep.subr.mxu0 0.0
      %8673 = vmatpush1.msra.mxu0 0.0
      %8674 = vmatprep.subr.mxu0 0.0
      %8675 = vmatpush1.msra.mxu0 0.0
      %8676 = vmatprep.subr.mxu0 0.0
      %8677 = vmatpush1.msra.mxu0 0.0
      %8678 = vmatprep.subr.mxu0 0.0
      %8679 = vmatpush1.msra.mxu0 0.0
      %8680 = vmatprep.subr.mxu0 0.0
      %8681 = vmatpush1.msra.mxu0 0.0
      %8682 = vmatprep.subr.mxu0 0.0
      %8683 = vmatpush1.msra.mxu0 0.0
      %8684 = vmatprep.subr.mxu0 0.0
      %8685 = vmatpush1.msra.mxu0 0.0
      %8686 = vmatprep.subr.mxu0 0.0
      %8687 = vmatpush1.msra.mxu0 0.0
      %8688 = vmatprep.mubr.f32.mxu0 0.0
      %8689 = vmatmul.mubr.f32.gmra.mrb[0].mxu0 %v8529
      %v8690 = vpop.f32.mrb[0].mxu0
      %v8691 = vadd.f32 0.0, %v8690
      %v8692 = vpop.f32.mrb[0].mxu0
      %8693 = vmatprep.mubr.f32.mxu0 0.0
      %8694 = vmatmul.mubr.f32.gmra.mrb[0].mxu0 %v8532
      %v8695 = vpop.f32.mrb[0].mxu0
      %v8696 = vadd.f32 0.0, %v8695
      %v8697 = vpop.f32.mrb[0].mxu0
      %8698 = vmatprep.mubr.f32.mxu0 0.0
      %8699 = vmatmul.mubr.f32.gmra.mrb[0].mxu0 %v8535
      %v8700 = vpop.f32.mrb[0].mxu0
      %v8701 = vadd.f32 0.0, %v8700
      %v8702 = vpop.f32.mrb[0].mxu0
      %8703 = vmatprep.mubr.f32.mxu0 0.0
      %8704 = vmatmul.mubr.f32.gmra.mrb[0].mxu0 %v8538
      %v8705 = vpop.f32.mrb[0].mxu0
      %v8706 = vadd.f32 0.0, %v8705
      %v8707 = vpop.f32.mrb[0].mxu0
      %8708 = vmatprep.mubr.f32.mxu0 0.0
      %8709 = vmatmul.mubr.f32.gmra.mrb[0].mxu0 %v8541
      %v8710 = vpop.f32.mrb[0].mxu0
      %v8711 = vadd.f32 0.0, %v8710
      %v8712 = vpop.f32.mrb[0].mxu0
      %8713 = vmatprep.mubr.f32.mxu0 0.0
      %8714 = vmatmul.mubr.f32.gmra.mrb[0].mxu0 %v8544
      %v8715 = vpop.f32.mrb[0].mxu0
      %v8716 = vadd.f32 0.0, %v8715
      %v8717 = vpop.f32.mrb[0].mxu0
      %8718 = vmatprep.mubr.f32.mxu0 0.0
      %8719 = vmatmul.mubr.f32.gmra.mrb[0].mxu0 %v8547
      %v8720 = vpop.f32.mrb[0].mxu0
      %v8721 = vadd.f32 0.0, %v8720
      %v8722 = vpop.f32.mrb[0].mxu0
      %8723 = vmatprep.mubr.f32.mxu0 0.0
      %8724 = vmatmul.mubr.f32.gmra.mrb[0].mxu0 %v8550
      %v8725 = vpop.f32.mrb[0].mxu0
      %v8726 = vadd.f32 0.0, %v8725
      %v8727 = vpop.f32.mrb[0].mxu0
      %8728 = vmatprep.mubr.f32.mxu0 0.0
      %8729 = vmatmul.mubr.f32.gmra.mrb[0].mxu0 %v8553
      %v8730 = vpop.f32.mrb[0].mxu0
      %v8731 = vadd.f32 0.0, %v8730
      %v8732 = vpop.f32.mrb[0].mxu0
      %8733 = vmatprep.mubr.f32.mxu0 0.0
      %8734 = vmatmul.mubr.f32.gmra.mrb[0].mxu0 %v8556
      %v8735 = vpop.f32.mrb[0].mxu0
      %v8736 = vadd.f32 0.0, %v8735
      %v8737 = vpop.f32.mrb[0].mxu0
      %8738 = vmatprep.mubr.f32.mxu0 0.0
      %8739 = vmatmul.mubr.f32.gmra.mrb[0].mxu0 %v8559
      %v8740 = vpop.f32.mrb[0].mxu0
      %v8741 = vadd.f32 0.0, %v8740
      %v8742 = vpop.f32.mrb[0].mxu0
      %8743 = vmatprep.mubr.f32.mxu0 0.0
      %8744 = vmatmul.mubr.f32.gmra.mrb[0].mxu0 %v8562
      %v8745 = vpop.f32.mrb[0].mxu0
      %v8746 = vadd.f32 0.0, %v8745
      %v8747 = vpop.f32.mrb[0].mxu0
      %8748 = vmatprep.mubr.f32.mxu0 0.0
      %8749 = vmatmul.mubr.f32.gmra.mrb[0].mxu0 %v8565
      %v8750 = vpop.f32.mrb[0].mxu0
      %v8751 = vadd.f32 0.0, %v8750
      %v8752 = vpop.f32.mrb[0].mxu0
      %8753 = vmatprep.mubr.f32.mxu0 0.0
      %8754 = vmatmul.mubr.f32.gmra.mrb[0].mxu0 %v8568
      %v8755 = vpop.f32.mrb[0].mxu0
      %v8756 = vadd.f32 0.0, %v8755
      %v8757 = vpop.f32.mrb[0].mxu0
      %8758 = vmatprep.mubr.f32.mxu0 0.0
      %8759 = vmatmul.mubr.f32.gmra.mrb[0].mxu0 %v8571
      %v8760 = vpop.f32.mrb[0].mxu0
      %v8761 = vadd.f32 0.0, %v8760
      %v8762 = vpop.f32.mrb[0].mxu0
      %8763 = vmatprep.mubr.f32.mxu0 0.0
      %8764 = vmatmul.mubr.f32.gmra.mrb[0].mxu0 %v8574
      %v8765 = vpop.f32.mrb[0].mxu0
      %v8766 = vadd.f32 0.0, %v8765
      %v8767 = vpop.f32.mrb[0].mxu0
      %8768 = vmatprep.mubr.f32.mxu0 0.0
      %8769 = vmatmul.mubr.f32.gmra.mrb[0].mxu0 %v8577
      %v8770 = vpop.f32.mrb[0].mxu0
      %v8771 = vadd.f32 0.0, %v8770
      %v8772 = vpop.f32.mrb[0].mxu0
      %8773 = vmatprep.mubr.f32.mxu0 0.0
      %8774 = vmatmul.mubr.f32.gmra.mrb[0].mxu0 %v8580
      %v8775 = vpop.f32.mrb[0].mxu0
      %v8776 = vadd.f32 0.0, %v8775
      %v8777 = vpop.f32.mrb[0].mxu0
      %8778 = vmatprep.mubr.f32.mxu0 0.0
      %8779 = vmatmul.mubr.f32.gmra.mrb[0].mxu0 %v8583
      %v8780 = vpop.f32.mrb[0].mxu0
      %v8781 = vadd.f32 0.0, %v8780
      %v8782 = vpop.f32.mrb[0].mxu0
      %8783 = vmatprep.mubr.f32.mxu0 0.0
      %8784 = vmatmul.mubr.f32.gmra.mrb[0].mxu0 %v8586
      %v8785 = vpop.f32.mrb[0].mxu0
      %v8786 = vadd.f32 0.0, %v8785
      %v8787 = vpop.f32.mrb[0].mxu0
      %8788 = vmatprep.mubr.f32.mxu0 0.0
      %8789 = vmatmul.mubr.f32.gmra.mrb[0].mxu0 %v8589
      %v8790 = vpop.f32.mrb[0].mxu0
      %v8791 = vadd.f32 0.0, %v8790
      %v8792 = vpop.f32.mrb[0].mxu0
      %8793 = vmatprep.mubr.f32.mxu0 0.0
      %8794 = vmatmul.mubr.f32.gmra.mrb[0].mxu0 %v8592
      %v8795 = vpop.f32.mrb[0].mxu0
      %v8796 = vadd.f32 0.0, %v8795
      %v8797 = vpop.f32.mrb[0].mxu0
      %8798 = vmatprep.mubr.f32.mxu0 0.0
      %8799 = vmatmul.mubr.f32.gmra.mrb[0].mxu0 %v8595
      %v8800 = vpop.f32.mrb[0].mxu0
      %v8801 = vadd.f32 0.0, %v8800
      %v8802 = vpop.f32.mrb[0].mxu0
      %8803 = vmatprep.mubr.f32.mxu0 0.0
      %8804 = vmatmul.mubr.f32.gmra.mrb[0].mxu0 %v8598
      %v8805 = vpop.f32.mrb[0].mxu0
      %v8806 = vadd.f32 0.0, %v8805
      %v8807 = vpop.f32.mrb[0].mxu0
      %8808 = vmatprep.mubr.f32.mxu0 0.0
      %8809 = vmatmul.mubr.f32.gmra.mrb[0].mxu0 %v8601
      %v8810 = vpop.f32.mrb[0].mxu0
      %v8811 = vadd.f32 0.0, %v8810
      %v8812 = vpop.f32.mrb[0].mxu0
      %8813 = vmatprep.mubr.f32.mxu0 0.0
      %8814 = vmatmul.mubr.f32.gmra.mrb[0].mxu0 %v8604
      %v8815 = vpop.f32.mrb[0].mxu0
      %v8816 = vadd.f32 0.0, %v8815
      %v8817 = vpop.f32.mrb[0].mxu0
      %8818 = vmatprep.mubr.f32.mxu0 0.0
      %8819 = vmatmul.mubr.f32.gmra.mrb[0].mxu0 %v8607
      %v8820 = vpop.f32.mrb[0].mxu0
      %v8821 = vadd.f32 0.0, %v8820
      %v8822 = vpop.f32.mrb[0].mxu0
      %8823 = vmatprep.mubr.f32.mxu0 0.0
      %8824 = vmatmul.mubr.f32.gmra.mrb[0].mxu0 %v8610
      %v8825 = vpop.f32.mrb[0].mxu0
      %v8826 = vadd.f32 0.0, %v8825
      %v8827 = vpop.f32.mrb[0].mxu0
      %8828 = vmatprep.mubr.f32.mxu0 0.0
      %8829 = vmatmul.mubr.f32.gmra.mrb[0].mxu0 %v8613
      %v8830 = vpop.f32.mrb[0].mxu0
      %v8831 = vadd.f32 0.0, %v8830
      %v8832 = vpop.f32.mrb[0].mxu0
      %8833 = vmatprep.mubr.f32.mxu0 0.0
      %8834 = vmatmul.mubr.f32.gmra.mrb[0].mxu0 %v8616
      %v8835 = vpop.f32.mrb[0].mxu0
      %v8836 = vadd.f32 0.0, %v8835
      %v8837 = vpop.f32.mrb[0].mxu0
      %8838 = vmatprep.mubr.f32.mxu0 0.0
      %8839 = vmatmul.mubr.f32.gmra.mrb[0].mxu0 %v8619
      %v8840 = vpop.f32.mrb[0].mxu0
      %v8841 = vadd.f32 0.0, %v8840
      %v8842 = vpop.f32.mrb[0].mxu0
      %8843 = vmatprep.mubr.f32.mxu0 0.0
      %8844 = vmatmul.mubr.f32.gmra.mrb[0].mxu0 %v8622
      %v8845 = vpop.f32.mrb[0].mxu0
      %v8846 = vadd.f32 0.0, %v8845
      %v8847 = vpop.f32.mrb[0].mxu0
      %8848 = vdwg.mxu0
      %v8849 = vadd.f32 %v8455, %v8691
      %v8850 = vadd.f32 %v8456, %v8696
      %v8851 = vadd.f32 %v8457, %v8701
      %v8852 = vadd.f32 %v8458, %v8706
      %v8853 = vadd.f32 %v8459, %v8711
      %v8854 = vadd.f32 %v8460, %v8716
      %v8855 = vadd.f32 %v8461, %v8721
      %v8856 = vadd.f32 %v8462, %v8726
      %v8857 = vadd.f32 %v8463, %v8731
      %v8858 = vadd.f32 %v8464, %v8736
      %v8859 = vadd.f32 %v8465, %v8741
      %v8860 = vadd.f32 %v8466, %v8746
      %v8861 = vadd.f32 %v8467, %v8751
      %v8862 = vadd.f32 %v8468, %v8756
      %v8863 = vadd.f32 %v8469, %v8761
      %v8864 = vadd.f32 %v8470, %v8766
      %v8865 = vadd.f32 %v8471, %v8771
      %v8866 = vadd.f32 %v8472, %v8776
      %v8867 = vadd.f32 %v8473, %v8781
      %v8868 = vadd.f32 %v8474, %v8786
      %v8869 = vadd.f32 %v8475, %v8791
      %v8870 = vadd.f32 %v8476, %v8796
      %v8871 = vadd.f32 %v8477, %v8801
      %v8872 = vadd.f32 %v8478, %v8806
      %v8873 = vadd.f32 %v8479, %v8811
      %v8874 = vadd.f32 %v8480, %v8816
      %v8875 = vadd.f32 %v8481, %v8821
      %v8876 = vadd.f32 %v8482, %v8826
      %v8877 = vadd.f32 %v8483, %v8831
      %v8878 = vadd.f32 %v8484, %v8836
      %v8879 = vadd.f32 %v8485, %v8841
      %v8880 = vadd.f32 %v8486, %v8846
      %v8881 = vld [vmem:[%s8092 + $0x2] sm:$0xff]
      %v8882 = vld [vmem:[%s8092 + $0xa] sm:$0xff]
      %v8883 = vld [vmem:[%s8092 + $0x1a] sm:$0xff]
      %v8884 = vld [vmem:[%s8092 + $0x22] sm:$0xff]
      %v8885 = vld [vmem:[%s8092 + $0x32] sm:$0xff]
      %v8886 = vld [vmem:[%s8092 + $0x3a] sm:$0xff]
      %v8887 = vld [vmem:[%s8092 + $0x4a] sm:$0xff]
      %v8888 = vld [vmem:[%s8092 + $0x52] sm:$0xff]
      %v8889 = vld [vmem:[%s8092 + $0x62] sm:$0xff]
      %v8890 = vld [vmem:[%s8092 + $0x6a] sm:$0xff]
      %v8891 = vld [vmem:[%s8092 + $0x7a] sm:$0xff]
      %v8892 = vld [vmem:[%s8092 + $0x82] sm:$0xff]
      %v8893 = vld [vmem:[%s8092 + $0x92] sm:$0xff]
      %v8894 = vld [vmem:[%s8092 + $0x9a] sm:$0xff]
      %v8895 = vld [vmem:[%s8092 + $0xaa] sm:$0xff]
      %v8896 = vld [vmem:[%s8092 + $0xb2] sm:$0xff]
      %v8897 = vld [vmem:[%s8092 + $0xc2] sm:$0xff]
      %v8898 = vld [vmem:[%s8092 + $0xca] sm:$0xff]
      %v8899 = vld [vmem:[%s8092 + $0xda] sm:$0xff]
      %v8900 = vld [vmem:[%s8092 + $0xe2] sm:$0xff]
      %v8901 = vld [vmem:[%s8092 + $0xf2] sm:$0xff]
      %v8902 = vld [vmem:[%s8092 + $0xfa] sm:$0xff]
      %v8903 = vld [vmem:[%s8092 + $0x10a] sm:$0xff]
      %v8904 = vld [vmem:[%s8092 + $0x112] sm:$0xff]
      %v8905 = vld [vmem:[%s8092 + $0x122] sm:$0xff]
      %v8906 = vld [vmem:[%s8092 + $0x12a] sm:$0xff]
      %v8907 = vld [vmem:[%s8092 + $0x13a] sm:$0xff]
      %v8908 = vld [vmem:[%s8092 + $0x142] sm:$0xff]
      %v8909 = vld [vmem:[%s8092 + $0x152] sm:$0xff]
      %v8910 = vld [vmem:[%s8092 + $0x15a] sm:$0xff]
      %v8911 = vld [vmem:[%s8092 + $0x16a] sm:$0xff]
      %v8912 = vld [vmem:[%s8092 + $0x172] sm:$0xff]
      %s8913 = scalar_lea.vmem %s5, 512
      %v8914 = vld [vmem:[%s8913] sm:$0xff]
      %v8915 = vld [vmem:[%s8913 + $0x8] sm:$0xff]
      %v8916 = vld [vmem:[%s8913 + $0x10] sm:$0xff]
      %v8917 = vld [vmem:[%s8913 + $0x18] sm:$0xff]
      %v8918 = vld [vmem:[%s8913 + $0x20] sm:$0xff]
      %v8919 = vld [vmem:[%s8913 + $0x28] sm:$0xff]
      %v8920 = vld [vmem:[%s8913 + $0x30] sm:$0xff]
      %v8921 = vld [vmem:[%s8913 + $0x38] sm:$0xff]
      %v8923 = vsel %vm1588, %v8881, 0
      %v8926 = vsel %vm1588, %v8882, 0
      %v8929 = vsel %vm1588, %v8883, 0
      %v8932 = vsel %vm1588, %v8884, 0
      %v8935 = vsel %vm1588, %v8885, 0
      %v8938 = vsel %vm1588, %v8886, 0
      %v8941 = vsel %vm1588, %v8887, 0
      %v8944 = vsel %vm1588, %v8888, 0
      %v8947 = vsel %vm1588, %v8889, 0
      %v8950 = vsel %vm1588, %v8890, 0
      %v8953 = vsel %vm1588, %v8891, 0
      %v8956 = vsel %vm1588, %v8892, 0
      %v8959 = vsel %vm1588, %v8893, 0
      %v8962 = vsel %vm1588, %v8894, 0
      %v8965 = vsel %vm1588, %v8895, 0
      %v8968 = vsel %vm1588, %v8896, 0
      %v8971 = vsel %vm1588, %v8897, 0
      %v8974 = vsel %vm1588, %v8898, 0
      %v8977 = vsel %vm1588, %v8899, 0
      %v8980 = vsel %vm1588, %v8900, 0
      %v8983 = vsel %vm1588, %v8901, 0
      %v8986 = vsel %vm1588, %v8902, 0
      %v8989 = vsel %vm1588, %v8903, 0
      %v8992 = vsel %vm1588, %v8904, 0
      %v8995 = vsel %vm1588, %v8905, 0
      %v8998 = vsel %vm1588, %v8906, 0
      %v9001 = vsel %vm1588, %v8907, 0
      %v9004 = vsel %vm1588, %v8908, 0
      %v9007 = vsel %vm1588, %v8909, 0
      %v9010 = vsel %vm1588, %v8910, 0
      %v9013 = vsel %vm1588, %v8911, 0
      %v9016 = vsel %vm1588, %v8912, 0
      %9018 = vmatprep.subr.mxu0 0.0
      %9019 = vmatpush1.msra.mxu0 %v8914
      %9020 = vmatprep.subr.mxu0 0.0
      %9021 = vmatpush1.msra.mxu0 %v8915
      %9022 = vmatprep.subr.mxu0 0.0
      %9023 = vmatpush1.msra.mxu0 %v8916
      %9024 = vmatprep.subr.mxu0 0.0
      %9025 = vmatpush1.msra.mxu0 %v8917
      %9026 = vmatprep.subr.mxu0 0.0
      %9027 = vmatpush1.msra.mxu0 %v8918
      %9028 = vmatprep.subr.mxu0 0.0
      %9029 = vmatpush1.msra.mxu0 %v8919
      %9030 = vmatprep.subr.mxu0 0.0
      %9031 = vmatpush1.msra.mxu0 %v8920
      %9032 = vmatprep.subr.mxu0 0.0
      %9033 = vmatpush1.msra.mxu0 %v8921
      %9034 = vmatprep.subr.mxu0 0.0
      %9035 = vmatpush1.msra.mxu0 0.0
      %9036 = vmatprep.subr.mxu0 0.0
      %9037 = vmatpush1.msra.mxu0 0.0
      %9038 = vmatprep.subr.mxu0 0.0
      %9039 = vmatpush1.msra.mxu0 0.0
      %9040 = vmatprep.subr.mxu0 0.0
      %9041 = vmatpush1.msra.mxu0 0.0
      %9042 = vmatprep.subr.mxu0 0.0
      %9043 = vmatpush1.msra.mxu0 0.0
      %9044 = vmatprep.subr.mxu0 0.0
      %9045 = vmatpush1.msra.mxu0 0.0
      %9046 = vmatprep.subr.mxu0 0.0
      %9047 = vmatpush1.msra.mxu0 0.0
      %9048 = vmatprep.subr.mxu0 0.0
      %9049 = vmatpush1.msra.mxu0 0.0
      %9050 = vmatprep.subr.mxu0 0.0
      %9051 = vmatpush1.msra.mxu0 0.0
      %9052 = vmatprep.subr.mxu0 0.0
      %9053 = vmatpush1.msra.mxu0 0.0
      %9054 = vmatprep.subr.mxu0 0.0
      %9055 = vmatpush1.msra.mxu0 0.0
      %9056 = vmatprep.subr.mxu0 0.0
      %9057 = vmatpush1.msra.mxu0 0.0
      %9058 = vmatprep.subr.mxu0 0.0
      %9059 = vmatpush1.msra.mxu0 0.0
      %9060 = vmatprep.subr.mxu0 0.0
      %9061 = vmatpush1.msra.mxu0 0.0
      %9062 = vmatprep.subr.mxu0 0.0
      %9063 = vmatpush1.msra.mxu0 0.0
      %9064 = vmatprep.subr.mxu0 0.0
      %9065 = vmatpush1.msra.mxu0 0.0
      %9066 = vmatprep.subr.mxu0 0.0
      %9067 = vmatpush1.msra.mxu0 0.0
      %9068 = vmatprep.subr.mxu0 0.0
      %9069 = vmatpush1.msra.mxu0 0.0
      %9070 = vmatprep.subr.mxu0 0.0
      %9071 = vmatpush1.msra.mxu0 0.0
      %9072 = vmatprep.subr.mxu0 0.0
      %9073 = vmatpush1.msra.mxu0 0.0
      %9074 = vmatprep.subr.mxu0 0.0
      %9075 = vmatpush1.msra.mxu0 0.0
      %9076 = vmatprep.subr.mxu0 0.0
      %9077 = vmatpush1.msra.mxu0 0.0
      %9078 = vmatprep.subr.mxu0 0.0
      %9079 = vmatpush1.msra.mxu0 0.0
      %9080 = vmatprep.subr.mxu0 0.0
      %9081 = vmatpush1.msra.mxu0 0.0
      %9082 = vmatprep.mubr.f32.mxu0 0.0
      %9083 = vmatmul.mubr.f32.gmra.mrb[0].mxu0 %v8923
      %v9084 = vpop.f32.mrb[0].mxu0
      %v9085 = vadd.f32 0.0, %v9084
      %v9086 = vpop.f32.mrb[0].mxu0
      %9087 = vmatprep.mubr.f32.mxu0 0.0
      %9088 = vmatmul.mubr.f32.gmra.mrb[0].mxu0 %v8926
      %v9089 = vpop.f32.mrb[0].mxu0
      %v9090 = vadd.f32 0.0, %v9089
      %v9091 = vpop.f32.mrb[0].mxu0
      %9092 = vmatprep.mubr.f32.mxu0 0.0
      %9093 = vmatmul.mubr.f32.gmra.mrb[0].mxu0 %v8929
      %v9094 = vpop.f32.mrb[0].mxu0
      %v9095 = vadd.f32 0.0, %v9094
      %v9096 = vpop.f32.mrb[0].mxu0
      %9097 = vmatprep.mubr.f32.mxu0 0.0
      %9098 = vmatmul.mubr.f32.gmra.mrb[0].mxu0 %v8932
      %v9099 = vpop.f32.mrb[0].mxu0
      %v9100 = vadd.f32 0.0, %v9099
      %v9101 = vpop.f32.mrb[0].mxu0
      %9102 = vmatprep.mubr.f32.mxu0 0.0
      %9103 = vmatmul.mubr.f32.gmra.mrb[0].mxu0 %v8935
      %v9104 = vpop.f32.mrb[0].mxu0
      %v9105 = vadd.f32 0.0, %v9104
      %v9106 = vpop.f32.mrb[0].mxu0
      %9107 = vmatprep.mubr.f32.mxu0 0.0
      %9108 = vmatmul.mubr.f32.gmra.mrb[0].mxu0 %v8938
      %v9109 = vpop.f32.mrb[0].mxu0
      %v9110 = vadd.f32 0.0, %v9109
      %v9111 = vpop.f32.mrb[0].mxu0
      %9112 = vmatprep.mubr.f32.mxu0 0.0
      %9113 = vmatmul.mubr.f32.gmra.mrb[0].mxu0 %v8941
      %v9114 = vpop.f32.mrb[0].mxu0
      %v9115 = vadd.f32 0.0, %v9114
      %v9116 = vpop.f32.mrb[0].mxu0
      %9117 = vmatprep.mubr.f32.mxu0 0.0
      %9118 = vmatmul.mubr.f32.gmra.mrb[0].mxu0 %v8944
      %v9119 = vpop.f32.mrb[0].mxu0
      %v9120 = vadd.f32 0.0, %v9119
      %v9121 = vpop.f32.mrb[0].mxu0
      %9122 = vmatprep.mubr.f32.mxu0 0.0
      %9123 = vmatmul.mubr.f32.gmra.mrb[0].mxu0 %v8947
      %v9124 = vpop.f32.mrb[0].mxu0
      %v9125 = vadd.f32 0.0, %v9124
      %v9126 = vpop.f32.mrb[0].mxu0
      %9127 = vmatprep.mubr.f32.mxu0 0.0
      %9128 = vmatmul.mubr.f32.gmra.mrb[0].mxu0 %v8950
      %v9129 = vpop.f32.mrb[0].mxu0
      %v9130 = vadd.f32 0.0, %v9129
      %v9131 = vpop.f32.mrb[0].mxu0
      %9132 = vmatprep.mubr.f32.mxu0 0.0
      %9133 = vmatmul.mubr.f32.gmra.mrb[0].mxu0 %v8953
      %v9134 = vpop.f32.mrb[0].mxu0
      %v9135 = vadd.f32 0.0, %v9134
      %v9136 = vpop.f32.mrb[0].mxu0
      %9137 = vmatprep.mubr.f32.mxu0 0.0
      %9138 = vmatmul.mubr.f32.gmra.mrb[0].mxu0 %v8956
      %v9139 = vpop.f32.mrb[0].mxu0
      %v9140 = vadd.f32 0.0, %v9139
      %v9141 = vpop.f32.mrb[0].mxu0
      %9142 = vmatprep.mubr.f32.mxu0 0.0
      %9143 = vmatmul.mubr.f32.gmra.mrb[0].mxu0 %v8959
      %v9144 = vpop.f32.mrb[0].mxu0
      %v9145 = vadd.f32 0.0, %v9144
      %v9146 = vpop.f32.mrb[0].mxu0
      %9147 = vmatprep.mubr.f32.mxu0 0.0
      %9148 = vmatmul.mubr.f32.gmra.mrb[0].mxu0 %v8962
      %v9149 = vpop.f32.mrb[0].mxu0
      %v9150 = vadd.f32 0.0, %v9149
      %v9151 = vpop.f32.mrb[0].mxu0
      %9152 = vmatprep.mubr.f32.mxu0 0.0
      %9153 = vmatmul.mubr.f32.gmra.mrb[0].mxu0 %v8965
      %v9154 = vpop.f32.mrb[0].mxu0
      %v9155 = vadd.f32 0.0, %v9154
      %v9156 = vpop.f32.mrb[0].mxu0
      %9157 = vmatprep.mubr.f32.mxu0 0.0
      %9158 = vmatmul.mubr.f32.gmra.mrb[0].mxu0 %v8968
      %v9159 = vpop.f32.mrb[0].mxu0
      %v9160 = vadd.f32 0.0, %v9159
      %v9161 = vpop.f32.mrb[0].mxu0
      %9162 = vmatprep.mubr.f32.mxu0 0.0
      %9163 = vmatmul.mubr.f32.gmra.mrb[0].mxu0 %v8971
      %v9164 = vpop.f32.mrb[0].mxu0
      %v9165 = vadd.f32 0.0, %v9164
      %v9166 = vpop.f32.mrb[0].mxu0
      %9167 = vmatprep.mubr.f32.mxu0 0.0
      %9168 = vmatmul.mubr.f32.gmra.mrb[0].mxu0 %v8974
      %v9169 = vpop.f32.mrb[0].mxu0
      %v9170 = vadd.f32 0.0, %v9169
      %v9171 = vpop.f32.mrb[0].mxu0
      %9172 = vmatprep.mubr.f32.mxu0 0.0
      %9173 = vmatmul.mubr.f32.gmra.mrb[0].mxu0 %v8977
      %v9174 = vpop.f32.mrb[0].mxu0
      %v9175 = vadd.f32 0.0, %v9174
      %v9176 = vpop.f32.mrb[0].mxu0
      %9177 = vmatprep.mubr.f32.mxu0 0.0
      %9178 = vmatmul.mubr.f32.gmra.mrb[0].mxu0 %v8980
      %v9179 = vpop.f32.mrb[0].mxu0
      %v9180 = vadd.f32 0.0, %v9179
      %v9181 = vpop.f32.mrb[0].mxu0
      %9182 = vmatprep.mubr.f32.mxu0 0.0
      %9183 = vmatmul.mubr.f32.gmra.mrb[0].mxu0 %v8983
      %v9184 = vpop.f32.mrb[0].mxu0
      %v9185 = vadd.f32 0.0, %v9184
      %v9186 = vpop.f32.mrb[0].mxu0
      %9187 = vmatprep.mubr.f32.mxu0 0.0
      %9188 = vmatmul.mubr.f32.gmra.mrb[0].mxu0 %v8986
      %v9189 = vpop.f32.mrb[0].mxu0
      %v9190 = vadd.f32 0.0, %v9189
      %v9191 = vpop.f32.mrb[0].mxu0
      %9192 = vmatprep.mubr.f32.mxu0 0.0
      %9193 = vmatmul.mubr.f32.gmra.mrb[0].mxu0 %v8989
      %v9194 = vpop.f32.mrb[0].mxu0
      %v9195 = vadd.f32 0.0, %v9194
      %v9196 = vpop.f32.mrb[0].mxu0
      %9197 = vmatprep.mubr.f32.mxu0 0.0
      %9198 = vmatmul.mubr.f32.gmra.mrb[0].mxu0 %v8992
      %v9199 = vpop.f32.mrb[0].mxu0
      %v9200 = vadd.f32 0.0, %v9199
      %v9201 = vpop.f32.mrb[0].mxu0
      %9202 = vmatprep.mubr.f32.mxu0 0.0
      %9203 = vmatmul.mubr.f32.gmra.mrb[0].mxu0 %v8995
      %v9204 = vpop.f32.mrb[0].mxu0
      %v9205 = vadd.f32 0.0, %v9204
      %v9206 = vpop.f32.mrb[0].mxu0
      %9207 = vmatprep.mubr.f32.mxu0 0.0
      %9208 = vmatmul.mubr.f32.gmra.mrb[0].mxu0 %v8998
      %v9209 = vpop.f32.mrb[0].mxu0
      %v9210 = vadd.f32 0.0, %v9209
      %v9211 = vpop.f32.mrb[0].mxu0
      %9212 = vmatprep.mubr.f32.mxu0 0.0
      %9213 = vmatmul.mubr.f32.gmra.mrb[0].mxu0 %v9001
      %v9214 = vpop.f32.mrb[0].mxu0
      %v9215 = vadd.f32 0.0, %v9214
      %v9216 = vpop.f32.mrb[0].mxu0
      %9217 = vmatprep.mubr.f32.mxu0 0.0
      %9218 = vmatmul.mubr.f32.gmra.mrb[0].mxu0 %v9004
      %v9219 = vpop.f32.mrb[0].mxu0
      %v9220 = vadd.f32 0.0, %v9219
      %v9221 = vpop.f32.mrb[0].mxu0
      %9222 = vmatprep.mubr.f32.mxu0 0.0
      %9223 = vmatmul.mubr.f32.gmra.mrb[0].mxu0 %v9007
      %v9224 = vpop.f32.mrb[0].mxu0
      %v9225 = vadd.f32 0.0, %v9224
      %v9226 = vpop.f32.mrb[0].mxu0
      %9227 = vmatprep.mubr.f32.mxu0 0.0
      %9228 = vmatmul.mubr.f32.gmra.mrb[0].mxu0 %v9010
      %v9229 = vpop.f32.mrb[0].mxu0
      %v9230 = vadd.f32 0.0, %v9229
      %v9231 = vpop.f32.mrb[0].mxu0
      %9232 = vmatprep.mubr.f32.mxu0 0.0
      %9233 = vmatmul.mubr.f32.gmra.mrb[0].mxu0 %v9013
      %v9234 = vpop.f32.mrb[0].mxu0
      %v9235 = vadd.f32 0.0, %v9234
      %v9236 = vpop.f32.mrb[0].mxu0
      %9237 = vmatprep.mubr.f32.mxu0 0.0
      %9238 = vmatmul.mubr.f32.gmra.mrb[0].mxu0 %v9016
      %v9239 = vpop.f32.mrb[0].mxu0
      %v9240 = vadd.f32 0.0, %v9239
      %v9241 = vpop.f32.mrb[0].mxu0
      %9242 = vdwg.mxu0
      %v9243 = vadd.f32 %v8849, %v9085
      %v9244 = vadd.f32 %v8850, %v9090
      %v9245 = vadd.f32 %v8851, %v9095
      %v9246 = vadd.f32 %v8852, %v9100
      %v9247 = vadd.f32 %v8853, %v9105
      %v9248 = vadd.f32 %v8854, %v9110
      %v9249 = vadd.f32 %v8855, %v9115
      %v9250 = vadd.f32 %v8856, %v9120
      %v9251 = vadd.f32 %v8857, %v9125
      %v9252 = vadd.f32 %v8858, %v9130
      %v9253 = vadd.f32 %v8859, %v9135
      %v9254 = vadd.f32 %v8860, %v9140
      %v9255 = vadd.f32 %v8861, %v9145
      %v9256 = vadd.f32 %v8862, %v9150
      %v9257 = vadd.f32 %v8863, %v9155
      %v9258 = vadd.f32 %v8864, %v9160
      %v9259 = vadd.f32 %v8865, %v9165
      %v9260 = vadd.f32 %v8866, %v9170
      %v9261 = vadd.f32 %v8867, %v9175
      %v9262 = vadd.f32 %v8868, %v9180
      %v9263 = vadd.f32 %v8869, %v9185
      %v9264 = vadd.f32 %v8870, %v9190
      %v9265 = vadd.f32 %v8871, %v9195
      %v9266 = vadd.f32 %v8872, %v9200
      %v9267 = vadd.f32 %v8873, %v9205
      %v9268 = vadd.f32 %v8874, %v9210
      %v9269 = vadd.f32 %v8875, %v9215
      %v9270 = vadd.f32 %v8876, %v9220
      %v9271 = vadd.f32 %v8877, %v9225
      %v9272 = vadd.f32 %v8878, %v9230
      %v9273 = vadd.f32 %v8879, %v9235
      %v9274 = vadd.f32 %v8880, %v9240
      %v9275 = vld [vmem:[%s6] sm:$0x1]
      %v9277 = vlaneseq
      %v9278 = vshrl.u32 %v9277, 7
      %v9279 = vsub.s32 0, %v9278
      %v9280 = vrot.slane %v9275, %v9279
      %v9282 = vadd.f32 %v9243, %v9280
      %v9283 = vadd.f32 %v9244, %v9280
      %v9284 = vadd.f32 %v9245, %v9280
      %v9285 = vadd.f32 %v9246, %v9280
      %v9286 = vadd.f32 %v9247, %v9280
      %v9287 = vadd.f32 %v9248, %v9280
      %v9288 = vadd.f32 %v9249, %v9280
      %v9289 = vadd.f32 %v9250, %v9280
      %v9290 = vadd.f32 %v9251, %v9280
      %v9291 = vadd.f32 %v9252, %v9280
      %v9292 = vadd.f32 %v9253, %v9280
      %v9293 = vadd.f32 %v9254, %v9280
      %v9294 = vadd.f32 %v9255, %v9280
      %v9295 = vadd.f32 %v9256, %v9280
      %v9296 = vadd.f32 %v9257, %v9280
      %v9297 = vadd.f32 %v9258, %v9280
      %v9298 = vadd.f32 %v9259, %v9280
      %v9299 = vadd.f32 %v9260, %v9280
      %v9300 = vadd.f32 %v9261, %v9280
      %v9301 = vadd.f32 %v9262, %v9280
      %v9302 = vadd.f32 %v9263, %v9280
      %v9303 = vadd.f32 %v9264, %v9280
      %v9304 = vadd.f32 %v9265, %v9280
      %v9305 = vadd.f32 %v9266, %v9280
      %v9306 = vadd.f32 %v9267, %v9280
      %v9307 = vadd.f32 %v9268, %v9280
      %v9308 = vadd.f32 %v9269, %v9280
      %v9309 = vadd.f32 %v9270, %v9280
      %v9310 = vadd.f32 %v9271, %v9280
      %v9311 = vadd.f32 %v9272, %v9280
      %v9312 = vadd.f32 %v9273, %v9280
      %v9313 = vadd.f32 %v9274, %v9280
      %vm9314 = vcmask 23552
      %9315 = vst.msk [vmem:[%s278] sm:$0xff] %vm9314, %v9282
      %9316 = vst.msk [vmem:[%s278 + $0x8] sm:$0xff] %vm9314, %v9283
      %9317 = vst.msk [vmem:[%s278 + $0x10] sm:$0xff] %vm9314, %v9284
      %9318 = vst.msk [vmem:[%s278 + $0x18] sm:$0xff] %vm9314, %v9285
      %9319 = vst.msk [vmem:[%s278 + $0x20] sm:$0xff] %vm9314, %v9286
      %9320 = vst.msk [vmem:[%s278 + $0x28] sm:$0xff] %vm9314, %v9287
      %9321 = vst.msk [vmem:[%s278 + $0x30] sm:$0xff] %vm9314, %v9288
      %9322 = vst.msk [vmem:[%s278 + $0x38] sm:$0xff] %vm9314, %v9289
      %9323 = vst.msk [vmem:[%s278 + $0x40] sm:$0xff] %vm9314, %v9290
      %9324 = vst.msk [vmem:[%s278 + $0x48] sm:$0xff] %vm9314, %v9291
      %9325 = vst.msk [vmem:[%s278 + $0x50] sm:$0xff] %vm9314, %v9292
      %9326 = vst.msk [vmem:[%s278 + $0x58] sm:$0xff] %vm9314, %v9293
      %9327 = vst.msk [vmem:[%s278 + $0x60] sm:$0xff] %vm9314, %v9294
      %9328 = vst.msk [vmem:[%s278 + $0x68] sm:$0xff] %vm9314, %v9295
      %9329 = vst.msk [vmem:[%s278 + $0x70] sm:$0xff] %vm9314, %v9296
      %9330 = vst.msk [vmem:[%s278 + $0x78] sm:$0xff] %vm9314, %v9297
      %9331 = vst.msk [vmem:[%s278 + $0x80] sm:$0xff] %vm9314, %v9298
      %9332 = vst.msk [vmem:[%s278 + $0x88] sm:$0xff] %vm9314, %v9299
      %9333 = vst.msk [vmem:[%s278 + $0x90] sm:$0xff] %vm9314, %v9300
      %9334 = vst.msk [vmem:[%s278 + $0x98] sm:$0xff] %vm9314, %v9301
      %9335 = vst.msk [vmem:[%s278 + $0xa0] sm:$0xff] %vm9314, %v9302
      %9336 = vst.msk [vmem:[%s278 + $0xa8] sm:$0xff] %vm9314, %v9303
      %9337 = vst.msk [vmem:[%s278 + $0xb0] sm:$0xff] %vm9314, %v9304
      %9338 = vst.msk [vmem:[%s278 + $0xb8] sm:$0xff] %vm9314, %v9305
      %9339 = vst.msk [vmem:[%s278 + $0xc0] sm:$0xff] %vm9314, %v9306
      %9340 = vst.msk [vmem:[%s278 + $0xc8] sm:$0xff] %vm9314, %v9307
      %9341 = vst.msk [vmem:[%s278 + $0xd0] sm:$0xff] %vm9314, %v9308
      %9342 = vst.msk [vmem:[%s278 + $0xd8] sm:$0xff] %vm9314, %v9309
      %9343 = vst.msk [vmem:[%s278 + $0xe0] sm:$0xff] %vm9314, %v9310
      %9344 = vst.msk [vmem:[%s278 + $0xe8] sm:$0xff] %vm9314, %v9311
      %9345 = vst.msk [vmem:[%s278 + $0xf0] sm:$0xff] %vm9314, %v9312
      %9346 = vst.msk [vmem:[%s278 + $0xf8] sm:$0xff] %vm9314, %v9313
      %p9347 = scmp.lt.s32.totalorder %s18, 1
      %s9348 = scalar_select %p9347, %s18, 1
      %s9349 = smul.addr %s9348, 32
      %s9350 = smul.addr %s9349, 8
      %s9351 = scalar_lea.vmem %s7, %s9350
      // Predicated region
      $region49: #{tpu_custom_call.1} parent=47 // pred_check
        %p9352 = pneg %p188
      $region50: #{tpu_custom_call.1} parent=47 // pred_check_branch
        %9354 = sbr.rel (%p9352) target = $region52
      $region51: #{tpu_custom_call.1} parent=47 // pred_region
        _
      $region52: #{tpu_custom_call.1} parent=47 // pred_fallthru
        _
    $region48: #{tpu_custom_call.1} parent=5 // pred_fallthru
      _
    %p9355 = scmp.le.s32.totalorder 2, %s13
    // Predicated region
    $region53: #{tpu_custom_call.1} parent=5 // pred_check
      %p9356 = pneg %p9355
    $region54: #{tpu_custom_call.1} parent=5 // pred_check_branch
      %9358 = sbr.rel (%p9356) target = $region56
    $region55: #{tpu_custom_call.1} parent=5 // pred_region
      %s9359 = ssub.s32 %s13, 2
      // Predicated region
      $region57: #{tpu_custom_call.1} parent=55 // pred_check
        %p9360 = pneg %p194
      $region58: #{tpu_custom_call.1} parent=55 // pred_check_branch
        %9362 = sbr.rel (%p9360) target = $region60
      $region59: #{tpu_custom_call.1} parent=55 // pred_region
        %p9363 = scmp.lt.s32.totalorder %s19, 1
        %s9364 = scalar_select %p9363, %s19, 1
        %s9365 = smul.addr %s9364, 32
        %s9366 = smul.addr %s9365, 8
        %s9367 = scalar_lea.vmem %s7, %s9366
      $region60: #{tpu_custom_call.1} parent=55 // pred_fallthru
        _
    $region56: #{tpu_custom_call.1} parent=5 // pred_fallthru
      _
  $region6: #{tpu_custom_call.1} parent=0 // loop_footer
    %s17 = sadd.s32 1, %s13
  $region7: #{tpu_custom_call.1} parent=0 // loop_footer_branch
    %12 = sbr.rel target = $region3
  $region8: #{tpu_custom_call.1} parent=0 // loop_exit
    _

</llo_original>
